<compile_context>
chip_gen: v7x
topology: tpu7x:2x2x1
jax: 0.10.0
libtpu: 0.0.40
codegen_flags: <defaults>
</compile_context>

<pallas_src>
import functools

import jax
import jax.numpy as jnp
from jax.experimental import pallas as pl
from jax.experimental.pallas import tpu as pltpu


PARAM_ORDER = (
    "wq_sa", "wk_sa", "wv_sa", "wo_sa", "bq_sa", "bk_sa", "bv_sa", "bo_sa",
    "wq_ca", "wk_ca", "wv_ca", "wo_ca", "bq_ca", "bk_ca", "bv_ca", "bo_ca",
    "w1", "b1", "w2", "b2",
    "g1", "be1", "g2", "be2", "g3", "be3",
)

_MATMUL_WEIGHTS = frozenset(
    {"wq_sa", "wk_sa", "wv_sa", "wo_sa",
     "wq_ca", "wk_ca", "wv_ca", "wo_ca", "w1", "w2"})


def _layernorm(x, gamma, beta, eps):
    mean = jnp.mean(x, axis=-1, keepdims=True)
    var = jnp.mean((x - mean) ** 2, axis=-1, keepdims=True)
    return (x - mean) * jax.lax.rsqrt(var + eps) * gamma + beta


def _decoder_layer_kernel(nhead, eps, cdt, exp_dtype,
                          tgt_ref, qpos_ref, mem_ref, pos_ref,
                          wq_sa, wk_sa, wv_sa, wo_sa, bq_sa, bk_sa, bv_sa, bo_sa,
                          wq_ca, wk_ca, wv_ca, wo_ca, bq_ca, bk_ca, bv_ca, bo_ca,
                          w1, b1, w2, b2,
                          g1, be1, g2, be2, g3, be3,
                          out_ref):
    L, B, E = tgt_ref.shape
    S = mem_ref.shape[0]
    H = nhead
    Dh = E // H

    # Fold (seq, batch) into the matmul M dim; residual path stays in f32.
    tgt = tgt_ref[...].reshape(L * B, E)
    qpos = qpos_ref[...].reshape(L * B, E)
    mem = mem_ref[...].reshape(S * B, E)
    pos = pos_ref[...].reshape(S * B, E)

    def proj(x2d, w_ref, b_ref):
        return jnp.dot(x2d.astype(cdt), w_ref[...],
                       preferred_element_type=jnp.float32) + b_ref[...]

    def to_heads(x2d, T):
        # (T*B, E) -> (B*H, T, Dh): cast first so the relayout moves cdt bytes.
        x = x2d.astype(cdt).reshape(T, B, H, Dh)
        return x.transpose(1, 2, 0, 3).reshape(B * H, T, Dh)

    def from_heads(x3d, T):
        # (B*H, T, Dh) -> (T*B, E); caller passes cdt data (half the XLU bytes).
        x = x3d.reshape(B, H, T, Dh).transpose(2, 0, 1, 3)
        return x.reshape(T * B, E)

    def attention(q2d, k2d, v2d, Tq, Tk):
        # 1/sqrt(Dh) is pre-folded into wq/bq by prepare_params().
        qh = to_heads(q2d, Tq)
        kh = to_heads(k2d, Tk)
        vh = to_heads(v2d, Tk)
        s = jnp.einsum("bqd,bkd->bqk", qh, kh,
                       preferred_element_type=jnp.float32)      # (B*H, Tq, Tk)
        s = s - jnp.max(s, axis=-1, keepdims=True)               # f32 max-subtract
        e = jnp.exp(s.astype(exp_dtype)).astype(jnp.float32)     # EUP (bf16 on v6e/v7x)
        p = e * pl.reciprocal(jnp.sum(e, axis=-1, keepdims=True), approx=True)
        ctx = jnp.einsum("bqk,bkd->bqd", p.astype(cdt), vh,
                         preferred_element_type=jnp.float32)     # (B*H, Tq, Dh)
        return from_heads(ctx.astype(cdt), Tq)

    # ---- self-attention: q = k = tgt + query_pos, v = tgt ----
    qk_in = tgt + qpos
    sa = attention(proj(qk_in, wq_sa, bq_sa),
                   proj(qk_in, wk_sa, bk_sa),
                   proj(tgt, wv_sa, bv_sa), L, L)
    sa = proj(sa, wo_sa, bo_sa)
    y = _layernorm(tgt + sa, g1[...], be1[...], eps)             # norm1

    # ---- cross-attention: q = y + query_pos, k = memory + pos, v = memory ----
    ca = attention(proj(y + qpos, wq_ca, bq_ca),
                   proj(mem + pos, wk_ca, bk_ca),
                   proj(mem, wv_ca, bv_ca), L, S)
    ca = proj(ca, wo_ca, bo_ca)
    z = _layernorm(y + ca, g2[...], be2[...], eps)               # norm2

    # ---- feed-forward: linear1 -> relu -> linear2 ----
    h = jnp.maximum(proj(z, w1, b1), 0.0).astype(cdt)            # hidden kept in cdt
    ff = proj(h, w2, b2)
    out = _layernorm(z + ff, g3[...], be3[...], eps)             # norm3

    out_ref[...] = out.reshape(L, B, E).astype(out_ref.dtype)


def prepare_params(params, *, nhead, compute_dtype=jnp.bfloat16):
    """One-time parameter prep (hoisted out of the per-forward path):
    fold 1/sqrt(Dh) into the q projection weights/biases and cast the matmul
    weights to the compute dtype."""
    E = params["wq_sa"].shape[0]
    scale = 1.0 / float(E // nhead) ** 0.5
    out = {}
    for name in PARAM_ORDER:
        p = params[name]
        if name in ("wq_sa", "wq_ca", "bq_sa", "bq_ca"):
            p = p * scale
        if name in _MATMUL_WEIGHTS:
            p = p.astype(compute_dtype)
        out[name] = p
    return out


def transformer_decoder_layer(tgt, memory, query_pos, pos, prepared_params, *,
                              nhead, eps=1e-5, compute_dtype=jnp.bfloat16):
    """tgt/query_pos: (L, N, E); memory/pos: (S, N, E). Returns (L, N, E) f32.

    `prepared_params` must come from prepare_params() (weights already cast,
    q-scale already folded)."""
    L, N, E = tgt.shape
    S, Nm, Em = memory.shape
    assert (Nm, Em) == (N, E), "memory batch/embed must match tgt"
    assert query_pos.shape == (L, N, E) and pos.shape == (S, N, E)
    assert E % nhead == 0, "d_model must be divisible by nhead"
    H = nhead
    F = prepared_params["w1"].shape[1]

    args = [prepared_params[name] for name in PARAM_ORDER]
    w_bytes = sum(int(a.size) * a.dtype.itemsize for a in args)

    # ---- VMEM budget: physical capacity minus headroom for compiler scratch ----
    try:
        vmem_cap = int(pltpu.get_tpu_info().vmem_capacity_bytes)
    except Exception:
        vmem_cap = 64 << 20                      # conservative fallback (v7x-sized)
    headroom = max(8 << 20, vmem_cap // 8)       # ~16 MiB on 128 MiB parts, 8 MiB on v7x
    vmem_limit = vmem_cap - headroom

    cdt_bytes = jnp.dtype(compute_dtype).itemsize

    def act_bytes(b):
        io = 4 * b * (3 * L * E + 2 * S * E)                  # tgt/qpos/out + mem/pos blocks
        scores = (4 + cdt_bytes) * b * H * (L * L + L * S)    # f32 scores + cdt probs
        hidden = cdt_bytes * L * b * F                        # FFN hidden (cdt after ReLU)
        misc = 4 * L * b * E * 6                              # q/k/v + residual temporaries
        return 2 * io + scores + hidden + misc                # activations double-buffered

    act_budget = max(vmem_limit - w_bytes - (4 << 20), 4 << 20)

    # ---- adaptive batch block (sublane dim must be a multiple of 8 or the full N) ----
    if N % 8 == 0:
        cands = [d for d in range(8, N + 1, 8) if N % d == 0]
        b_blk = cands[0]
        for d in cands:
            if act_bytes(d) <= act_budget:
                b_blk = d
        if N // b_blk == 1:
            # keep >=2 "parallel" grid steps (v7x megacore) if M = L*b stays MXU-friendly
            smaller = [d for d in cands if d < b_blk and L * d >= 256]
            if smaller:
                b_blk = smaller[-1]
    else:
        # TODO(synk): pad N to a multiple of 8 (instead of one big block) for large ragged batches.
        b_blk = N
    grid = (N // b_blk,)

    # ---- softmax exp dtype: bf16 EUP path only on v6e/v7x (v5e has no bf16 EUP/VPU) ----
    try:
        kind = jax.devices()[0].device_kind.lower()
    except Exception:
        kind = ""
    exp_dtype = compute_dtype if ("v6" in kind or "v7" in kind) else jnp.float32

    kernel = functools.partial(_decoder_layer_kernel, nhead, eps, compute_dtype, exp_dtype)

    def const_spec(shape):
        # Constant operand (same block every grid step): single-buffer it so the
        # weights occupy 1x, not 2x, of VMEM.
        try:
            return pl.BlockSpec(shape, lambda b: (0,) * len(shape),
                                pipeline_mode=pl.Buffered(1))
        except Exception:
            return pl.BlockSpec(shape, lambda b: (0,) * len(shape))

    in_specs = [
        pl.BlockSpec((L, b_blk, E), lambda b: (0, b, 0)),   # tgt
        pl.BlockSpec((L, b_blk, E), lambda b: (0, b, 0)),   # query_pos
        pl.BlockSpec((S, b_blk, E), lambda b: (0, b, 0)),   # memory
        pl.BlockSpec((S, b_blk, E), lambda b: (0, b, 0)),   # pos
    ] + [const_spec(prepared_params[name].shape) for name in PARAM_ORDER]

    out_specs = pl.BlockSpec((L, b_blk, E), lambda b: (0, b, 0))
    out_shape = jax.ShapeDtypeStruct((L, N, E), jnp.float32)

    return pl.pallas_call(
        kernel,
        out_shape=out_shape,
        grid=grid,
        in_specs=in_specs,
        out_specs=out_specs,
        compiler_params=pltpu.CompilerParams(
            dimension_semantics=("parallel",),
            vmem_limit_bytes=int(vmem_limit)),
    )(tgt, query_pos, memory, pos, *args)


def init_params(key, d_model, dim_feedforward):
    """Deterministic synthetic parameters (pre-transposed so kernel does x @ W)."""
    E, F = d_model, dim_feedforward
    ks = jax.random.split(key, 10)
    s = 0.05

    def w(k, shape):
        return jax.random.normal(k, shape, jnp.float32) * s

    params = {
        "wq_sa": w(ks[0], (E, E)), "wk_sa": w(ks[1], (E, E)),
        "wv_sa": w(ks[2], (E, E)), "wo_sa": w(ks[3], (E, E)),
        "wq_ca": w(ks[4], (E, E)), "wk_ca": w(ks[5], (E, E)),
        "wv_ca": w(ks[6], (E, E)), "wo_ca": w(ks[7], (E, E)),
        "w1": w(ks[8], (E, F)), "w2": w(ks[9], (F, E)),
        "bq_sa": jnp.full((1, E), 0.01, jnp.float32),
        "bk_sa": jnp.full((1, E), -0.01, jnp.float32),
        "bv_sa": jnp.full((1, E), 0.02, jnp.float32),
        "bo_sa": jnp.full((1, E), -0.02, jnp.float32),
        "bq_ca": jnp.full((1, E), 0.015, jnp.float32),
        "bk_ca": jnp.full((1, E), -0.015, jnp.float32),
        "bv_ca": jnp.full((1, E), 0.025, jnp.float32),
        "bo_ca": jnp.full((1, E), -0.025, jnp.float32),
        "b1": jnp.full((1, F), 0.03, jnp.float32),
        "b2": jnp.full((1, E), -0.03, jnp.float32),
        "g1": jnp.ones((1, E), jnp.float32), "be1": jnp.zeros((1, E), jnp.float32),
        "g2": jnp.ones((1, E), jnp.float32), "be2": jnp.zeros((1, E), jnp.float32),
        "g3": jnp.ones((1, E), jnp.float32), "be3": jnp.zeros((1, E), jnp.float32),
    }
    return params


def reference(tgt, memory, query_pos, pos, params, nhead, eps=1e-5):
    """Pure-JAX f32 reference mirroring PyTorch forward_post (eval mode)."""
    L, N, E = tgt.shape
    H = nhead
    Dh = E // H

    def mha(q_in, k_in, v_in, pfx):
        q = q_in @ params[f"wq_{pfx}"] + params[f"bq_{pfx}"]
        k = k_in @ params[f"wk_{pfx}"] + params[f"bk_{pfx}"]
        v = v_in @ params[f"wv_{pfx}"] + params[f"bv_{pfx}"]
        Tq, Tk = q.shape[0], k.shape[0]
        qh = q.reshape(Tq, N, H, Dh) / jnp.sqrt(float(Dh))
        kh = k.reshape(Tk, N, H, Dh)
        vh = v.reshape(Tk, N, H, Dh)
        s = jnp.einsum("qnhd,knhd->nhqk", qh, kh)
        p = jax.nn.softmax(s, axis=-1)
        ctx = jnp.einsum("nhqk,knhd->qnhd", p, vh).reshape(Tq, N, E)
        return ctx @ params[f"wo_{pfx}"] + params[f"bo_{pfx}"]

    x = tgt
    x = _layernorm(x + mha(x + query_pos, x + query_pos, x, "sa"),
                   params["g1"], params["be1"], eps)
    x = _layernorm(x + mha(x + query_pos, memory + pos, memory, "ca"),
                   params["g2"], params["be2"], eps)
    h = jax.nn.relu(x @ params["w1"] + params["b1"])
    x = _layernorm(x + h @ params["w2"] + params["b2"],
                   params["g3"], params["be3"], eps)
    return x


if __name__ == "__main__":
    # seq_tgt, seq_mem, batch, d_model, nhead, dim_feedforward
    L, S, N, E, H, FF = 8, 16, 2, 32, 4, 64
    key = jax.random.PRNGKey(0)
    k_tgt, k_mem, k_qp, k_pos, k_par = jax.random.split(key, 5)
    tgt = jax.random.normal(k_tgt, (L, N, E), jnp.float32)
    memory = jax.random.normal(k_mem, (S, N, E), jnp.float32)
    query_pos = jax.random.normal(k_qp, (L, N, E), jnp.float32)
    pos = jax.random.normal(k_pos, (S, N, E), jnp.float32)
    params = init_params(k_par, E, FF)

    # One-time weight prep (bf16 cast + folded q scale) hoisted off the forward path.
    prepped = prepare_params(params, nhead=H, compute_dtype=jnp.bfloat16)

    out = transformer_decoder_layer(tgt, memory, query_pos, pos, prepped, nhead=H)
    out = jax.block_until_ready(out)

    ref = reference(tgt, memory, query_pos, pos, params, H)
    assert out.shape == (L, N, E)
    max_err = float(jnp.max(jnp.abs(out - ref)))
    assert jnp.allclose(out, ref, atol=5e-2, rtol=5e-2), f"max abs err {max_err}"
    print("KERNEL_OK")
</pallas_src>

<mosaic_0001>
module attributes {stable_mosaic.version = 11 : i64} {
  func.func @_decoder_layer_kernel(%arg0: i32, %arg1: memref<8x2x32xf32, #tpu.memory_space<vmem>>, %arg2: memref<8x2x32xf32, #tpu.memory_space<vmem>>, %arg3: memref<16x2x32xf32, #tpu.memory_space<vmem>>, %arg4: memref<16x2x32xf32, #tpu.memory_space<vmem>>, %arg5: memref<32x32xbf16, #tpu.memory_space<vmem>>, %arg6: memref<32x32xbf16, #tpu.memory_space<vmem>>, %arg7: memref<32x32xbf16, #tpu.memory_space<vmem>>, %arg8: memref<32x32xbf16, #tpu.memory_space<vmem>>, %arg9: memref<1x32xf32, #tpu.memory_space<vmem>>, %arg10: memref<1x32xf32, #tpu.memory_space<vmem>>, %arg11: memref<1x32xf32, #tpu.memory_space<vmem>>, %arg12: memref<1x32xf32, #tpu.memory_space<vmem>>, %arg13: memref<32x32xbf16, #tpu.memory_space<vmem>>, %arg14: memref<32x32xbf16, #tpu.memory_space<vmem>>, %arg15: memref<32x32xbf16, #tpu.memory_space<vmem>>, %arg16: memref<32x32xbf16, #tpu.memory_space<vmem>>, %arg17: memref<1x32xf32, #tpu.memory_space<vmem>>, %arg18: memref<1x32xf32, #tpu.memory_space<vmem>>, %arg19: memref<1x32xf32, #tpu.memory_space<vmem>>, %arg20: memref<1x32xf32, #tpu.memory_space<vmem>>, %arg21: memref<32x64xbf16, #tpu.memory_space<vmem>>, %arg22: memref<1x64xf32, #tpu.memory_space<vmem>>, %arg23: memref<64x32xbf16, #tpu.memory_space<vmem>>, %arg24: memref<1x32xf32, #tpu.memory_space<vmem>>, %arg25: memref<1x32xf32, #tpu.memory_space<vmem>>, %arg26: memref<1x32xf32, #tpu.memory_space<vmem>>, %arg27: memref<1x32xf32, #tpu.memory_space<vmem>>, %arg28: memref<1x32xf32, #tpu.memory_space<vmem>>, %arg29: memref<1x32xf32, #tpu.memory_space<vmem>>, %arg30: memref<1x32xf32, #tpu.memory_space<vmem>>, %arg31: memref<8x2x32xf32, #tpu.memory_space<vmem>>) attributes {dimension_semantics = [#tpu.dimension_semantics<parallel>], iteration_bounds = array<i64: 1>, scalar_prefetch = 0 : i64, scratch_operands = 0 : i64, tpu.core_type = #tpu.core_type<tc>, window_params = [{transform_indices = @transform_0, window_bounds = array<i64: 8, 2, 32>}, {transform_indices = @transform_1, window_bounds = array<i64: 8, 2, 32>}, {transform_indices = @transform_2, window_bounds = array<i64: 16, 2, 32>}, {transform_indices = @transform_3, window_bounds = array<i64: 16, 2, 32>}, {pipeline_mode = #tpu.pipeline_mode<synchronous>, transform_indices = @transform_4, window_bounds = array<i64: 32, 32>}, {pipeline_mode = #tpu.pipeline_mode<synchronous>, transform_indices = @transform_5, window_bounds = array<i64: 32, 32>}, {pipeline_mode = #tpu.pipeline_mode<synchronous>, transform_indices = @transform_6, window_bounds = array<i64: 32, 32>}, {pipeline_mode = #tpu.pipeline_mode<synchronous>, transform_indices = @transform_7, window_bounds = array<i64: 32, 32>}, {pipeline_mode = #tpu.pipeline_mode<synchronous>, transform_indices = @transform_8, window_bounds = array<i64: 1, 32>}, {pipeline_mode = #tpu.pipeline_mode<synchronous>, transform_indices = @transform_9, window_bounds = array<i64: 1, 32>}, {pipeline_mode = #tpu.pipeline_mode<synchronous>, transform_indices = @transform_10, window_bounds = array<i64: 1, 32>}, {pipeline_mode = #tpu.pipeline_mode<synchronous>, transform_indices = @transform_11, window_bounds = array<i64: 1, 32>}, {pipeline_mode = #tpu.pipeline_mode<synchronous>, transform_indices = @transform_12, window_bounds = array<i64: 32, 32>}, {pipeline_mode = #tpu.pipeline_mode<synchronous>, transform_indices = @transform_13, window_bounds = array<i64: 32, 32>}, {pipeline_mode = #tpu.pipeline_mode<synchronous>, transform_indices = @transform_14, window_bounds = array<i64: 32, 32>}, {pipeline_mode = #tpu.pipeline_mode<synchronous>, transform_indices = @transform_15, window_bounds = array<i64: 32, 32>}, {pipeline_mode = #tpu.pipeline_mode<synchronous>, transform_indices = @transform_16, window_bounds = array<i64: 1, 32>}, {pipeline_mode = #tpu.pipeline_mode<synchronous>, transform_indices = @transform_17, window_bounds = array<i64: 1, 32>}, {pipeline_mode = #tpu.pipeline_mode<synchronous>, transform_indices = @transform_18, window_bounds = array<i64: 1, 32>}, {pipeline_mode = #tpu.pipeline_mode<synchronous>, transform_indices = @transform_19, window_bounds = array<i64: 1, 32>}, {pipeline_mode = #tpu.pipeline_mode<synchronous>, transform_indices = @transform_20, window_bounds = array<i64: 32, 64>}, {pipeline_mode = #tpu.pipeline_mode<synchronous>, transform_indices = @transform_21, window_bounds = array<i64: 1, 64>}, {pipeline_mode = #tpu.pipeline_mode<synchronous>, transform_indices = @transform_22, window_bounds = array<i64: 64, 32>}, {pipeline_mode = #tpu.pipeline_mode<synchronous>, transform_indices = @transform_23, window_bounds = array<i64: 1, 32>}, {pipeline_mode = #tpu.pipeline_mode<synchronous>, transform_indices = @transform_24, window_bounds = array<i64: 1, 32>}, {pipeline_mode = #tpu.pipeline_mode<synchronous>, transform_indices = @transform_25, window_bounds = array<i64: 1, 32>}, {pipeline_mode = #tpu.pipeline_mode<synchronous>, transform_indices = @transform_26, window_bounds = array<i64: 1, 32>}, {pipeline_mode = #tpu.pipeline_mode<synchronous>, transform_indices = @transform_27, window_bounds = array<i64: 1, 32>}, {pipeline_mode = #tpu.pipeline_mode<synchronous>, transform_indices = @transform_28, window_bounds = array<i64: 1, 32>}, {pipeline_mode = #tpu.pipeline_mode<synchronous>, transform_indices = @transform_29, window_bounds = array<i64: 1, 32>}, {transform_indices = @transform_30, window_bounds = array<i64: 8, 2, 32>}]} {
    %c0 = arith.constant 0 : index
    %c0_0 = arith.constant 0 : index
    %c0_1 = arith.constant 0 : index
    %0 = vector.load %arg1[%c0, %c0_0, %c0_1] : memref<8x2x32xf32, #tpu.memory_space<vmem>>, vector<8x2x32xf32>
    %1 = vector.shape_cast %0 : vector<8x2x32xf32> to vector<16x32xf32>
    %c0_2 = arith.constant 0 : index
    %c0_3 = arith.constant 0 : index
    %c0_4 = arith.constant 0 : index
    %2 = vector.load %arg2[%c0_2, %c0_3, %c0_4] : memref<8x2x32xf32, #tpu.memory_space<vmem>>, vector<8x2x32xf32>
    %3 = vector.shape_cast %2 : vector<8x2x32xf32> to vector<16x32xf32>
    %c0_5 = arith.constant 0 : index
    %c0_6 = arith.constant 0 : index
    %c0_7 = arith.constant 0 : index
    %4 = vector.load %arg3[%c0_5, %c0_6, %c0_7] : memref<16x2x32xf32, #tpu.memory_space<vmem>>, vector<16x2x32xf32>
    %5 = vector.shape_cast %4 : vector<16x2x32xf32> to vector<32x32xf32>
    %c0_8 = arith.constant 0 : index
    %c0_9 = arith.constant 0 : index
    %c0_10 = arith.constant 0 : index
    %6 = vector.load %arg4[%c0_8, %c0_9, %c0_10] : memref<16x2x32xf32, #tpu.memory_space<vmem>>, vector<16x2x32xf32>
    %7 = vector.shape_cast %6 : vector<16x2x32xf32> to vector<32x32xf32>
    %8 = arith.addf %1, %3 : vector<16x32xf32>
    %9 = arith.truncf %8 : vector<16x32xf32> to vector<16x32xbf16>
    %c0_11 = arith.constant 0 : index
    %c0_12 = arith.constant 0 : index
    %10 = vector.load %arg5[%c0_11, %c0_12] : memref<32x32xbf16, #tpu.memory_space<vmem>>, vector<32x32xbf16>
    %cst = arith.constant dense<0.000000e+00> : vector<16x32xf32>
    %11 = tpu.matmul %9, %10, %cst {dimension_numbers = #tpu.dot_dimension_numbers<[1], [0], [0], [1], [0, 0, 1, 1], [], []>} : vector<16x32xbf16>, vector<32x32xbf16>, vector<16x32xf32> -> vector<16x32xf32>
    %c0_13 = arith.constant 0 : index
    %c0_14 = arith.constant 0 : index
    %12 = vector.load %arg9[%c0_13, %c0_14] : memref<1x32xf32, #tpu.memory_space<vmem>>, vector<1x32xf32>
    %13 = vector.broadcast %12 : vector<1x32xf32> to vector<16x32xf32>
    %14 = arith.addf %11, %13 : vector<16x32xf32>
    %15 = arith.truncf %8 : vector<16x32xf32> to vector<16x32xbf16>
    %c0_15 = arith.constant 0 : index
    %c0_16 = arith.constant 0 : index
    %16 = vector.load %arg6[%c0_15, %c0_16] : memref<32x32xbf16, #tpu.memory_space<vmem>>, vector<32x32xbf16>
    %cst_17 = arith.constant dense<0.000000e+00> : vector<16x32xf32>
    %17 = tpu.matmul %15, %16, %cst_17 {dimension_numbers = #tpu.dot_dimension_numbers<[1], [0], [0], [1], [0, 0, 1, 1], [], []>} : vector<16x32xbf16>, vector<32x32xbf16>, vector<16x32xf32> -> vector<16x32xf32>
    %c0_18 = arith.constant 0 : index
    %c0_19 = arith.constant 0 : index
    %18 = vector.load %arg10[%c0_18, %c0_19] : memref<1x32xf32, #tpu.memory_space<vmem>>, vector<1x32xf32>
    %19 = vector.broadcast %18 : vector<1x32xf32> to vector<16x32xf32>
    %20 = arith.addf %17, %19 : vector<16x32xf32>
    %21 = arith.truncf %1 : vector<16x32xf32> to vector<16x32xbf16>
    %c0_20 = arith.constant 0 : index
    %c0_21 = arith.constant 0 : index
    %22 = vector.load %arg7[%c0_20, %c0_21] : memref<32x32xbf16, #tpu.memory_space<vmem>>, vector<32x32xbf16>
    %cst_22 = arith.constant dense<0.000000e+00> : vector<16x32xf32>
    %23 = tpu.matmul %21, %22, %cst_22 {dimension_numbers = #tpu.dot_dimension_numbers<[1], [0], [0], [1], [0, 0, 1, 1], [], []>} : vector<16x32xbf16>, vector<32x32xbf16>, vector<16x32xf32> -> vector<16x32xf32>
    %c0_23 = arith.constant 0 : index
    %c0_24 = arith.constant 0 : index
    %24 = vector.load %arg11[%c0_23, %c0_24] : memref<1x32xf32, #tpu.memory_space<vmem>>, vector<1x32xf32>
    %25 = vector.broadcast %24 : vector<1x32xf32> to vector<16x32xf32>
    %26 = arith.addf %23, %25 : vector<16x32xf32>
    %27 = arith.truncf %14 : vector<16x32xf32> to vector<16x32xbf16>
    %28 = vector.shape_cast %27 : vector<16x32xbf16> to vector<8x2x4x8xbf16>
    %29 = tpu.transpose %28, [1, 2, 0, 3] : vector<8x2x4x8xbf16> -> vector<2x4x8x8xbf16>
    %30 = vector.shape_cast %29 : vector<2x4x8x8xbf16> to vector<8x8x8xbf16>
    %31 = arith.truncf %20 : vector<16x32xf32> to vector<16x32xbf16>
    %32 = vector.shape_cast %31 : vector<16x32xbf16> to vector<8x2x4x8xbf16>
    %33 = tpu.transpose %32, [1, 2, 0, 3] : vector<8x2x4x8xbf16> -> vector<2x4x8x8xbf16>
    %34 = vector.shape_cast %33 : vector<2x4x8x8xbf16> to vector<8x8x8xbf16>
    %35 = arith.truncf %26 : vector<16x32xf32> to vector<16x32xbf16>
    %36 = vector.shape_cast %35 : vector<16x32xbf16> to vector<8x2x4x8xbf16>
    %37 = tpu.transpose %36, [1, 2, 0, 3] : vector<8x2x4x8xbf16> -> vector<2x4x8x8xbf16>
    %38 = vector.shape_cast %37 : vector<2x4x8x8xbf16> to vector<8x8x8xbf16>
    "tpu.trace_start"() <{level = 10 : i32, message = "bqd,bkd->bqk"}> : () -> ()
    %cst_25 = arith.constant dense<0.000000e+00> : vector<8x8x8xf32>
    %39 = tpu.matmul %30, %34, %cst_25 {dimension_numbers = #tpu.dot_dimension_numbers<[2], [2], [1], [1], [0, 0, 0, 1, 1, 1], [0], [0]>} : vector<8x8x8xbf16>, vector<8x8x8xbf16>, vector<8x8x8xf32> -> vector<8x8x8xf32>
    "tpu.trace_stop"() : () -> ()
    %cst_26 = arith.constant dense<0xFF800000> : vector<8x8xf32>
    %40 = vector.multi_reduction <maximumf>, %39, %cst_26 [2] : vector<8x8x8xf32> to vector<8x8xf32>
    %41 = vector.shape_cast %40 : vector<8x8xf32> to vector<8x8x1xf32>
    %42 = vector.broadcast %41 : vector<8x8x1xf32> to vector<8x8x8xf32>
    %43 = arith.subf %39, %42 : vector<8x8x8xf32>
    %44 = math.exp %43 : vector<8x8x8xf32>
    %cst_27 = arith.constant dense<0.000000e+00> : vector<8x8xf32>
    %45 = vector.multi_reduction <add>, %44, %cst_27 [2] : vector<8x8x8xf32> to vector<8x8xf32>
    %46 = vector.shape_cast %45 : vector<8x8xf32> to vector<8x8x1xf32>
    %47 = tpu.reciprocal %46 {approx = true} : vector<8x8x1xf32> -> vector<8x8x1xf32>
    %48 = vector.broadcast %47 : vector<8x8x1xf32> to vector<8x8x8xf32>
    %49 = arith.mulf %44, %48 : vector<8x8x8xf32>
    %50 = arith.truncf %49 : vector<8x8x8xf32> to vector<8x8x8xbf16>
    "tpu.trace_start"() <{level = 10 : i32, message = "bqk,bkd->bqd"}> : () -> ()
    %cst_28 = arith.constant dense<0.000000e+00> : vector<8x8x8xf32>
    %51 = tpu.matmul %50, %38, %cst_28 {dimension_numbers = #tpu.dot_dimension_numbers<[2], [1], [1], [2], [0, 0, 0, 1, 1, 2], [0], [0]>} : vector<8x8x8xbf16>, vector<8x8x8xbf16>, vector<8x8x8xf32> -> vector<8x8x8xf32>
    "tpu.trace_stop"() : () -> ()
    %52 = arith.truncf %51 : vector<8x8x8xf32> to vector<8x8x8xbf16>
    %53 = vector.shape_cast %52 : vector<8x8x8xbf16> to vector<2x4x8x8xbf16>
    %54 = tpu.transpose %53, [2, 0, 1, 3] : vector<2x4x8x8xbf16> -> vector<8x2x4x8xbf16>
    %55 = vector.shape_cast %54 : vector<8x2x4x8xbf16> to vector<16x32xbf16>
    %c0_29 = arith.constant 0 : index
    %c0_30 = arith.constant 0 : index
    %56 = vector.load %arg8[%c0_29, %c0_30] : memref<32x32xbf16, #tpu.memory_space<vmem>>, vector<32x32xbf16>
    %cst_31 = arith.constant dense<0.000000e+00> : vector<16x32xf32>
    %57 = tpu.matmul %55, %56, %cst_31 {dimension_numbers = #tpu.dot_dimension_numbers<[1], [0], [0], [1], [0, 0, 1, 1], [], []>} : vector<16x32xbf16>, vector<32x32xbf16>, vector<16x32xf32> -> vector<16x32xf32>
    %c0_32 = arith.constant 0 : index
    %c0_33 = arith.constant 0 : index
    %58 = vector.load %arg12[%c0_32, %c0_33] : memref<1x32xf32, #tpu.memory_space<vmem>>, vector<1x32xf32>
    %59 = vector.broadcast %58 : vector<1x32xf32> to vector<16x32xf32>
    %60 = arith.addf %57, %59 : vector<16x32xf32>
    %61 = arith.addf %1, %60 : vector<16x32xf32>
    %c0_34 = arith.constant 0 : index
    %c0_35 = arith.constant 0 : index
    %62 = vector.load %arg25[%c0_34, %c0_35] : memref<1x32xf32, #tpu.memory_space<vmem>>, vector<1x32xf32>
    %c0_36 = arith.constant 0 : index
    %c0_37 = arith.constant 0 : index
    %63 = vector.load %arg26[%c0_36, %c0_37] : memref<1x32xf32, #tpu.memory_space<vmem>>, vector<1x32xf32>
    %cst_38 = arith.constant dense<0.000000e+00> : vector<16xf32>
    %64 = vector.multi_reduction <add>, %61, %cst_38 [1] : vector<16x32xf32> to vector<16xf32>
    %65 = vector.shape_cast %64 : vector<16xf32> to vector<16x1xf32>
    %cst_39 = arith.constant 3.200000e+01 : f32
    %66 = vector.broadcast %cst_39 : f32 to vector<16x1xf32>
    %67 = arith.divf %65, %66 : vector<16x1xf32>
    %68 = vector.broadcast %67 : vector<16x1xf32> to vector<16x32xf32>
    %69 = arith.subf %61, %68 : vector<16x32xf32>
    %70 = arith.mulf %69, %69 : vector<16x32xf32>
    %cst_40 = arith.constant dense<0.000000e+00> : vector<16xf32>
    %71 = vector.multi_reduction <add>, %70, %cst_40 [1] : vector<16x32xf32> to vector<16xf32>
    %72 = vector.shape_cast %71 : vector<16xf32> to vector<16x1xf32>
    %cst_41 = arith.constant 3.200000e+01 : f32
    %73 = vector.broadcast %cst_41 : f32 to vector<16x1xf32>
    %74 = arith.divf %72, %73 : vector<16x1xf32>
    %75 = vector.broadcast %67 : vector<16x1xf32> to vector<16x32xf32>
    %76 = arith.subf %61, %75 : vector<16x32xf32>
    %cst_42 = arith.constant 9.99999974E-6 : f32
    %77 = vector.broadcast %cst_42 : f32 to vector<16x1xf32>
    %78 = arith.addf %74, %77 : vector<16x1xf32>
    %79 = math.rsqrt %78 : vector<16x1xf32>
    %80 = vector.broadcast %79 : vector<16x1xf32> to vector<16x32xf32>
    %81 = arith.mulf %76, %80 : vector<16x32xf32>
    %82 = vector.broadcast %62 : vector<1x32xf32> to vector<16x32xf32>
    %83 = arith.mulf %81, %82 : vector<16x32xf32>
    %84 = vector.broadcast %63 : vector<1x32xf32> to vector<16x32xf32>
    %85 = arith.addf %83, %84 : vector<16x32xf32>
    %86 = arith.addf %85, %3 : vector<16x32xf32>
    %87 = arith.truncf %86 : vector<16x32xf32> to vector<16x32xbf16>
    %c0_43 = arith.constant 0 : index
    %c0_44 = arith.constant 0 : index
    %88 = vector.load %arg13[%c0_43, %c0_44] : memref<32x32xbf16, #tpu.memory_space<vmem>>, vector<32x32xbf16>
    %cst_45 = arith.constant dense<0.000000e+00> : vector<16x32xf32>
    %89 = tpu.matmul %87, %88, %cst_45 {dimension_numbers = #tpu.dot_dimension_numbers<[1], [0], [0], [1], [0, 0, 1, 1], [], []>} : vector<16x32xbf16>, vector<32x32xbf16>, vector<16x32xf32> -> vector<16x32xf32>
    %c0_46 = arith.constant 0 : index
    %c0_47 = arith.constant 0 : index
    %90 = vector.load %arg17[%c0_46, %c0_47] : memref<1x32xf32, #tpu.memory_space<vmem>>, vector<1x32xf32>
    %91 = vector.broadcast %90 : vector<1x32xf32> to vector<16x32xf32>
    %92 = arith.addf %89, %91 : vector<16x32xf32>
    %93 = arith.addf %5, %7 : vector<32x32xf32>
    %94 = arith.truncf %93 : vector<32x32xf32> to vector<32x32xbf16>
    %c0_48 = arith.constant 0 : index
    %c0_49 = arith.constant 0 : index
    %95 = vector.load %arg14[%c0_48, %c0_49] : memref<32x32xbf16, #tpu.memory_space<vmem>>, vector<32x32xbf16>
    %cst_50 = arith.constant dense<0.000000e+00> : vector<32x32xf32>
    %96 = tpu.matmul %94, %95, %cst_50 {dimension_numbers = #tpu.dot_dimension_numbers<[1], [0], [0], [1], [0, 0, 1, 1], [], []>} : vector<32x32xbf16>, vector<32x32xbf16>, vector<32x32xf32> -> vector<32x32xf32>
    %c0_51 = arith.constant 0 : index
    %c0_52 = arith.constant 0 : index
    %97 = vector.load %arg18[%c0_51, %c0_52] : memref<1x32xf32, #tpu.memory_space<vmem>>, vector<1x32xf32>
    %98 = vector.broadcast %97 : vector<1x32xf32> to vector<32x32xf32>
    %99 = arith.addf %96, %98 : vector<32x32xf32>
    %100 = arith.truncf %5 : vector<32x32xf32> to vector<32x32xbf16>
    %c0_53 = arith.constant 0 : index
    %c0_54 = arith.constant 0 : index
    %101 = vector.load %arg15[%c0_53, %c0_54] : memref<32x32xbf16, #tpu.memory_space<vmem>>, vector<32x32xbf16>
    %cst_55 = arith.constant dense<0.000000e+00> : vector<32x32xf32>
    %102 = tpu.matmul %100, %101, %cst_55 {dimension_numbers = #tpu.dot_dimension_numbers<[1], [0], [0], [1], [0, 0, 1, 1], [], []>} : vector<32x32xbf16>, vector<32x32xbf16>, vector<32x32xf32> -> vector<32x32xf32>
    %c0_56 = arith.constant 0 : index
    %c0_57 = arith.constant 0 : index
    %103 = vector.load %arg19[%c0_56, %c0_57] : memref<1x32xf32, #tpu.memory_space<vmem>>, vector<1x32xf32>
    %104 = vector.broadcast %103 : vector<1x32xf32> to vector<32x32xf32>
    %105 = arith.addf %102, %104 : vector<32x32xf32>
    %106 = arith.truncf %92 : vector<16x32xf32> to vector<16x32xbf16>
    %107 = vector.shape_cast %106 : vector<16x32xbf16> to vector<8x2x4x8xbf16>
    %108 = tpu.transpose %107, [1, 2, 0, 3] : vector<8x2x4x8xbf16> -> vector<2x4x8x8xbf16>
    %109 = vector.shape_cast %108 : vector<2x4x8x8xbf16> to vector<8x8x8xbf16>
    %110 = arith.truncf %99 : vector<32x32xf32> to vector<32x32xbf16>
    %111 = vector.shape_cast %110 : vector<32x32xbf16> to vector<16x2x4x8xbf16>
    %112 = tpu.transpose %111, [1, 2, 0, 3] : vector<16x2x4x8xbf16> -> vector<2x4x16x8xbf16>
    %113 = vector.shape_cast %112 : vector<2x4x16x8xbf16> to vector<8x16x8xbf16>
    %114 = arith.truncf %105 : vector<32x32xf32> to vector<32x32xbf16>
    %115 = vector.shape_cast %114 : vector<32x32xbf16> to vector<16x2x4x8xbf16>
    %116 = tpu.transpose %115, [1, 2, 0, 3] : vector<16x2x4x8xbf16> -> vector<2x4x16x8xbf16>
    %117 = vector.shape_cast %116 : vector<2x4x16x8xbf16> to vector<8x16x8xbf16>
    "tpu.trace_start"() <{level = 10 : i32, message = "bqd,bkd->bqk"}> : () -> ()
    %cst_58 = arith.constant dense<0.000000e+00> : vector<8x8x16xf32>
    %118 = tpu.matmul %109, %113, %cst_58 {dimension_numbers = #tpu.dot_dimension_numbers<[2], [2], [1], [1], [0, 0, 0, 1, 1, 1], [0], [0]>} : vector<8x8x8xbf16>, vector<8x16x8xbf16>, vector<8x8x16xf32> -> vector<8x8x16xf32>
    "tpu.trace_stop"() : () -> ()
    %cst_59 = arith.constant dense<0xFF800000> : vector<8x8xf32>
    %119 = vector.multi_reduction <maximumf>, %118, %cst_59 [2] : vector<8x8x16xf32> to vector<8x8xf32>
    %120 = vector.shape_cast %119 : vector<8x8xf32> to vector<8x8x1xf32>
    %121 = vector.broadcast %120 : vector<8x8x1xf32> to vector<8x8x16xf32>
    %122 = arith.subf %118, %121 : vector<8x8x16xf32>
    %123 = math.exp %122 : vector<8x8x16xf32>
    %cst_60 = arith.constant dense<0.000000e+00> : vector<8x8xf32>
    %124 = vector.multi_reduction <add>, %123, %cst_60 [2] : vector<8x8x16xf32> to vector<8x8xf32>
    %125 = vector.shape_cast %124 : vector<8x8xf32> to vector<8x8x1xf32>
    %126 = tpu.reciprocal %125 {approx = true} : vector<8x8x1xf32> -> vector<8x8x1xf32>
    %127 = vector.broadcast %126 : vector<8x8x1xf32> to vector<8x8x16xf32>
    %128 = arith.mulf %123, %127 : vector<8x8x16xf32>
    %129 = arith.truncf %128 : vector<8x8x16xf32> to vector<8x8x16xbf16>
    "tpu.trace_start"() <{level = 10 : i32, message = "bqk,bkd->bqd"}> : () -> ()
    %cst_61 = arith.constant dense<0.000000e+00> : vector<8x8x8xf32>
    %130 = tpu.matmul %129, %117, %cst_61 {dimension_numbers = #tpu.dot_dimension_numbers<[2], [1], [1], [2], [0, 0, 0, 1, 1, 2], [0], [0]>} : vector<8x8x16xbf16>, vector<8x16x8xbf16>, vector<8x8x8xf32> -> vector<8x8x8xf32>
    "tpu.trace_stop"() : () -> ()
    %131 = arith.truncf %130 : vector<8x8x8xf32> to vector<8x8x8xbf16>
    %132 = vector.shape_cast %131 : vector<8x8x8xbf16> to vector<2x4x8x8xbf16>
    %133 = tpu.transpose %132, [2, 0, 1, 3] : vector<2x4x8x8xbf16> -> vector<8x2x4x8xbf16>
    %134 = vector.shape_cast %133 : vector<8x2x4x8xbf16> to vector<16x32xbf16>
    %c0_62 = arith.constant 0 : index
    %c0_63 = arith.constant 0 : index
    %135 = vector.load %arg16[%c0_62, %c0_63] : memref<32x32xbf16, #tpu.memory_space<vmem>>, vector<32x32xbf16>
    %cst_64 = arith.constant dense<0.000000e+00> : vector<16x32xf32>
    %136 = tpu.matmul %134, %135, %cst_64 {dimension_numbers = #tpu.dot_dimension_numbers<[1], [0], [0], [1], [0, 0, 1, 1], [], []>} : vector<16x32xbf16>, vector<32x32xbf16>, vector<16x32xf32> -> vector<16x32xf32>
    %c0_65 = arith.constant 0 : index
    %c0_66 = arith.constant 0 : index
    %137 = vector.load %arg20[%c0_65, %c0_66] : memref<1x32xf32, #tpu.memory_space<vmem>>, vector<1x32xf32>
    %138 = vector.broadcast %137 : vector<1x32xf32> to vector<16x32xf32>
    %139 = arith.addf %136, %138 : vector<16x32xf32>
    %140 = arith.addf %85, %139 : vector<16x32xf32>
    %c0_67 = arith.constant 0 : index
    %c0_68 = arith.constant 0 : index
    %141 = vector.load %arg27[%c0_67, %c0_68] : memref<1x32xf32, #tpu.memory_space<vmem>>, vector<1x32xf32>
    %c0_69 = arith.constant 0 : index
    %c0_70 = arith.constant 0 : index
    %142 = vector.load %arg28[%c0_69, %c0_70] : memref<1x32xf32, #tpu.memory_space<vmem>>, vector<1x32xf32>
    %cst_71 = arith.constant dense<0.000000e+00> : vector<16xf32>
    %143 = vector.multi_reduction <add>, %140, %cst_71 [1] : vector<16x32xf32> to vector<16xf32>
    %144 = vector.shape_cast %143 : vector<16xf32> to vector<16x1xf32>
    %cst_72 = arith.constant 3.200000e+01 : f32
    %145 = vector.broadcast %cst_72 : f32 to vector<16x1xf32>
    %146 = arith.divf %144, %145 : vector<16x1xf32>
    %147 = vector.broadcast %146 : vector<16x1xf32> to vector<16x32xf32>
    %148 = arith.subf %140, %147 : vector<16x32xf32>
    %149 = arith.mulf %148, %148 : vector<16x32xf32>
    %cst_73 = arith.constant dense<0.000000e+00> : vector<16xf32>
    %150 = vector.multi_reduction <add>, %149, %cst_73 [1] : vector<16x32xf32> to vector<16xf32>
    %151 = vector.shape_cast %150 : vector<16xf32> to vector<16x1xf32>
    %cst_74 = arith.constant 3.200000e+01 : f32
    %152 = vector.broadcast %cst_74 : f32 to vector<16x1xf32>
    %153 = arith.divf %151, %152 : vector<16x1xf32>
    %154 = vector.broadcast %146 : vector<16x1xf32> to vector<16x32xf32>
    %155 = arith.subf %140, %154 : vector<16x32xf32>
    %cst_75 = arith.constant 9.99999974E-6 : f32
    %156 = vector.broadcast %cst_75 : f32 to vector<16x1xf32>
    %157 = arith.addf %153, %156 : vector<16x1xf32>
    %158 = math.rsqrt %157 : vector<16x1xf32>
    %159 = vector.broadcast %158 : vector<16x1xf32> to vector<16x32xf32>
    %160 = arith.mulf %155, %159 : vector<16x32xf32>
    %161 = vector.broadcast %141 : vector<1x32xf32> to vector<16x32xf32>
    %162 = arith.mulf %160, %161 : vector<16x32xf32>
    %163 = vector.broadcast %142 : vector<1x32xf32> to vector<16x32xf32>
    %164 = arith.addf %162, %163 : vector<16x32xf32>
    %165 = arith.truncf %164 : vector<16x32xf32> to vector<16x32xbf16>
    %c0_76 = arith.constant 0 : index
    %c0_77 = arith.constant 0 : index
    %166 = vector.load %arg21[%c0_76, %c0_77] : memref<32x64xbf16, #tpu.memory_space<vmem>>, vector<32x64xbf16>
    %cst_78 = arith.constant dense<0.000000e+00> : vector<16x64xf32>
    %167 = tpu.matmul %165, %166, %cst_78 {dimension_numbers = #tpu.dot_dimension_numbers<[1], [0], [0], [1], [0, 0, 1, 1], [], []>} : vector<16x32xbf16>, vector<32x64xbf16>, vector<16x64xf32> -> vector<16x64xf32>
    %c0_79 = arith.constant 0 : index
    %c0_80 = arith.constant 0 : index
    %168 = vector.load %arg22[%c0_79, %c0_80] : memref<1x64xf32, #tpu.memory_space<vmem>>, vector<1x64xf32>
    %169 = vector.broadcast %168 : vector<1x64xf32> to vector<16x64xf32>
    %170 = arith.addf %167, %169 : vector<16x64xf32>
    %cst_81 = arith.constant 0.000000e+00 : f32
    %171 = vector.broadcast %cst_81 : f32 to vector<16x64xf32>
    %172 = arith.maximumf %170, %171 : vector<16x64xf32>
    %173 = arith.truncf %172 : vector<16x64xf32> to vector<16x64xbf16>
    %c0_82 = arith.constant 0 : index
    %c0_83 = arith.constant 0 : index
    %174 = vector.load %arg23[%c0_82, %c0_83] : memref<64x32xbf16, #tpu.memory_space<vmem>>, vector<64x32xbf16>
    %cst_84 = arith.constant dense<0.000000e+00> : vector<16x32xf32>
    %175 = tpu.matmul %173, %174, %cst_84 {dimension_numbers = #tpu.dot_dimension_numbers<[1], [0], [0], [1], [0, 0, 1, 1], [], []>} : vector<16x64xbf16>, vector<64x32xbf16>, vector<16x32xf32> -> vector<16x32xf32>
    %c0_85 = arith.constant 0 : index
    %c0_86 = arith.constant 0 : index
    %176 = vector.load %arg24[%c0_85, %c0_86] : memref<1x32xf32, #tpu.memory_space<vmem>>, vector<1x32xf32>
    %177 = vector.broadcast %176 : vector<1x32xf32> to vector<16x32xf32>
    %178 = arith.addf %175, %177 : vector<16x32xf32>
    %179 = arith.addf %164, %178 : vector<16x32xf32>
    %c0_87 = arith.constant 0 : index
    %c0_88 = arith.constant 0 : index
    %180 = vector.load %arg29[%c0_87, %c0_88] : memref<1x32xf32, #tpu.memory_space<vmem>>, vector<1x32xf32>
    %c0_89 = arith.constant 0 : index
    %c0_90 = arith.constant 0 : index
    %181 = vector.load %arg30[%c0_89, %c0_90] : memref<1x32xf32, #tpu.memory_space<vmem>>, vector<1x32xf32>
    %cst_91 = arith.constant dense<0.000000e+00> : vector<16xf32>
    %182 = vector.multi_reduction <add>, %179, %cst_91 [1] : vector<16x32xf32> to vector<16xf32>
    %183 = vector.shape_cast %182 : vector<16xf32> to vector<16x1xf32>
    %cst_92 = arith.constant 3.200000e+01 : f32
    %184 = vector.broadcast %cst_92 : f32 to vector<16x1xf32>
    %185 = arith.divf %183, %184 : vector<16x1xf32>
    %186 = vector.broadcast %185 : vector<16x1xf32> to vector<16x32xf32>
    %187 = arith.subf %179, %186 : vector<16x32xf32>
    %188 = arith.mulf %187, %187 : vector<16x32xf32>
    %cst_93 = arith.constant dense<0.000000e+00> : vector<16xf32>
    %189 = vector.multi_reduction <add>, %188, %cst_93 [1] : vector<16x32xf32> to vector<16xf32>
    %190 = vector.shape_cast %189 : vector<16xf32> to vector<16x1xf32>
    %cst_94 = arith.constant 3.200000e+01 : f32
    %191 = vector.broadcast %cst_94 : f32 to vector<16x1xf32>
    %192 = arith.divf %190, %191 : vector<16x1xf32>
    %193 = vector.broadcast %185 : vector<16x1xf32> to vector<16x32xf32>
    %194 = arith.subf %179, %193 : vector<16x32xf32>
    %cst_95 = arith.constant 9.99999974E-6 : f32
    %195 = vector.broadcast %cst_95 : f32 to vector<16x1xf32>
    %196 = arith.addf %192, %195 : vector<16x1xf32>
    %197 = math.rsqrt %196 : vector<16x1xf32>
    %198 = vector.broadcast %197 : vector<16x1xf32> to vector<16x32xf32>
    %199 = arith.mulf %194, %198 : vector<16x32xf32>
    %200 = vector.broadcast %180 : vector<1x32xf32> to vector<16x32xf32>
    %201 = arith.mulf %199, %200 : vector<16x32xf32>
    %202 = vector.broadcast %181 : vector<1x32xf32> to vector<16x32xf32>
    %203 = arith.addf %201, %202 : vector<16x32xf32>
    %204 = vector.shape_cast %203 : vector<16x32xf32> to vector<8x2x32xf32>
    %c0_96 = arith.constant 0 : index
    %c0_97 = arith.constant 0 : index
    %c0_98 = arith.constant 0 : index
    %205 = vector.load %arg31[%c0_96, %c0_97, %c0_98] : memref<8x2x32xf32, #tpu.memory_space<vmem>>, vector<8x2x32xf32>
    tpu.vector_store %arg31[%c0_96, %c0_97, %c0_98], %204 {strides = array<i32>} : memref<8x2x32xf32, #tpu.memory_space<vmem>>, vector<8x2x32xf32>,
    return
  }
  func.func @transform_0(%arg0: i32) -> (i32, i32, i32) {
    %c0_i32 = arith.constant 0 : i32
    %c0_i32_0 = arith.constant 0 : i32
    %c0_i32_1 = arith.constant 0 : i32
    return %c0_i32, %arg0, %c0_i32_0 : i32, i32, i32
  }
  func.func @transform_1(%arg0: i32) -> (i32, i32, i32) {
    %c0_i32 = arith.constant 0 : i32
    %c0_i32_0 = arith.constant 0 : i32
    %c0_i32_1 = arith.constant 0 : i32
    return %c0_i32, %arg0, %c0_i32_0 : i32, i32, i32
  }
  func.func @transform_2(%arg0: i32) -> (i32, i32, i32) {
    %c0_i32 = arith.constant 0 : i32
    %c0_i32_0 = arith.constant 0 : i32
    %c0_i32_1 = arith.constant 0 : i32
    return %c0_i32, %arg0, %c0_i32_0 : i32, i32, i32
  }
  func.func @transform_3(%arg0: i32) -> (i32, i32, i32) {
    %c0_i32 = arith.constant 0 : i32
    %c0_i32_0 = arith.constant 0 : i32
    %c0_i32_1 = arith.constant 0 : i32
    return %c0_i32, %arg0, %c0_i32_0 : i32, i32, i32
  }
  func.func @transform_4(%arg0: i32) -> (i32, i32) {
    %c0_i32 = arith.constant 0 : i32
    %c0_i32_0 = arith.constant 0 : i32
    %c0_i32_1 = arith.constant 0 : i32
    return %c0_i32, %c0_i32_0 : i32, i32
  }
  func.func @transform_5(%arg0: i32) -> (i32, i32) {
    %c0_i32 = arith.constant 0 : i32
    %c0_i32_0 = arith.constant 0 : i32
    %c0_i32_1 = arith.constant 0 : i32
    return %c0_i32, %c0_i32_0 : i32, i32
  }
  func.func @transform_6(%arg0: i32) -> (i32, i32) {
    %c0_i32 = arith.constant 0 : i32
    %c0_i32_0 = arith.constant 0 : i32
    %c0_i32_1 = arith.constant 0 : i32
    return %c0_i32, %c0_i32_0 : i32, i32
  }
  func.func @transform_7(%arg0: i32) -> (i32, i32) {
    %c0_i32 = arith.constant 0 : i32
    %c0_i32_0 = arith.constant 0 : i32
    %c0_i32_1 = arith.constant 0 : i32
    return %c0_i32, %c0_i32_0 : i32, i32
  }
  func.func @transform_8(%arg0: i32) -> (i32, i32) {
    %c0_i32 = arith.constant 0 : i32
    %c0_i32_0 = arith.constant 0 : i32
    %c0_i32_1 = arith.constant 0 : i32
    return %c0_i32, %c0_i32_0 : i32, i32
  }
  func.func @transform_9(%arg0: i32) -> (i32, i32) {
    %c0_i32 = arith.constant 0 : i32
    %c0_i32_0 = arith.constant 0 : i32
    %c0_i32_1 = arith.constant 0 : i32
    return %c0_i32, %c0_i32_0 : i32, i32
  }
  func.func @transform_10(%arg0: i32) -> (i32, i32) {
    %c0_i32 = arith.constant 0 : i32
    %c0_i32_0 = arith.constant 0 : i32
    %c0_i32_1 = arith.constant 0 : i32
    return %c0_i32, %c0_i32_0 : i32, i32
  }
  func.func @transform_11(%arg0: i32) -> (i32, i32) {
    %c0_i32 = arith.constant 0 : i32
    %c0_i32_0 = arith.constant 0 : i32
    %c0_i32_1 = arith.constant 0 : i32
    return %c0_i32, %c0_i32_0 : i32, i32
  }
  func.func @transform_12(%arg0: i32) -> (i32, i32) {
    %c0_i32 = arith.constant 0 : i32
    %c0_i32_0 = arith.constant 0 : i32
    %c0_i32_1 = arith.constant 0 : i32
    return %c0_i32, %c0_i32_0 : i32, i32
  }
  func.func @transform_13(%arg0: i32) -> (i32, i32) {
    %c0_i32 = arith.constant 0 : i32
    %c0_i32_0 = arith.constant 0 : i32
    %c0_i32_1 = arith.constant 0 : i32
    return %c0_i32, %c0_i32_0 : i32, i32
  }
  func.func @transform_14(%arg0: i32) -> (i32, i32) {
    %c0_i32 = arith.constant 0 : i32
    %c0_i32_0 = arith.constant 0 : i32
    %c0_i32_1 = arith.constant 0 : i32
    return %c0_i32, %c0_i32_0 : i32, i32
  }
  func.func @transform_15(%arg0: i32) -> (i32, i32) {
    %c0_i32 = arith.constant 0 : i32
    %c0_i32_0 = arith.constant 0 : i32
    %c0_i32_1 = arith.constant 0 : i32
    return %c0_i32, %c0_i32_0 : i32, i32
  }
  func.func @transform_16(%arg0: i32) -> (i32, i32) {
    %c0_i32 = arith.constant 0 : i32
    %c0_i32_0 = arith.constant 0 : i32
    %c0_i32_1 = arith.constant 0 : i32
    return %c0_i32, %c0_i32_0 : i32, i32
  }
  func.func @transform_17(%arg0: i32) -> (i32, i32) {
    %c0_i32 = arith.constant 0 : i32
    %c0_i32_0 = arith.constant 0 : i32
    %c0_i32_1 = arith.constant 0 : i32
    return %c0_i32, %c0_i32_0 : i32, i32
  }
  func.func @transform_18(%arg0: i32) -> (i32, i32) {
    %c0_i32 = arith.constant 0 : i32
    %c0_i32_0 = arith.constant 0 : i32
    %c0_i32_1 = arith.constant 0 : i32
    return %c0_i32, %c0_i32_0 : i32, i32
  }
  func.func @transform_19(%arg0: i32) -> (i32, i32) {
    %c0_i32 = arith.constant 0 : i32
    %c0_i32_0 = arith.constant 0 : i32
    %c0_i32_1 = arith.constant 0 : i32
    return %c0_i32, %c0_i32_0 : i32, i32
  }
  func.func @transform_20(%arg0: i32) -> (i32, i32) {
    %c0_i32 = arith.constant 0 : i32
    %c0_i32_0 = arith.constant 0 : i32
    %c0_i32_1 = arith.constant 0 : i32
    return %c0_i32, %c0_i32_0 : i32, i32
  }
  func.func @transform_21(%arg0: i32) -> (i32, i32) {
    %c0_i32 = arith.constant 0 : i32
    %c0_i32_0 = arith.constant 0 : i32
    %c0_i32_1 = arith.constant 0 : i32
    return %c0_i32, %c0_i32_0 : i32, i32
  }
  func.func @transform_22(%arg0: i32) -> (i32, i32) {
    %c0_i32 = arith.constant 0 : i32
    %c0_i32_0 = arith.constant 0 : i32
    %c0_i32_1 = arith.constant 0 : i32
    return %c0_i32, %c0_i32_0 : i32, i32
  }
  func.func @transform_23(%arg0: i32) -> (i32, i32) {
    %c0_i32 = arith.constant 0 : i32
    %c0_i32_0 = arith.constant 0 : i32
    %c0_i32_1 = arith.constant 0 : i32
    return %c0_i32, %c0_i32_0 : i32, i32
  }
  func.func @transform_24(%arg0: i32) -> (i32, i32) {
    %c0_i32 = arith.constant 0 : i32
    %c0_i32_0 = arith.constant 0 : i32
    %c0_i32_1 = arith.constant 0 : i32
    return %c0_i32, %c0_i32_0 : i32, i32
  }
  func.func @transform_25(%arg0: i32) -> (i32, i32) {
    %c0_i32 = arith.constant 0 : i32
    %c0_i32_0 = arith.constant 0 : i32
    %c0_i32_1 = arith.constant 0 : i32
    return %c0_i32, %c0_i32_0 : i32, i32
  }
  func.func @transform_26(%arg0: i32) -> (i32, i32) {
    %c0_i32 = arith.constant 0 : i32
    %c0_i32_0 = arith.constant 0 : i32
    %c0_i32_1 = arith.constant 0 : i32
    return %c0_i32, %c0_i32_0 : i32, i32
  }
  func.func @transform_27(%arg0: i32) -> (i32, i32) {
    %c0_i32 = arith.constant 0 : i32
    %c0_i32_0 = arith.constant 0 : i32
    %c0_i32_1 = arith.constant 0 : i32
    return %c0_i32, %c0_i32_0 : i32, i32
  }
  func.func @transform_28(%arg0: i32) -> (i32, i32) {
    %c0_i32 = arith.constant 0 : i32
    %c0_i32_0 = arith.constant 0 : i32
    %c0_i32_1 = arith.constant 0 : i32
    return %c0_i32, %c0_i32_0 : i32, i32
  }
  func.func @transform_29(%arg0: i32) -> (i32, i32) {
    %c0_i32 = arith.constant 0 : i32
    %c0_i32_0 = arith.constant 0 : i32
    %c0_i32_1 = arith.constant 0 : i32
    return %c0_i32, %c0_i32_0 : i32, i32
  }
  func.func @transform_30(%arg0: i32) -> (i32, i32, i32) {
    %c0_i32 = arith.constant 0 : i32
    %c0_i32_0 = arith.constant 0 : i32
    %c0_i32_1 = arith.constant 0 : i32
    return %c0_i32, %arg0, %c0_i32_0 : i32, i32, i32
  }
}

</mosaic_0001>

<llo_original>
// kernel: tpu_custom_call.1
$region0: #{tpu_custom_call.1}
  #allocation0 [shape = 'u32[]', space=smem, size = 0x4, offset = 0x4, fixed_abs, tag = 'smem constant byte address 0x4 - core index']
  #allocation1 [shape = 'u32[144,128]{1,0:T(1,128)}', space=vmem, size = 0x12000, scoped, tag = 'internal scratch']
  %s0 = inlined_call_operand.smem [shape: u32[31], index: -1, kind: input, shape index: {}]
  %s1 = sld [smem:[%s0]]
  %s2 = scalar_lea.smem %s0, 1
  %s3 = sld [smem:[%s2]]
  %s4 = scalar_lea.smem %s0, 2
  %s5 = sld [smem:[%s4]]
  %s6 = scalar_lea.smem %s0, 3
  %s7 = sld [smem:[%s6]]
  %s8 = scalar_lea.smem %s0, 4
  %s9 = sld [smem:[%s8]]
  %s10 = scalar_lea.smem %s0, 5
  %s11 = sld [smem:[%s10]]
  %s12 = scalar_lea.smem %s0, 6
  %s13 = sld [smem:[%s12]]
  %s14 = scalar_lea.smem %s0, 7
  %s15 = sld [smem:[%s14]]
  %s16 = scalar_lea.smem %s0, 8
  %s17 = sld [smem:[%s16]]
  %s18 = scalar_lea.smem %s0, 9
  %s19 = sld [smem:[%s18]]
  %s20 = scalar_lea.smem %s0, 10
  %s21 = sld [smem:[%s20]]
  %s22 = scalar_lea.smem %s0, 11
  %s23 = sld [smem:[%s22]]
  %s24 = scalar_lea.smem %s0, 12
  %s25 = sld [smem:[%s24]]
  %s26 = scalar_lea.smem %s0, 13
  %s27 = sld [smem:[%s26]]
  %s28 = scalar_lea.smem %s0, 14
  %s29 = sld [smem:[%s28]]
  %s30 = scalar_lea.smem %s0, 15
  %s31 = sld [smem:[%s30]]
  %s32 = scalar_lea.smem %s0, 16
  %s33 = sld [smem:[%s32]]
  %s34 = scalar_lea.smem %s0, 17
  %s35 = sld [smem:[%s34]]
  %s36 = scalar_lea.smem %s0, 18
  %s37 = sld [smem:[%s36]]
  %s38 = scalar_lea.smem %s0, 19
  %s39 = sld [smem:[%s38]]
  %s40 = scalar_lea.smem %s0, 20
  %s41 = sld [smem:[%s40]]
  %s42 = scalar_lea.smem %s0, 21
  %s43 = sld [smem:[%s42]]
  %s44 = scalar_lea.smem %s0, 22
  %s45 = sld [smem:[%s44]]
  %s46 = scalar_lea.smem %s0, 23
  %s47 = sld [smem:[%s46]]
  %s48 = scalar_lea.smem %s0, 24
  %s49 = sld [smem:[%s48]]
  %s50 = scalar_lea.smem %s0, 25
  %s51 = sld [smem:[%s50]]
  %s52 = scalar_lea.smem %s0, 26
  %s53 = sld [smem:[%s52]]
  %s54 = scalar_lea.smem %s0, 27
  %s55 = sld [smem:[%s54]]
  %s56 = scalar_lea.smem %s0, 28
  %s57 = sld [smem:[%s56]]
  %s58 = scalar_lea.smem %s0, 29
  %s59 = sld [smem:[%s58]]
  %s60 = scalar_lea.smem %s0, 30
  %s61 = sld [smem:[%s60]]
  %s62 = sld [smem:[#allocation0]]
  $region186: #{tpu_custom_call.1} parent=0
    _
  %s64 = ssub.s32 1, %s62
  %s65 = scalar_select 0, %s64, %s62
  $region1: #{tpu_custom_call.1} parent=0
    #allocation2 [shape = 'u8[8192]{0}', space=vmem, size = 0x2000, scoped, tag = 'input window, operand 1, single buffered']
    #allocation3 [shape = 's32[1]{0}', space=sflag, size = 0x4, scoped, tag = 'scoped memory for tpu_custom_call.1']
    #allocation4 [shape = 's32[1]{0}', space=sflag, size = 0x4, scoped, tag = 'scoped memory for tpu_custom_call.1']
    #allocation5 [shape = 'u8[16384]{0}', space=vmem, size = 0x4000, scoped, tag = 'input window, operand 3, single buffered']
    #allocation6 [shape = 's32[1]{0}', space=sflag, size = 0x4, scoped, tag = 'scoped memory for tpu_custom_call.1']
    #allocation7 [shape = 'u8[8192]{0}', space=vmem, size = 0x2000, scoped, tag = 'input window, operand 4, single buffered']
    #allocation8 [shape = 'u8[8192]{0}', space=vmem, size = 0x2000, scoped, tag = 'input window, operand 5, single buffered']
    #allocation9 [shape = 's32[1]{0}', space=sflag, size = 0x4, scoped, tag = 'scoped memory for tpu_custom_call.1']
    #allocation10 [shape = 'u8[8192]{0}', space=vmem, size = 0x2000, scoped, tag = 'input window, operand 6, single buffered']
    #allocation11 [shape = 'u8[8192]{0}', space=vmem, size = 0x2000, scoped, tag = 'input window, operand 7, single buffered']
    #allocation12 [shape = 's32[1]{0}', space=sflag, size = 0x4, scoped, tag = 'scoped memory for tpu_custom_call.1']
    #allocation13 [shape = 'u8[512]{0}', space=vmem, size = 0x400, scoped, tag = 'input window, operand 8, single buffered']
    #allocation14 [shape = 'u8[512]{0}', space=vmem, size = 0x400, scoped, tag = 'input window, operand 9, single buffered']
    #allocation15 [shape = 's32[1]{0}', space=sflag, size = 0x4, scoped, tag = 'scoped memory for tpu_custom_call.1']
    #allocation16 [shape = 'u8[512]{0}', space=vmem, size = 0x400, scoped, tag = 'input window, operand 10, single buffered']
    #allocation17 [shape = 'u8[512]{0}', space=vmem, size = 0x400, scoped, tag = 'input window, operand 11, single buffered']
    #allocation18 [shape = 's32[1]{0}', space=sflag, size = 0x4, scoped, tag = 'scoped memory for tpu_custom_call.1']
    #allocation19 [shape = 'u8[8192]{0}', space=vmem, size = 0x2000, scoped, tag = 'input window, operand 14, single buffered']
    #allocation20 [shape = 'u8[8192]{0}', space=vmem, size = 0x2000, scoped, tag = 'input window, operand 15, single buffered']
    #allocation21 [shape = 's32[1]{0}', space=sflag, size = 0x4, scoped, tag = 'scoped memory for tpu_custom_call.1']
    #allocation22 [shape = 'u8[512]{0}', space=vmem, size = 0x400, scoped, tag = 'input window, operand 16, single buffered']
    #allocation23 [shape = 'u8[512]{0}', space=vmem, size = 0x400, scoped, tag = 'input window, operand 17, single buffered']
    #allocation24 [shape = 's32[1]{0}', space=sflag, size = 0x4, scoped, tag = 'scoped memory for tpu_custom_call.1']
    #allocation25 [shape = 'u8[8192]{0}', space=vmem, size = 0x2000, scoped, tag = 'output window, operand 0, single buffered']
    %66 = vsyncpa [#allocation3], 0
    %67 = vsyncpa [#allocation6], 0
    %68 = vsyncpa [#allocation9], 0
    %69 = vsyncpa [#allocation12], 0
    %70 = vsyncpa [#allocation15], 0
    %71 = vsyncpa [#allocation18], 0
    %72 = vsyncpa [#allocation21], 0
    %73 = vsyncpa [#allocation24], 0
    %74 = vsyncpa [#allocation4], 0
    // Predicated region
    $region2: #{tpu_custom_call.1} parent=1 // pred_check
      _
    $region3: #{tpu_custom_call.1} parent=1 // pred_check_branch
      %76 = sbr.rel (0) target = $region5
    $region4: #{tpu_custom_call.1} parent=1 // pred_region
      _
    $region5: #{tpu_custom_call.1} parent=1 // pred_fallthru
      _
    // Predicated region
    $region6: #{tpu_custom_call.1} parent=1 // pred_check
      _
    $region7: #{tpu_custom_call.1} parent=1 // pred_check_branch
      %78 = sbr.rel (0) target = $region9
    $region8: #{tpu_custom_call.1} parent=1 // pred_region
      %s80 = ssub.s32 256, 256
      %81 = vsyncadd [#allocation3], %s80
      %s82 = sshll.u32 [#allocation2], 4
      %s83 = int_to_ptr.vmem [resolvable:$true] %s82
      %88 = dma.hbm_to_vmem [thread:$0]  %s3, 256, %s83, [#allocation3], 32, 32, 2
    $region9: #{tpu_custom_call.1} parent=1 // pred_fallthru
      _
    // Predicated region
    $region10: #{tpu_custom_call.1} parent=1 // pred_check
      _
    $region11: #{tpu_custom_call.1} parent=1 // pred_check_branch
      %90 = sbr.rel (0) target = $region13
    $region12: #{tpu_custom_call.1} parent=1 // pred_region
      _
    $region13: #{tpu_custom_call.1} parent=1 // pred_fallthru
      _
    // Predicated region
    $region14: #{tpu_custom_call.1} parent=1 // pred_check
      _
    $region15: #{tpu_custom_call.1} parent=1 // pred_check_branch
      %92 = sbr.rel (0) target = $region17
    $region16: #{tpu_custom_call.1} parent=1 // pred_region
      %s94 = ssub.s32 512, 512
      %95 = vsyncadd [#allocation6], %s94
      %s96 = sshll.u32 [#allocation5], 4
      %s97 = int_to_ptr.vmem [resolvable:$true] %s96
      %102 = dma.hbm_to_vmem [thread:$0]  %s7, 512, %s97, [#allocation6], 32, 32, 2
    $region17: #{tpu_custom_call.1} parent=1 // pred_fallthru
      _
    // Predicated region
    $region18: #{tpu_custom_call.1} parent=1 // pred_check
      _
    $region19: #{tpu_custom_call.1} parent=1 // pred_check_branch
      %104 = sbr.rel (0) target = $region21
    $region20: #{tpu_custom_call.1} parent=1 // pred_region
      %s106 = ssub.s32 256, 256
      %107 = vsyncadd [#allocation6], %s106
      %s108 = sshll.u32 [#allocation7], 4
      %s109 = int_to_ptr.vmem [resolvable:$true] %s108
      %114 = dma.hbm_to_vmem [thread:$0]  %s9, 256, %s109, [#allocation6], 64, 64, 4
    $region21: #{tpu_custom_call.1} parent=1 // pred_fallthru
      _
    // Predicated region
    $region22: #{tpu_custom_call.1} parent=1 // pred_check
      _
    $region23: #{tpu_custom_call.1} parent=1 // pred_check_branch
      %116 = sbr.rel (0) target = $region25
    $region24: #{tpu_custom_call.1} parent=1 // pred_region
      %s118 = ssub.s32 256, 256
      %119 = vsyncadd [#allocation9], %s118
      %s120 = sshll.u32 [#allocation8], 4
      %s121 = int_to_ptr.vmem [resolvable:$true] %s120
      %126 = dma.hbm_to_vmem [thread:$0]  %s11, 256, %s121, [#allocation9], 64, 64, 4
    $region25: #{tpu_custom_call.1} parent=1 // pred_fallthru
      _
    // Predicated region
    $region26: #{tpu_custom_call.1} parent=1 // pred_check
      _
    $region27: #{tpu_custom_call.1} parent=1 // pred_check_branch
      %128 = sbr.rel (0) target = $region29
    $region28: #{tpu_custom_call.1} parent=1 // pred_region
      %s130 = ssub.s32 256, 256
      %131 = vsyncadd [#allocation9], %s130
      %s132 = sshll.u32 [#allocation10], 4
      %s133 = int_to_ptr.vmem [resolvable:$true] %s132
      %138 = dma.hbm_to_vmem [thread:$0]  %s13, 256, %s133, [#allocation9], 64, 64, 4
    $region29: #{tpu_custom_call.1} parent=1 // pred_fallthru
      _
    // Predicated region
    $region30: #{tpu_custom_call.1} parent=1 // pred_check
      _
    $region31: #{tpu_custom_call.1} parent=1 // pred_check_branch
      %140 = sbr.rel (0) target = $region33
    $region32: #{tpu_custom_call.1} parent=1 // pred_region
      %s142 = ssub.s32 256, 256
      %143 = vsyncadd [#allocation12], %s142
      %s144 = sshll.u32 [#allocation11], 4
      %s145 = int_to_ptr.vmem [resolvable:$true] %s144
      %150 = dma.hbm_to_vmem [thread:$0]  %s15, 256, %s145, [#allocation12], 64, 64, 4
    $region33: #{tpu_custom_call.1} parent=1 // pred_fallthru
      _
    // Predicated region
    $region34: #{tpu_custom_call.1} parent=1 // pred_check
      _
    $region35: #{tpu_custom_call.1} parent=1 // pred_check_branch
      %152 = sbr.rel (0) target = $region37
    $region36: #{tpu_custom_call.1} parent=1 // pred_region
      %s154 = ssub.s32 16, 16
      %155 = vsyncadd [#allocation12], %s154
      %s157 = sshll.u32 [#allocation13], 4
      %s158 = int_to_ptr.vmem [resolvable:$true] %s157
      %160 = dma.hbm_to_vmem [thread:$0]  %s17, 16, %s158, [#allocation12]
    $region37: #{tpu_custom_call.1} parent=1 // pred_fallthru
      _
    // Predicated region
    $region38: #{tpu_custom_call.1} parent=1 // pred_check
      _
    $region39: #{tpu_custom_call.1} parent=1 // pred_check_branch
      %162 = sbr.rel (0) target = $region41
    $region40: #{tpu_custom_call.1} parent=1 // pred_region
      %s164 = ssub.s32 16, 16
      %165 = vsyncadd [#allocation15], %s164
      %s167 = sshll.u32 [#allocation14], 4
      %s168 = int_to_ptr.vmem [resolvable:$true] %s167
      %170 = dma.hbm_to_vmem [thread:$0]  %s19, 16, %s168, [#allocation15]
    $region41: #{tpu_custom_call.1} parent=1 // pred_fallthru
      _
    // Predicated region
    $region42: #{tpu_custom_call.1} parent=1 // pred_check
      _
    $region43: #{tpu_custom_call.1} parent=1 // pred_check_branch
      %172 = sbr.rel (0) target = $region45
    $region44: #{tpu_custom_call.1} parent=1 // pred_region
      %s174 = ssub.s32 16, 16
      %175 = vsyncadd [#allocation15], %s174
      %s177 = sshll.u32 [#allocation16], 4
      %s178 = int_to_ptr.vmem [resolvable:$true] %s177
      %180 = dma.hbm_to_vmem [thread:$0]  %s21, 16, %s178, [#allocation15]
    $region45: #{tpu_custom_call.1} parent=1 // pred_fallthru
      _
    // Predicated region
    $region46: #{tpu_custom_call.1} parent=1 // pred_check
      _
    $region47: #{tpu_custom_call.1} parent=1 // pred_check_branch
      %182 = sbr.rel (0) target = $region49
    $region48: #{tpu_custom_call.1} parent=1 // pred_region
      %s184 = ssub.s32 16, 16
      %185 = vsyncadd [#allocation18], %s184
      %s187 = sshll.u32 [#allocation17], 4
      %s188 = int_to_ptr.vmem [resolvable:$true] %s187
      %190 = dma.hbm_to_vmem [thread:$0]  %s23, 16, %s188, [#allocation18]
    $region49: #{tpu_custom_call.1} parent=1 // pred_fallthru
      _
    // Predicated region
    $region50: #{tpu_custom_call.1} parent=1 // pred_check
      _
    $region51: #{tpu_custom_call.1} parent=1 // pred_check_branch
      %192 = sbr.rel (0) target = $region53
    $region52: #{tpu_custom_call.1} parent=1 // pred_region
      _
    $region53: #{tpu_custom_call.1} parent=1 // pred_fallthru
      _
    // Predicated region
    $region54: #{tpu_custom_call.1} parent=1 // pred_check
      _
    $region55: #{tpu_custom_call.1} parent=1 // pred_check_branch
      %194 = sbr.rel (0) target = $region57
    $region56: #{tpu_custom_call.1} parent=1 // pred_region
      _
    $region57: #{tpu_custom_call.1} parent=1 // pred_fallthru
      _
    // Predicated region
    $region58: #{tpu_custom_call.1} parent=1 // pred_check
      _
    $region59: #{tpu_custom_call.1} parent=1 // pred_check_branch
      %196 = sbr.rel (0) target = $region61
    $region60: #{tpu_custom_call.1} parent=1 // pred_region
      %s198 = ssub.s32 256, 256
      %199 = vsyncadd [#allocation18], %s198
      %s200 = sshll.u32 [#allocation19], 4
      %s201 = int_to_ptr.vmem [resolvable:$true] %s200
      %206 = dma.hbm_to_vmem [thread:$0]  %s29, 256, %s201, [#allocation18], 64, 64, 4
    $region61: #{tpu_custom_call.1} parent=1 // pred_fallthru
      _
    // Predicated region
    $region62: #{tpu_custom_call.1} parent=1 // pred_check
      _
    $region63: #{tpu_custom_call.1} parent=1 // pred_check_branch
      %208 = sbr.rel (0) target = $region65
    $region64: #{tpu_custom_call.1} parent=1 // pred_region
      %s210 = ssub.s32 256, 256
      %211 = vsyncadd [#allocation21], %s210
      %s212 = sshll.u32 [#allocation20], 4
      %s213 = int_to_ptr.vmem [resolvable:$true] %s212
      %218 = dma.hbm_to_vmem [thread:$0]  %s31, 256, %s213, [#allocation21], 64, 64, 4
    $region65: #{tpu_custom_call.1} parent=1 // pred_fallthru
      _
    // Predicated region
    $region66: #{tpu_custom_call.1} parent=1 // pred_check
      _
    $region67: #{tpu_custom_call.1} parent=1 // pred_check_branch
      %220 = sbr.rel (0) target = $region69
    $region68: #{tpu_custom_call.1} parent=1 // pred_region
      %s222 = ssub.s32 16, 16
      %223 = vsyncadd [#allocation21], %s222
      %s225 = sshll.u32 [#allocation22], 4
      %s226 = int_to_ptr.vmem [resolvable:$true] %s225
      %228 = dma.hbm_to_vmem [thread:$0]  %s33, 16, %s226, [#allocation21]
    $region69: #{tpu_custom_call.1} parent=1 // pred_fallthru
      _
    // Predicated region
    $region70: #{tpu_custom_call.1} parent=1 // pred_check
      _
    $region71: #{tpu_custom_call.1} parent=1 // pred_check_branch
      %230 = sbr.rel (0) target = $region73
    $region72: #{tpu_custom_call.1} parent=1 // pred_region
      %s232 = ssub.s32 16, 16
      %233 = vsyncadd [#allocation24], %s232
      %s235 = sshll.u32 [#allocation23], 4
      %s236 = int_to_ptr.vmem [resolvable:$true] %s235
      %238 = dma.hbm_to_vmem [thread:$0]  %s35, 16, %s236, [#allocation24]
    $region73: #{tpu_custom_call.1} parent=1 // pred_fallthru
      _
    // Predicated region
    $region74: #{tpu_custom_call.1} parent=1 // pred_check
      _
    $region75: #{tpu_custom_call.1} parent=1 // pred_check_branch
      %240 = sbr.rel (0) target = $region77
    $region76: #{tpu_custom_call.1} parent=1 // pred_region
      _
    $region77: #{tpu_custom_call.1} parent=1 // pred_fallthru
      _
    // Predicated region
    $region78: #{tpu_custom_call.1} parent=1 // pred_check
      _
    $region79: #{tpu_custom_call.1} parent=1 // pred_check_branch
      %242 = sbr.rel (0) target = $region81
    $region80: #{tpu_custom_call.1} parent=1 // pred_region
      _
    $region81: #{tpu_custom_call.1} parent=1 // pred_fallthru
      _
    // Predicated region
    $region82: #{tpu_custom_call.1} parent=1 // pred_check
      _
    $region83: #{tpu_custom_call.1} parent=1 // pred_check_branch
      %244 = sbr.rel (0) target = $region85
    $region84: #{tpu_custom_call.1} parent=1 // pred_region
      _
    $region85: #{tpu_custom_call.1} parent=1 // pred_fallthru
      _
    // Predicated region
    $region86: #{tpu_custom_call.1} parent=1 // pred_check
      _
    $region87: #{tpu_custom_call.1} parent=1 // pred_check_branch
      %246 = sbr.rel (0) target = $region89
    $region88: #{tpu_custom_call.1} parent=1 // pred_region
      _
    $region89: #{tpu_custom_call.1} parent=1 // pred_fallthru
      _
    // Predicated region
    $region90: #{tpu_custom_call.1} parent=1 // pred_check
      _
    $region91: #{tpu_custom_call.1} parent=1 // pred_check_branch
      %248 = sbr.rel (0) target = $region93
    $region92: #{tpu_custom_call.1} parent=1 // pred_region
      _
    $region93: #{tpu_custom_call.1} parent=1 // pred_fallthru
      _
    // Predicated region
    $region94: #{tpu_custom_call.1} parent=1 // pred_check
      _
    $region95: #{tpu_custom_call.1} parent=1 // pred_check_branch
      %250 = sbr.rel (0) target = $region97
    $region96: #{tpu_custom_call.1} parent=1 // pred_region
      _
    $region97: #{tpu_custom_call.1} parent=1 // pred_fallthru
      _
    // Predicated region
    $region98: #{tpu_custom_call.1} parent=1 // pred_check
      _
    $region99: #{tpu_custom_call.1} parent=1 // pred_check_branch
      %252 = sbr.rel (0) target = $region101
    $region100: #{tpu_custom_call.1} parent=1 // pred_region
      _
    $region101: #{tpu_custom_call.1} parent=1 // pred_fallthru
      _
    // Predicated region
    $region102: #{tpu_custom_call.1} parent=1 // pred_check
      _
    $region103: #{tpu_custom_call.1} parent=1 // pred_check_branch
      %254 = sbr.rel (0) target = $region105
    $region104: #{tpu_custom_call.1} parent=1 // pred_region
      _
    $region105: #{tpu_custom_call.1} parent=1 // pred_fallthru
      _
    // Predicated region
    $region106: #{tpu_custom_call.1} parent=1 // pred_check
      _
    $region107: #{tpu_custom_call.1} parent=1 // pred_check_branch
      %256 = sbr.rel (0) target = $region109
    $region108: #{tpu_custom_call.1} parent=1 // pred_region
      _
    $region109: #{tpu_custom_call.1} parent=1 // pred_fallthru
      _
    // Predicated region
    $region110: #{tpu_custom_call.1} parent=1 // pred_check
      _
    $region111: #{tpu_custom_call.1} parent=1 // pred_check_branch
      %258 = sbr.rel (0) target = $region113
    $region112: #{tpu_custom_call.1} parent=1 // pred_region
      _
    $region113: #{tpu_custom_call.1} parent=1 // pred_fallthru
      _
    // Predicated region
    $region114: #{tpu_custom_call.1} parent=1 // pred_check
      _
    $region115: #{tpu_custom_call.1} parent=1 // pred_check_branch
      %260 = sbr.rel (0) target = $region117
    $region116: #{tpu_custom_call.1} parent=1 // pred_region
      _
    $region117: #{tpu_custom_call.1} parent=1 // pred_fallthru
      _
    // Predicated region
    $region118: #{tpu_custom_call.1} parent=1 // pred_check
      _
    $region119: #{tpu_custom_call.1} parent=1 // pred_check_branch
      %262 = sbr.rel (0) target = $region121
    $region120: #{tpu_custom_call.1} parent=1 // pred_region
      _
    $region121: #{tpu_custom_call.1} parent=1 // pred_fallthru
      _
    // Predicated region
    $region122: #{tpu_custom_call.1} parent=1 // pred_check
      _
    $region123: #{tpu_custom_call.1} parent=1 // pred_check_branch
      %264 = sbr.rel (0) target = $region125
    $region124: #{tpu_custom_call.1} parent=1 // pred_region
      %265 = dma.done [#allocation3], 256
    $region125: #{tpu_custom_call.1} parent=1 // pred_fallthru
      _
    // Predicated region
    $region126: #{tpu_custom_call.1} parent=1 // pred_check
      _
    $region127: #{tpu_custom_call.1} parent=1 // pred_check_branch
      %267 = sbr.rel (0) target = $region129
    $region128: #{tpu_custom_call.1} parent=1 // pred_region
      %268 = dma.done [#allocation6], 512
    $region129: #{tpu_custom_call.1} parent=1 // pred_fallthru
      _
    // Predicated region
    $region130: #{tpu_custom_call.1} parent=1 // pred_check
      _
    $region131: #{tpu_custom_call.1} parent=1 // pred_check_branch
      %270 = sbr.rel (0) target = $region133
    $region132: #{tpu_custom_call.1} parent=1 // pred_region
      %271 = dma.done [#allocation6], 256
    $region133: #{tpu_custom_call.1} parent=1 // pred_fallthru
      _
    // Predicated region
    $region134: #{tpu_custom_call.1} parent=1 // pred_check
      _
    $region135: #{tpu_custom_call.1} parent=1 // pred_check_branch
      %273 = sbr.rel (0) target = $region137
    $region136: #{tpu_custom_call.1} parent=1 // pred_region
      %274 = dma.done [#allocation9], 256
    $region137: #{tpu_custom_call.1} parent=1 // pred_fallthru
      _
    // Predicated region
    $region138: #{tpu_custom_call.1} parent=1 // pred_check
      _
    $region139: #{tpu_custom_call.1} parent=1 // pred_check_branch
      %276 = sbr.rel (0) target = $region141
    $region140: #{tpu_custom_call.1} parent=1 // pred_region
      %277 = dma.done [#allocation9], 256
    $region141: #{tpu_custom_call.1} parent=1 // pred_fallthru
      _
    // Predicated region
    $region142: #{tpu_custom_call.1} parent=1 // pred_check
      _
    $region143: #{tpu_custom_call.1} parent=1 // pred_check_branch
      %279 = sbr.rel (0) target = $region145
    $region144: #{tpu_custom_call.1} parent=1 // pred_region
      %280 = dma.done [#allocation12], 256
    $region145: #{tpu_custom_call.1} parent=1 // pred_fallthru
      _
    // Predicated region
    $region146: #{tpu_custom_call.1} parent=1 // pred_check
      _
    $region147: #{tpu_custom_call.1} parent=1 // pred_check_branch
      %282 = sbr.rel (0) target = $region149
    $region148: #{tpu_custom_call.1} parent=1 // pred_region
      %283 = dma.done [#allocation12], 16
    $region149: #{tpu_custom_call.1} parent=1 // pred_fallthru
      _
    // Predicated region
    $region150: #{tpu_custom_call.1} parent=1 // pred_check
      _
    $region151: #{tpu_custom_call.1} parent=1 // pred_check_branch
      %285 = sbr.rel (0) target = $region153
    $region152: #{tpu_custom_call.1} parent=1 // pred_region
      %286 = dma.done [#allocation15], 16
    $region153: #{tpu_custom_call.1} parent=1 // pred_fallthru
      _
    // Predicated region
    $region154: #{tpu_custom_call.1} parent=1 // pred_check
      _
    $region155: #{tpu_custom_call.1} parent=1 // pred_check_branch
      %288 = sbr.rel (0) target = $region157
    $region156: #{tpu_custom_call.1} parent=1 // pred_region
      %289 = dma.done [#allocation15], 16
    $region157: #{tpu_custom_call.1} parent=1 // pred_fallthru
      _
    // Predicated region
    $region158: #{tpu_custom_call.1} parent=1 // pred_check
      _
    $region159: #{tpu_custom_call.1} parent=1 // pred_check_branch
      %291 = sbr.rel (0) target = $region161
    $region160: #{tpu_custom_call.1} parent=1 // pred_region
      %292 = dma.done [#allocation18], 16
    $region161: #{tpu_custom_call.1} parent=1 // pred_fallthru
      _
    // Predicated region
    $region162: #{tpu_custom_call.1} parent=1 // pred_check
      _
    $region163: #{tpu_custom_call.1} parent=1 // pred_check_branch
      %294 = sbr.rel (0) target = $region165
    $region164: #{tpu_custom_call.1} parent=1 // pred_region
      %295 = dma.done [#allocation18], 256
    $region165: #{tpu_custom_call.1} parent=1 // pred_fallthru
      _
    // Predicated region
    $region166: #{tpu_custom_call.1} parent=1 // pred_check
      _
    $region167: #{tpu_custom_call.1} parent=1 // pred_check_branch
      %297 = sbr.rel (0) target = $region169
    $region168: #{tpu_custom_call.1} parent=1 // pred_region
      %298 = dma.done [#allocation21], 256
    $region169: #{tpu_custom_call.1} parent=1 // pred_fallthru
      _
    // Predicated region
    $region170: #{tpu_custom_call.1} parent=1 // pred_check
      _
    $region171: #{tpu_custom_call.1} parent=1 // pred_check_branch
      %300 = sbr.rel (0) target = $region173
    $region172: #{tpu_custom_call.1} parent=1 // pred_region
      %301 = dma.done [#allocation21], 16
    $region173: #{tpu_custom_call.1} parent=1 // pred_fallthru
      _
    // Predicated region
    $region174: #{tpu_custom_call.1} parent=1 // pred_check
      _
    $region175: #{tpu_custom_call.1} parent=1 // pred_check_branch
      %303 = sbr.rel (0) target = $region177
    $region176: #{tpu_custom_call.1} parent=1 // pred_region
      %304 = dma.done [#allocation24], 16
    $region177: #{tpu_custom_call.1} parent=1 // pred_fallthru
      _
    %v306 = vld [vmem:[%s1] sm:$0x3]
    %v307 = vld [vmem:[%s1 + $0x2] sm:$0x3]
    %v308 = vld [vmem:[%s1 + $0x4] sm:$0x3]
    %v309 = vld [vmem:[%s1 + $0x6] sm:$0x3]
    %v310 = vld [vmem:[%s1 + $0x8] sm:$0x3]
    %v311 = vld [vmem:[%s1 + $0xa] sm:$0x3]
    %v312 = vld [vmem:[%s1 + $0xc] sm:$0x3]
    %v313 = vld [vmem:[%s1 + $0xe] sm:$0x3]
    %v314 = vld [vmem:[#allocation2] sm:$0x3]
    %v315 = vld [vmem:[#allocation2 + $0x2] sm:$0x3]
    %v316 = vld [vmem:[#allocation2 + $0x4] sm:$0x3]
    %v317 = vld [vmem:[#allocation2 + $0x6] sm:$0x3]
    %v318 = vld [vmem:[#allocation2 + $0x8] sm:$0x3]
    %v319 = vld [vmem:[#allocation2 + $0xa] sm:$0x3]
    %v320 = vld [vmem:[#allocation2 + $0xc] sm:$0x3]
    %v321 = vld [vmem:[#allocation2 + $0xe] sm:$0x3]
    %v322 = vld [vmem:[%s5] sm:$0x3]
    %v323 = vld [vmem:[%s5 + $0x2] sm:$0x3]
    %v324 = vld [vmem:[%s5 + $0x4] sm:$0x3]
    %v325 = vld [vmem:[%s5 + $0x6] sm:$0x3]
    %v326 = vld [vmem:[%s5 + $0x8] sm:$0x3]
    %v327 = vld [vmem:[%s5 + $0xa] sm:$0x3]
    %v328 = vld [vmem:[%s5 + $0xc] sm:$0x3]
    %v329 = vld [vmem:[%s5 + $0xe] sm:$0x3]
    %v330 = vld [vmem:[%s5 + $0x10] sm:$0x3]
    %v331 = vld [vmem:[%s5 + $0x12] sm:$0x3]
    %v332 = vld [vmem:[%s5 + $0x14] sm:$0x3]
    %v333 = vld [vmem:[%s5 + $0x16] sm:$0x3]
    %v334 = vld [vmem:[%s5 + $0x18] sm:$0x3]
    %v335 = vld [vmem:[%s5 + $0x1a] sm:$0x3]
    %v336 = vld [vmem:[%s5 + $0x1c] sm:$0x3]
    %v337 = vld [vmem:[%s5 + $0x1e] sm:$0x3]
    %v338 = vld [vmem:[#allocation5] sm:$0x3]
    %v339 = vld [vmem:[#allocation5 + $0x2] sm:$0x3]
    %v340 = vld [vmem:[#allocation5 + $0x4] sm:$0x3]
    %v341 = vld [vmem:[#allocation5 + $0x6] sm:$0x3]
    %v342 = vld [vmem:[#allocation5 + $0x8] sm:$0x3]
    %v343 = vld [vmem:[#allocation5 + $0xa] sm:$0x3]
    %v344 = vld [vmem:[#allocation5 + $0xc] sm:$0x3]
    %v345 = vld [vmem:[#allocation5 + $0xe] sm:$0x3]
    %v346 = vld [vmem:[#allocation5 + $0x10] sm:$0x3]
    %v347 = vld [vmem:[#allocation5 + $0x12] sm:$0x3]
    %v348 = vld [vmem:[#allocation5 + $0x14] sm:$0x3]
    %v349 = vld [vmem:[#allocation5 + $0x16] sm:$0x3]
    %v350 = vld [vmem:[#allocation5 + $0x18] sm:$0x3]
    %v351 = vld [vmem:[#allocation5 + $0x1a] sm:$0x3]
    %v352 = vld [vmem:[#allocation5 + $0x1c] sm:$0x3]
    %v353 = vld [vmem:[#allocation5 + $0x1e] sm:$0x3]
    %v354 = vadd.f32 %v306, %v314
    %v355 = vadd.f32 %v307, %v315
    %v356 = vadd.f32 %v308, %v316
    %v357 = vadd.f32 %v309, %v317
    %v358 = vadd.f32 %v310, %v318
    %v359 = vadd.f32 %v311, %v319
    %v360 = vadd.f32 %v312, %v320
    %v361 = vadd.f32 %v313, %v321
    %v370 = vcombine.low %v354, %v355
    %v371 = vcombine.low %v356, %v357
    %v373 = vunpack.c.l.s4 1983009808
    %v374 = vunpack.c.0.s8 %v373
    %v375 = vlaneseq
    %v376 = vshrl.u32 %v375, 7
    %v377 = vsub.s32 %v374, %v376
    %v378 = vrot.slane %v370, %v377
    %v380 = vunpack.c.l.s4 1983009808
    %v381 = vunpack.c.0.s8 %v380
    %v382 = vlaneseq
    %v383 = vshrl.u32 %v382, 7
    %v384 = vsub.s32 %v381, %v383
    %v385 = vrot.slane %v371, %v384
    %v386 = vcombine.low %v378, %v385
    %v387 = vcombine.low %v358, %v359
    %v388 = vcombine.low %v360, %v361
    %v390 = vunpack.c.l.s4 1983009808
    %v391 = vunpack.c.0.s8 %v390
    %v392 = vlaneseq
    %v393 = vshrl.u32 %v392, 7
    %v394 = vsub.s32 %v391, %v393
    %v395 = vrot.slane %v387, %v394
    %v397 = vunpack.c.l.s4 1983009808
    %v398 = vunpack.c.0.s8 %v397
    %v399 = vlaneseq
    %v400 = vshrl.u32 %v399, 7
    %v401 = vsub.s32 %v398, %v400
    %v402 = vrot.slane %v388, %v401
    %v403 = vcombine.low %v395, %v402
    %v406 = vpack.c.bf16 %v403, %v386
    %v407 = vld [vmem:[#allocation7] sm:$0xf]
    %v408 = vld [vmem:[#allocation7 + $0x4] sm:$0xf]
    %v409 = vld [vmem:[#allocation7 + $0x8] sm:$0xf]
    %v410 = vld [vmem:[#allocation7 + $0xc] sm:$0xf]
    %v411 = vld [vmem:[#allocation13] sm:$0x1]
    %v413 = vlaneseq
    %v414 = vshrl.u32 %v413, 7
    %v415 = vsub.s32 0, %v414
    %v416 = vrot.slane %v411, %v415
    %v422 = vunpack.c.l.b16 %v407
    %v423 = vunpack.c.l.b16 %v408
    %v424 = vunpack.c.l.b16 %v409
    %v425 = vunpack.c.l.b16 %v410
    %v426 = vpack.c.b16 %v423, %v422
    %v427 = vpack.c.b16 %v425, %v424
    %vm430 = vcmask 261120
    %v432 = vsel %vm430, %v406, 0
    %434 = vmatprep.subr.bf16.mxu0 0
    %435 = vmatpush1.bf16.msra.mxu0 %v426
    %436 = vmatprep.subr.bf16.mxu0 0
    %437 = vmatpush1.bf16.msra.mxu0 %v427
    %438 = vmatprep.subr.bf16.mxu0 0
    %439 = vmatpush1.bf16.msra.mxu0 0
    %440 = vmatprep.subr.bf16.mxu0 0
    %441 = vmatpush1.bf16.msra.mxu0 0
    %442 = vmatprep.subr.bf16.mxu0 0
    %443 = vmatpush1.bf16.msra.mxu0 0
    %444 = vmatprep.subr.bf16.mxu0 0
    %445 = vmatpush1.bf16.msra.mxu0 0
    %446 = vmatprep.subr.bf16.mxu0 0
    %447 = vmatpush1.bf16.msra.mxu0 0
    %448 = vmatprep.subr.bf16.mxu0 0
    %449 = vmatpush1.bf16.msra.mxu0 0
    %450 = vmatprep.subr.bf16.mxu0 0
    %451 = vmatpush1.bf16.msra.mxu0 0
    %452 = vmatprep.subr.bf16.mxu0 0
    %453 = vmatpush1.bf16.msra.mxu0 0
    %454 = vmatprep.subr.bf16.mxu0 0
    %455 = vmatpush1.bf16.msra.mxu0 0
    %456 = vmatprep.subr.bf16.mxu0 0
    %457 = vmatpush1.bf16.msra.mxu0 0
    %458 = vmatprep.subr.bf16.mxu0 0
    %459 = vmatpush1.bf16.msra.mxu0 0
    %460 = vmatprep.subr.bf16.mxu0 0
    %461 = vmatpush1.bf16.msra.mxu0 0
    %462 = vmatprep.subr.bf16.mxu0 0
    %463 = vmatpush1.bf16.msra.mxu0 0
    %464 = vmatprep.subr.bf16.mxu0 0
    %465 = vmatpush1.bf16.msra.mxu0 0
    %466 = vmatprep.mubr.bf16.mxu0 0
    %467 = vmatmul.mubr.bf16.gmra.mrb[0].mxu0 %v432
    %v468 = vpop.f32.mrb[0].mxu0
    %v469 = vadd.f32 %v416, %v468
    %v470 = vpop.f32.mrb[0].mxu0
    %v471 = vpop.f32.mrb[0].mxu0
    %v472 = vadd.f32 %v416, %v471
    %v473 = vpop.f32.mrb[0].mxu0
    %474 = vdwg.mxu0
    %v475 = vld [vmem:[#allocation8] sm:$0xf]
    %v476 = vld [vmem:[#allocation8 + $0x4] sm:$0xf]
    %v477 = vld [vmem:[#allocation8 + $0x8] sm:$0xf]
    %v478 = vld [vmem:[#allocation8 + $0xc] sm:$0xf]
    %v479 = vld [vmem:[#allocation14] sm:$0x1]
    %v481 = vlaneseq
    %v482 = vshrl.u32 %v481, 7
    %v483 = vsub.s32 0, %v482
    %v484 = vrot.slane %v479, %v483
    %v490 = vunpack.c.l.b16 %v475
    %v491 = vunpack.c.l.b16 %v476
    %v492 = vunpack.c.l.b16 %v477
    %v493 = vunpack.c.l.b16 %v478
    %v494 = vpack.c.b16 %v491, %v490
    %v495 = vpack.c.b16 %v493, %v492
    %498 = vmatprep.subr.bf16.mxu0 0
    %499 = vmatpush1.bf16.msra.mxu0 %v494
    %500 = vmatprep.subr.bf16.mxu0 0
    %501 = vmatpush1.bf16.msra.mxu0 %v495
    %502 = vmatprep.subr.bf16.mxu0 0
    %503 = vmatpush1.bf16.msra.mxu0 0
    %504 = vmatprep.subr.bf16.mxu0 0
    %505 = vmatpush1.bf16.msra.mxu0 0
    %506 = vmatprep.subr.bf16.mxu0 0
    %507 = vmatpush1.bf16.msra.mxu0 0
    %508 = vmatprep.subr.bf16.mxu0 0
    %509 = vmatpush1.bf16.msra.mxu0 0
    %510 = vmatprep.subr.bf16.mxu0 0
    %511 = vmatpush1.bf16.msra.mxu0 0
    %512 = vmatprep.subr.bf16.mxu0 0
    %513 = vmatpush1.bf16.msra.mxu0 0
    %514 = vmatprep.subr.bf16.mxu0 0
    %515 = vmatpush1.bf16.msra.mxu0 0
    %516 = vmatprep.subr.bf16.mxu0 0
    %517 = vmatpush1.bf16.msra.mxu0 0
    %518 = vmatprep.subr.bf16.mxu0 0
    %519 = vmatpush1.bf16.msra.mxu0 0
    %520 = vmatprep.subr.bf16.mxu0 0
    %521 = vmatpush1.bf16.msra.mxu0 0
    %522 = vmatprep.subr.bf16.mxu0 0
    %523 = vmatpush1.bf16.msra.mxu0 0
    %524 = vmatprep.subr.bf16.mxu0 0
    %525 = vmatpush1.bf16.msra.mxu0 0
    %526 = vmatprep.subr.bf16.mxu0 0
    %527 = vmatpush1.bf16.msra.mxu0 0
    %528 = vmatprep.subr.bf16.mxu0 0
    %529 = vmatpush1.bf16.msra.mxu0 0
    %530 = vmatprep.mubr.bf16.mxu0 0
    %531 = vmatmul.mubr.bf16.gmra.mrb[0].mxu0 %v432
    %v532 = vpop.f32.mrb[0].mxu0
    %v533 = vadd.f32 %v484, %v532
    %v534 = vpop.f32.mrb[0].mxu0
    %v535 = vpop.f32.mrb[0].mxu0
    %v536 = vadd.f32 %v484, %v535
    %v537 = vpop.f32.mrb[0].mxu0
    %538 = vdwg.mxu0
    %v547 = vcombine.low %v306, %v307
    %v548 = vcombine.low %v308, %v309
    %v550 = vunpack.c.l.s4 1983009808
    %v551 = vunpack.c.0.s8 %v550
    %v552 = vlaneseq
    %v553 = vshrl.u32 %v552, 7
    %v554 = vsub.s32 %v551, %v553
    %v555 = vrot.slane %v547, %v554
    %v557 = vunpack.c.l.s4 1983009808
    %v558 = vunpack.c.0.s8 %v557
    %v559 = vlaneseq
    %v560 = vshrl.u32 %v559, 7
    %v561 = vsub.s32 %v558, %v560
    %v562 = vrot.slane %v548, %v561
    %v563 = vcombine.low %v555, %v562
    %v564 = vcombine.low %v310, %v311
    %v565 = vcombine.low %v312, %v313
    %v567 = vunpack.c.l.s4 1983009808
    %v568 = vunpack.c.0.s8 %v567
    %v569 = vlaneseq
    %v570 = vshrl.u32 %v569, 7
    %v571 = vsub.s32 %v568, %v570
    %v572 = vrot.slane %v564, %v571
    %v574 = vunpack.c.l.s4 1983009808
    %v575 = vunpack.c.0.s8 %v574
    %v576 = vlaneseq
    %v577 = vshrl.u32 %v576, 7
    %v578 = vsub.s32 %v575, %v577
    %v579 = vrot.slane %v565, %v578
    %v580 = vcombine.low %v572, %v579
    %v583 = vpack.c.bf16 %v580, %v563
    %v584 = vld [vmem:[#allocation10] sm:$0xf]
    %v585 = vld [vmem:[#allocation10 + $0x4] sm:$0xf]
    %v586 = vld [vmem:[#allocation10 + $0x8] sm:$0xf]
    %v587 = vld [vmem:[#allocation10 + $0xc] sm:$0xf]
    %v588 = vld [vmem:[#allocation16] sm:$0x1]
    %v590 = vlaneseq
    %v591 = vshrl.u32 %v590, 7
    %v592 = vsub.s32 0, %v591
    %v593 = vrot.slane %v588, %v592
    %v599 = vunpack.c.l.b16 %v584
    %v600 = vunpack.c.l.b16 %v585
    %v601 = vunpack.c.l.b16 %v586
    %v602 = vunpack.c.l.b16 %v587
    %v603 = vpack.c.b16 %v600, %v599
    %v604 = vpack.c.b16 %v602, %v601
    %v608 = vsel %vm430, %v583, 0
    %610 = vmatprep.subr.bf16.mxu0 0
    %611 = vmatpush1.bf16.msra.mxu0 %v603
    %612 = vmatprep.subr.bf16.mxu0 0
    %613 = vmatpush1.bf16.msra.mxu0 %v604
    %614 = vmatprep.subr.bf16.mxu0 0
    %615 = vmatpush1.bf16.msra.mxu0 0
    %616 = vmatprep.subr.bf16.mxu0 0
    %617 = vmatpush1.bf16.msra.mxu0 0
    %618 = vmatprep.subr.bf16.mxu0 0
    %619 = vmatpush1.bf16.msra.mxu0 0
    %620 = vmatprep.subr.bf16.mxu0 0
    %621 = vmatpush1.bf16.msra.mxu0 0
    %622 = vmatprep.subr.bf16.mxu0 0
    %623 = vmatpush1.bf16.msra.mxu0 0
    %624 = vmatprep.subr.bf16.mxu0 0
    %625 = vmatpush1.bf16.msra.mxu0 0
    %626 = vmatprep.subr.bf16.mxu0 0
    %627 = vmatpush1.bf16.msra.mxu0 0
    %628 = vmatprep.subr.bf16.mxu0 0
    %629 = vmatpush1.bf16.msra.mxu0 0
    %630 = vmatprep.subr.bf16.mxu0 0
    %631 = vmatpush1.bf16.msra.mxu0 0
    %632 = vmatprep.subr.bf16.mxu0 0
    %633 = vmatpush1.bf16.msra.mxu0 0
    %634 = vmatprep.subr.bf16.mxu0 0
    %635 = vmatpush1.bf16.msra.mxu0 0
    %636 = vmatprep.subr.bf16.mxu0 0
    %637 = vmatpush1.bf16.msra.mxu0 0
    %638 = vmatprep.subr.bf16.mxu0 0
    %639 = vmatpush1.bf16.msra.mxu0 0
    %640 = vmatprep.subr.bf16.mxu0 0
    %641 = vmatpush1.bf16.msra.mxu0 0
    %642 = vmatprep.mubr.bf16.mxu0 0
    %643 = vmatmul.mubr.bf16.gmra.mrb[0].mxu0 %v608
    %v644 = vpop.f32.mrb[0].mxu0
    %v645 = vadd.f32 %v593, %v644
    %v646 = vpop.f32.mrb[0].mxu0
    %v647 = vpop.f32.mrb[0].mxu0
    %v648 = vadd.f32 %v593, %v647
    %v649 = vpop.f32.mrb[0].mxu0
    %650 = vdwg.mxu0
    %v651 = vpack.c.bf16 %v472, %v469
    %653 = vrot.lane.b32.xlu0 %v651, 120
    %v654 = vpop.permute.xlu0 %653
    %655 = vrot.lane.b32.xlu0 %v651, 112
    %v656 = vpop.permute.xlu0 %655
    %657 = vrot.lane.b32.xlu0 %v651, 104
    %v658 = vpop.permute.xlu0 %657
    %v661 = vpack.i.b16 %v654, %v651
    %v663 = vshrl.u32 %v651, 16
    %v664 = vshrl.u32 %v654, 16
    %v665 = vpack.i.b16 %v664, %v663
    %v669 = vpack.i.b16 %v658, %v656
    %v671 = vshrl.u32 %v656, 16
    %v672 = vshrl.u32 %v658, 16
    %v673 = vpack.i.b16 %v672, %v671
    %v676 = vpack.i.b16 0, 0
    %v678 = vshrl.u32 0, 16
    %v679 = vpack.i.b16 %v678, %v678
    %v681 = vcombine.high %v661, %v676
    %v683 = vunpack.c.l.s4 1983009808
    %v684 = vunpack.c.0.s8 %v683
    %v685 = vlaneseq
    %v686 = vshrl.u32 %v685, 7
    %v687 = vsub.s32 %v684, %v686
    %v688 = vrot.slane %v661, %v687
    %v690 = vunpack.c.l.s4 1983009808
    %v691 = vunpack.c.0.s8 %v690
    %v692 = vlaneseq
    %v693 = vshrl.u32 %v692, 7
    %v694 = vsub.s32 %v691, %v693
    %v695 = vrot.slane %v681, %v694
    %v696 = vcombine.high %v669, %v676
    %v698 = vunpack.c.l.s4 1983009808
    %v699 = vunpack.c.0.s8 %v698
    %v700 = vlaneseq
    %v701 = vshrl.u32 %v700, 7
    %v702 = vsub.s32 %v699, %v701
    %v703 = vrot.slane %v669, %v702
    %v705 = vunpack.c.l.s4 1983009808
    %v706 = vunpack.c.0.s8 %v705
    %v707 = vlaneseq
    %v708 = vshrl.u32 %v707, 7
    %v709 = vsub.s32 %v706, %v708
    %v710 = vrot.slane %v696, %v709
    %v711 = vcombine.low %v688, %v703
    %v712 = vcombine.high %v688, %v703
    %v714 = vunpack.c.l.s4 1934713408
    %v715 = vunpack.c.0.s8 %v714
    %v716 = vlaneseq
    %v717 = vshrl.u32 %v716, 7
    %v718 = vsub.s32 %v715, %v717
    %v719 = vrot.slane %v711, %v718
    %v721 = vunpack.c.l.s4 1934713408
    %v722 = vunpack.c.0.s8 %v721
    %v723 = vlaneseq
    %v724 = vshrl.u32 %v723, 7
    %v725 = vsub.s32 %v722, %v724
    %v726 = vrot.slane %v712, %v725
    %v727 = vcombine.low %v695, %v710
    %v728 = vcombine.high %v695, %v710
    %v730 = vunpack.c.l.s4 1934713408
    %v731 = vunpack.c.0.s8 %v730
    %v732 = vlaneseq
    %v733 = vshrl.u32 %v732, 7
    %v734 = vsub.s32 %v731, %v733
    %v735 = vrot.slane %v727, %v734
    %v737 = vunpack.c.l.s4 1934713408
    %v738 = vunpack.c.0.s8 %v737
    %v739 = vlaneseq
    %v740 = vshrl.u32 %v739, 7
    %v741 = vsub.s32 %v738, %v740
    %v742 = vrot.slane %v728, %v741
    %v743 = vcombine.high %v719, 0
    %v744 = vcombine.high %v726, 0
    %v745 = vcombine.high %v735, 0
    %v746 = vcombine.high %v742, 0
    %v747 = vcombine.high %v665, %v679
    %v749 = vunpack.c.l.s4 1983009808
    %v750 = vunpack.c.0.s8 %v749
    %v751 = vlaneseq
    %v752 = vshrl.u32 %v751, 7
    %v753 = vsub.s32 %v750, %v752
    %v754 = vrot.slane %v665, %v753
    %v756 = vunpack.c.l.s4 1983009808
    %v757 = vunpack.c.0.s8 %v756
    %v758 = vlaneseq
    %v759 = vshrl.u32 %v758, 7
    %v760 = vsub.s32 %v757, %v759
    %v761 = vrot.slane %v747, %v760
    %v762 = vcombine.high %v673, %v679
    %v764 = vunpack.c.l.s4 1983009808
    %v765 = vunpack.c.0.s8 %v764
    %v766 = vlaneseq
    %v767 = vshrl.u32 %v766, 7
    %v768 = vsub.s32 %v765, %v767
    %v769 = vrot.slane %v673, %v768
    %v771 = vunpack.c.l.s4 1983009808
    %v772 = vunpack.c.0.s8 %v771
    %v773 = vlaneseq
    %v774 = vshrl.u32 %v773, 7
    %v775 = vsub.s32 %v772, %v774
    %v776 = vrot.slane %v762, %v775
    %v777 = vcombine.low %v754, %v769
    %v778 = vcombine.high %v754, %v769
    %v780 = vunpack.c.l.s4 1934713408
    %v781 = vunpack.c.0.s8 %v780
    %v782 = vlaneseq
    %v783 = vshrl.u32 %v782, 7
    %v784 = vsub.s32 %v781, %v783
    %v785 = vrot.slane %v777, %v784
    %v787 = vunpack.c.l.s4 1934713408
    %v788 = vunpack.c.0.s8 %v787
    %v789 = vlaneseq
    %v790 = vshrl.u32 %v789, 7
    %v791 = vsub.s32 %v788, %v790
    %v792 = vrot.slane %v778, %v791
    %v793 = vcombine.low %v761, %v776
    %v794 = vcombine.high %v761, %v776
    %v796 = vunpack.c.l.s4 1934713408
    %v797 = vunpack.c.0.s8 %v796
    %v798 = vlaneseq
    %v799 = vshrl.u32 %v798, 7
    %v800 = vsub.s32 %v797, %v799
    %v801 = vrot.slane %v793, %v800
    %v803 = vunpack.c.l.s4 1934713408
    %v804 = vunpack.c.0.s8 %v803
    %v805 = vlaneseq
    %v806 = vshrl.u32 %v805, 7
    %v807 = vsub.s32 %v804, %v806
    %v808 = vrot.slane %v794, %v807
    %v809 = vcombine.high %v785, 0
    %v810 = vcombine.high %v792, 0
    %v811 = vcombine.high %v801, 0
    %v812 = vcombine.high %v808, 0
    %v813 = vcombine.low %v719, %v735
    %v815 = vunpack.c.l.s4 1983009808
    %v816 = vunpack.c.0.s8 %v815
    %v817 = vlaneseq
    %v818 = vshrl.u32 %v817, 7
    %v819 = vsub.s32 %v816, %v818
    %v820 = vrot.slane %v813, %v819
    %v821 = vcombine.low %v726, %v742
    %v823 = vunpack.c.l.s4 1983009808
    %v824 = vunpack.c.0.s8 %v823
    %v825 = vlaneseq
    %v826 = vshrl.u32 %v825, 7
    %v827 = vsub.s32 %v824, %v826
    %v828 = vrot.slane %v821, %v827
    %v829 = vcombine.low %v820, %v828
    %v831 = vunpack.c.l.s4 1934713408
    %v832 = vunpack.c.0.s8 %v831
    %v833 = vlaneseq
    %v834 = vshrl.u32 %v833, 7
    %v835 = vsub.s32 %v832, %v834
    %v836 = vrot.slane %v829, %v835
    %v837 = vcombine.high %v836, 0
    %v838 = vcombine.low %v743, %v745
    %v840 = vunpack.c.l.s4 1983009808
    %v841 = vunpack.c.0.s8 %v840
    %v842 = vlaneseq
    %v843 = vshrl.u32 %v842, 7
    %v844 = vsub.s32 %v841, %v843
    %v845 = vrot.slane %v838, %v844
    %v846 = vcombine.low %v744, %v746
    %v848 = vunpack.c.l.s4 1983009808
    %v849 = vunpack.c.0.s8 %v848
    %v850 = vlaneseq
    %v851 = vshrl.u32 %v850, 7
    %v852 = vsub.s32 %v849, %v851
    %v853 = vrot.slane %v846, %v852
    %v854 = vcombine.low %v845, %v853
    %v856 = vunpack.c.l.s4 1934713408
    %v857 = vunpack.c.0.s8 %v856
    %v858 = vlaneseq
    %v859 = vshrl.u32 %v858, 7
    %v860 = vsub.s32 %v857, %v859
    %v861 = vrot.slane %v854, %v860
    %v862 = vcombine.high %v861, 0
    %v863 = vcombine.low %v785, %v801
    %v865 = vunpack.c.l.s4 1983009808
    %v866 = vunpack.c.0.s8 %v865
    %v867 = vlaneseq
    %v868 = vshrl.u32 %v867, 7
    %v869 = vsub.s32 %v866, %v868
    %v870 = vrot.slane %v863, %v869
    %v871 = vcombine.low %v792, %v808
    %v873 = vunpack.c.l.s4 1983009808
    %v874 = vunpack.c.0.s8 %v873
    %v875 = vlaneseq
    %v876 = vshrl.u32 %v875, 7
    %v877 = vsub.s32 %v874, %v876
    %v878 = vrot.slane %v871, %v877
    %v879 = vcombine.low %v870, %v878
    %v881 = vunpack.c.l.s4 1934713408
    %v882 = vunpack.c.0.s8 %v881
    %v883 = vlaneseq
    %v884 = vshrl.u32 %v883, 7
    %v885 = vsub.s32 %v882, %v884
    %v886 = vrot.slane %v879, %v885
    %v887 = vcombine.high %v886, 0
    %v888 = vcombine.low %v809, %v811
    %v890 = vunpack.c.l.s4 1983009808
    %v891 = vunpack.c.0.s8 %v890
    %v892 = vlaneseq
    %v893 = vshrl.u32 %v892, 7
    %v894 = vsub.s32 %v891, %v893
    %v895 = vrot.slane %v888, %v894
    %v896 = vcombine.low %v810, %v812
    %v898 = vunpack.c.l.s4 1983009808
    %v899 = vunpack.c.0.s8 %v898
    %v900 = vlaneseq
    %v901 = vshrl.u32 %v900, 7
    %v902 = vsub.s32 %v899, %v901
    %v903 = vrot.slane %v896, %v902
    %v904 = vcombine.low %v895, %v903
    %v906 = vunpack.c.l.s4 1934713408
    %v907 = vunpack.c.0.s8 %v906
    %v908 = vlaneseq
    %v909 = vshrl.u32 %v908, 7
    %v910 = vsub.s32 %v907, %v909
    %v911 = vrot.slane %v904, %v910
    %v912 = vcombine.high %v911, 0
    %v915 = vpack.i.b16 %v861, %v836
    %v916 = vshrl.u32 %v836, 16
    %v917 = vshrl.u32 %v861, 16
    %v918 = vpack.i.b16 %v917, %v916
    %v921 = vpack.i.b16 %v862, %v837
    %v922 = vshrl.u32 %v837, 16
    %v923 = vshrl.u32 %v862, 16
    %v924 = vpack.i.b16 %v923, %v922
    %v927 = vpack.i.b16 %v911, %v886
    %v928 = vshrl.u32 %v886, 16
    %v929 = vshrl.u32 %v911, 16
    %v930 = vpack.i.b16 %v929, %v928
    %v933 = vpack.i.b16 %v912, %v887
    %v934 = vshrl.u32 %v887, 16
    %v935 = vshrl.u32 %v912, 16
    %v936 = vpack.i.b16 %v935, %v934
    %v937 = vpack.c.bf16 %v536, %v533
    %939 = vrot.lane.b32.xlu0 %v937, 120
    %v940 = vpop.permute.xlu0 %939
    %941 = vrot.lane.b32.xlu0 %v937, 112
    %v942 = vpop.permute.xlu0 %941
    %943 = vrot.lane.b32.xlu0 %v937, 104
    %v944 = vpop.permute.xlu0 %943
    %v947 = vpack.i.b16 %v940, %v937
    %v949 = vshrl.u32 %v937, 16
    %v950 = vshrl.u32 %v940, 16
    %v951 = vpack.i.b16 %v950, %v949
    %v955 = vpack.i.b16 %v944, %v942
    %v957 = vshrl.u32 %v942, 16
    %v958 = vshrl.u32 %v944, 16
    %v959 = vpack.i.b16 %v958, %v957
    %v961 = vcombine.high %v947, %v676
    %v963 = vunpack.c.l.s4 1983009808
    %v964 = vunpack.c.0.s8 %v963
    %v965 = vlaneseq
    %v966 = vshrl.u32 %v965, 7
    %v967 = vsub.s32 %v964, %v966
    %v968 = vrot.slane %v947, %v967
    %v970 = vunpack.c.l.s4 1983009808
    %v971 = vunpack.c.0.s8 %v970
    %v972 = vlaneseq
    %v973 = vshrl.u32 %v972, 7
    %v974 = vsub.s32 %v971, %v973
    %v975 = vrot.slane %v961, %v974
    %v976 = vcombine.high %v955, %v676
    %v978 = vunpack.c.l.s4 1983009808
    %v979 = vunpack.c.0.s8 %v978
    %v980 = vlaneseq
    %v981 = vshrl.u32 %v980, 7
    %v982 = vsub.s32 %v979, %v981
    %v983 = vrot.slane %v955, %v982
    %v985 = vunpack.c.l.s4 1983009808
    %v986 = vunpack.c.0.s8 %v985
    %v987 = vlaneseq
    %v988 = vshrl.u32 %v987, 7
    %v989 = vsub.s32 %v986, %v988
    %v990 = vrot.slane %v976, %v989
    %v991 = vcombine.low %v968, %v983
    %v992 = vcombine.high %v968, %v983
    %v994 = vunpack.c.l.s4 1934713408
    %v995 = vunpack.c.0.s8 %v994
    %v996 = vlaneseq
    %v997 = vshrl.u32 %v996, 7
    %v998 = vsub.s32 %v995, %v997
    %v999 = vrot.slane %v991, %v998
    %v1001 = vunpack.c.l.s4 1934713408
    %v1002 = vunpack.c.0.s8 %v1001
    %v1003 = vlaneseq
    %v1004 = vshrl.u32 %v1003, 7
    %v1005 = vsub.s32 %v1002, %v1004
    %v1006 = vrot.slane %v992, %v1005
    %v1007 = vcombine.low %v975, %v990
    %v1008 = vcombine.high %v975, %v990
    %v1010 = vunpack.c.l.s4 1934713408
    %v1011 = vunpack.c.0.s8 %v1010
    %v1012 = vlaneseq
    %v1013 = vshrl.u32 %v1012, 7
    %v1014 = vsub.s32 %v1011, %v1013
    %v1015 = vrot.slane %v1007, %v1014
    %v1017 = vunpack.c.l.s4 1934713408
    %v1018 = vunpack.c.0.s8 %v1017
    %v1019 = vlaneseq
    %v1020 = vshrl.u32 %v1019, 7
    %v1021 = vsub.s32 %v1018, %v1020
    %v1022 = vrot.slane %v1008, %v1021
    %v1023 = vcombine.high %v999, 0
    %v1024 = vcombine.high %v1006, 0
    %v1025 = vcombine.high %v1015, 0
    %v1026 = vcombine.high %v1022, 0
    %v1027 = vcombine.high %v951, %v679
    %v1029 = vunpack.c.l.s4 1983009808
    %v1030 = vunpack.c.0.s8 %v1029
    %v1031 = vlaneseq
    %v1032 = vshrl.u32 %v1031, 7
    %v1033 = vsub.s32 %v1030, %v1032
    %v1034 = vrot.slane %v951, %v1033
    %v1036 = vunpack.c.l.s4 1983009808
    %v1037 = vunpack.c.0.s8 %v1036
    %v1038 = vlaneseq
    %v1039 = vshrl.u32 %v1038, 7
    %v1040 = vsub.s32 %v1037, %v1039
    %v1041 = vrot.slane %v1027, %v1040
    %v1042 = vcombine.high %v959, %v679
    %v1044 = vunpack.c.l.s4 1983009808
    %v1045 = vunpack.c.0.s8 %v1044
    %v1046 = vlaneseq
    %v1047 = vshrl.u32 %v1046, 7
    %v1048 = vsub.s32 %v1045, %v1047
    %v1049 = vrot.slane %v959, %v1048
    %v1051 = vunpack.c.l.s4 1983009808
    %v1052 = vunpack.c.0.s8 %v1051
    %v1053 = vlaneseq
    %v1054 = vshrl.u32 %v1053, 7
    %v1055 = vsub.s32 %v1052, %v1054
    %v1056 = vrot.slane %v1042, %v1055
    %v1057 = vcombine.low %v1034, %v1049
    %v1058 = vcombine.high %v1034, %v1049
    %v1060 = vunpack.c.l.s4 1934713408
    %v1061 = vunpack.c.0.s8 %v1060
    %v1062 = vlaneseq
    %v1063 = vshrl.u32 %v1062, 7
    %v1064 = vsub.s32 %v1061, %v1063
    %v1065 = vrot.slane %v1057, %v1064
    %v1067 = vunpack.c.l.s4 1934713408
    %v1068 = vunpack.c.0.s8 %v1067
    %v1069 = vlaneseq
    %v1070 = vshrl.u32 %v1069, 7
    %v1071 = vsub.s32 %v1068, %v1070
    %v1072 = vrot.slane %v1058, %v1071
    %v1073 = vcombine.low %v1041, %v1056
    %v1074 = vcombine.high %v1041, %v1056
    %v1076 = vunpack.c.l.s4 1934713408
    %v1077 = vunpack.c.0.s8 %v1076
    %v1078 = vlaneseq
    %v1079 = vshrl.u32 %v1078, 7
    %v1080 = vsub.s32 %v1077, %v1079
    %v1081 = vrot.slane %v1073, %v1080
    %v1083 = vunpack.c.l.s4 1934713408
    %v1084 = vunpack.c.0.s8 %v1083
    %v1085 = vlaneseq
    %v1086 = vshrl.u32 %v1085, 7
    %v1087 = vsub.s32 %v1084, %v1086
    %v1088 = vrot.slane %v1074, %v1087
    %v1089 = vcombine.high %v1065, 0
    %v1090 = vcombine.high %v1072, 0
    %v1091 = vcombine.high %v1081, 0
    %v1092 = vcombine.high %v1088, 0
    %v1093 = vcombine.low %v999, %v1015
    %v1095 = vunpack.c.l.s4 1983009808
    %v1096 = vunpack.c.0.s8 %v1095
    %v1097 = vlaneseq
    %v1098 = vshrl.u32 %v1097, 7
    %v1099 = vsub.s32 %v1096, %v1098
    %v1100 = vrot.slane %v1093, %v1099
    %v1101 = vcombine.low %v1006, %v1022
    %v1103 = vunpack.c.l.s4 1983009808
    %v1104 = vunpack.c.0.s8 %v1103
    %v1105 = vlaneseq
    %v1106 = vshrl.u32 %v1105, 7
    %v1107 = vsub.s32 %v1104, %v1106
    %v1108 = vrot.slane %v1101, %v1107
    %v1109 = vcombine.low %v1100, %v1108
    %v1111 = vunpack.c.l.s4 1934713408
    %v1112 = vunpack.c.0.s8 %v1111
    %v1113 = vlaneseq
    %v1114 = vshrl.u32 %v1113, 7
    %v1115 = vsub.s32 %v1112, %v1114
    %v1116 = vrot.slane %v1109, %v1115
    %v1117 = vcombine.high %v1116, 0
    %v1118 = vcombine.low %v1023, %v1025
    %v1120 = vunpack.c.l.s4 1983009808
    %v1121 = vunpack.c.0.s8 %v1120
    %v1122 = vlaneseq
    %v1123 = vshrl.u32 %v1122, 7
    %v1124 = vsub.s32 %v1121, %v1123
    %v1125 = vrot.slane %v1118, %v1124
    %v1126 = vcombine.low %v1024, %v1026
    %v1128 = vunpack.c.l.s4 1983009808
    %v1129 = vunpack.c.0.s8 %v1128
    %v1130 = vlaneseq
    %v1131 = vshrl.u32 %v1130, 7
    %v1132 = vsub.s32 %v1129, %v1131
    %v1133 = vrot.slane %v1126, %v1132
    %v1134 = vcombine.low %v1125, %v1133
    %v1136 = vunpack.c.l.s4 1934713408
    %v1137 = vunpack.c.0.s8 %v1136
    %v1138 = vlaneseq
    %v1139 = vshrl.u32 %v1138, 7
    %v1140 = vsub.s32 %v1137, %v1139
    %v1141 = vrot.slane %v1134, %v1140
    %v1142 = vcombine.high %v1141, 0
    %v1143 = vcombine.low %v1065, %v1081
    %v1145 = vunpack.c.l.s4 1983009808
    %v1146 = vunpack.c.0.s8 %v1145
    %v1147 = vlaneseq
    %v1148 = vshrl.u32 %v1147, 7
    %v1149 = vsub.s32 %v1146, %v1148
    %v1150 = vrot.slane %v1143, %v1149
    %v1151 = vcombine.low %v1072, %v1088
    %v1153 = vunpack.c.l.s4 1983009808
    %v1154 = vunpack.c.0.s8 %v1153
    %v1155 = vlaneseq
    %v1156 = vshrl.u32 %v1155, 7
    %v1157 = vsub.s32 %v1154, %v1156
    %v1158 = vrot.slane %v1151, %v1157
    %v1159 = vcombine.low %v1150, %v1158
    %v1161 = vunpack.c.l.s4 1934713408
    %v1162 = vunpack.c.0.s8 %v1161
    %v1163 = vlaneseq
    %v1164 = vshrl.u32 %v1163, 7
    %v1165 = vsub.s32 %v1162, %v1164
    %v1166 = vrot.slane %v1159, %v1165
    %v1167 = vcombine.high %v1166, 0
    %v1168 = vcombine.low %v1089, %v1091
    %v1170 = vunpack.c.l.s4 1983009808
    %v1171 = vunpack.c.0.s8 %v1170
    %v1172 = vlaneseq
    %v1173 = vshrl.u32 %v1172, 7
    %v1174 = vsub.s32 %v1171, %v1173
    %v1175 = vrot.slane %v1168, %v1174
    %v1176 = vcombine.low %v1090, %v1092
    %v1178 = vunpack.c.l.s4 1983009808
    %v1179 = vunpack.c.0.s8 %v1178
    %v1180 = vlaneseq
    %v1181 = vshrl.u32 %v1180, 7
    %v1182 = vsub.s32 %v1179, %v1181
    %v1183 = vrot.slane %v1176, %v1182
    %v1184 = vcombine.low %v1175, %v1183
    %v1186 = vunpack.c.l.s4 1934713408
    %v1187 = vunpack.c.0.s8 %v1186
    %v1188 = vlaneseq
    %v1189 = vshrl.u32 %v1188, 7
    %v1190 = vsub.s32 %v1187, %v1189
    %v1191 = vrot.slane %v1184, %v1190
    %v1192 = vcombine.high %v1191, 0
    %v1195 = vpack.i.b16 %v1141, %v1116
    %v1196 = vshrl.u32 %v1116, 16
    %v1197 = vshrl.u32 %v1141, 16
    %v1198 = vpack.i.b16 %v1197, %v1196
    %v1201 = vpack.i.b16 %v1142, %v1117
    %v1202 = vshrl.u32 %v1117, 16
    %v1203 = vshrl.u32 %v1142, 16
    %v1204 = vpack.i.b16 %v1203, %v1202
    %v1207 = vpack.i.b16 %v1191, %v1166
    %v1208 = vshrl.u32 %v1166, 16
    %v1209 = vshrl.u32 %v1191, 16
    %v1210 = vpack.i.b16 %v1209, %v1208
    %v1213 = vpack.i.b16 %v1192, %v1167
    %v1214 = vshrl.u32 %v1167, 16
    %v1215 = vshrl.u32 %v1192, 16
    %v1216 = vpack.i.b16 %v1215, %v1214
    %v1217 = vpack.c.bf16 %v648, %v645
    %1219 = vrot.lane.b32.xlu0 %v1217, 120
    %v1220 = vpop.permute.xlu0 %1219
    %1221 = vrot.lane.b32.xlu0 %v1217, 112
    %v1222 = vpop.permute.xlu0 %1221
    %1223 = vrot.lane.b32.xlu0 %v1217, 104
    %v1224 = vpop.permute.xlu0 %1223
    %v1227 = vpack.i.b16 %v1220, %v1217
    %v1229 = vshrl.u32 %v1217, 16
    %v1230 = vshrl.u32 %v1220, 16
    %v1231 = vpack.i.b16 %v1230, %v1229
    %v1235 = vpack.i.b16 %v1224, %v1222
    %v1237 = vshrl.u32 %v1222, 16
    %v1238 = vshrl.u32 %v1224, 16
    %v1239 = vpack.i.b16 %v1238, %v1237
    %v1241 = vcombine.high %v1227, %v676
    %v1243 = vunpack.c.l.s4 1983009808
    %v1244 = vunpack.c.0.s8 %v1243
    %v1245 = vlaneseq
    %v1246 = vshrl.u32 %v1245, 7
    %v1247 = vsub.s32 %v1244, %v1246
    %v1248 = vrot.slane %v1227, %v1247
    %v1250 = vunpack.c.l.s4 1983009808
    %v1251 = vunpack.c.0.s8 %v1250
    %v1252 = vlaneseq
    %v1253 = vshrl.u32 %v1252, 7
    %v1254 = vsub.s32 %v1251, %v1253
    %v1255 = vrot.slane %v1241, %v1254
    %v1256 = vcombine.high %v1235, %v676
    %v1258 = vunpack.c.l.s4 1983009808
    %v1259 = vunpack.c.0.s8 %v1258
    %v1260 = vlaneseq
    %v1261 = vshrl.u32 %v1260, 7
    %v1262 = vsub.s32 %v1259, %v1261
    %v1263 = vrot.slane %v1235, %v1262
    %v1265 = vunpack.c.l.s4 1983009808
    %v1266 = vunpack.c.0.s8 %v1265
    %v1267 = vlaneseq
    %v1268 = vshrl.u32 %v1267, 7
    %v1269 = vsub.s32 %v1266, %v1268
    %v1270 = vrot.slane %v1256, %v1269
    %v1271 = vcombine.low %v1248, %v1263
    %v1272 = vcombine.high %v1248, %v1263
    %v1274 = vunpack.c.l.s4 1934713408
    %v1275 = vunpack.c.0.s8 %v1274
    %v1276 = vlaneseq
    %v1277 = vshrl.u32 %v1276, 7
    %v1278 = vsub.s32 %v1275, %v1277
    %v1279 = vrot.slane %v1271, %v1278
    %v1281 = vunpack.c.l.s4 1934713408
    %v1282 = vunpack.c.0.s8 %v1281
    %v1283 = vlaneseq
    %v1284 = vshrl.u32 %v1283, 7
    %v1285 = vsub.s32 %v1282, %v1284
    %v1286 = vrot.slane %v1272, %v1285
    %v1287 = vcombine.low %v1255, %v1270
    %v1288 = vcombine.high %v1255, %v1270
    %v1290 = vunpack.c.l.s4 1934713408
    %v1291 = vunpack.c.0.s8 %v1290
    %v1292 = vlaneseq
    %v1293 = vshrl.u32 %v1292, 7
    %v1294 = vsub.s32 %v1291, %v1293
    %v1295 = vrot.slane %v1287, %v1294
    %v1297 = vunpack.c.l.s4 1934713408
    %v1298 = vunpack.c.0.s8 %v1297
    %v1299 = vlaneseq
    %v1300 = vshrl.u32 %v1299, 7
    %v1301 = vsub.s32 %v1298, %v1300
    %v1302 = vrot.slane %v1288, %v1301
    %v1303 = vcombine.high %v1279, 0
    %v1304 = vcombine.high %v1286, 0
    %v1305 = vcombine.high %v1295, 0
    %v1306 = vcombine.high %v1302, 0
    %v1307 = vcombine.high %v1231, %v679
    %v1309 = vunpack.c.l.s4 1983009808
    %v1310 = vunpack.c.0.s8 %v1309
    %v1311 = vlaneseq
    %v1312 = vshrl.u32 %v1311, 7
    %v1313 = vsub.s32 %v1310, %v1312
    %v1314 = vrot.slane %v1231, %v1313
    %v1316 = vunpack.c.l.s4 1983009808
    %v1317 = vunpack.c.0.s8 %v1316
    %v1318 = vlaneseq
    %v1319 = vshrl.u32 %v1318, 7
    %v1320 = vsub.s32 %v1317, %v1319
    %v1321 = vrot.slane %v1307, %v1320
    %v1322 = vcombine.high %v1239, %v679
    %v1324 = vunpack.c.l.s4 1983009808
    %v1325 = vunpack.c.0.s8 %v1324
    %v1326 = vlaneseq
    %v1327 = vshrl.u32 %v1326, 7
    %v1328 = vsub.s32 %v1325, %v1327
    %v1329 = vrot.slane %v1239, %v1328
    %v1331 = vunpack.c.l.s4 1983009808
    %v1332 = vunpack.c.0.s8 %v1331
    %v1333 = vlaneseq
    %v1334 = vshrl.u32 %v1333, 7
    %v1335 = vsub.s32 %v1332, %v1334
    %v1336 = vrot.slane %v1322, %v1335
    %v1337 = vcombine.low %v1314, %v1329
    %v1338 = vcombine.high %v1314, %v1329
    %v1340 = vunpack.c.l.s4 1934713408
    %v1341 = vunpack.c.0.s8 %v1340
    %v1342 = vlaneseq
    %v1343 = vshrl.u32 %v1342, 7
    %v1344 = vsub.s32 %v1341, %v1343
    %v1345 = vrot.slane %v1337, %v1344
    %v1347 = vunpack.c.l.s4 1934713408
    %v1348 = vunpack.c.0.s8 %v1347
    %v1349 = vlaneseq
    %v1350 = vshrl.u32 %v1349, 7
    %v1351 = vsub.s32 %v1348, %v1350
    %v1352 = vrot.slane %v1338, %v1351
    %v1353 = vcombine.low %v1321, %v1336
    %v1354 = vcombine.high %v1321, %v1336
    %v1356 = vunpack.c.l.s4 1934713408
    %v1357 = vunpack.c.0.s8 %v1356
    %v1358 = vlaneseq
    %v1359 = vshrl.u32 %v1358, 7
    %v1360 = vsub.s32 %v1357, %v1359
    %v1361 = vrot.slane %v1353, %v1360
    %v1363 = vunpack.c.l.s4 1934713408
    %v1364 = vunpack.c.0.s8 %v1363
    %v1365 = vlaneseq
    %v1366 = vshrl.u32 %v1365, 7
    %v1367 = vsub.s32 %v1364, %v1366
    %v1368 = vrot.slane %v1354, %v1367
    %v1369 = vcombine.high %v1345, 0
    %v1370 = vcombine.high %v1352, 0
    %v1371 = vcombine.high %v1361, 0
    %v1372 = vcombine.high %v1368, 0
    %v1373 = vcombine.low %v1279, %v1295
    %v1375 = vunpack.c.l.s4 1983009808
    %v1376 = vunpack.c.0.s8 %v1375
    %v1377 = vlaneseq
    %v1378 = vshrl.u32 %v1377, 7
    %v1379 = vsub.s32 %v1376, %v1378
    %v1380 = vrot.slane %v1373, %v1379
    %v1381 = vcombine.low %v1286, %v1302
    %v1383 = vunpack.c.l.s4 1983009808
    %v1384 = vunpack.c.0.s8 %v1383
    %v1385 = vlaneseq
    %v1386 = vshrl.u32 %v1385, 7
    %v1387 = vsub.s32 %v1384, %v1386
    %v1388 = vrot.slane %v1381, %v1387
    %v1389 = vcombine.low %v1380, %v1388
    %v1391 = vunpack.c.l.s4 1934713408
    %v1392 = vunpack.c.0.s8 %v1391
    %v1393 = vlaneseq
    %v1394 = vshrl.u32 %v1393, 7
    %v1395 = vsub.s32 %v1392, %v1394
    %v1396 = vrot.slane %v1389, %v1395
    %v1397 = vcombine.high %v1396, 0
    %v1398 = vcombine.low %v1303, %v1305
    %v1400 = vunpack.c.l.s4 1983009808
    %v1401 = vunpack.c.0.s8 %v1400
    %v1402 = vlaneseq
    %v1403 = vshrl.u32 %v1402, 7
    %v1404 = vsub.s32 %v1401, %v1403
    %v1405 = vrot.slane %v1398, %v1404
    %v1406 = vcombine.low %v1304, %v1306
    %v1408 = vunpack.c.l.s4 1983009808
    %v1409 = vunpack.c.0.s8 %v1408
    %v1410 = vlaneseq
    %v1411 = vshrl.u32 %v1410, 7
    %v1412 = vsub.s32 %v1409, %v1411
    %v1413 = vrot.slane %v1406, %v1412
    %v1414 = vcombine.low %v1405, %v1413
    %v1416 = vunpack.c.l.s4 1934713408
    %v1417 = vunpack.c.0.s8 %v1416
    %v1418 = vlaneseq
    %v1419 = vshrl.u32 %v1418, 7
    %v1420 = vsub.s32 %v1417, %v1419
    %v1421 = vrot.slane %v1414, %v1420
    %v1422 = vcombine.high %v1421, 0
    %v1423 = vcombine.low %v1345, %v1361
    %v1425 = vunpack.c.l.s4 1983009808
    %v1426 = vunpack.c.0.s8 %v1425
    %v1427 = vlaneseq
    %v1428 = vshrl.u32 %v1427, 7
    %v1429 = vsub.s32 %v1426, %v1428
    %v1430 = vrot.slane %v1423, %v1429
    %v1431 = vcombine.low %v1352, %v1368
    %v1433 = vunpack.c.l.s4 1983009808
    %v1434 = vunpack.c.0.s8 %v1433
    %v1435 = vlaneseq
    %v1436 = vshrl.u32 %v1435, 7
    %v1437 = vsub.s32 %v1434, %v1436
    %v1438 = vrot.slane %v1431, %v1437
    %v1439 = vcombine.low %v1430, %v1438
    %v1441 = vunpack.c.l.s4 1934713408
    %v1442 = vunpack.c.0.s8 %v1441
    %v1443 = vlaneseq
    %v1444 = vshrl.u32 %v1443, 7
    %v1445 = vsub.s32 %v1442, %v1444
    %v1446 = vrot.slane %v1439, %v1445
    %v1447 = vcombine.high %v1446, 0
    %v1448 = vcombine.low %v1369, %v1371
    %v1450 = vunpack.c.l.s4 1983009808
    %v1451 = vunpack.c.0.s8 %v1450
    %v1452 = vlaneseq
    %v1453 = vshrl.u32 %v1452, 7
    %v1454 = vsub.s32 %v1451, %v1453
    %v1455 = vrot.slane %v1448, %v1454
    %v1456 = vcombine.low %v1370, %v1372
    %v1458 = vunpack.c.l.s4 1983009808
    %v1459 = vunpack.c.0.s8 %v1458
    %v1460 = vlaneseq
    %v1461 = vshrl.u32 %v1460, 7
    %v1462 = vsub.s32 %v1459, %v1461
    %v1463 = vrot.slane %v1456, %v1462
    %v1464 = vcombine.low %v1455, %v1463
    %v1466 = vunpack.c.l.s4 1934713408
    %v1467 = vunpack.c.0.s8 %v1466
    %v1468 = vlaneseq
    %v1469 = vshrl.u32 %v1468, 7
    %v1470 = vsub.s32 %v1467, %v1469
    %v1471 = vrot.slane %v1464, %v1470
    %v1472 = vcombine.high %v1471, 0
    %v1475 = vpack.i.b16 %v1421, %v1396
    %v1476 = vshrl.u32 %v1396, 16
    %v1477 = vshrl.u32 %v1421, 16
    %v1478 = vpack.i.b16 %v1477, %v1476
    %v1481 = vpack.i.b16 %v1422, %v1397
    %v1482 = vshrl.u32 %v1397, 16
    %v1483 = vshrl.u32 %v1422, 16
    %v1484 = vpack.i.b16 %v1483, %v1482
    %v1487 = vpack.i.b16 %v1471, %v1446
    %v1488 = vshrl.u32 %v1446, 16
    %v1489 = vshrl.u32 %v1471, 16
    %v1490 = vpack.i.b16 %v1489, %v1488
    %v1493 = vpack.i.b16 %v1472, %v1447
    %v1494 = vshrl.u32 %v1447, 16
    %v1495 = vshrl.u32 %v1472, 16
    %v1496 = vpack.i.b16 %v1495, %v1494
    %vm1497 = vcmask 64512
    %v1499 = vsel %vm1497, %v915, 0
    %v1502 = vsel %vm1497, %v1195, 0
    %1504 = vmatprep.subr.bf16.mxu0 0
    %1505 = vmatpush1.bf16.xpose.msra.mxu0 %v1502
    %1506 = vmatprep.subr.bf16.mxu0 0
    %1507 = vmatpush1.bf16.xpose.msra.mxu0 0
    %1508 = vmatprep.subr.bf16.mxu0 0
    %1509 = vmatpush1.bf16.xpose.msra.mxu0 0
    %1510 = vmatprep.subr.bf16.mxu0 0
    %1511 = vmatpush1.bf16.xpose.msra.mxu0 0
    %1512 = vmatprep.subr.bf16.mxu0 0
    %1513 = vmatpush1.bf16.xpose.msra.mxu0 0
    %1514 = vmatprep.subr.bf16.mxu0 0
    %1515 = vmatpush1.bf16.xpose.msra.mxu0 0
    %1516 = vmatprep.subr.bf16.mxu0 0
    %1517 = vmatpush1.bf16.xpose.msra.mxu0 0
    %1518 = vmatprep.subr.bf16.mxu0 0
    %1519 = vmatpush1.bf16.xpose.msra.mxu0 0
    %1520 = vmatprep.subr.bf16.mxu0 0
    %1521 = vmatpush1.bf16.xpose.msra.mxu0 0
    %1522 = vmatprep.subr.bf16.mxu0 0
    %1523 = vmatpush1.bf16.xpose.msra.mxu0 0
    %1524 = vmatprep.subr.bf16.mxu0 0
    %1525 = vmatpush1.bf16.xpose.msra.mxu0 0
    %1526 = vmatprep.subr.bf16.mxu0 0
    %1527 = vmatpush1.bf16.xpose.msra.mxu0 0
    %1528 = vmatprep.subr.bf16.mxu0 0
    %1529 = vmatpush1.bf16.xpose.msra.mxu0 0
    %1530 = vmatprep.subr.bf16.mxu0 0
    %1531 = vmatpush1.bf16.xpose.msra.mxu0 0
    %1532 = vmatprep.subr.bf16.mxu0 0
    %1533 = vmatpush1.bf16.xpose.msra.mxu0 0
    %1534 = vmatprep.subr.bf16.mxu0 0
    %1535 = vmatpush1.bf16.xpose.msra.mxu0 0
    %1536 = vmatprep.mubr.bf16.mxu0 0
    %1537 = vmatmul.mubr.bf16.gmra.mrb[0].mxu0 %v1499
    %v1538 = vpop.f32.mrb[0].mxu0
    %v1539 = vadd.f32 0.0, %v1538
    %v1540 = vpop.f32.mrb[0].mxu0
    %v1541 = vpop.f32.mrb[0].mxu0
    %v1542 = vpop.f32.mrb[0].mxu0
    %1543 = vdwg.mxu0
    %v1545 = vsel %vm1497, %v918, 0
    %v1548 = vsel %vm1497, %v1198, 0
    %1550 = vmatprep.subr.bf16.mxu0 0
    %1551 = vmatpush1.bf16.xpose.msra.mxu0 %v1548
    %1552 = vmatprep.subr.bf16.mxu0 0
    %1553 = vmatpush1.bf16.xpose.msra.mxu0 0
    %1554 = vmatprep.subr.bf16.mxu0 0
    %1555 = vmatpush1.bf16.xpose.msra.mxu0 0
    %1556 = vmatprep.subr.bf16.mxu0 0
    %1557 = vmatpush1.bf16.xpose.msra.mxu0 0
    %1558 = vmatprep.subr.bf16.mxu0 0
    %1559 = vmatpush1.bf16.xpose.msra.mxu0 0
    %1560 = vmatprep.subr.bf16.mxu0 0
    %1561 = vmatpush1.bf16.xpose.msra.mxu0 0
    %1562 = vmatprep.subr.bf16.mxu0 0
    %1563 = vmatpush1.bf16.xpose.msra.mxu0 0
    %1564 = vmatprep.subr.bf16.mxu0 0
    %1565 = vmatpush1.bf16.xpose.msra.mxu0 0
    %1566 = vmatprep.subr.bf16.mxu0 0
    %1567 = vmatpush1.bf16.xpose.msra.mxu0 0
    %1568 = vmatprep.subr.bf16.mxu0 0
    %1569 = vmatpush1.bf16.xpose.msra.mxu0 0
    %1570 = vmatprep.subr.bf16.mxu0 0
    %1571 = vmatpush1.bf16.xpose.msra.mxu0 0
    %1572 = vmatprep.subr.bf16.mxu0 0
    %1573 = vmatpush1.bf16.xpose.msra.mxu0 0
    %1574 = vmatprep.subr.bf16.mxu0 0
    %1575 = vmatpush1.bf16.xpose.msra.mxu0 0
    %1576 = vmatprep.subr.bf16.mxu0 0
    %1577 = vmatpush1.bf16.xpose.msra.mxu0 0
    %1578 = vmatprep.subr.bf16.mxu0 0
    %1579 = vmatpush1.bf16.xpose.msra.mxu0 0
    %1580 = vmatprep.subr.bf16.mxu0 0
    %1581 = vmatpush1.bf16.xpose.msra.mxu0 0
    %1582 = vmatprep.mubr.bf16.mxu0 0
    %1583 = vmatmul.mubr.bf16.gmra.mrb[0].mxu0 %v1545
    %v1584 = vpop.f32.mrb[0].mxu0
    %v1585 = vadd.f32 0.0, %v1584
    %v1586 = vpop.f32.mrb[0].mxu0
    %v1587 = vpop.f32.mrb[0].mxu0
    %v1588 = vpop.f32.mrb[0].mxu0
    %1589 = vdwg.mxu0
    %v1591 = vsel %vm1497, %v921, 0
    %v1594 = vsel %vm1497, %v1201, 0
    %1596 = vmatprep.subr.bf16.mxu0 0
    %1597 = vmatpush1.bf16.xpose.msra.mxu0 %v1594
    %1598 = vmatprep.subr.bf16.mxu0 0
    %1599 = vmatpush1.bf16.xpose.msra.mxu0 0
    %1600 = vmatprep.subr.bf16.mxu0 0
    %1601 = vmatpush1.bf16.xpose.msra.mxu0 0
    %1602 = vmatprep.subr.bf16.mxu0 0
    %1603 = vmatpush1.bf16.xpose.msra.mxu0 0
    %1604 = vmatprep.subr.bf16.mxu0 0
    %1605 = vmatpush1.bf16.xpose.msra.mxu0 0
    %1606 = vmatprep.subr.bf16.mxu0 0
    %1607 = vmatpush1.bf16.xpose.msra.mxu0 0
    %1608 = vmatprep.subr.bf16.mxu0 0
    %1609 = vmatpush1.bf16.xpose.msra.mxu0 0
    %1610 = vmatprep.subr.bf16.mxu0 0
    %1611 = vmatpush1.bf16.xpose.msra.mxu0 0
    %1612 = vmatprep.subr.bf16.mxu0 0
    %1613 = vmatpush1.bf16.xpose.msra.mxu0 0
    %1614 = vmatprep.subr.bf16.mxu0 0
    %1615 = vmatpush1.bf16.xpose.msra.mxu0 0
    %1616 = vmatprep.subr.bf16.mxu0 0
    %1617 = vmatpush1.bf16.xpose.msra.mxu0 0
    %1618 = vmatprep.subr.bf16.mxu0 0
    %1619 = vmatpush1.bf16.xpose.msra.mxu0 0
    %1620 = vmatprep.subr.bf16.mxu0 0
    %1621 = vmatpush1.bf16.xpose.msra.mxu0 0
    %1622 = vmatprep.subr.bf16.mxu0 0
    %1623 = vmatpush1.bf16.xpose.msra.mxu0 0
    %1624 = vmatprep.subr.bf16.mxu0 0
    %1625 = vmatpush1.bf16.xpose.msra.mxu0 0
    %1626 = vmatprep.subr.bf16.mxu0 0
    %1627 = vmatpush1.bf16.xpose.msra.mxu0 0
    %1628 = vmatprep.mubr.bf16.mxu0 0
    %1629 = vmatmul.mubr.bf16.gmra.mrb[0].mxu0 %v1591
    %v1630 = vpop.f32.mrb[0].mxu0
    %v1631 = vadd.f32 0.0, %v1630
    %v1632 = vpop.f32.mrb[0].mxu0
    %v1633 = vpop.f32.mrb[0].mxu0
    %v1634 = vpop.f32.mrb[0].mxu0
    %1635 = vdwg.mxu0
    %v1637 = vsel %vm1497, %v924, 0
    %v1640 = vsel %vm1497, %v1204, 0
    %1642 = vmatprep.subr.bf16.mxu0 0
    %1643 = vmatpush1.bf16.xpose.msra.mxu0 %v1640
    %1644 = vmatprep.subr.bf16.mxu0 0
    %1645 = vmatpush1.bf16.xpose.msra.mxu0 0
    %1646 = vmatprep.subr.bf16.mxu0 0
    %1647 = vmatpush1.bf16.xpose.msra.mxu0 0
    %1648 = vmatprep.subr.bf16.mxu0 0
    %1649 = vmatpush1.bf16.xpose.msra.mxu0 0
    %1650 = vmatprep.subr.bf16.mxu0 0
    %1651 = vmatpush1.bf16.xpose.msra.mxu0 0
    %1652 = vmatprep.subr.bf16.mxu0 0
    %1653 = vmatpush1.bf16.xpose.msra.mxu0 0
    %1654 = vmatprep.subr.bf16.mxu0 0
    %1655 = vmatpush1.bf16.xpose.msra.mxu0 0
    %1656 = vmatprep.subr.bf16.mxu0 0
    %1657 = vmatpush1.bf16.xpose.msra.mxu0 0
    %1658 = vmatprep.subr.bf16.mxu0 0
    %1659 = vmatpush1.bf16.xpose.msra.mxu0 0
    %1660 = vmatprep.subr.bf16.mxu0 0
    %1661 = vmatpush1.bf16.xpose.msra.mxu0 0
    %1662 = vmatprep.subr.bf16.mxu0 0
    %1663 = vmatpush1.bf16.xpose.msra.mxu0 0
    %1664 = vmatprep.subr.bf16.mxu0 0
    %1665 = vmatpush1.bf16.xpose.msra.mxu0 0
    %1666 = vmatprep.subr.bf16.mxu0 0
    %1667 = vmatpush1.bf16.xpose.msra.mxu0 0
    %1668 = vmatprep.subr.bf16.mxu0 0
    %1669 = vmatpush1.bf16.xpose.msra.mxu0 0
    %1670 = vmatprep.subr.bf16.mxu0 0
    %1671 = vmatpush1.bf16.xpose.msra.mxu0 0
    %1672 = vmatprep.subr.bf16.mxu0 0
    %1673 = vmatpush1.bf16.xpose.msra.mxu0 0
    %1674 = vmatprep.mubr.bf16.mxu0 0
    %1675 = vmatmul.mubr.bf16.gmra.mrb[0].mxu0 %v1637
    %v1676 = vpop.f32.mrb[0].mxu0
    %v1677 = vadd.f32 0.0, %v1676
    %v1678 = vpop.f32.mrb[0].mxu0
    %v1679 = vpop.f32.mrb[0].mxu0
    %v1680 = vpop.f32.mrb[0].mxu0
    %1681 = vdwg.mxu0
    %v1683 = vsel %vm1497, %v927, 0
    %v1686 = vsel %vm1497, %v1207, 0
    %1688 = vmatprep.subr.bf16.mxu0 0
    %1689 = vmatpush1.bf16.xpose.msra.mxu0 %v1686
    %1690 = vmatprep.subr.bf16.mxu0 0
    %1691 = vmatpush1.bf16.xpose.msra.mxu0 0
    %1692 = vmatprep.subr.bf16.mxu0 0
    %1693 = vmatpush1.bf16.xpose.msra.mxu0 0
    %1694 = vmatprep.subr.bf16.mxu0 0
    %1695 = vmatpush1.bf16.xpose.msra.mxu0 0
    %1696 = vmatprep.subr.bf16.mxu0 0
    %1697 = vmatpush1.bf16.xpose.msra.mxu0 0
    %1698 = vmatprep.subr.bf16.mxu0 0
    %1699 = vmatpush1.bf16.xpose.msra.mxu0 0
    %1700 = vmatprep.subr.bf16.mxu0 0
    %1701 = vmatpush1.bf16.xpose.msra.mxu0 0
    %1702 = vmatprep.subr.bf16.mxu0 0
    %1703 = vmatpush1.bf16.xpose.msra.mxu0 0
    %1704 = vmatprep.subr.bf16.mxu0 0
    %1705 = vmatpush1.bf16.xpose.msra.mxu0 0
    %1706 = vmatprep.subr.bf16.mxu0 0
    %1707 = vmatpush1.bf16.xpose.msra.mxu0 0
    %1708 = vmatprep.subr.bf16.mxu0 0
    %1709 = vmatpush1.bf16.xpose.msra.mxu0 0
    %1710 = vmatprep.subr.bf16.mxu0 0
    %1711 = vmatpush1.bf16.xpose.msra.mxu0 0
    %1712 = vmatprep.subr.bf16.mxu0 0
    %1713 = vmatpush1.bf16.xpose.msra.mxu0 0
    %1714 = vmatprep.subr.bf16.mxu0 0
    %1715 = vmatpush1.bf16.xpose.msra.mxu0 0
    %1716 = vmatprep.subr.bf16.mxu0 0
    %1717 = vmatpush1.bf16.xpose.msra.mxu0 0
    %1718 = vmatprep.subr.bf16.mxu0 0
    %1719 = vmatpush1.bf16.xpose.msra.mxu0 0
    %1720 = vmatprep.mubr.bf16.mxu0 0
    %1721 = vmatmul.mubr.bf16.gmra.mrb[0].mxu0 %v1683
    %v1722 = vpop.f32.mrb[0].mxu0
    %v1723 = vadd.f32 0.0, %v1722
    %v1724 = vpop.f32.mrb[0].mxu0
    %v1725 = vpop.f32.mrb[0].mxu0
    %v1726 = vpop.f32.mrb[0].mxu0
    %1727 = vdwg.mxu0
    %v1729 = vsel %vm1497, %v930, 0
    %v1732 = vsel %vm1497, %v1210, 0
    %1734 = vmatprep.subr.bf16.mxu0 0
    %1735 = vmatpush1.bf16.xpose.msra.mxu0 %v1732
    %1736 = vmatprep.subr.bf16.mxu0 0
    %1737 = vmatpush1.bf16.xpose.msra.mxu0 0
    %1738 = vmatprep.subr.bf16.mxu0 0
    %1739 = vmatpush1.bf16.xpose.msra.mxu0 0
    %1740 = vmatprep.subr.bf16.mxu0 0
    %1741 = vmatpush1.bf16.xpose.msra.mxu0 0
    %1742 = vmatprep.subr.bf16.mxu0 0
    %1743 = vmatpush1.bf16.xpose.msra.mxu0 0
    %1744 = vmatprep.subr.bf16.mxu0 0
    %1745 = vmatpush1.bf16.xpose.msra.mxu0 0
    %1746 = vmatprep.subr.bf16.mxu0 0
    %1747 = vmatpush1.bf16.xpose.msra.mxu0 0
    %1748 = vmatprep.subr.bf16.mxu0 0
    %1749 = vmatpush1.bf16.xpose.msra.mxu0 0
    %1750 = vmatprep.subr.bf16.mxu0 0
    %1751 = vmatpush1.bf16.xpose.msra.mxu0 0
    %1752 = vmatprep.subr.bf16.mxu0 0
    %1753 = vmatpush1.bf16.xpose.msra.mxu0 0
    %1754 = vmatprep.subr.bf16.mxu0 0
    %1755 = vmatpush1.bf16.xpose.msra.mxu0 0
    %1756 = vmatprep.subr.bf16.mxu0 0
    %1757 = vmatpush1.bf16.xpose.msra.mxu0 0
    %1758 = vmatprep.subr.bf16.mxu0 0
    %1759 = vmatpush1.bf16.xpose.msra.mxu0 0
    %1760 = vmatprep.subr.bf16.mxu0 0
    %1761 = vmatpush1.bf16.xpose.msra.mxu0 0
    %1762 = vmatprep.subr.bf16.mxu0 0
    %1763 = vmatpush1.bf16.xpose.msra.mxu0 0
    %1764 = vmatprep.subr.bf16.mxu0 0
    %1765 = vmatpush1.bf16.xpose.msra.mxu0 0
    %1766 = vmatprep.mubr.bf16.mxu0 0
    %1767 = vmatmul.mubr.bf16.gmra.mrb[0].mxu0 %v1729
    %v1768 = vpop.f32.mrb[0].mxu0
    %v1769 = vadd.f32 0.0, %v1768
    %v1770 = vpop.f32.mrb[0].mxu0
    %v1771 = vpop.f32.mrb[0].mxu0
    %v1772 = vpop.f32.mrb[0].mxu0
    %1773 = vdwg.mxu0
    %v1775 = vsel %vm1497, %v933, 0
    %v1778 = vsel %vm1497, %v1213, 0
    %1780 = vmatprep.subr.bf16.mxu0 0
    %1781 = vmatpush1.bf16.xpose.msra.mxu0 %v1778
    %1782 = vmatprep.subr.bf16.mxu0 0
    %1783 = vmatpush1.bf16.xpose.msra.mxu0 0
    %1784 = vmatprep.subr.bf16.mxu0 0
    %1785 = vmatpush1.bf16.xpose.msra.mxu0 0
    %1786 = vmatprep.subr.bf16.mxu0 0
    %1787 = vmatpush1.bf16.xpose.msra.mxu0 0
    %1788 = vmatprep.subr.bf16.mxu0 0
    %1789 = vmatpush1.bf16.xpose.msra.mxu0 0
    %1790 = vmatprep.subr.bf16.mxu0 0
    %1791 = vmatpush1.bf16.xpose.msra.mxu0 0
    %1792 = vmatprep.subr.bf16.mxu0 0
    %1793 = vmatpush1.bf16.xpose.msra.mxu0 0
    %1794 = vmatprep.subr.bf16.mxu0 0
    %1795 = vmatpush1.bf16.xpose.msra.mxu0 0
    %1796 = vmatprep.subr.bf16.mxu0 0
    %1797 = vmatpush1.bf16.xpose.msra.mxu0 0
    %1798 = vmatprep.subr.bf16.mxu0 0
    %1799 = vmatpush1.bf16.xpose.msra.mxu0 0
    %1800 = vmatprep.subr.bf16.mxu0 0
    %1801 = vmatpush1.bf16.xpose.msra.mxu0 0
    %1802 = vmatprep.subr.bf16.mxu0 0
    %1803 = vmatpush1.bf16.xpose.msra.mxu0 0
    %1804 = vmatprep.subr.bf16.mxu0 0
    %1805 = vmatpush1.bf16.xpose.msra.mxu0 0
    %1806 = vmatprep.subr.bf16.mxu0 0
    %1807 = vmatpush1.bf16.xpose.msra.mxu0 0
    %1808 = vmatprep.subr.bf16.mxu0 0
    %1809 = vmatpush1.bf16.xpose.msra.mxu0 0
    %1810 = vmatprep.subr.bf16.mxu0 0
    %1811 = vmatpush1.bf16.xpose.msra.mxu0 0
    %1812 = vmatprep.mubr.bf16.mxu0 0
    %1813 = vmatmul.mubr.bf16.gmra.mrb[0].mxu0 %v1775
    %v1814 = vpop.f32.mrb[0].mxu0
    %v1815 = vadd.f32 0.0, %v1814
    %v1816 = vpop.f32.mrb[0].mxu0
    %v1817 = vpop.f32.mrb[0].mxu0
    %v1818 = vpop.f32.mrb[0].mxu0
    %1819 = vdwg.mxu0
    %v1821 = vsel %vm1497, %v936, 0
    %v1824 = vsel %vm1497, %v1216, 0
    %1826 = vmatprep.subr.bf16.mxu0 0
    %1827 = vmatpush1.bf16.xpose.msra.mxu0 %v1824
    %1828 = vmatprep.subr.bf16.mxu0 0
    %1829 = vmatpush1.bf16.xpose.msra.mxu0 0
    %1830 = vmatprep.subr.bf16.mxu0 0
    %1831 = vmatpush1.bf16.xpose.msra.mxu0 0
    %1832 = vmatprep.subr.bf16.mxu0 0
    %1833 = vmatpush1.bf16.xpose.msra.mxu0 0
    %1834 = vmatprep.subr.bf16.mxu0 0
    %1835 = vmatpush1.bf16.xpose.msra.mxu0 0
    %1836 = vmatprep.subr.bf16.mxu0 0
    %1837 = vmatpush1.bf16.xpose.msra.mxu0 0
    %1838 = vmatprep.subr.bf16.mxu0 0
    %1839 = vmatpush1.bf16.xpose.msra.mxu0 0
    %1840 = vmatprep.subr.bf16.mxu0 0
    %1841 = vmatpush1.bf16.xpose.msra.mxu0 0
    %1842 = vmatprep.subr.bf16.mxu0 0
    %1843 = vmatpush1.bf16.xpose.msra.mxu0 0
    %1844 = vmatprep.subr.bf16.mxu0 0
    %1845 = vmatpush1.bf16.xpose.msra.mxu0 0
    %1846 = vmatprep.subr.bf16.mxu0 0
    %1847 = vmatpush1.bf16.xpose.msra.mxu0 0
    %1848 = vmatprep.subr.bf16.mxu0 0
    %1849 = vmatpush1.bf16.xpose.msra.mxu0 0
    %1850 = vmatprep.subr.bf16.mxu0 0
    %1851 = vmatpush1.bf16.xpose.msra.mxu0 0
    %1852 = vmatprep.subr.bf16.mxu0 0
    %1853 = vmatpush1.bf16.xpose.msra.mxu0 0
    %1854 = vmatprep.subr.bf16.mxu0 0
    %1855 = vmatpush1.bf16.xpose.msra.mxu0 0
    %1856 = vmatprep.subr.bf16.mxu0 0
    %1857 = vmatpush1.bf16.xpose.msra.mxu0 0
    %1858 = vmatprep.mubr.bf16.mxu0 0
    %1859 = vmatmul.mubr.bf16.gmra.mrb[0].mxu0 %v1821
    %v1860 = vpop.f32.mrb[0].mxu0
    %v1861 = vadd.f32 0.0, %v1860
    %v1862 = vpop.f32.mrb[0].mxu0
    %v1863 = vpop.f32.mrb[0].mxu0
    %v1864 = vpop.f32.mrb[0].mxu0
    %1865 = vdwg.mxu0
    %v1866 = vsel %vm1497, %v1539, -inf
    %1867 = vmax.xlane.f32.xlu0 %v1866
    %v1868 = vpop.xlane.xlu0 %1867
    %v1869 = vsel %vm1497, %v1585, -inf
    %1870 = vmax.xlane.f32.xlu0 %v1869
    %v1871 = vpop.xlane.xlu0 %1870
    %v1872 = vsel %vm1497, %v1631, -inf
    %1873 = vmax.xlane.f32.xlu0 %v1872
    %v1874 = vpop.xlane.xlu0 %1873
    %v1875 = vsel %vm1497, %v1677, -inf
    %1876 = vmax.xlane.f32.xlu0 %v1875
    %v1877 = vpop.xlane.xlu0 %1876
    %v1878 = vsel %vm1497, %v1723, -inf
    %1879 = vmax.xlane.f32.xlu0 %v1878
    %v1880 = vpop.xlane.xlu0 %1879
    %v1881 = vsel %vm1497, %v1769, -inf
    %1882 = vmax.xlane.f32.xlu0 %v1881
    %v1883 = vpop.xlane.xlu0 %1882
    %v1884 = vsel %vm1497, %v1815, -inf
    %1885 = vmax.xlane.f32.xlu0 %v1884
    %v1886 = vpop.xlane.xlu0 %1885
    %v1887 = vsel %vm1497, %v1861, -inf
    %1888 = vmax.xlane.f32.xlu0 %v1887
    %v1889 = vpop.xlane.xlu0 %1888
    %v1890 = vsub.f32 %v1539, %v1868
    %v1891 = vsub.f32 %v1585, %v1871
    %v1892 = vsub.f32 %v1631, %v1874
    %v1893 = vsub.f32 %v1677, %v1877
    %v1894 = vsub.f32 %v1723, %v1880
    %v1895 = vsub.f32 %v1769, %v1883
    %v1896 = vsub.f32 %v1815, %v1886
    %v1897 = vsub.f32 %v1861, %v1889
    %v1898 = vmul.f32 %v1890, 1.442695
    %v1899 = vpow.pop %v1898
    %v1900 = vmul.f32 %v1891, 1.442695
    %v1901 = vpow.pop %v1900
    %v1902 = vmul.f32 %v1892, 1.442695
    %v1903 = vpow.pop %v1902
    %v1904 = vmul.f32 %v1893, 1.442695
    %v1905 = vpow.pop %v1904
    %v1906 = vmul.f32 %v1894, 1.442695
    %v1907 = vpow.pop %v1906
    %v1908 = vmul.f32 %v1895, 1.442695
    %v1909 = vpow.pop %v1908
    %v1910 = vmul.f32 %v1896, 1.442695
    %v1911 = vpow.pop %v1910
    %v1912 = vmul.f32 %v1897, 1.442695
    %v1913 = vpow.pop %v1912
    %v1914 = vsel %vm1497, %v1899, 0.0
    %1915 = vadd.xlane.f32.xlu0 %v1914
    %v1916 = vpop.xlane.xlu0 %1915
    %v1917 = vsel %vm1497, %v1901, 0.0
    %1918 = vadd.xlane.f32.xlu0 %v1917
    %v1919 = vpop.xlane.xlu0 %1918
    %v1920 = vsel %vm1497, %v1903, 0.0
    %1921 = vadd.xlane.f32.xlu0 %v1920
    %v1922 = vpop.xlane.xlu0 %1921
    %v1923 = vsel %vm1497, %v1905, 0.0
    %1924 = vadd.xlane.f32.xlu0 %v1923
    %v1925 = vpop.xlane.xlu0 %1924
    %v1926 = vsel %vm1497, %v1907, 0.0
    %1927 = vadd.xlane.f32.xlu0 %v1926
    %v1928 = vpop.xlane.xlu0 %1927
    %v1929 = vsel %vm1497, %v1909, 0.0
    %1930 = vadd.xlane.f32.xlu0 %v1929
    %v1931 = vpop.xlane.xlu0 %1930
    %v1932 = vsel %vm1497, %v1911, 0.0
    %1933 = vadd.xlane.f32.xlu0 %v1932
    %v1934 = vpop.xlane.xlu0 %1933
    %v1935 = vsel %vm1497, %v1913, 0.0
    %1936 = vadd.xlane.f32.xlu0 %v1935
    %v1937 = vpop.xlane.xlu0 %1936
    %v1938 = vrcp.pop %v1916
    %v1939 = vrcp.pop %v1919
    %v1940 = vrcp.pop %v1922
    %v1941 = vrcp.pop %v1925
    %v1942 = vrcp.pop %v1928
    %v1943 = vrcp.pop %v1931
    %v1944 = vrcp.pop %v1934
    %v1945 = vrcp.pop %v1937
    %v1946 = vmul.f32 %v1899, %v1938
    %v1947 = vmul.f32 %v1901, %v1939
    %v1948 = vmul.f32 %v1903, %v1940
    %v1949 = vmul.f32 %v1905, %v1941
    %v1950 = vmul.f32 %v1907, %v1942
    %v1951 = vmul.f32 %v1909, %v1943
    %v1952 = vmul.f32 %v1911, %v1944
    %v1953 = vmul.f32 %v1913, %v1945
    %v1954 = vpack.c.bf16 %v1946, %v1946
    %v1955 = vpack.c.bf16 %v1947, %v1947
    %v1956 = vpack.c.bf16 %v1948, %v1948
    %v1957 = vpack.c.bf16 %v1949, %v1949
    %v1958 = vpack.c.bf16 %v1950, %v1950
    %v1959 = vpack.c.bf16 %v1951, %v1951
    %v1960 = vpack.c.bf16 %v1952, %v1952
    %v1961 = vpack.c.bf16 %v1953, %v1953
    %v1963 = vsel %vm1497, %v1954, 0
    %vm1965 = vcmask 1043456
    %v1967 = vsel %vm1965, %v1475, 0
    %1969 = vmatprep.subr.bf16.mxu0 0
    %1970 = vmatpush1.bf16.msra.mxu0 %v1967
    %1971 = vmatprep.subr.bf16.mxu0 0
    %1972 = vmatpush1.bf16.msra.mxu0 0
    %1973 = vmatprep.subr.bf16.mxu0 0
    %1974 = vmatpush1.bf16.msra.mxu0 0
    %1975 = vmatprep.subr.bf16.mxu0 0
    %1976 = vmatpush1.bf16.msra.mxu0 0
    %1977 = vmatprep.subr.bf16.mxu0 0
    %1978 = vmatpush1.bf16.msra.mxu0 0
    %1979 = vmatprep.subr.bf16.mxu0 0
    %1980 = vmatpush1.bf16.msra.mxu0 0
    %1981 = vmatprep.subr.bf16.mxu0 0
    %1982 = vmatpush1.bf16.msra.mxu0 0
    %1983 = vmatprep.subr.bf16.mxu0 0
    %1984 = vmatpush1.bf16.msra.mxu0 0
    %1985 = vmatprep.subr.bf16.mxu0 0
    %1986 = vmatpush1.bf16.msra.mxu0 0
    %1987 = vmatprep.subr.bf16.mxu0 0
    %1988 = vmatpush1.bf16.msra.mxu0 0
    %1989 = vmatprep.subr.bf16.mxu0 0
    %1990 = vmatpush1.bf16.msra.mxu0 0
    %1991 = vmatprep.subr.bf16.mxu0 0
    %1992 = vmatpush1.bf16.msra.mxu0 0
    %1993 = vmatprep.subr.bf16.mxu0 0
    %1994 = vmatpush1.bf16.msra.mxu0 0
    %1995 = vmatprep.subr.bf16.mxu0 0
    %1996 = vmatpush1.bf16.msra.mxu0 0
    %1997 = vmatprep.subr.bf16.mxu0 0
    %1998 = vmatpush1.bf16.msra.mxu0 0
    %1999 = vmatprep.subr.bf16.mxu0 0
    %2000 = vmatpush1.bf16.msra.mxu0 0
    %2001 = vmatprep.mubr.bf16.mxu0 0
    %2002 = vmatmul.mubr.bf16.gmra.mrb[0].mxu0 %v1963
    %v2003 = vpop.f32.mrb[0].mxu0
    %v2004 = vadd.f32 0.0, %v2003
    %v2005 = vpop.f32.mrb[0].mxu0
    %v2006 = vpop.f32.mrb[0].mxu0
    %v2007 = vpop.f32.mrb[0].mxu0
    %2008 = vdwg.mxu0
    %v2010 = vsel %vm1497, %v1955, 0
    %v2013 = vsel %vm1965, %v1478, 0
    %2015 = vmatprep.subr.bf16.mxu0 0
    %2016 = vmatpush1.bf16.msra.mxu0 %v2013
    %2017 = vmatprep.subr.bf16.mxu0 0
    %2018 = vmatpush1.bf16.msra.mxu0 0
    %2019 = vmatprep.subr.bf16.mxu0 0
    %2020 = vmatpush1.bf16.msra.mxu0 0
    %2021 = vmatprep.subr.bf16.mxu0 0
    %2022 = vmatpush1.bf16.msra.mxu0 0
    %2023 = vmatprep.subr.bf16.mxu0 0
    %2024 = vmatpush1.bf16.msra.mxu0 0
    %2025 = vmatprep.subr.bf16.mxu0 0
    %2026 = vmatpush1.bf16.msra.mxu0 0
    %2027 = vmatprep.subr.bf16.mxu0 0
    %2028 = vmatpush1.bf16.msra.mxu0 0
    %2029 = vmatprep.subr.bf16.mxu0 0
    %2030 = vmatpush1.bf16.msra.mxu0 0
    %2031 = vmatprep.subr.bf16.mxu0 0
    %2032 = vmatpush1.bf16.msra.mxu0 0
    %2033 = vmatprep.subr.bf16.mxu0 0
    %2034 = vmatpush1.bf16.msra.mxu0 0
    %2035 = vmatprep.subr.bf16.mxu0 0
    %2036 = vmatpush1.bf16.msra.mxu0 0
    %2037 = vmatprep.subr.bf16.mxu0 0
    %2038 = vmatpush1.bf16.msra.mxu0 0
    %2039 = vmatprep.subr.bf16.mxu0 0
    %2040 = vmatpush1.bf16.msra.mxu0 0
    %2041 = vmatprep.subr.bf16.mxu0 0
    %2042 = vmatpush1.bf16.msra.mxu0 0
    %2043 = vmatprep.subr.bf16.mxu0 0
    %2044 = vmatpush1.bf16.msra.mxu0 0
    %2045 = vmatprep.subr.bf16.mxu0 0
    %2046 = vmatpush1.bf16.msra.mxu0 0
    %2047 = vmatprep.mubr.bf16.mxu0 0
    %2048 = vmatmul.mubr.bf16.gmra.mrb[0].mxu0 %v2010
    %v2049 = vpop.f32.mrb[0].mxu0
    %v2050 = vadd.f32 0.0, %v2049
    %v2051 = vpop.f32.mrb[0].mxu0
    %v2052 = vpop.f32.mrb[0].mxu0
    %v2053 = vpop.f32.mrb[0].mxu0
    %2054 = vdwg.mxu0
    %v2056 = vsel %vm1497, %v1956, 0
    %v2059 = vsel %vm1965, %v1481, 0
    %2061 = vmatprep.subr.bf16.mxu0 0
    %2062 = vmatpush1.bf16.msra.mxu0 %v2059
    %2063 = vmatprep.subr.bf16.mxu0 0
    %2064 = vmatpush1.bf16.msra.mxu0 0
    %2065 = vmatprep.subr.bf16.mxu0 0
    %2066 = vmatpush1.bf16.msra.mxu0 0
    %2067 = vmatprep.subr.bf16.mxu0 0
    %2068 = vmatpush1.bf16.msra.mxu0 0
    %2069 = vmatprep.subr.bf16.mxu0 0
    %2070 = vmatpush1.bf16.msra.mxu0 0
    %2071 = vmatprep.subr.bf16.mxu0 0
    %2072 = vmatpush1.bf16.msra.mxu0 0
    %2073 = vmatprep.subr.bf16.mxu0 0
    %2074 = vmatpush1.bf16.msra.mxu0 0
    %2075 = vmatprep.subr.bf16.mxu0 0
    %2076 = vmatpush1.bf16.msra.mxu0 0
    %2077 = vmatprep.subr.bf16.mxu0 0
    %2078 = vmatpush1.bf16.msra.mxu0 0
    %2079 = vmatprep.subr.bf16.mxu0 0
    %2080 = vmatpush1.bf16.msra.mxu0 0
    %2081 = vmatprep.subr.bf16.mxu0 0
    %2082 = vmatpush1.bf16.msra.mxu0 0
    %2083 = vmatprep.subr.bf16.mxu0 0
    %2084 = vmatpush1.bf16.msra.mxu0 0
    %2085 = vmatprep.subr.bf16.mxu0 0
    %2086 = vmatpush1.bf16.msra.mxu0 0
    %2087 = vmatprep.subr.bf16.mxu0 0
    %2088 = vmatpush1.bf16.msra.mxu0 0
    %2089 = vmatprep.subr.bf16.mxu0 0
    %2090 = vmatpush1.bf16.msra.mxu0 0
    %2091 = vmatprep.subr.bf16.mxu0 0
    %2092 = vmatpush1.bf16.msra.mxu0 0
    %2093 = vmatprep.mubr.bf16.mxu0 0
    %2094 = vmatmul.mubr.bf16.gmra.mrb[0].mxu0 %v2056
    %v2095 = vpop.f32.mrb[0].mxu0
    %v2096 = vadd.f32 0.0, %v2095
    %v2097 = vpop.f32.mrb[0].mxu0
    %v2098 = vpop.f32.mrb[0].mxu0
    %v2099 = vpop.f32.mrb[0].mxu0
    %2100 = vdwg.mxu0
    %v2102 = vsel %vm1497, %v1957, 0
    %v2105 = vsel %vm1965, %v1484, 0
    %2107 = vmatprep.subr.bf16.mxu0 0
    %2108 = vmatpush1.bf16.msra.mxu0 %v2105
    %2109 = vmatprep.subr.bf16.mxu0 0
    %2110 = vmatpush1.bf16.msra.mxu0 0
    %2111 = vmatprep.subr.bf16.mxu0 0
    %2112 = vmatpush1.bf16.msra.mxu0 0
    %2113 = vmatprep.subr.bf16.mxu0 0
    %2114 = vmatpush1.bf16.msra.mxu0 0
    %2115 = vmatprep.subr.bf16.mxu0 0
    %2116 = vmatpush1.bf16.msra.mxu0 0
    %2117 = vmatprep.subr.bf16.mxu0 0
    %2118 = vmatpush1.bf16.msra.mxu0 0
    %2119 = vmatprep.subr.bf16.mxu0 0
    %2120 = vmatpush1.bf16.msra.mxu0 0
    %2121 = vmatprep.subr.bf16.mxu0 0
    %2122 = vmatpush1.bf16.msra.mxu0 0
    %2123 = vmatprep.subr.bf16.mxu0 0
    %2124 = vmatpush1.bf16.msra.mxu0 0
    %2125 = vmatprep.subr.bf16.mxu0 0
    %2126 = vmatpush1.bf16.msra.mxu0 0
    %2127 = vmatprep.subr.bf16.mxu0 0
    %2128 = vmatpush1.bf16.msra.mxu0 0
    %2129 = vmatprep.subr.bf16.mxu0 0
    %2130 = vmatpush1.bf16.msra.mxu0 0
    %2131 = vmatprep.subr.bf16.mxu0 0
    %2132 = vmatpush1.bf16.msra.mxu0 0
    %2133 = vmatprep.subr.bf16.mxu0 0
    %2134 = vmatpush1.bf16.msra.mxu0 0
    %2135 = vmatprep.subr.bf16.mxu0 0
    %2136 = vmatpush1.bf16.msra.mxu0 0
    %2137 = vmatprep.subr.bf16.mxu0 0
    %2138 = vmatpush1.bf16.msra.mxu0 0
    %2139 = vmatprep.mubr.bf16.mxu0 0
    %2140 = vmatmul.mubr.bf16.gmra.mrb[0].mxu0 %v2102
    %v2141 = vpop.f32.mrb[0].mxu0
    %v2142 = vadd.f32 0.0, %v2141
    %v2143 = vpop.f32.mrb[0].mxu0
    %v2144 = vpop.f32.mrb[0].mxu0
    %v2145 = vpop.f32.mrb[0].mxu0
    %2146 = vdwg.mxu0
    %v2148 = vsel %vm1497, %v1958, 0
    %v2151 = vsel %vm1965, %v1487, 0
    %2153 = vmatprep.subr.bf16.mxu0 0
    %2154 = vmatpush1.bf16.msra.mxu0 %v2151
    %2155 = vmatprep.subr.bf16.mxu0 0
    %2156 = vmatpush1.bf16.msra.mxu0 0
    %2157 = vmatprep.subr.bf16.mxu0 0
    %2158 = vmatpush1.bf16.msra.mxu0 0
    %2159 = vmatprep.subr.bf16.mxu0 0
    %2160 = vmatpush1.bf16.msra.mxu0 0
    %2161 = vmatprep.subr.bf16.mxu0 0
    %2162 = vmatpush1.bf16.msra.mxu0 0
    %2163 = vmatprep.subr.bf16.mxu0 0
    %2164 = vmatpush1.bf16.msra.mxu0 0
    %2165 = vmatprep.subr.bf16.mxu0 0
    %2166 = vmatpush1.bf16.msra.mxu0 0
    %2167 = vmatprep.subr.bf16.mxu0 0
    %2168 = vmatpush1.bf16.msra.mxu0 0
    %2169 = vmatprep.subr.bf16.mxu0 0
    %2170 = vmatpush1.bf16.msra.mxu0 0
    %2171 = vmatprep.subr.bf16.mxu0 0
    %2172 = vmatpush1.bf16.msra.mxu0 0
    %2173 = vmatprep.subr.bf16.mxu0 0
    %2174 = vmatpush1.bf16.msra.mxu0 0
    %2175 = vmatprep.subr.bf16.mxu0 0
    %2176 = vmatpush1.bf16.msra.mxu0 0
    %2177 = vmatprep.subr.bf16.mxu0 0
    %2178 = vmatpush1.bf16.msra.mxu0 0
    %2179 = vmatprep.subr.bf16.mxu0 0
    %2180 = vmatpush1.bf16.msra.mxu0 0
    %2181 = vmatprep.subr.bf16.mxu0 0
    %2182 = vmatpush1.bf16.msra.mxu0 0
    %2183 = vmatprep.subr.bf16.mxu0 0
    %2184 = vmatpush1.bf16.msra.mxu0 0
    %2185 = vmatprep.mubr.bf16.mxu0 0
    %2186 = vmatmul.mubr.bf16.gmra.mrb[0].mxu0 %v2148
    %v2187 = vpop.f32.mrb[0].mxu0
    %v2188 = vadd.f32 0.0, %v2187
    %v2189 = vpop.f32.mrb[0].mxu0
    %v2190 = vpop.f32.mrb[0].mxu0
    %v2191 = vpop.f32.mrb[0].mxu0
    %2192 = vdwg.mxu0
    %v2194 = vsel %vm1497, %v1959, 0
    %v2197 = vsel %vm1965, %v1490, 0
    %2199 = vmatprep.subr.bf16.mxu0 0
    %2200 = vmatpush1.bf16.msra.mxu0 %v2197
    %2201 = vmatprep.subr.bf16.mxu0 0
    %2202 = vmatpush1.bf16.msra.mxu0 0
    %2203 = vmatprep.subr.bf16.mxu0 0
    %2204 = vmatpush1.bf16.msra.mxu0 0
    %2205 = vmatprep.subr.bf16.mxu0 0
    %2206 = vmatpush1.bf16.msra.mxu0 0
    %2207 = vmatprep.subr.bf16.mxu0 0
    %2208 = vmatpush1.bf16.msra.mxu0 0
    %2209 = vmatprep.subr.bf16.mxu0 0
    %2210 = vmatpush1.bf16.msra.mxu0 0
    %2211 = vmatprep.subr.bf16.mxu0 0
    %2212 = vmatpush1.bf16.msra.mxu0 0
    %2213 = vmatprep.subr.bf16.mxu0 0
    %2214 = vmatpush1.bf16.msra.mxu0 0
    %2215 = vmatprep.subr.bf16.mxu0 0
    %2216 = vmatpush1.bf16.msra.mxu0 0
    %2217 = vmatprep.subr.bf16.mxu0 0
    %2218 = vmatpush1.bf16.msra.mxu0 0
    %2219 = vmatprep.subr.bf16.mxu0 0
    %2220 = vmatpush1.bf16.msra.mxu0 0
    %2221 = vmatprep.subr.bf16.mxu0 0
    %2222 = vmatpush1.bf16.msra.mxu0 0
    %2223 = vmatprep.subr.bf16.mxu0 0
    %2224 = vmatpush1.bf16.msra.mxu0 0
    %2225 = vmatprep.subr.bf16.mxu0 0
    %2226 = vmatpush1.bf16.msra.mxu0 0
    %2227 = vmatprep.subr.bf16.mxu0 0
    %2228 = vmatpush1.bf16.msra.mxu0 0
    %2229 = vmatprep.subr.bf16.mxu0 0
    %2230 = vmatpush1.bf16.msra.mxu0 0
    %2231 = vmatprep.mubr.bf16.mxu0 0
    %2232 = vmatmul.mubr.bf16.gmra.mrb[0].mxu0 %v2194
    %v2233 = vpop.f32.mrb[0].mxu0
    %v2234 = vadd.f32 0.0, %v2233
    %v2235 = vpop.f32.mrb[0].mxu0
    %v2236 = vpop.f32.mrb[0].mxu0
    %v2237 = vpop.f32.mrb[0].mxu0
    %2238 = vdwg.mxu0
    %v2240 = vsel %vm1497, %v1960, 0
    %v2243 = vsel %vm1965, %v1493, 0
    %2245 = vmatprep.subr.bf16.mxu0 0
    %2246 = vmatpush1.bf16.msra.mxu0 %v2243
    %2247 = vmatprep.subr.bf16.mxu0 0
    %2248 = vmatpush1.bf16.msra.mxu0 0
    %2249 = vmatprep.subr.bf16.mxu0 0
    %2250 = vmatpush1.bf16.msra.mxu0 0
    %2251 = vmatprep.subr.bf16.mxu0 0
    %2252 = vmatpush1.bf16.msra.mxu0 0
    %2253 = vmatprep.subr.bf16.mxu0 0
    %2254 = vmatpush1.bf16.msra.mxu0 0
    %2255 = vmatprep.subr.bf16.mxu0 0
    %2256 = vmatpush1.bf16.msra.mxu0 0
    %2257 = vmatprep.subr.bf16.mxu0 0
    %2258 = vmatpush1.bf16.msra.mxu0 0
    %2259 = vmatprep.subr.bf16.mxu0 0
    %2260 = vmatpush1.bf16.msra.mxu0 0
    %2261 = vmatprep.subr.bf16.mxu0 0
    %2262 = vmatpush1.bf16.msra.mxu0 0
    %2263 = vmatprep.subr.bf16.mxu0 0
    %2264 = vmatpush1.bf16.msra.mxu0 0
    %2265 = vmatprep.subr.bf16.mxu0 0
    %2266 = vmatpush1.bf16.msra.mxu0 0
    %2267 = vmatprep.subr.bf16.mxu0 0
    %2268 = vmatpush1.bf16.msra.mxu0 0
    %2269 = vmatprep.subr.bf16.mxu0 0
    %2270 = vmatpush1.bf16.msra.mxu0 0
    %2271 = vmatprep.subr.bf16.mxu0 0
    %2272 = vmatpush1.bf16.msra.mxu0 0
    %2273 = vmatprep.subr.bf16.mxu0 0
    %2274 = vmatpush1.bf16.msra.mxu0 0
    %2275 = vmatprep.subr.bf16.mxu0 0
    %2276 = vmatpush1.bf16.msra.mxu0 0
    %2277 = vmatprep.mubr.bf16.mxu0 0
    %2278 = vmatmul.mubr.bf16.gmra.mrb[0].mxu0 %v2240
    %v2279 = vpop.f32.mrb[0].mxu0
    %v2280 = vadd.f32 0.0, %v2279
    %v2281 = vpop.f32.mrb[0].mxu0
    %v2282 = vpop.f32.mrb[0].mxu0
    %v2283 = vpop.f32.mrb[0].mxu0
    %2284 = vdwg.mxu0
    %v2286 = vsel %vm1497, %v1961, 0
    %v2289 = vsel %vm1965, %v1496, 0
    %2291 = vmatprep.subr.bf16.mxu0 0
    %2292 = vmatpush1.bf16.msra.mxu0 %v2289
    %2293 = vmatprep.subr.bf16.mxu0 0
    %2294 = vmatpush1.bf16.msra.mxu0 0
    %2295 = vmatprep.subr.bf16.mxu0 0
    %2296 = vmatpush1.bf16.msra.mxu0 0
    %2297 = vmatprep.subr.bf16.mxu0 0
    %2298 = vmatpush1.bf16.msra.mxu0 0
    %2299 = vmatprep.subr.bf16.mxu0 0
    %2300 = vmatpush1.bf16.msra.mxu0 0
    %2301 = vmatprep.subr.bf16.mxu0 0
    %2302 = vmatpush1.bf16.msra.mxu0 0
    %2303 = vmatprep.subr.bf16.mxu0 0
    %2304 = vmatpush1.bf16.msra.mxu0 0
    %2305 = vmatprep.subr.bf16.mxu0 0
    %2306 = vmatpush1.bf16.msra.mxu0 0
    %2307 = vmatprep.subr.bf16.mxu0 0
    %2308 = vmatpush1.bf16.msra.mxu0 0
    %2309 = vmatprep.subr.bf16.mxu0 0
    %2310 = vmatpush1.bf16.msra.mxu0 0
    %2311 = vmatprep.subr.bf16.mxu0 0
    %2312 = vmatpush1.bf16.msra.mxu0 0
    %2313 = vmatprep.subr.bf16.mxu0 0
    %2314 = vmatpush1.bf16.msra.mxu0 0
    %2315 = vmatprep.subr.bf16.mxu0 0
    %2316 = vmatpush1.bf16.msra.mxu0 0
    %2317 = vmatprep.subr.bf16.mxu0 0
    %2318 = vmatpush1.bf16.msra.mxu0 0
    %2319 = vmatprep.subr.bf16.mxu0 0
    %2320 = vmatpush1.bf16.msra.mxu0 0
    %2321 = vmatprep.subr.bf16.mxu0 0
    %2322 = vmatpush1.bf16.msra.mxu0 0
    %2323 = vmatprep.mubr.bf16.mxu0 0
    %2324 = vmatmul.mubr.bf16.gmra.mrb[0].mxu0 %v2286
    %v2325 = vpop.f32.mrb[0].mxu0
    %v2326 = vadd.f32 0.0, %v2325
    %v2327 = vpop.f32.mrb[0].mxu0
    %v2328 = vpop.f32.mrb[0].mxu0
    %v2329 = vpop.f32.mrb[0].mxu0
    %2330 = vdwg.mxu0
    %v2331 = vpack.c.bf16 %v2004, %v2004
    %v2333 = vunpack.c.l.s4 1983009808
    %v2334 = vunpack.c.0.s8 %v2333
    %v2335 = vlaneseq
    %v2336 = vshrl.u32 %v2335, 7
    %v2337 = vsub.s32 %v2334, %v2336
    %v2338 = vrot.slane %v2331, %v2337
    %v2339 = vpack.c.bf16 %v2096, %v2096
    %v2341 = vunpack.c.l.s4 1983009808
    %v2342 = vunpack.c.0.s8 %v2341
    %v2343 = vlaneseq
    %v2344 = vshrl.u32 %v2343, 7
    %v2345 = vsub.s32 %v2342, %v2344
    %v2346 = vrot.slane %v2339, %v2345
    %v2347 = vcombine.low %v2338, %v2346
    %v2348 = vcombine.high %v2338, %v2346
    %v2350 = vunpack.c.l.s4 1934713408
    %v2351 = vunpack.c.0.s8 %v2350
    %v2352 = vlaneseq
    %v2353 = vshrl.u32 %v2352, 7
    %v2354 = vsub.s32 %v2351, %v2353
    %v2355 = vrot.slane %v2347, %v2354
    %v2357 = vunpack.c.l.s4 1934713408
    %v2358 = vunpack.c.0.s8 %v2357
    %v2359 = vlaneseq
    %v2360 = vshrl.u32 %v2359, 7
    %v2361 = vsub.s32 %v2358, %v2360
    %v2362 = vrot.slane %v2348, %v2361
    %v2363 = vcombine.high %v2355, 0
    %v2364 = vcombine.high %v2362, 0
    %v2365 = vpack.c.bf16 %v2050, %v2050
    %v2367 = vunpack.c.l.s4 1983009808
    %v2368 = vunpack.c.0.s8 %v2367
    %v2369 = vlaneseq
    %v2370 = vshrl.u32 %v2369, 7
    %v2371 = vsub.s32 %v2368, %v2370
    %v2372 = vrot.slane %v2365, %v2371
    %v2373 = vpack.c.bf16 %v2142, %v2142
    %v2375 = vunpack.c.l.s4 1983009808
    %v2376 = vunpack.c.0.s8 %v2375
    %v2377 = vlaneseq
    %v2378 = vshrl.u32 %v2377, 7
    %v2379 = vsub.s32 %v2376, %v2378
    %v2380 = vrot.slane %v2373, %v2379
    %v2381 = vcombine.low %v2372, %v2380
    %v2382 = vcombine.high %v2372, %v2380
    %v2384 = vunpack.c.l.s4 1934713408
    %v2385 = vunpack.c.0.s8 %v2384
    %v2386 = vlaneseq
    %v2387 = vshrl.u32 %v2386, 7
    %v2388 = vsub.s32 %v2385, %v2387
    %v2389 = vrot.slane %v2381, %v2388
    %v2391 = vunpack.c.l.s4 1934713408
    %v2392 = vunpack.c.0.s8 %v2391
    %v2393 = vlaneseq
    %v2394 = vshrl.u32 %v2393, 7
    %v2395 = vsub.s32 %v2392, %v2394
    %v2396 = vrot.slane %v2382, %v2395
    %v2397 = vcombine.high %v2389, 0
    %v2398 = vcombine.high %v2396, 0
    %v2399 = vpack.c.bf16 %v2188, %v2188
    %v2401 = vunpack.c.l.s4 1983009808
    %v2402 = vunpack.c.0.s8 %v2401
    %v2403 = vlaneseq
    %v2404 = vshrl.u32 %v2403, 7
    %v2405 = vsub.s32 %v2402, %v2404
    %v2406 = vrot.slane %v2399, %v2405
    %v2407 = vpack.c.bf16 %v2280, %v2280
    %v2409 = vunpack.c.l.s4 1983009808
    %v2410 = vunpack.c.0.s8 %v2409
    %v2411 = vlaneseq
    %v2412 = vshrl.u32 %v2411, 7
    %v2413 = vsub.s32 %v2410, %v2412
    %v2414 = vrot.slane %v2407, %v2413
    %v2415 = vcombine.low %v2406, %v2414
    %v2416 = vcombine.high %v2406, %v2414
    %v2418 = vunpack.c.l.s4 1934713408
    %v2419 = vunpack.c.0.s8 %v2418
    %v2420 = vlaneseq
    %v2421 = vshrl.u32 %v2420, 7
    %v2422 = vsub.s32 %v2419, %v2421
    %v2423 = vrot.slane %v2415, %v2422
    %v2425 = vunpack.c.l.s4 1934713408
    %v2426 = vunpack.c.0.s8 %v2425
    %v2427 = vlaneseq
    %v2428 = vshrl.u32 %v2427, 7
    %v2429 = vsub.s32 %v2426, %v2428
    %v2430 = vrot.slane %v2416, %v2429
    %v2431 = vcombine.high %v2423, 0
    %v2432 = vcombine.high %v2430, 0
    %v2433 = vpack.c.bf16 %v2234, %v2234
    %v2435 = vunpack.c.l.s4 1983009808
    %v2436 = vunpack.c.0.s8 %v2435
    %v2437 = vlaneseq
    %v2438 = vshrl.u32 %v2437, 7
    %v2439 = vsub.s32 %v2436, %v2438
    %v2440 = vrot.slane %v2433, %v2439
    %v2441 = vpack.c.bf16 %v2326, %v2326
    %v2443 = vunpack.c.l.s4 1983009808
    %v2444 = vunpack.c.0.s8 %v2443
    %v2445 = vlaneseq
    %v2446 = vshrl.u32 %v2445, 7
    %v2447 = vsub.s32 %v2444, %v2446
    %v2448 = vrot.slane %v2441, %v2447
    %v2449 = vcombine.low %v2440, %v2448
    %v2450 = vcombine.high %v2440, %v2448
    %v2452 = vunpack.c.l.s4 1934713408
    %v2453 = vunpack.c.0.s8 %v2452
    %v2454 = vlaneseq
    %v2455 = vshrl.u32 %v2454, 7
    %v2456 = vsub.s32 %v2453, %v2455
    %v2457 = vrot.slane %v2449, %v2456
    %v2459 = vunpack.c.l.s4 1934713408
    %v2460 = vunpack.c.0.s8 %v2459
    %v2461 = vlaneseq
    %v2462 = vshrl.u32 %v2461, 7
    %v2463 = vsub.s32 %v2460, %v2462
    %v2464 = vrot.slane %v2450, %v2463
    %v2465 = vcombine.high %v2457, 0
    %v2466 = vcombine.high %v2464, 0
    %v2469 = vpack.i.b16 %v2389, %v2355
    %v2471 = vshrl.u32 %v2355, 16
    %v2472 = vshrl.u32 %v2389, 16
    %v2473 = vpack.i.b16 %v2472, %v2471
    %v2477 = vpack.i.b16 %v2397, %v2363
    %v2479 = vshrl.u32 %v2363, 16
    %v2480 = vshrl.u32 %v2397, 16
    %v2481 = vpack.i.b16 %v2480, %v2479
    %v2485 = vpack.i.b16 %v2396, %v2362
    %v2487 = vshrl.u32 %v2362, 16
    %v2488 = vshrl.u32 %v2396, 16
    %v2489 = vpack.i.b16 %v2488, %v2487
    %v2493 = vpack.i.b16 %v2398, %v2364
    %v2495 = vshrl.u32 %v2364, 16
    %v2496 = vshrl.u32 %v2398, 16
    %v2497 = vpack.i.b16 %v2496, %v2495
    %v2501 = vpack.i.b16 %v2457, %v2423
    %v2503 = vshrl.u32 %v2423, 16
    %v2504 = vshrl.u32 %v2457, 16
    %v2505 = vpack.i.b16 %v2504, %v2503
    %v2509 = vpack.i.b16 %v2465, %v2431
    %v2511 = vshrl.u32 %v2431, 16
    %v2512 = vshrl.u32 %v2465, 16
    %v2513 = vpack.i.b16 %v2512, %v2511
    %v2517 = vpack.i.b16 %v2464, %v2430
    %v2519 = vshrl.u32 %v2430, 16
    %v2520 = vshrl.u32 %v2464, 16
    %v2521 = vpack.i.b16 %v2520, %v2519
    %v2525 = vpack.i.b16 %v2466, %v2432
    %v2527 = vshrl.u32 %v2432, 16
    %v2528 = vshrl.u32 %v2466, 16
    %v2529 = vpack.i.b16 %v2528, %v2527
    %v2531 = vcombine.low %v2469, %v2477
    %v2533 = vunpack.c.l.s4 1983009808
    %v2534 = vunpack.c.0.s8 %v2533
    %v2535 = vlaneseq
    %v2536 = vshrl.u32 %v2535, 7
    %v2537 = vsub.s32 %v2534, %v2536
    %v2538 = vrot.slane %v2531, %v2537
    %v2539 = vcombine.low %v2473, %v2481
    %v2541 = vunpack.c.l.s4 1983009808
    %v2542 = vunpack.c.0.s8 %v2541
    %v2543 = vlaneseq
    %v2544 = vshrl.u32 %v2543, 7
    %v2545 = vsub.s32 %v2542, %v2544
    %v2546 = vrot.slane %v2539, %v2545
    %v2547 = vcombine.low %v2485, %v2493
    %v2549 = vunpack.c.l.s4 1983009808
    %v2550 = vunpack.c.0.s8 %v2549
    %v2551 = vlaneseq
    %v2552 = vshrl.u32 %v2551, 7
    %v2553 = vsub.s32 %v2550, %v2552
    %v2554 = vrot.slane %v2547, %v2553
    %v2555 = vcombine.low %v2489, %v2497
    %v2557 = vunpack.c.l.s4 1983009808
    %v2558 = vunpack.c.0.s8 %v2557
    %v2559 = vlaneseq
    %v2560 = vshrl.u32 %v2559, 7
    %v2561 = vsub.s32 %v2558, %v2560
    %v2562 = vrot.slane %v2555, %v2561
    %v2563 = vcombine.low %v2538, %v2546
    %v2565 = vunpack.c.l.s4 1934713408
    %v2566 = vunpack.c.0.s8 %v2565
    %v2567 = vlaneseq
    %v2568 = vshrl.u32 %v2567, 7
    %v2569 = vsub.s32 %v2566, %v2568
    %v2570 = vrot.slane %v2563, %v2569
    %v2571 = vcombine.low %v2554, %v2562
    %v2573 = vunpack.c.l.s4 1934713408
    %v2574 = vunpack.c.0.s8 %v2573
    %v2575 = vlaneseq
    %v2576 = vshrl.u32 %v2575, 7
    %v2577 = vsub.s32 %v2574, %v2576
    %v2578 = vrot.slane %v2571, %v2577
    %v2579 = vcombine.low %v2570, %v2578
    %v2580 = vcombine.high %v2570, %v2578
    %v2581 = vcombine.low %v2501, %v2509
    %v2583 = vunpack.c.l.s4 1983009808
    %v2584 = vunpack.c.0.s8 %v2583
    %v2585 = vlaneseq
    %v2586 = vshrl.u32 %v2585, 7
    %v2587 = vsub.s32 %v2584, %v2586
    %v2588 = vrot.slane %v2581, %v2587
    %v2589 = vcombine.low %v2505, %v2513
    %v2591 = vunpack.c.l.s4 1983009808
    %v2592 = vunpack.c.0.s8 %v2591
    %v2593 = vlaneseq
    %v2594 = vshrl.u32 %v2593, 7
    %v2595 = vsub.s32 %v2592, %v2594
    %v2596 = vrot.slane %v2589, %v2595
    %v2597 = vcombine.low %v2517, %v2525
    %v2599 = vunpack.c.l.s4 1983009808
    %v2600 = vunpack.c.0.s8 %v2599
    %v2601 = vlaneseq
    %v2602 = vshrl.u32 %v2601, 7
    %v2603 = vsub.s32 %v2600, %v2602
    %v2604 = vrot.slane %v2597, %v2603
    %v2605 = vcombine.low %v2521, %v2529
    %v2607 = vunpack.c.l.s4 1983009808
    %v2608 = vunpack.c.0.s8 %v2607
    %v2609 = vlaneseq
    %v2610 = vshrl.u32 %v2609, 7
    %v2611 = vsub.s32 %v2608, %v2610
    %v2612 = vrot.slane %v2605, %v2611
    %v2613 = vcombine.low %v2588, %v2596
    %v2615 = vunpack.c.l.s4 1934713408
    %v2616 = vunpack.c.0.s8 %v2615
    %v2617 = vlaneseq
    %v2618 = vshrl.u32 %v2617, 7
    %v2619 = vsub.s32 %v2616, %v2618
    %v2620 = vrot.slane %v2613, %v2619
    %v2621 = vcombine.low %v2604, %v2612
    %v2623 = vunpack.c.l.s4 1934713408
    %v2624 = vunpack.c.0.s8 %v2623
    %v2625 = vlaneseq
    %v2626 = vshrl.u32 %v2625, 7
    %v2627 = vsub.s32 %v2624, %v2626
    %v2628 = vrot.slane %v2621, %v2627
    %v2629 = vcombine.low %v2620, %v2628
    %v2630 = vcombine.high %v2620, %v2628
    %v2633 = vpack.i.b16 %v2629, %v2579
    %v2634 = vshrl.u32 %v2579, 16
    %v2635 = vshrl.u32 %v2629, 16
    %v2636 = vpack.i.b16 %v2635, %v2634
    %v2639 = vpack.i.b16 %v2630, %v2580
    %v2640 = vshrl.u32 %v2580, 16
    %v2641 = vshrl.u32 %v2630, 16
    %v2642 = vpack.i.b16 %v2641, %v2640
    %2643 = vrot.lane.b32.xlu0 %v2636, 8
    %v2644 = vpop.permute.xlu0 %2643
    %2645 = vrot.lane.b32.xlu0 %v2639, 16
    %v2646 = vpop.permute.xlu0 %2645
    %2647 = vrot.lane.b32.xlu0 %v2642, 24
    %v2648 = vpop.permute.xlu0 %2647
    %v2651 = vsel %vm1497, %v2633, %v2644
    %vm2652 = vcmask 130048
    %v2654 = vsel %vm2652, %v2651, %v2646
    %vm2655 = vcmask 195584
    %v2657 = vsel %vm2655, %v2654, %v2648
    %v2658 = vld [vmem:[#allocation11] sm:$0xf]
    %v2659 = vld [vmem:[#allocation11 + $0x4] sm:$0xf]
    %v2660 = vld [vmem:[#allocation11 + $0x8] sm:$0xf]
    %v2661 = vld [vmem:[#allocation11 + $0xc] sm:$0xf]
    %v2662 = vld [vmem:[#allocation17] sm:$0x1]
    %v2664 = vlaneseq
    %v2665 = vshrl.u32 %v2664, 7
    %v2666 = vsub.s32 0, %v2665
    %v2667 = vrot.slane %v2662, %v2666
    %v2673 = vunpack.c.l.b16 %v2658
    %v2674 = vunpack.c.l.b16 %v2659
    %v2675 = vunpack.c.l.b16 %v2660
    %v2676 = vunpack.c.l.b16 %v2661
    %v2677 = vpack.c.b16 %v2674, %v2673
    %v2678 = vpack.c.b16 %v2676, %v2675
    %v2681 = vsel %vm430, %v2657, 0
    %2683 = vmatprep.subr.bf16.mxu0 0
    %2684 = vmatpush1.bf16.msra.mxu0 %v2677
    %2685 = vmatprep.subr.bf16.mxu0 0
    %2686 = vmatpush1.bf16.msra.mxu0 %v2678
    %2687 = vmatprep.subr.bf16.mxu0 0
    %2688 = vmatpush1.bf16.msra.mxu0 0
    %2689 = vmatprep.subr.bf16.mxu0 0
    %2690 = vmatpush1.bf16.msra.mxu0 0
    %2691 = vmatprep.subr.bf16.mxu0 0
    %2692 = vmatpush1.bf16.msra.mxu0 0
    %2693 = vmatprep.subr.bf16.mxu0 0
    %2694 = vmatpush1.bf16.msra.mxu0 0
    %2695 = vmatprep.subr.bf16.mxu0 0
    %2696 = vmatpush1.bf16.msra.mxu0 0
    %2697 = vmatprep.subr.bf16.mxu0 0
    %2698 = vmatpush1.bf16.msra.mxu0 0
    %2699 = vmatprep.subr.bf16.mxu0 0
    %2700 = vmatpush1.bf16.msra.mxu0 0
    %2701 = vmatprep.subr.bf16.mxu0 0
    %2702 = vmatpush1.bf16.msra.mxu0 0
    %2703 = vmatprep.subr.bf16.mxu0 0
    %2704 = vmatpush1.bf16.msra.mxu0 0
    %2705 = vmatprep.subr.bf16.mxu0 0
    %2706 = vmatpush1.bf16.msra.mxu0 0
    %2707 = vmatprep.subr.bf16.mxu0 0
    %2708 = vmatpush1.bf16.msra.mxu0 0
    %2709 = vmatprep.subr.bf16.mxu0 0
    %2710 = vmatpush1.bf16.msra.mxu0 0
    %2711 = vmatprep.subr.bf16.mxu0 0
    %2712 = vmatpush1.bf16.msra.mxu0 0
    %2713 = vmatprep.subr.bf16.mxu0 0
    %2714 = vmatpush1.bf16.msra.mxu0 0
    %2715 = vmatprep.mubr.bf16.mxu0 0
    %2716 = vmatmul.mubr.bf16.gmra.mrb[0].mxu0 %v2681
    %v2717 = vpop.f32.mrb[0].mxu0
    %v2718 = vadd.f32 %v2667, %v2717
    %v2719 = vpop.f32.mrb[0].mxu0
    %v2720 = vpop.f32.mrb[0].mxu0
    %v2721 = vadd.f32 %v2667, %v2720
    %v2722 = vpop.f32.mrb[0].mxu0
    %2723 = vdwg.mxu0
    %v2726 = vcombine.high %v2718, %v2718
    %v2728 = vunpack.c.l.s4 1983009808
    %v2729 = vunpack.c.0.s8 %v2728
    %v2730 = vlaneseq
    %v2731 = vshrl.u32 %v2730, 7
    %v2732 = vsub.s32 %v2729, %v2731
    %v2733 = vrot.slane %v2718, %v2732
    %v2735 = vunpack.c.l.s4 1983009808
    %v2736 = vunpack.c.0.s8 %v2735
    %v2737 = vlaneseq
    %v2738 = vshrl.u32 %v2737, 7
    %v2739 = vsub.s32 %v2736, %v2738
    %v2740 = vrot.slane %v2726, %v2739
    %v2741 = vcombine.high %v2733, %v2733
    %v2742 = vcombine.high %v2740, %v2740
    %v2743 = vcombine.high %v2721, %v2721
    %v2745 = vunpack.c.l.s4 1983009808
    %v2746 = vunpack.c.0.s8 %v2745
    %v2747 = vlaneseq
    %v2748 = vshrl.u32 %v2747, 7
    %v2749 = vsub.s32 %v2746, %v2748
    %v2750 = vrot.slane %v2721, %v2749
    %v2752 = vunpack.c.l.s4 1983009808
    %v2753 = vunpack.c.0.s8 %v2752
    %v2754 = vlaneseq
    %v2755 = vshrl.u32 %v2754, 7
    %v2756 = vsub.s32 %v2753, %v2755
    %v2757 = vrot.slane %v2743, %v2756
    %v2758 = vcombine.high %v2750, %v2750
    %v2759 = vcombine.high %v2757, %v2757
    %v2768 = vadd.f32 %v306, %v2733
    %v2769 = vadd.f32 %v307, %v2741
    %v2770 = vadd.f32 %v308, %v2740
    %v2771 = vadd.f32 %v309, %v2742
    %v2772 = vadd.f32 %v310, %v2750
    %v2773 = vadd.f32 %v311, %v2758
    %v2774 = vadd.f32 %v312, %v2757
    %v2775 = vadd.f32 %v313, %v2759
    %v2776 = vld [vmem:[%s49] sm:$0x1]
    %v2777 = vld [vmem:[%s51] sm:$0x1]
    %v2786 = vcombine.low %v2768, %v2769
    %v2787 = vcombine.low %v2770, %v2771
    %v2789 = vunpack.c.l.s4 1983009808
    %v2790 = vunpack.c.0.s8 %v2789
    %v2791 = vlaneseq
    %v2792 = vshrl.u32 %v2791, 7
    %v2793 = vsub.s32 %v2790, %v2792
    %v2794 = vrot.slane %v2786, %v2793
    %v2796 = vunpack.c.l.s4 1983009808
    %v2797 = vunpack.c.0.s8 %v2796
    %v2798 = vlaneseq
    %v2799 = vshrl.u32 %v2798, 7
    %v2800 = vsub.s32 %v2797, %v2799
    %v2801 = vrot.slane %v2787, %v2800
    %v2802 = vcombine.low %v2794, %v2801
    %v2803 = vcombine.low %v2772, %v2773
    %v2804 = vcombine.low %v2774, %v2775
    %v2806 = vunpack.c.l.s4 1983009808
    %v2807 = vunpack.c.0.s8 %v2806
    %v2808 = vlaneseq
    %v2809 = vshrl.u32 %v2808, 7
    %v2810 = vsub.s32 %v2807, %v2809
    %v2811 = vrot.slane %v2803, %v2810
    %v2813 = vunpack.c.l.s4 1983009808
    %v2814 = vunpack.c.0.s8 %v2813
    %v2815 = vlaneseq
    %v2816 = vshrl.u32 %v2815, 7
    %v2817 = vsub.s32 %v2814, %v2816
    %v2818 = vrot.slane %v2804, %v2817
    %v2819 = vcombine.low %v2811, %v2818
    %v2822 = vsel %vm430, %v2802, 0.0
    %2823 = vadd.xlane.f32.xlu0 %v2822
    %v2824 = vpop.xlane.xlu0 %2823
    %v2825 = vsel %vm430, %v2819, 0.0
    %2826 = vadd.xlane.f32.xlu0 %v2825
    %v2827 = vpop.xlane.xlu0 %2826
    %v2828 = vrcp.pop 32.0
    %v2829 = vmul.f32 %v2824, %v2828
    %v2830 = vmul.f32 %v2827, %v2828
    %v2834 = vunpack.c.l.s4 269488144
    %v2835 = vunpack.c.0.s8 %v2834
    %v2836 = vlaneseq
    %v2837 = vshrl.u32 %v2836, 7
    %v2838 = vsub.s32 %v2835, %v2837
    %v2839 = vrot.slane %v2829, %v2838
    %v2841 = vunpack.c.l.s4 842150450
    %v2842 = vunpack.c.0.s8 %v2841
    %v2843 = vlaneseq
    %v2844 = vshrl.u32 %v2843, 7
    %v2845 = vsub.s32 %v2842, %v2844
    %v2846 = vrot.slane %v2829, %v2845
    %v2848 = vunpack.c.l.s4 1414812756
    %v2849 = vunpack.c.0.s8 %v2848
    %v2850 = vlaneseq
    %v2851 = vshrl.u32 %v2850, 7
    %v2852 = vsub.s32 %v2849, %v2851
    %v2853 = vrot.slane %v2829, %v2852
    %v2855 = vunpack.c.l.s4 1987475062
    %v2856 = vunpack.c.0.s8 %v2855
    %v2857 = vlaneseq
    %v2858 = vshrl.u32 %v2857, 7
    %v2859 = vsub.s32 %v2856, %v2858
    %v2860 = vrot.slane %v2829, %v2859
    %v2862 = vunpack.c.l.s4 269488144
    %v2863 = vunpack.c.0.s8 %v2862
    %v2864 = vlaneseq
    %v2865 = vshrl.u32 %v2864, 7
    %v2866 = vsub.s32 %v2863, %v2865
    %v2867 = vrot.slane %v2830, %v2866
    %v2869 = vunpack.c.l.s4 842150450
    %v2870 = vunpack.c.0.s8 %v2869
    %v2871 = vlaneseq
    %v2872 = vshrl.u32 %v2871, 7
    %v2873 = vsub.s32 %v2870, %v2872
    %v2874 = vrot.slane %v2830, %v2873
    %v2876 = vunpack.c.l.s4 1414812756
    %v2877 = vunpack.c.0.s8 %v2876
    %v2878 = vlaneseq
    %v2879 = vshrl.u32 %v2878, 7
    %v2880 = vsub.s32 %v2877, %v2879
    %v2881 = vrot.slane %v2830, %v2880
    %v2883 = vunpack.c.l.s4 1987475062
    %v2884 = vunpack.c.0.s8 %v2883
    %v2885 = vlaneseq
    %v2886 = vshrl.u32 %v2885, 7
    %v2887 = vsub.s32 %v2884, %v2886
    %v2888 = vrot.slane %v2830, %v2887
    %v2897 = vsub.f32 %v2768, %v2839
    %v2898 = vsub.f32 %v2769, %v2846
    %v2899 = vsub.f32 %v2770, %v2853
    %v2900 = vsub.f32 %v2771, %v2860
    %v2901 = vsub.f32 %v2772, %v2867
    %v2902 = vsub.f32 %v2773, %v2874
    %v2903 = vsub.f32 %v2774, %v2881
    %v2904 = vsub.f32 %v2775, %v2888
    %v2905 = vmul.f32 %v2897, %v2897
    %v2906 = vmul.f32 %v2898, %v2898
    %v2907 = vmul.f32 %v2899, %v2899
    %v2908 = vmul.f32 %v2900, %v2900
    %v2909 = vmul.f32 %v2901, %v2901
    %v2910 = vmul.f32 %v2902, %v2902
    %v2911 = vmul.f32 %v2903, %v2903
    %v2912 = vmul.f32 %v2904, %v2904
    %v2921 = vcombine.low %v2905, %v2906
    %v2922 = vcombine.low %v2907, %v2908
    %v2924 = vunpack.c.l.s4 1983009808
    %v2925 = vunpack.c.0.s8 %v2924
    %v2926 = vlaneseq
    %v2927 = vshrl.u32 %v2926, 7
    %v2928 = vsub.s32 %v2925, %v2927
    %v2929 = vrot.slane %v2921, %v2928
    %v2931 = vunpack.c.l.s4 1983009808
    %v2932 = vunpack.c.0.s8 %v2931
    %v2933 = vlaneseq
    %v2934 = vshrl.u32 %v2933, 7
    %v2935 = vsub.s32 %v2932, %v2934
    %v2936 = vrot.slane %v2922, %v2935
    %v2937 = vcombine.low %v2929, %v2936
    %v2938 = vcombine.low %v2909, %v2910
    %v2939 = vcombine.low %v2911, %v2912
    %v2941 = vunpack.c.l.s4 1983009808
    %v2942 = vunpack.c.0.s8 %v2941
    %v2943 = vlaneseq
    %v2944 = vshrl.u32 %v2943, 7
    %v2945 = vsub.s32 %v2942, %v2944
    %v2946 = vrot.slane %v2938, %v2945
    %v2948 = vunpack.c.l.s4 1983009808
    %v2949 = vunpack.c.0.s8 %v2948
    %v2950 = vlaneseq
    %v2951 = vshrl.u32 %v2950, 7
    %v2952 = vsub.s32 %v2949, %v2951
    %v2953 = vrot.slane %v2939, %v2952
    %v2954 = vcombine.low %v2946, %v2953
    %v2957 = vsel %vm430, %v2937, 0.0
    %2958 = vadd.xlane.f32.xlu0 %v2957
    %v2959 = vpop.xlane.xlu0 %2958
    %v2960 = vsel %vm430, %v2954, 0.0
    %2961 = vadd.xlane.f32.xlu0 %v2960
    %v2962 = vpop.xlane.xlu0 %2961
    %v2963 = vmul.f32 %v2959, %v2828
    %v2964 = vmul.f32 %v2962, %v2828
    %v2965 = vadd.f32 %v2963, 1e-05
    %v2966 = vadd.f32 %v2964, 1e-05
    %v2967 = vrsqrt.pop %v2965
    %v2968 = vrsqrt.pop %v2966
    %v2972 = vunpack.c.l.s4 269488144
    %v2973 = vunpack.c.0.s8 %v2972
    %v2974 = vlaneseq
    %v2975 = vshrl.u32 %v2974, 7
    %v2976 = vsub.s32 %v2973, %v2975
    %v2977 = vrot.slane %v2967, %v2976
    %v2979 = vunpack.c.l.s4 842150450
    %v2980 = vunpack.c.0.s8 %v2979
    %v2981 = vlaneseq
    %v2982 = vshrl.u32 %v2981, 7
    %v2983 = vsub.s32 %v2980, %v2982
    %v2984 = vrot.slane %v2967, %v2983
    %v2986 = vunpack.c.l.s4 1414812756
    %v2987 = vunpack.c.0.s8 %v2986
    %v2988 = vlaneseq
    %v2989 = vshrl.u32 %v2988, 7
    %v2990 = vsub.s32 %v2987, %v2989
    %v2991 = vrot.slane %v2967, %v2990
    %v2993 = vunpack.c.l.s4 1987475062
    %v2994 = vunpack.c.0.s8 %v2993
    %v2995 = vlaneseq
    %v2996 = vshrl.u32 %v2995, 7
    %v2997 = vsub.s32 %v2994, %v2996
    %v2998 = vrot.slane %v2967, %v2997
    %v3000 = vunpack.c.l.s4 269488144
    %v3001 = vunpack.c.0.s8 %v3000
    %v3002 = vlaneseq
    %v3003 = vshrl.u32 %v3002, 7
    %v3004 = vsub.s32 %v3001, %v3003
    %v3005 = vrot.slane %v2968, %v3004
    %v3007 = vunpack.c.l.s4 842150450
    %v3008 = vunpack.c.0.s8 %v3007
    %v3009 = vlaneseq
    %v3010 = vshrl.u32 %v3009, 7
    %v3011 = vsub.s32 %v3008, %v3010
    %v3012 = vrot.slane %v2968, %v3011
    %v3014 = vunpack.c.l.s4 1414812756
    %v3015 = vunpack.c.0.s8 %v3014
    %v3016 = vlaneseq
    %v3017 = vshrl.u32 %v3016, 7
    %v3018 = vsub.s32 %v3015, %v3017
    %v3019 = vrot.slane %v2968, %v3018
    %v3021 = vunpack.c.l.s4 1987475062
    %v3022 = vunpack.c.0.s8 %v3021
    %v3023 = vlaneseq
    %v3024 = vshrl.u32 %v3023, 7
    %v3025 = vsub.s32 %v3022, %v3024
    %v3026 = vrot.slane %v2968, %v3025
    %v3035 = vmul.f32 %v2897, %v2977
    %v3036 = vmul.f32 %v2898, %v2984
    %v3037 = vmul.f32 %v2899, %v2991
    %v3038 = vmul.f32 %v2900, %v2998
    %v3039 = vmul.f32 %v2901, %v3005
    %v3040 = vmul.f32 %v2902, %v3012
    %v3041 = vmul.f32 %v2903, %v3019
    %v3042 = vmul.f32 %v2904, %v3026
    %v3044 = vlaneseq
    %v3045 = vshrl.u32 %v3044, 7
    %v3046 = vsub.s32 0, %v3045
    %v3047 = vrot.slane %v2776, %v3046
    %v3048 = vcombine.high %v3047, %v3047
    %v3050 = vunpack.c.l.s4 1983009808
    %v3051 = vunpack.c.0.s8 %v3050
    %v3052 = vlaneseq
    %v3053 = vshrl.u32 %v3052, 7
    %v3054 = vsub.s32 %v3051, %v3053
    %v3055 = vrot.slane %v3047, %v3054
    %v3057 = vunpack.c.l.s4 1983009808
    %v3058 = vunpack.c.0.s8 %v3057
    %v3059 = vlaneseq
    %v3060 = vshrl.u32 %v3059, 7
    %v3061 = vsub.s32 %v3058, %v3060
    %v3062 = vrot.slane %v3048, %v3061
    %v3063 = vcombine.high %v3055, %v3055
    %v3064 = vcombine.high %v3062, %v3062
    %v3069 = vmul.f32 %v3035, %v3055
    %v3070 = vmul.f32 %v3036, %v3063
    %v3071 = vmul.f32 %v3037, %v3062
    %v3072 = vmul.f32 %v3038, %v3064
    %v3073 = vmul.f32 %v3039, %v3055
    %v3074 = vmul.f32 %v3040, %v3063
    %v3075 = vmul.f32 %v3041, %v3062
    %v3076 = vmul.f32 %v3042, %v3064
    %v3078 = vlaneseq
    %v3079 = vshrl.u32 %v3078, 7
    %v3080 = vsub.s32 0, %v3079
    %v3081 = vrot.slane %v2777, %v3080
    %v3082 = vcombine.high %v3081, %v3081
    %v3084 = vunpack.c.l.s4 1983009808
    %v3085 = vunpack.c.0.s8 %v3084
    %v3086 = vlaneseq
    %v3087 = vshrl.u32 %v3086, 7
    %v3088 = vsub.s32 %v3085, %v3087
    %v3089 = vrot.slane %v3081, %v3088
    %v3091 = vunpack.c.l.s4 1983009808
    %v3092 = vunpack.c.0.s8 %v3091
    %v3093 = vlaneseq
    %v3094 = vshrl.u32 %v3093, 7
    %v3095 = vsub.s32 %v3092, %v3094
    %v3096 = vrot.slane %v3082, %v3095
    %v3097 = vcombine.high %v3089, %v3089
    %v3098 = vcombine.high %v3096, %v3096
    %v3103 = vadd.f32 %v3069, %v3089
    %v3104 = vadd.f32 %v3070, %v3097
    %v3105 = vadd.f32 %v3071, %v3096
    %v3106 = vadd.f32 %v3072, %v3098
    %v3107 = vadd.f32 %v3073, %v3089
    %v3108 = vadd.f32 %v3074, %v3097
    %v3109 = vadd.f32 %v3075, %v3096
    %v3110 = vadd.f32 %v3076, %v3098
    %v3111 = vadd.f32 %v3103, %v314
    %v3112 = vadd.f32 %v3104, %v315
    %v3113 = vadd.f32 %v3105, %v316
    %v3114 = vadd.f32 %v3106, %v317
    %v3115 = vadd.f32 %v3107, %v318
    %v3116 = vadd.f32 %v3108, %v319
    %v3117 = vadd.f32 %v3109, %v320
    %v3118 = vadd.f32 %v3110, %v321
    %v3127 = vcombine.low %v3111, %v3112
    %v3128 = vcombine.low %v3113, %v3114
    %v3130 = vunpack.c.l.s4 1983009808
    %v3131 = vunpack.c.0.s8 %v3130
    %v3132 = vlaneseq
    %v3133 = vshrl.u32 %v3132, 7
    %v3134 = vsub.s32 %v3131, %v3133
    %v3135 = vrot.slane %v3127, %v3134
    %v3137 = vunpack.c.l.s4 1983009808
    %v3138 = vunpack.c.0.s8 %v3137
    %v3139 = vlaneseq
    %v3140 = vshrl.u32 %v3139, 7
    %v3141 = vsub.s32 %v3138, %v3140
    %v3142 = vrot.slane %v3128, %v3141
    %v3143 = vcombine.low %v3135, %v3142
    %v3144 = vcombine.low %v3115, %v3116
    %v3145 = vcombine.low %v3117, %v3118
    %v3147 = vunpack.c.l.s4 1983009808
    %v3148 = vunpack.c.0.s8 %v3147
    %v3149 = vlaneseq
    %v3150 = vshrl.u32 %v3149, 7
    %v3151 = vsub.s32 %v3148, %v3150
    %v3152 = vrot.slane %v3144, %v3151
    %v3154 = vunpack.c.l.s4 1983009808
    %v3155 = vunpack.c.0.s8 %v3154
    %v3156 = vlaneseq
    %v3157 = vshrl.u32 %v3156, 7
    %v3158 = vsub.s32 %v3155, %v3157
    %v3159 = vrot.slane %v3145, %v3158
    %v3160 = vcombine.low %v3152, %v3159
    %v3163 = vpack.c.bf16 %v3160, %v3143
    %v3164 = vld [vmem:[%s25] sm:$0xf]
    %v3165 = vld [vmem:[%s25 + $0x4] sm:$0xf]
    %v3166 = vld [vmem:[%s25 + $0x8] sm:$0xf]
    %v3167 = vld [vmem:[%s25 + $0xc] sm:$0xf]
    %v3168 = vld [vmem:[#allocation22] sm:$0x1]
    %v3170 = vlaneseq
    %v3171 = vshrl.u32 %v3170, 7
    %v3172 = vsub.s32 0, %v3171
    %v3173 = vrot.slane %v3168, %v3172
    %v3179 = vunpack.c.l.b16 %v3164
    %v3180 = vunpack.c.l.b16 %v3165
    %v3181 = vunpack.c.l.b16 %v3166
    %v3182 = vunpack.c.l.b16 %v3167
    %v3183 = vpack.c.b16 %v3180, %v3179
    %v3184 = vpack.c.b16 %v3182, %v3181
    %v3188 = vsel %vm430, %v3163, 0
    %3190 = vmatprep.subr.bf16.mxu0 0
    %3191 = vmatpush1.bf16.msra.mxu0 %v3183
    %3192 = vmatprep.subr.bf16.mxu0 0
    %3193 = vmatpush1.bf16.msra.mxu0 %v3184
    %3194 = vmatprep.subr.bf16.mxu0 0
    %3195 = vmatpush1.bf16.msra.mxu0 0
    %3196 = vmatprep.subr.bf16.mxu0 0
    %3197 = vmatpush1.bf16.msra.mxu0 0
    %3198 = vmatprep.subr.bf16.mxu0 0
    %3199 = vmatpush1.bf16.msra.mxu0 0
    %3200 = vmatprep.subr.bf16.mxu0 0
    %3201 = vmatpush1.bf16.msra.mxu0 0
    %3202 = vmatprep.subr.bf16.mxu0 0
    %3203 = vmatpush1.bf16.msra.mxu0 0
    %3204 = vmatprep.subr.bf16.mxu0 0
    %3205 = vmatpush1.bf16.msra.mxu0 0
    %3206 = vmatprep.subr.bf16.mxu0 0
    %3207 = vmatpush1.bf16.msra.mxu0 0
    %3208 = vmatprep.subr.bf16.mxu0 0
    %3209 = vmatpush1.bf16.msra.mxu0 0
    %3210 = vmatprep.subr.bf16.mxu0 0
    %3211 = vmatpush1.bf16.msra.mxu0 0
    %3212 = vmatprep.subr.bf16.mxu0 0
    %3213 = vmatpush1.bf16.msra.mxu0 0
    %3214 = vmatprep.subr.bf16.mxu0 0
    %3215 = vmatpush1.bf16.msra.mxu0 0
    %3216 = vmatprep.subr.bf16.mxu0 0
    %3217 = vmatpush1.bf16.msra.mxu0 0
    %3218 = vmatprep.subr.bf16.mxu0 0
    %3219 = vmatpush1.bf16.msra.mxu0 0
    %3220 = vmatprep.subr.bf16.mxu0 0
    %3221 = vmatpush1.bf16.msra.mxu0 0
    %3222 = vmatprep.mubr.bf16.mxu0 0
    %3223 = vmatmul.mubr.bf16.gmra.mrb[0].mxu0 %v3188
    %v3224 = vpop.f32.mrb[0].mxu0
    %v3225 = vadd.f32 %v3173, %v3224
    %v3226 = vpop.f32.mrb[0].mxu0
    %v3227 = vpop.f32.mrb[0].mxu0
    %v3228 = vadd.f32 %v3173, %v3227
    %v3229 = vpop.f32.mrb[0].mxu0
    %3230 = vdwg.mxu0
    %v3231 = vadd.f32 %v322, %v338
    %v3232 = vadd.f32 %v323, %v339
    %v3233 = vadd.f32 %v324, %v340
    %v3234 = vadd.f32 %v325, %v341
    %v3235 = vadd.f32 %v326, %v342
    %v3236 = vadd.f32 %v327, %v343
    %v3237 = vadd.f32 %v328, %v344
    %v3238 = vadd.f32 %v329, %v345
    %v3239 = vadd.f32 %v330, %v346
    %v3240 = vadd.f32 %v331, %v347
    %v3241 = vadd.f32 %v332, %v348
    %v3242 = vadd.f32 %v333, %v349
    %v3243 = vadd.f32 %v334, %v350
    %v3244 = vadd.f32 %v335, %v351
    %v3245 = vadd.f32 %v336, %v352
    %v3246 = vadd.f32 %v337, %v353
    %v3263 = vcombine.low %v3231, %v3232
    %v3264 = vcombine.low %v3233, %v3234
    %v3266 = vunpack.c.l.s4 1983009808
    %v3267 = vunpack.c.0.s8 %v3266
    %v3268 = vlaneseq
    %v3269 = vshrl.u32 %v3268, 7
    %v3270 = vsub.s32 %v3267, %v3269
    %v3271 = vrot.slane %v3263, %v3270
    %v3273 = vunpack.c.l.s4 1983009808
    %v3274 = vunpack.c.0.s8 %v3273
    %v3275 = vlaneseq
    %v3276 = vshrl.u32 %v3275, 7
    %v3277 = vsub.s32 %v3274, %v3276
    %v3278 = vrot.slane %v3264, %v3277
    %v3279 = vcombine.low %v3271, %v3278
    %v3280 = vcombine.low %v3235, %v3236
    %v3281 = vcombine.low %v3237, %v3238
    %v3283 = vunpack.c.l.s4 1983009808
    %v3284 = vunpack.c.0.s8 %v3283
    %v3285 = vlaneseq
    %v3286 = vshrl.u32 %v3285, 7
    %v3287 = vsub.s32 %v3284, %v3286
    %v3288 = vrot.slane %v3280, %v3287
    %v3290 = vunpack.c.l.s4 1983009808
    %v3291 = vunpack.c.0.s8 %v3290
    %v3292 = vlaneseq
    %v3293 = vshrl.u32 %v3292, 7
    %v3294 = vsub.s32 %v3291, %v3293
    %v3295 = vrot.slane %v3281, %v3294
    %v3296 = vcombine.low %v3288, %v3295
    %v3297 = vcombine.low %v3239, %v3240
    %v3298 = vcombine.low %v3241, %v3242
    %v3300 = vunpack.c.l.s4 1983009808
    %v3301 = vunpack.c.0.s8 %v3300
    %v3302 = vlaneseq
    %v3303 = vshrl.u32 %v3302, 7
    %v3304 = vsub.s32 %v3301, %v3303
    %v3305 = vrot.slane %v3297, %v3304
    %v3307 = vunpack.c.l.s4 1983009808
    %v3308 = vunpack.c.0.s8 %v3307
    %v3309 = vlaneseq
    %v3310 = vshrl.u32 %v3309, 7
    %v3311 = vsub.s32 %v3308, %v3310
    %v3312 = vrot.slane %v3298, %v3311
    %v3313 = vcombine.low %v3305, %v3312
    %v3314 = vcombine.low %v3243, %v3244
    %v3315 = vcombine.low %v3245, %v3246
    %v3317 = vunpack.c.l.s4 1983009808
    %v3318 = vunpack.c.0.s8 %v3317
    %v3319 = vlaneseq
    %v3320 = vshrl.u32 %v3319, 7
    %v3321 = vsub.s32 %v3318, %v3320
    %v3322 = vrot.slane %v3314, %v3321
    %v3324 = vunpack.c.l.s4 1983009808
    %v3325 = vunpack.c.0.s8 %v3324
    %v3326 = vlaneseq
    %v3327 = vshrl.u32 %v3326, 7
    %v3328 = vsub.s32 %v3325, %v3327
    %v3329 = vrot.slane %v3315, %v3328
    %v3330 = vcombine.low %v3322, %v3329
    %v3335 = vpack.c.bf16 %v3296, %v3279
    %v3336 = vpack.c.bf16 %v3330, %v3313
    %v3337 = vld [vmem:[%s27] sm:$0xf]
    %v3338 = vld [vmem:[%s27 + $0x4] sm:$0xf]
    %v3339 = vld [vmem:[%s27 + $0x8] sm:$0xf]
    %v3340 = vld [vmem:[%s27 + $0xc] sm:$0xf]
    %v3341 = vld [vmem:[#allocation23] sm:$0x1]
    %v3343 = vlaneseq
    %v3344 = vshrl.u32 %v3343, 7
    %v3345 = vsub.s32 0, %v3344
    %v3346 = vrot.slane %v3341, %v3345
    %v3352 = vunpack.c.l.b16 %v3337
    %v3353 = vunpack.c.l.b16 %v3338
    %v3354 = vunpack.c.l.b16 %v3339
    %v3355 = vunpack.c.l.b16 %v3340
    %v3356 = vpack.c.b16 %v3353, %v3352
    %v3357 = vpack.c.b16 %v3355, %v3354
    %v3361 = vsel %vm430, %v3335, 0
    %v3364 = vsel %vm430, %v3336, 0
    %3366 = vmatprep.subr.bf16.mxu0 0
    %3367 = vmatpush1.bf16.msra.mxu0 %v3356
    %3368 = vmatprep.subr.bf16.mxu0 0
    %3369 = vmatpush1.bf16.msra.mxu0 %v3357
    %3370 = vmatprep.subr.bf16.mxu0 0
    %3371 = vmatpush1.bf16.msra.mxu0 0
    %3372 = vmatprep.subr.bf16.mxu0 0
    %3373 = vmatpush1.bf16.msra.mxu0 0
    %3374 = vmatprep.subr.bf16.mxu0 0
    %3375 = vmatpush1.bf16.msra.mxu0 0
    %3376 = vmatprep.subr.bf16.mxu0 0
    %3377 = vmatpush1.bf16.msra.mxu0 0
    %3378 = vmatprep.subr.bf16.mxu0 0
    %3379 = vmatpush1.bf16.msra.mxu0 0
    %3380 = vmatprep.subr.bf16.mxu0 0
    %3381 = vmatpush1.bf16.msra.mxu0 0
    %3382 = vmatprep.subr.bf16.mxu0 0
    %3383 = vmatpush1.bf16.msra.mxu0 0
    %3384 = vmatprep.subr.bf16.mxu0 0
    %3385 = vmatpush1.bf16.msra.mxu0 0
    %3386 = vmatprep.subr.bf16.mxu0 0
    %3387 = vmatpush1.bf16.msra.mxu0 0
    %3388 = vmatprep.subr.bf16.mxu0 0
    %3389 = vmatpush1.bf16.msra.mxu0 0
    %3390 = vmatprep.subr.bf16.mxu0 0
    %3391 = vmatpush1.bf16.msra.mxu0 0
    %3392 = vmatprep.subr.bf16.mxu0 0
    %3393 = vmatpush1.bf16.msra.mxu0 0
    %3394 = vmatprep.subr.bf16.mxu0 0
    %3395 = vmatpush1.bf16.msra.mxu0 0
    %3396 = vmatprep.subr.bf16.mxu0 0
    %3397 = vmatpush1.bf16.msra.mxu0 0
    %3398 = vmatprep.mubr.bf16.mxu0 0
    %3399 = vmatmul.mubr.bf16.gmra.mrb[0].mxu0 %v3361
    %v3400 = vpop.f32.mrb[0].mxu0
    %v3401 = vadd.f32 %v3346, %v3400
    %v3402 = vpop.f32.mrb[0].mxu0
    %v3403 = vpop.f32.mrb[0].mxu0
    %v3404 = vadd.f32 %v3346, %v3403
    %v3405 = vpop.f32.mrb[0].mxu0
    %3406 = vmatprep.mubr.bf16.mxu0 0
    %3407 = vmatmul.mubr.bf16.gmra.mrb[0].mxu0 %v3364
    %v3408 = vpop.f32.mrb[0].mxu0
    %v3409 = vadd.f32 %v3346, %v3408
    %v3410 = vpop.f32.mrb[0].mxu0
    %v3411 = vpop.f32.mrb[0].mxu0
    %v3412 = vadd.f32 %v3346, %v3411
    %v3413 = vpop.f32.mrb[0].mxu0
    %3414 = vdwg.mxu0
    %v3431 = vcombine.low %v322, %v323
    %v3432 = vcombine.low %v324, %v325
    %v3434 = vunpack.c.l.s4 1983009808
    %v3435 = vunpack.c.0.s8 %v3434
    %v3436 = vlaneseq
    %v3437 = vshrl.u32 %v3436, 7
    %v3438 = vsub.s32 %v3435, %v3437
    %v3439 = vrot.slane %v3431, %v3438
    %v3441 = vunpack.c.l.s4 1983009808
    %v3442 = vunpack.c.0.s8 %v3441
    %v3443 = vlaneseq
    %v3444 = vshrl.u32 %v3443, 7
    %v3445 = vsub.s32 %v3442, %v3444
    %v3446 = vrot.slane %v3432, %v3445
    %v3447 = vcombine.low %v3439, %v3446
    %v3448 = vcombine.low %v326, %v327
    %v3449 = vcombine.low %v328, %v329
    %v3451 = vunpack.c.l.s4 1983009808
    %v3452 = vunpack.c.0.s8 %v3451
    %v3453 = vlaneseq
    %v3454 = vshrl.u32 %v3453, 7
    %v3455 = vsub.s32 %v3452, %v3454
    %v3456 = vrot.slane %v3448, %v3455
    %v3458 = vunpack.c.l.s4 1983009808
    %v3459 = vunpack.c.0.s8 %v3458
    %v3460 = vlaneseq
    %v3461 = vshrl.u32 %v3460, 7
    %v3462 = vsub.s32 %v3459, %v3461
    %v3463 = vrot.slane %v3449, %v3462
    %v3464 = vcombine.low %v3456, %v3463
    %v3465 = vcombine.low %v330, %v331
    %v3466 = vcombine.low %v332, %v333
    %v3468 = vunpack.c.l.s4 1983009808
    %v3469 = vunpack.c.0.s8 %v3468
    %v3470 = vlaneseq
    %v3471 = vshrl.u32 %v3470, 7
    %v3472 = vsub.s32 %v3469, %v3471
    %v3473 = vrot.slane %v3465, %v3472
    %v3475 = vunpack.c.l.s4 1983009808
    %v3476 = vunpack.c.0.s8 %v3475
    %v3477 = vlaneseq
    %v3478 = vshrl.u32 %v3477, 7
    %v3479 = vsub.s32 %v3476, %v3478
    %v3480 = vrot.slane %v3466, %v3479
    %v3481 = vcombine.low %v3473, %v3480
    %v3482 = vcombine.low %v334, %v335
    %v3483 = vcombine.low %v336, %v337
    %v3485 = vunpack.c.l.s4 1983009808
    %v3486 = vunpack.c.0.s8 %v3485
    %v3487 = vlaneseq
    %v3488 = vshrl.u32 %v3487, 7
    %v3489 = vsub.s32 %v3486, %v3488
    %v3490 = vrot.slane %v3482, %v3489
    %v3492 = vunpack.c.l.s4 1983009808
    %v3493 = vunpack.c.0.s8 %v3492
    %v3494 = vlaneseq
    %v3495 = vshrl.u32 %v3494, 7
    %v3496 = vsub.s32 %v3493, %v3495
    %v3497 = vrot.slane %v3483, %v3496
    %v3498 = vcombine.low %v3490, %v3497
    %v3503 = vpack.c.bf16 %v3464, %v3447
    %v3504 = vpack.c.bf16 %v3498, %v3481
    %v3505 = vld [vmem:[#allocation19] sm:$0xf]
    %v3506 = vld [vmem:[#allocation19 + $0x4] sm:$0xf]
    %v3507 = vld [vmem:[#allocation19 + $0x8] sm:$0xf]
    %v3508 = vld [vmem:[#allocation19 + $0xc] sm:$0xf]
    %v3509 = vld [vmem:[%s37] sm:$0x1]
    %v3511 = vlaneseq
    %v3512 = vshrl.u32 %v3511, 7
    %v3513 = vsub.s32 0, %v3512
    %v3514 = vrot.slane %v3509, %v3513
    %v3520 = vunpack.c.l.b16 %v3505
    %v3521 = vunpack.c.l.b16 %v3506
    %v3522 = vunpack.c.l.b16 %v3507
    %v3523 = vunpack.c.l.b16 %v3508
    %v3524 = vpack.c.b16 %v3521, %v3520
    %v3525 = vpack.c.b16 %v3523, %v3522
    %v3529 = vsel %vm430, %v3503, 0
    %v3532 = vsel %vm430, %v3504, 0
    %3534 = vmatprep.subr.bf16.mxu0 0
    %3535 = vmatpush1.bf16.msra.mxu0 %v3524
    %3536 = vmatprep.subr.bf16.mxu0 0
    %3537 = vmatpush1.bf16.msra.mxu0 %v3525
    %3538 = vmatprep.subr.bf16.mxu0 0
    %3539 = vmatpush1.bf16.msra.mxu0 0
    %3540 = vmatprep.subr.bf16.mxu0 0
    %3541 = vmatpush1.bf16.msra.mxu0 0
    %3542 = vmatprep.subr.bf16.mxu0 0
    %3543 = vmatpush1.bf16.msra.mxu0 0
    %3544 = vmatprep.subr.bf16.mxu0 0
    %3545 = vmatpush1.bf16.msra.mxu0 0
    %3546 = vmatprep.subr.bf16.mxu0 0
    %3547 = vmatpush1.bf16.msra.mxu0 0
    %3548 = vmatprep.subr.bf16.mxu0 0
    %3549 = vmatpush1.bf16.msra.mxu0 0
    %3550 = vmatprep.subr.bf16.mxu0 0
    %3551 = vmatpush1.bf16.msra.mxu0 0
    %3552 = vmatprep.subr.bf16.mxu0 0
    %3553 = vmatpush1.bf16.msra.mxu0 0
    %3554 = vmatprep.subr.bf16.mxu0 0
    %3555 = vmatpush1.bf16.msra.mxu0 0
    %3556 = vmatprep.subr.bf16.mxu0 0
    %3557 = vmatpush1.bf16.msra.mxu0 0
    %3558 = vmatprep.subr.bf16.mxu0 0
    %3559 = vmatpush1.bf16.msra.mxu0 0
    %3560 = vmatprep.subr.bf16.mxu0 0
    %3561 = vmatpush1.bf16.msra.mxu0 0
    %3562 = vmatprep.subr.bf16.mxu0 0
    %3563 = vmatpush1.bf16.msra.mxu0 0
    %3564 = vmatprep.subr.bf16.mxu0 0
    %3565 = vmatpush1.bf16.msra.mxu0 0
    %3566 = vmatprep.mubr.bf16.mxu0 0
    %3567 = vmatmul.mubr.bf16.gmra.mrb[0].mxu0 %v3529
    %v3568 = vpop.f32.mrb[0].mxu0
    %v3569 = vadd.f32 %v3514, %v3568
    %v3570 = vpop.f32.mrb[0].mxu0
    %v3571 = vpop.f32.mrb[0].mxu0
    %v3572 = vadd.f32 %v3514, %v3571
    %v3573 = vpop.f32.mrb[0].mxu0
    %3574 = vmatprep.mubr.bf16.mxu0 0
    %3575 = vmatmul.mubr.bf16.gmra.mrb[0].mxu0 %v3532
    %v3576 = vpop.f32.mrb[0].mxu0
    %v3577 = vadd.f32 %v3514, %v3576
    %v3578 = vpop.f32.mrb[0].mxu0
    %v3579 = vpop.f32.mrb[0].mxu0
    %v3580 = vadd.f32 %v3514, %v3579
    %v3581 = vpop.f32.mrb[0].mxu0
    %3582 = vdwg.mxu0
    %v3583 = vpack.c.bf16 %v3228, %v3225
    %3585 = vrot.lane.b32.xlu0 %v3583, 120
    %v3586 = vpop.permute.xlu0 %3585
    %3587 = vrot.lane.b32.xlu0 %v3583, 112
    %v3588 = vpop.permute.xlu0 %3587
    %3589 = vrot.lane.b32.xlu0 %v3583, 104
    %v3590 = vpop.permute.xlu0 %3589
    %v3593 = vpack.i.b16 %v3586, %v3583
    %v3595 = vshrl.u32 %v3583, 16
    %v3596 = vshrl.u32 %v3586, 16
    %v3597 = vpack.i.b16 %v3596, %v3595
    %v3601 = vpack.i.b16 %v3590, %v3588
    %v3603 = vshrl.u32 %v3588, 16
    %v3604 = vshrl.u32 %v3590, 16
    %v3605 = vpack.i.b16 %v3604, %v3603
    %v3607 = vcombine.high %v3593, %v676
    %v3609 = vunpack.c.l.s4 1983009808
    %v3610 = vunpack.c.0.s8 %v3609
    %v3611 = vlaneseq
    %v3612 = vshrl.u32 %v3611, 7
    %v3613 = vsub.s32 %v3610, %v3612
    %v3614 = vrot.slane %v3593, %v3613
    %v3616 = vunpack.c.l.s4 1983009808
    %v3617 = vunpack.c.0.s8 %v3616
    %v3618 = vlaneseq
    %v3619 = vshrl.u32 %v3618, 7
    %v3620 = vsub.s32 %v3617, %v3619
    %v3621 = vrot.slane %v3607, %v3620
    %v3622 = vcombine.high %v3601, %v676
    %v3624 = vunpack.c.l.s4 1983009808
    %v3625 = vunpack.c.0.s8 %v3624
    %v3626 = vlaneseq
    %v3627 = vshrl.u32 %v3626, 7
    %v3628 = vsub.s32 %v3625, %v3627
    %v3629 = vrot.slane %v3601, %v3628
    %v3631 = vunpack.c.l.s4 1983009808
    %v3632 = vunpack.c.0.s8 %v3631
    %v3633 = vlaneseq
    %v3634 = vshrl.u32 %v3633, 7
    %v3635 = vsub.s32 %v3632, %v3634
    %v3636 = vrot.slane %v3622, %v3635
    %v3637 = vcombine.low %v3614, %v3629
    %v3638 = vcombine.high %v3614, %v3629
    %v3640 = vunpack.c.l.s4 1934713408
    %v3641 = vunpack.c.0.s8 %v3640
    %v3642 = vlaneseq
    %v3643 = vshrl.u32 %v3642, 7
    %v3644 = vsub.s32 %v3641, %v3643
    %v3645 = vrot.slane %v3637, %v3644
    %v3647 = vunpack.c.l.s4 1934713408
    %v3648 = vunpack.c.0.s8 %v3647
    %v3649 = vlaneseq
    %v3650 = vshrl.u32 %v3649, 7
    %v3651 = vsub.s32 %v3648, %v3650
    %v3652 = vrot.slane %v3638, %v3651
    %v3653 = vcombine.low %v3621, %v3636
    %v3654 = vcombine.high %v3621, %v3636
    %v3656 = vunpack.c.l.s4 1934713408
    %v3657 = vunpack.c.0.s8 %v3656
    %v3658 = vlaneseq
    %v3659 = vshrl.u32 %v3658, 7
    %v3660 = vsub.s32 %v3657, %v3659
    %v3661 = vrot.slane %v3653, %v3660
    %v3663 = vunpack.c.l.s4 1934713408
    %v3664 = vunpack.c.0.s8 %v3663
    %v3665 = vlaneseq
    %v3666 = vshrl.u32 %v3665, 7
    %v3667 = vsub.s32 %v3664, %v3666
    %v3668 = vrot.slane %v3654, %v3667
    %v3669 = vcombine.high %v3645, 0
    %v3670 = vcombine.high %v3652, 0
    %v3671 = vcombine.high %v3661, 0
    %v3672 = vcombine.high %v3668, 0
    %v3673 = vcombine.high %v3597, %v679
    %v3675 = vunpack.c.l.s4 1983009808
    %v3676 = vunpack.c.0.s8 %v3675
    %v3677 = vlaneseq
    %v3678 = vshrl.u32 %v3677, 7
    %v3679 = vsub.s32 %v3676, %v3678
    %v3680 = vrot.slane %v3597, %v3679
    %v3682 = vunpack.c.l.s4 1983009808
    %v3683 = vunpack.c.0.s8 %v3682
    %v3684 = vlaneseq
    %v3685 = vshrl.u32 %v3684, 7
    %v3686 = vsub.s32 %v3683, %v3685
    %v3687 = vrot.slane %v3673, %v3686
    %v3688 = vcombine.high %v3605, %v679
    %v3690 = vunpack.c.l.s4 1983009808
    %v3691 = vunpack.c.0.s8 %v3690
    %v3692 = vlaneseq
    %v3693 = vshrl.u32 %v3692, 7
    %v3694 = vsub.s32 %v3691, %v3693
    %v3695 = vrot.slane %v3605, %v3694
    %v3697 = vunpack.c.l.s4 1983009808
    %v3698 = vunpack.c.0.s8 %v3697
    %v3699 = vlaneseq
    %v3700 = vshrl.u32 %v3699, 7
    %v3701 = vsub.s32 %v3698, %v3700
    %v3702 = vrot.slane %v3688, %v3701
    %v3703 = vcombine.low %v3680, %v3695
    %v3704 = vcombine.high %v3680, %v3695
    %v3706 = vunpack.c.l.s4 1934713408
    %v3707 = vunpack.c.0.s8 %v3706
    %v3708 = vlaneseq
    %v3709 = vshrl.u32 %v3708, 7
    %v3710 = vsub.s32 %v3707, %v3709
    %v3711 = vrot.slane %v3703, %v3710
    %v3713 = vunpack.c.l.s4 1934713408
    %v3714 = vunpack.c.0.s8 %v3713
    %v3715 = vlaneseq
    %v3716 = vshrl.u32 %v3715, 7
    %v3717 = vsub.s32 %v3714, %v3716
    %v3718 = vrot.slane %v3704, %v3717
    %v3719 = vcombine.low %v3687, %v3702
    %v3720 = vcombine.high %v3687, %v3702
    %v3722 = vunpack.c.l.s4 1934713408
    %v3723 = vunpack.c.0.s8 %v3722
    %v3724 = vlaneseq
    %v3725 = vshrl.u32 %v3724, 7
    %v3726 = vsub.s32 %v3723, %v3725
    %v3727 = vrot.slane %v3719, %v3726
    %v3729 = vunpack.c.l.s4 1934713408
    %v3730 = vunpack.c.0.s8 %v3729
    %v3731 = vlaneseq
    %v3732 = vshrl.u32 %v3731, 7
    %v3733 = vsub.s32 %v3730, %v3732
    %v3734 = vrot.slane %v3720, %v3733
    %v3735 = vcombine.high %v3711, 0
    %v3736 = vcombine.high %v3718, 0
    %v3737 = vcombine.high %v3727, 0
    %v3738 = vcombine.high %v3734, 0
    %v3739 = vcombine.low %v3645, %v3661
    %v3741 = vunpack.c.l.s4 1983009808
    %v3742 = vunpack.c.0.s8 %v3741
    %v3743 = vlaneseq
    %v3744 = vshrl.u32 %v3743, 7
    %v3745 = vsub.s32 %v3742, %v3744
    %v3746 = vrot.slane %v3739, %v3745
    %v3747 = vcombine.low %v3652, %v3668
    %v3749 = vunpack.c.l.s4 1983009808
    %v3750 = vunpack.c.0.s8 %v3749
    %v3751 = vlaneseq
    %v3752 = vshrl.u32 %v3751, 7
    %v3753 = vsub.s32 %v3750, %v3752
    %v3754 = vrot.slane %v3747, %v3753
    %v3755 = vcombine.low %v3746, %v3754
    %v3757 = vunpack.c.l.s4 1934713408
    %v3758 = vunpack.c.0.s8 %v3757
    %v3759 = vlaneseq
    %v3760 = vshrl.u32 %v3759, 7
    %v3761 = vsub.s32 %v3758, %v3760
    %v3762 = vrot.slane %v3755, %v3761
    %v3763 = vcombine.high %v3762, 0
    %v3764 = vcombine.low %v3669, %v3671
    %v3766 = vunpack.c.l.s4 1983009808
    %v3767 = vunpack.c.0.s8 %v3766
    %v3768 = vlaneseq
    %v3769 = vshrl.u32 %v3768, 7
    %v3770 = vsub.s32 %v3767, %v3769
    %v3771 = vrot.slane %v3764, %v3770
    %v3772 = vcombine.low %v3670, %v3672
    %v3774 = vunpack.c.l.s4 1983009808
    %v3775 = vunpack.c.0.s8 %v3774
    %v3776 = vlaneseq
    %v3777 = vshrl.u32 %v3776, 7
    %v3778 = vsub.s32 %v3775, %v3777
    %v3779 = vrot.slane %v3772, %v3778
    %v3780 = vcombine.low %v3771, %v3779
    %v3782 = vunpack.c.l.s4 1934713408
    %v3783 = vunpack.c.0.s8 %v3782
    %v3784 = vlaneseq
    %v3785 = vshrl.u32 %v3784, 7
    %v3786 = vsub.s32 %v3783, %v3785
    %v3787 = vrot.slane %v3780, %v3786
    %v3788 = vcombine.high %v3787, 0
    %v3789 = vcombine.low %v3711, %v3727
    %v3791 = vunpack.c.l.s4 1983009808
    %v3792 = vunpack.c.0.s8 %v3791
    %v3793 = vlaneseq
    %v3794 = vshrl.u32 %v3793, 7
    %v3795 = vsub.s32 %v3792, %v3794
    %v3796 = vrot.slane %v3789, %v3795
    %v3797 = vcombine.low %v3718, %v3734
    %v3799 = vunpack.c.l.s4 1983009808
    %v3800 = vunpack.c.0.s8 %v3799
    %v3801 = vlaneseq
    %v3802 = vshrl.u32 %v3801, 7
    %v3803 = vsub.s32 %v3800, %v3802
    %v3804 = vrot.slane %v3797, %v3803
    %v3805 = vcombine.low %v3796, %v3804
    %v3807 = vunpack.c.l.s4 1934713408
    %v3808 = vunpack.c.0.s8 %v3807
    %v3809 = vlaneseq
    %v3810 = vshrl.u32 %v3809, 7
    %v3811 = vsub.s32 %v3808, %v3810
    %v3812 = vrot.slane %v3805, %v3811
    %v3813 = vcombine.high %v3812, 0
    %v3814 = vcombine.low %v3735, %v3737
    %v3816 = vunpack.c.l.s4 1983009808
    %v3817 = vunpack.c.0.s8 %v3816
    %v3818 = vlaneseq
    %v3819 = vshrl.u32 %v3818, 7
    %v3820 = vsub.s32 %v3817, %v3819
    %v3821 = vrot.slane %v3814, %v3820
    %v3822 = vcombine.low %v3736, %v3738
    %v3824 = vunpack.c.l.s4 1983009808
    %v3825 = vunpack.c.0.s8 %v3824
    %v3826 = vlaneseq
    %v3827 = vshrl.u32 %v3826, 7
    %v3828 = vsub.s32 %v3825, %v3827
    %v3829 = vrot.slane %v3822, %v3828
    %v3830 = vcombine.low %v3821, %v3829
    %v3832 = vunpack.c.l.s4 1934713408
    %v3833 = vunpack.c.0.s8 %v3832
    %v3834 = vlaneseq
    %v3835 = vshrl.u32 %v3834, 7
    %v3836 = vsub.s32 %v3833, %v3835
    %v3837 = vrot.slane %v3830, %v3836
    %v3838 = vcombine.high %v3837, 0
    %v3841 = vpack.i.b16 %v3787, %v3762
    %v3842 = vshrl.u32 %v3762, 16
    %v3843 = vshrl.u32 %v3787, 16
    %v3844 = vpack.i.b16 %v3843, %v3842
    %v3847 = vpack.i.b16 %v3788, %v3763
    %v3848 = vshrl.u32 %v3763, 16
    %v3849 = vshrl.u32 %v3788, 16
    %v3850 = vpack.i.b16 %v3849, %v3848
    %v3853 = vpack.i.b16 %v3837, %v3812
    %v3854 = vshrl.u32 %v3812, 16
    %v3855 = vshrl.u32 %v3837, 16
    %v3856 = vpack.i.b16 %v3855, %v3854
    %v3859 = vpack.i.b16 %v3838, %v3813
    %v3860 = vshrl.u32 %v3813, 16
    %v3861 = vshrl.u32 %v3838, 16
    %v3862 = vpack.i.b16 %v3861, %v3860
    %v3863 = vpack.c.bf16 %v3404, %v3401
    %v3864 = vpack.c.bf16 %v3412, %v3409
    %3867 = vrot.lane.b32.xlu0 %v3863, 120
    %v3868 = vpop.permute.xlu0 %3867
    %3869 = vrot.lane.b32.xlu0 %v3864, 120
    %v3870 = vpop.permute.xlu0 %3869
    %3871 = vrot.lane.b32.xlu0 %v3863, 112
    %v3872 = vpop.permute.xlu0 %3871
    %3873 = vrot.lane.b32.xlu0 %v3864, 112
    %v3874 = vpop.permute.xlu0 %3873
    %3875 = vrot.lane.b32.xlu0 %v3863, 104
    %v3876 = vpop.permute.xlu0 %3875
    %3877 = vrot.lane.b32.xlu0 %v3864, 104
    %v3878 = vpop.permute.xlu0 %3877
    %v3881 = vpack.i.b16 %v3868, %v3863
    %v3883 = vshrl.u32 %v3863, 16
    %v3884 = vshrl.u32 %v3868, 16
    %v3885 = vpack.i.b16 %v3884, %v3883
    %v3889 = vpack.i.b16 %v3876, %v3872
    %v3891 = vshrl.u32 %v3872, 16
    %v3892 = vshrl.u32 %v3876, 16
    %v3893 = vpack.i.b16 %v3892, %v3891
    %v3897 = vpack.i.b16 %v3870, %v3864
    %v3899 = vshrl.u32 %v3864, 16
    %v3900 = vshrl.u32 %v3870, 16
    %v3901 = vpack.i.b16 %v3900, %v3899
    %v3905 = vpack.i.b16 %v3878, %v3874
    %v3907 = vshrl.u32 %v3874, 16
    %v3908 = vshrl.u32 %v3878, 16
    %v3909 = vpack.i.b16 %v3908, %v3907
    %v3911 = vcombine.high %v3881, %v676
    %v3913 = vunpack.c.l.s4 1983009808
    %v3914 = vunpack.c.0.s8 %v3913
    %v3915 = vlaneseq
    %v3916 = vshrl.u32 %v3915, 7
    %v3917 = vsub.s32 %v3914, %v3916
    %v3918 = vrot.slane %v3881, %v3917
    %v3920 = vunpack.c.l.s4 1983009808
    %v3921 = vunpack.c.0.s8 %v3920
    %v3922 = vlaneseq
    %v3923 = vshrl.u32 %v3922, 7
    %v3924 = vsub.s32 %v3921, %v3923
    %v3925 = vrot.slane %v3911, %v3924
    %v3926 = vcombine.high %v3889, %v676
    %v3928 = vunpack.c.l.s4 1983009808
    %v3929 = vunpack.c.0.s8 %v3928
    %v3930 = vlaneseq
    %v3931 = vshrl.u32 %v3930, 7
    %v3932 = vsub.s32 %v3929, %v3931
    %v3933 = vrot.slane %v3889, %v3932
    %v3935 = vunpack.c.l.s4 1983009808
    %v3936 = vunpack.c.0.s8 %v3935
    %v3937 = vlaneseq
    %v3938 = vshrl.u32 %v3937, 7
    %v3939 = vsub.s32 %v3936, %v3938
    %v3940 = vrot.slane %v3926, %v3939
    %v3941 = vcombine.low %v3918, %v3933
    %v3942 = vcombine.high %v3918, %v3933
    %v3944 = vunpack.c.l.s4 1934713408
    %v3945 = vunpack.c.0.s8 %v3944
    %v3946 = vlaneseq
    %v3947 = vshrl.u32 %v3946, 7
    %v3948 = vsub.s32 %v3945, %v3947
    %v3949 = vrot.slane %v3941, %v3948
    %v3951 = vunpack.c.l.s4 1934713408
    %v3952 = vunpack.c.0.s8 %v3951
    %v3953 = vlaneseq
    %v3954 = vshrl.u32 %v3953, 7
    %v3955 = vsub.s32 %v3952, %v3954
    %v3956 = vrot.slane %v3942, %v3955
    %v3957 = vcombine.low %v3925, %v3940
    %v3958 = vcombine.high %v3925, %v3940
    %v3960 = vunpack.c.l.s4 1934713408
    %v3961 = vunpack.c.0.s8 %v3960
    %v3962 = vlaneseq
    %v3963 = vshrl.u32 %v3962, 7
    %v3964 = vsub.s32 %v3961, %v3963
    %v3965 = vrot.slane %v3957, %v3964
    %v3967 = vunpack.c.l.s4 1934713408
    %v3968 = vunpack.c.0.s8 %v3967
    %v3969 = vlaneseq
    %v3970 = vshrl.u32 %v3969, 7
    %v3971 = vsub.s32 %v3968, %v3970
    %v3972 = vrot.slane %v3958, %v3971
    %v3973 = vcombine.high %v3949, 0
    %v3974 = vcombine.high %v3956, 0
    %v3975 = vcombine.high %v3965, 0
    %v3976 = vcombine.high %v3972, 0
    %v3977 = vcombine.high %v3885, %v679
    %v3979 = vunpack.c.l.s4 1983009808
    %v3980 = vunpack.c.0.s8 %v3979
    %v3981 = vlaneseq
    %v3982 = vshrl.u32 %v3981, 7
    %v3983 = vsub.s32 %v3980, %v3982
    %v3984 = vrot.slane %v3885, %v3983
    %v3986 = vunpack.c.l.s4 1983009808
    %v3987 = vunpack.c.0.s8 %v3986
    %v3988 = vlaneseq
    %v3989 = vshrl.u32 %v3988, 7
    %v3990 = vsub.s32 %v3987, %v3989
    %v3991 = vrot.slane %v3977, %v3990
    %v3992 = vcombine.high %v3893, %v679
    %v3994 = vunpack.c.l.s4 1983009808
    %v3995 = vunpack.c.0.s8 %v3994
    %v3996 = vlaneseq
    %v3997 = vshrl.u32 %v3996, 7
    %v3998 = vsub.s32 %v3995, %v3997
    %v3999 = vrot.slane %v3893, %v3998
    %v4001 = vunpack.c.l.s4 1983009808
    %v4002 = vunpack.c.0.s8 %v4001
    %v4003 = vlaneseq
    %v4004 = vshrl.u32 %v4003, 7
    %v4005 = vsub.s32 %v4002, %v4004
    %v4006 = vrot.slane %v3992, %v4005
    %v4007 = vcombine.low %v3984, %v3999
    %v4008 = vcombine.high %v3984, %v3999
    %v4010 = vunpack.c.l.s4 1934713408
    %v4011 = vunpack.c.0.s8 %v4010
    %v4012 = vlaneseq
    %v4013 = vshrl.u32 %v4012, 7
    %v4014 = vsub.s32 %v4011, %v4013
    %v4015 = vrot.slane %v4007, %v4014
    %v4017 = vunpack.c.l.s4 1934713408
    %v4018 = vunpack.c.0.s8 %v4017
    %v4019 = vlaneseq
    %v4020 = vshrl.u32 %v4019, 7
    %v4021 = vsub.s32 %v4018, %v4020
    %v4022 = vrot.slane %v4008, %v4021
    %v4023 = vcombine.low %v3991, %v4006
    %v4024 = vcombine.high %v3991, %v4006
    %v4026 = vunpack.c.l.s4 1934713408
    %v4027 = vunpack.c.0.s8 %v4026
    %v4028 = vlaneseq
    %v4029 = vshrl.u32 %v4028, 7
    %v4030 = vsub.s32 %v4027, %v4029
    %v4031 = vrot.slane %v4023, %v4030
    %v4033 = vunpack.c.l.s4 1934713408
    %v4034 = vunpack.c.0.s8 %v4033
    %v4035 = vlaneseq
    %v4036 = vshrl.u32 %v4035, 7
    %v4037 = vsub.s32 %v4034, %v4036
    %v4038 = vrot.slane %v4024, %v4037
    %v4039 = vcombine.high %v4015, 0
    %v4040 = vcombine.high %v4022, 0
    %v4041 = vcombine.high %v4031, 0
    %v4042 = vcombine.high %v4038, 0
    %v4043 = vcombine.high %v3897, %v676
    %v4045 = vunpack.c.l.s4 1983009808
    %v4046 = vunpack.c.0.s8 %v4045
    %v4047 = vlaneseq
    %v4048 = vshrl.u32 %v4047, 7
    %v4049 = vsub.s32 %v4046, %v4048
    %v4050 = vrot.slane %v3897, %v4049
    %v4052 = vunpack.c.l.s4 1983009808
    %v4053 = vunpack.c.0.s8 %v4052
    %v4054 = vlaneseq
    %v4055 = vshrl.u32 %v4054, 7
    %v4056 = vsub.s32 %v4053, %v4055
    %v4057 = vrot.slane %v4043, %v4056
    %v4058 = vcombine.high %v3905, %v676
    %v4060 = vunpack.c.l.s4 1983009808
    %v4061 = vunpack.c.0.s8 %v4060
    %v4062 = vlaneseq
    %v4063 = vshrl.u32 %v4062, 7
    %v4064 = vsub.s32 %v4061, %v4063
    %v4065 = vrot.slane %v3905, %v4064
    %v4067 = vunpack.c.l.s4 1983009808
    %v4068 = vunpack.c.0.s8 %v4067
    %v4069 = vlaneseq
    %v4070 = vshrl.u32 %v4069, 7
    %v4071 = vsub.s32 %v4068, %v4070
    %v4072 = vrot.slane %v4058, %v4071
    %v4073 = vcombine.low %v4050, %v4065
    %v4074 = vcombine.high %v4050, %v4065
    %v4076 = vunpack.c.l.s4 1934713408
    %v4077 = vunpack.c.0.s8 %v4076
    %v4078 = vlaneseq
    %v4079 = vshrl.u32 %v4078, 7
    %v4080 = vsub.s32 %v4077, %v4079
    %v4081 = vrot.slane %v4073, %v4080
    %v4083 = vunpack.c.l.s4 1934713408
    %v4084 = vunpack.c.0.s8 %v4083
    %v4085 = vlaneseq
    %v4086 = vshrl.u32 %v4085, 7
    %v4087 = vsub.s32 %v4084, %v4086
    %v4088 = vrot.slane %v4074, %v4087
    %v4089 = vcombine.low %v4057, %v4072
    %v4090 = vcombine.high %v4057, %v4072
    %v4092 = vunpack.c.l.s4 1934713408
    %v4093 = vunpack.c.0.s8 %v4092
    %v4094 = vlaneseq
    %v4095 = vshrl.u32 %v4094, 7
    %v4096 = vsub.s32 %v4093, %v4095
    %v4097 = vrot.slane %v4089, %v4096
    %v4099 = vunpack.c.l.s4 1934713408
    %v4100 = vunpack.c.0.s8 %v4099
    %v4101 = vlaneseq
    %v4102 = vshrl.u32 %v4101, 7
    %v4103 = vsub.s32 %v4100, %v4102
    %v4104 = vrot.slane %v4090, %v4103
    %v4105 = vcombine.high %v4081, 0
    %v4106 = vcombine.high %v4088, 0
    %v4107 = vcombine.high %v4097, 0
    %v4108 = vcombine.high %v4104, 0
    %v4109 = vcombine.high %v3901, %v679
    %v4111 = vunpack.c.l.s4 1983009808
    %v4112 = vunpack.c.0.s8 %v4111
    %v4113 = vlaneseq
    %v4114 = vshrl.u32 %v4113, 7
    %v4115 = vsub.s32 %v4112, %v4114
    %v4116 = vrot.slane %v3901, %v4115
    %v4118 = vunpack.c.l.s4 1983009808
    %v4119 = vunpack.c.0.s8 %v4118
    %v4120 = vlaneseq
    %v4121 = vshrl.u32 %v4120, 7
    %v4122 = vsub.s32 %v4119, %v4121
    %v4123 = vrot.slane %v4109, %v4122
    %v4124 = vcombine.high %v3909, %v679
    %v4126 = vunpack.c.l.s4 1983009808
    %v4127 = vunpack.c.0.s8 %v4126
    %v4128 = vlaneseq
    %v4129 = vshrl.u32 %v4128, 7
    %v4130 = vsub.s32 %v4127, %v4129
    %v4131 = vrot.slane %v3909, %v4130
    %v4133 = vunpack.c.l.s4 1983009808
    %v4134 = vunpack.c.0.s8 %v4133
    %v4135 = vlaneseq
    %v4136 = vshrl.u32 %v4135, 7
    %v4137 = vsub.s32 %v4134, %v4136
    %v4138 = vrot.slane %v4124, %v4137
    %v4139 = vcombine.low %v4116, %v4131
    %v4140 = vcombine.high %v4116, %v4131
    %v4142 = vunpack.c.l.s4 1934713408
    %v4143 = vunpack.c.0.s8 %v4142
    %v4144 = vlaneseq
    %v4145 = vshrl.u32 %v4144, 7
    %v4146 = vsub.s32 %v4143, %v4145
    %v4147 = vrot.slane %v4139, %v4146
    %v4149 = vunpack.c.l.s4 1934713408
    %v4150 = vunpack.c.0.s8 %v4149
    %v4151 = vlaneseq
    %v4152 = vshrl.u32 %v4151, 7
    %v4153 = vsub.s32 %v4150, %v4152
    %v4154 = vrot.slane %v4140, %v4153
    %v4155 = vcombine.low %v4123, %v4138
    %v4156 = vcombine.high %v4123, %v4138
    %v4158 = vunpack.c.l.s4 1934713408
    %v4159 = vunpack.c.0.s8 %v4158
    %v4160 = vlaneseq
    %v4161 = vshrl.u32 %v4160, 7
    %v4162 = vsub.s32 %v4159, %v4161
    %v4163 = vrot.slane %v4155, %v4162
    %v4165 = vunpack.c.l.s4 1934713408
    %v4166 = vunpack.c.0.s8 %v4165
    %v4167 = vlaneseq
    %v4168 = vshrl.u32 %v4167, 7
    %v4169 = vsub.s32 %v4166, %v4168
    %v4170 = vrot.slane %v4156, %v4169
    %v4171 = vcombine.high %v4147, 0
    %v4172 = vcombine.high %v4154, 0
    %v4173 = vcombine.high %v4163, 0
    %v4174 = vcombine.high %v4170, 0
    %v4175 = vcombine.low %v3949, %v3965
    %v4177 = vunpack.c.l.s4 1983009808
    %v4178 = vunpack.c.0.s8 %v4177
    %v4179 = vlaneseq
    %v4180 = vshrl.u32 %v4179, 7
    %v4181 = vsub.s32 %v4178, %v4180
    %v4182 = vrot.slane %v4175, %v4181
    %v4183 = vcombine.low %v3956, %v3972
    %v4185 = vunpack.c.l.s4 1983009808
    %v4186 = vunpack.c.0.s8 %v4185
    %v4187 = vlaneseq
    %v4188 = vshrl.u32 %v4187, 7
    %v4189 = vsub.s32 %v4186, %v4188
    %v4190 = vrot.slane %v4183, %v4189
    %v4191 = vcombine.low %v4081, %v4097
    %v4193 = vunpack.c.l.s4 1983009808
    %v4194 = vunpack.c.0.s8 %v4193
    %v4195 = vlaneseq
    %v4196 = vshrl.u32 %v4195, 7
    %v4197 = vsub.s32 %v4194, %v4196
    %v4198 = vrot.slane %v4191, %v4197
    %v4199 = vcombine.low %v4088, %v4104
    %v4201 = vunpack.c.l.s4 1983009808
    %v4202 = vunpack.c.0.s8 %v4201
    %v4203 = vlaneseq
    %v4204 = vshrl.u32 %v4203, 7
    %v4205 = vsub.s32 %v4202, %v4204
    %v4206 = vrot.slane %v4199, %v4205
    %v4207 = vcombine.low %v4182, %v4190
    %v4209 = vunpack.c.l.s4 1934713408
    %v4210 = vunpack.c.0.s8 %v4209
    %v4211 = vlaneseq
    %v4212 = vshrl.u32 %v4211, 7
    %v4213 = vsub.s32 %v4210, %v4212
    %v4214 = vrot.slane %v4207, %v4213
    %v4215 = vcombine.low %v4198, %v4206
    %v4217 = vunpack.c.l.s4 1934713408
    %v4218 = vunpack.c.0.s8 %v4217
    %v4219 = vlaneseq
    %v4220 = vshrl.u32 %v4219, 7
    %v4221 = vsub.s32 %v4218, %v4220
    %v4222 = vrot.slane %v4215, %v4221
    %v4223 = vcombine.low %v4214, %v4222
    %v4224 = vcombine.high %v4214, %v4222
    %v4225 = vcombine.low %v3973, %v3975
    %v4227 = vunpack.c.l.s4 1983009808
    %v4228 = vunpack.c.0.s8 %v4227
    %v4229 = vlaneseq
    %v4230 = vshrl.u32 %v4229, 7
    %v4231 = vsub.s32 %v4228, %v4230
    %v4232 = vrot.slane %v4225, %v4231
    %v4233 = vcombine.low %v3974, %v3976
    %v4235 = vunpack.c.l.s4 1983009808
    %v4236 = vunpack.c.0.s8 %v4235
    %v4237 = vlaneseq
    %v4238 = vshrl.u32 %v4237, 7
    %v4239 = vsub.s32 %v4236, %v4238
    %v4240 = vrot.slane %v4233, %v4239
    %v4241 = vcombine.low %v4105, %v4107
    %v4243 = vunpack.c.l.s4 1983009808
    %v4244 = vunpack.c.0.s8 %v4243
    %v4245 = vlaneseq
    %v4246 = vshrl.u32 %v4245, 7
    %v4247 = vsub.s32 %v4244, %v4246
    %v4248 = vrot.slane %v4241, %v4247
    %v4249 = vcombine.low %v4106, %v4108
    %v4251 = vunpack.c.l.s4 1983009808
    %v4252 = vunpack.c.0.s8 %v4251
    %v4253 = vlaneseq
    %v4254 = vshrl.u32 %v4253, 7
    %v4255 = vsub.s32 %v4252, %v4254
    %v4256 = vrot.slane %v4249, %v4255
    %v4257 = vcombine.low %v4232, %v4240
    %v4259 = vunpack.c.l.s4 1934713408
    %v4260 = vunpack.c.0.s8 %v4259
    %v4261 = vlaneseq
    %v4262 = vshrl.u32 %v4261, 7
    %v4263 = vsub.s32 %v4260, %v4262
    %v4264 = vrot.slane %v4257, %v4263
    %v4265 = vcombine.low %v4248, %v4256
    %v4267 = vunpack.c.l.s4 1934713408
    %v4268 = vunpack.c.0.s8 %v4267
    %v4269 = vlaneseq
    %v4270 = vshrl.u32 %v4269, 7
    %v4271 = vsub.s32 %v4268, %v4270
    %v4272 = vrot.slane %v4265, %v4271
    %v4273 = vcombine.low %v4264, %v4272
    %v4274 = vcombine.high %v4264, %v4272
    %v4275 = vcombine.low %v4015, %v4031
    %v4277 = vunpack.c.l.s4 1983009808
    %v4278 = vunpack.c.0.s8 %v4277
    %v4279 = vlaneseq
    %v4280 = vshrl.u32 %v4279, 7
    %v4281 = vsub.s32 %v4278, %v4280
    %v4282 = vrot.slane %v4275, %v4281
    %v4283 = vcombine.low %v4022, %v4038
    %v4285 = vunpack.c.l.s4 1983009808
    %v4286 = vunpack.c.0.s8 %v4285
    %v4287 = vlaneseq
    %v4288 = vshrl.u32 %v4287, 7
    %v4289 = vsub.s32 %v4286, %v4288
    %v4290 = vrot.slane %v4283, %v4289
    %v4291 = vcombine.low %v4147, %v4163
    %v4293 = vunpack.c.l.s4 1983009808
    %v4294 = vunpack.c.0.s8 %v4293
    %v4295 = vlaneseq
    %v4296 = vshrl.u32 %v4295, 7
    %v4297 = vsub.s32 %v4294, %v4296
    %v4298 = vrot.slane %v4291, %v4297
    %v4299 = vcombine.low %v4154, %v4170
    %v4301 = vunpack.c.l.s4 1983009808
    %v4302 = vunpack.c.0.s8 %v4301
    %v4303 = vlaneseq
    %v4304 = vshrl.u32 %v4303, 7
    %v4305 = vsub.s32 %v4302, %v4304
    %v4306 = vrot.slane %v4299, %v4305
    %v4307 = vcombine.low %v4282, %v4290
    %v4309 = vunpack.c.l.s4 1934713408
    %v4310 = vunpack.c.0.s8 %v4309
    %v4311 = vlaneseq
    %v4312 = vshrl.u32 %v4311, 7
    %v4313 = vsub.s32 %v4310, %v4312
    %v4314 = vrot.slane %v4307, %v4313
    %v4315 = vcombine.low %v4298, %v4306
    %v4317 = vunpack.c.l.s4 1934713408
    %v4318 = vunpack.c.0.s8 %v4317
    %v4319 = vlaneseq
    %v4320 = vshrl.u32 %v4319, 7
    %v4321 = vsub.s32 %v4318, %v4320
    %v4322 = vrot.slane %v4315, %v4321
    %v4323 = vcombine.low %v4314, %v4322
    %v4324 = vcombine.high %v4314, %v4322
    %v4325 = vcombine.low %v4039, %v4041
    %v4327 = vunpack.c.l.s4 1983009808
    %v4328 = vunpack.c.0.s8 %v4327
    %v4329 = vlaneseq
    %v4330 = vshrl.u32 %v4329, 7
    %v4331 = vsub.s32 %v4328, %v4330
    %v4332 = vrot.slane %v4325, %v4331
    %v4333 = vcombine.low %v4040, %v4042
    %v4335 = vunpack.c.l.s4 1983009808
    %v4336 = vunpack.c.0.s8 %v4335
    %v4337 = vlaneseq
    %v4338 = vshrl.u32 %v4337, 7
    %v4339 = vsub.s32 %v4336, %v4338
    %v4340 = vrot.slane %v4333, %v4339
    %v4341 = vcombine.low %v4171, %v4173
    %v4343 = vunpack.c.l.s4 1983009808
    %v4344 = vunpack.c.0.s8 %v4343
    %v4345 = vlaneseq
    %v4346 = vshrl.u32 %v4345, 7
    %v4347 = vsub.s32 %v4344, %v4346
    %v4348 = vrot.slane %v4341, %v4347
    %v4349 = vcombine.low %v4172, %v4174
    %v4351 = vunpack.c.l.s4 1983009808
    %v4352 = vunpack.c.0.s8 %v4351
    %v4353 = vlaneseq
    %v4354 = vshrl.u32 %v4353, 7
    %v4355 = vsub.s32 %v4352, %v4354
    %v4356 = vrot.slane %v4349, %v4355
    %v4357 = vcombine.low %v4332, %v4340
    %v4359 = vunpack.c.l.s4 1934713408
    %v4360 = vunpack.c.0.s8 %v4359
    %v4361 = vlaneseq
    %v4362 = vshrl.u32 %v4361, 7
    %v4363 = vsub.s32 %v4360, %v4362
    %v4364 = vrot.slane %v4357, %v4363
    %v4365 = vcombine.low %v4348, %v4356
    %v4367 = vunpack.c.l.s4 1934713408
    %v4368 = vunpack.c.0.s8 %v4367
    %v4369 = vlaneseq
    %v4370 = vshrl.u32 %v4369, 7
    %v4371 = vsub.s32 %v4368, %v4370
    %v4372 = vrot.slane %v4365, %v4371
    %v4373 = vcombine.low %v4364, %v4372
    %v4374 = vcombine.high %v4364, %v4372
    %v4377 = vpack.i.b16 %v4273, %v4223
    %v4378 = vshrl.u32 %v4223, 16
    %v4379 = vshrl.u32 %v4273, 16
    %v4380 = vpack.i.b16 %v4379, %v4378
    %v4383 = vpack.i.b16 %v4274, %v4224
    %v4384 = vshrl.u32 %v4224, 16
    %v4385 = vshrl.u32 %v4274, 16
    %v4386 = vpack.i.b16 %v4385, %v4384
    %v4389 = vpack.i.b16 %v4373, %v4323
    %v4390 = vshrl.u32 %v4323, 16
    %v4391 = vshrl.u32 %v4373, 16
    %v4392 = vpack.i.b16 %v4391, %v4390
    %v4395 = vpack.i.b16 %v4374, %v4324
    %v4396 = vshrl.u32 %v4324, 16
    %v4397 = vshrl.u32 %v4374, 16
    %v4398 = vpack.i.b16 %v4397, %v4396
    %v4399 = vpack.c.bf16 %v3572, %v3569
    %v4400 = vpack.c.bf16 %v3580, %v3577
    %4403 = vrot.lane.b32.xlu0 %v4399, 120
    %v4404 = vpop.permute.xlu0 %4403
    %4405 = vrot.lane.b32.xlu0 %v4400, 120
    %v4406 = vpop.permute.xlu0 %4405
    %4407 = vrot.lane.b32.xlu0 %v4399, 112
    %v4408 = vpop.permute.xlu0 %4407
    %4409 = vrot.lane.b32.xlu0 %v4400, 112
    %v4410 = vpop.permute.xlu0 %4409
    %4411 = vrot.lane.b32.xlu0 %v4399, 104
    %v4412 = vpop.permute.xlu0 %4411
    %4413 = vrot.lane.b32.xlu0 %v4400, 104
    %v4414 = vpop.permute.xlu0 %4413
    %v4417 = vpack.i.b16 %v4404, %v4399
    %v4419 = vshrl.u32 %v4399, 16
    %v4420 = vshrl.u32 %v4404, 16
    %v4421 = vpack.i.b16 %v4420, %v4419
    %v4425 = vpack.i.b16 %v4412, %v4408
    %v4427 = vshrl.u32 %v4408, 16
    %v4428 = vshrl.u32 %v4412, 16
    %v4429 = vpack.i.b16 %v4428, %v4427
    %v4433 = vpack.i.b16 %v4406, %v4400
    %v4435 = vshrl.u32 %v4400, 16
    %v4436 = vshrl.u32 %v4406, 16
    %v4437 = vpack.i.b16 %v4436, %v4435
    %v4441 = vpack.i.b16 %v4414, %v4410
    %v4443 = vshrl.u32 %v4410, 16
    %v4444 = vshrl.u32 %v4414, 16
    %v4445 = vpack.i.b16 %v4444, %v4443
    %v4447 = vcombine.high %v4417, %v676
    %v4449 = vunpack.c.l.s4 1983009808
    %v4450 = vunpack.c.0.s8 %v4449
    %v4451 = vlaneseq
    %v4452 = vshrl.u32 %v4451, 7
    %v4453 = vsub.s32 %v4450, %v4452
    %v4454 = vrot.slane %v4417, %v4453
    %v4456 = vunpack.c.l.s4 1983009808
    %v4457 = vunpack.c.0.s8 %v4456
    %v4458 = vlaneseq
    %v4459 = vshrl.u32 %v4458, 7
    %v4460 = vsub.s32 %v4457, %v4459
    %v4461 = vrot.slane %v4447, %v4460
    %v4462 = vcombine.high %v4425, %v676
    %v4464 = vunpack.c.l.s4 1983009808
    %v4465 = vunpack.c.0.s8 %v4464
    %v4466 = vlaneseq
    %v4467 = vshrl.u32 %v4466, 7
    %v4468 = vsub.s32 %v4465, %v4467
    %v4469 = vrot.slane %v4425, %v4468
    %v4471 = vunpack.c.l.s4 1983009808
    %v4472 = vunpack.c.0.s8 %v4471
    %v4473 = vlaneseq
    %v4474 = vshrl.u32 %v4473, 7
    %v4475 = vsub.s32 %v4472, %v4474
    %v4476 = vrot.slane %v4462, %v4475
    %v4477 = vcombine.low %v4454, %v4469
    %v4478 = vcombine.high %v4454, %v4469
    %v4480 = vunpack.c.l.s4 1934713408
    %v4481 = vunpack.c.0.s8 %v4480
    %v4482 = vlaneseq
    %v4483 = vshrl.u32 %v4482, 7
    %v4484 = vsub.s32 %v4481, %v4483
    %v4485 = vrot.slane %v4477, %v4484
    %v4487 = vunpack.c.l.s4 1934713408
    %v4488 = vunpack.c.0.s8 %v4487
    %v4489 = vlaneseq
    %v4490 = vshrl.u32 %v4489, 7
    %v4491 = vsub.s32 %v4488, %v4490
    %v4492 = vrot.slane %v4478, %v4491
    %v4493 = vcombine.low %v4461, %v4476
    %v4494 = vcombine.high %v4461, %v4476
    %v4496 = vunpack.c.l.s4 1934713408
    %v4497 = vunpack.c.0.s8 %v4496
    %v4498 = vlaneseq
    %v4499 = vshrl.u32 %v4498, 7
    %v4500 = vsub.s32 %v4497, %v4499
    %v4501 = vrot.slane %v4493, %v4500
    %v4503 = vunpack.c.l.s4 1934713408
    %v4504 = vunpack.c.0.s8 %v4503
    %v4505 = vlaneseq
    %v4506 = vshrl.u32 %v4505, 7
    %v4507 = vsub.s32 %v4504, %v4506
    %v4508 = vrot.slane %v4494, %v4507
    %v4509 = vcombine.high %v4485, 0
    %v4510 = vcombine.high %v4492, 0
    %v4511 = vcombine.high %v4501, 0
    %v4512 = vcombine.high %v4508, 0
    %v4513 = vcombine.high %v4421, %v679
    %v4515 = vunpack.c.l.s4 1983009808
    %v4516 = vunpack.c.0.s8 %v4515
    %v4517 = vlaneseq
    %v4518 = vshrl.u32 %v4517, 7
    %v4519 = vsub.s32 %v4516, %v4518
    %v4520 = vrot.slane %v4421, %v4519
    %v4522 = vunpack.c.l.s4 1983009808
    %v4523 = vunpack.c.0.s8 %v4522
    %v4524 = vlaneseq
    %v4525 = vshrl.u32 %v4524, 7
    %v4526 = vsub.s32 %v4523, %v4525
    %v4527 = vrot.slane %v4513, %v4526
    %v4528 = vcombine.high %v4429, %v679
    %v4530 = vunpack.c.l.s4 1983009808
    %v4531 = vunpack.c.0.s8 %v4530
    %v4532 = vlaneseq
    %v4533 = vshrl.u32 %v4532, 7
    %v4534 = vsub.s32 %v4531, %v4533
    %v4535 = vrot.slane %v4429, %v4534
    %v4537 = vunpack.c.l.s4 1983009808
    %v4538 = vunpack.c.0.s8 %v4537
    %v4539 = vlaneseq
    %v4540 = vshrl.u32 %v4539, 7
    %v4541 = vsub.s32 %v4538, %v4540
    %v4542 = vrot.slane %v4528, %v4541
    %v4543 = vcombine.low %v4520, %v4535
    %v4544 = vcombine.high %v4520, %v4535
    %v4546 = vunpack.c.l.s4 1934713408
    %v4547 = vunpack.c.0.s8 %v4546
    %v4548 = vlaneseq
    %v4549 = vshrl.u32 %v4548, 7
    %v4550 = vsub.s32 %v4547, %v4549
    %v4551 = vrot.slane %v4543, %v4550
    %v4553 = vunpack.c.l.s4 1934713408
    %v4554 = vunpack.c.0.s8 %v4553
    %v4555 = vlaneseq
    %v4556 = vshrl.u32 %v4555, 7
    %v4557 = vsub.s32 %v4554, %v4556
    %v4558 = vrot.slane %v4544, %v4557
    %v4559 = vcombine.low %v4527, %v4542
    %v4560 = vcombine.high %v4527, %v4542
    %v4562 = vunpack.c.l.s4 1934713408
    %v4563 = vunpack.c.0.s8 %v4562
    %v4564 = vlaneseq
    %v4565 = vshrl.u32 %v4564, 7
    %v4566 = vsub.s32 %v4563, %v4565
    %v4567 = vrot.slane %v4559, %v4566
    %v4569 = vunpack.c.l.s4 1934713408
    %v4570 = vunpack.c.0.s8 %v4569
    %v4571 = vlaneseq
    %v4572 = vshrl.u32 %v4571, 7
    %v4573 = vsub.s32 %v4570, %v4572
    %v4574 = vrot.slane %v4560, %v4573
    %v4575 = vcombine.high %v4551, 0
    %v4576 = vcombine.high %v4558, 0
    %v4577 = vcombine.high %v4567, 0
    %v4578 = vcombine.high %v4574, 0
    %v4579 = vcombine.high %v4433, %v676
    %v4581 = vunpack.c.l.s4 1983009808
    %v4582 = vunpack.c.0.s8 %v4581
    %v4583 = vlaneseq
    %v4584 = vshrl.u32 %v4583, 7
    %v4585 = vsub.s32 %v4582, %v4584
    %v4586 = vrot.slane %v4433, %v4585
    %v4588 = vunpack.c.l.s4 1983009808
    %v4589 = vunpack.c.0.s8 %v4588
    %v4590 = vlaneseq
    %v4591 = vshrl.u32 %v4590, 7
    %v4592 = vsub.s32 %v4589, %v4591
    %v4593 = vrot.slane %v4579, %v4592
    %v4594 = vcombine.high %v4441, %v676
    %v4596 = vunpack.c.l.s4 1983009808
    %v4597 = vunpack.c.0.s8 %v4596
    %v4598 = vlaneseq
    %v4599 = vshrl.u32 %v4598, 7
    %v4600 = vsub.s32 %v4597, %v4599
    %v4601 = vrot.slane %v4441, %v4600
    %v4603 = vunpack.c.l.s4 1983009808
    %v4604 = vunpack.c.0.s8 %v4603
    %v4605 = vlaneseq
    %v4606 = vshrl.u32 %v4605, 7
    %v4607 = vsub.s32 %v4604, %v4606
    %v4608 = vrot.slane %v4594, %v4607
    %v4609 = vcombine.low %v4586, %v4601
    %v4610 = vcombine.high %v4586, %v4601
    %v4612 = vunpack.c.l.s4 1934713408
    %v4613 = vunpack.c.0.s8 %v4612
    %v4614 = vlaneseq
    %v4615 = vshrl.u32 %v4614, 7
    %v4616 = vsub.s32 %v4613, %v4615
    %v4617 = vrot.slane %v4609, %v4616
    %v4619 = vunpack.c.l.s4 1934713408
    %v4620 = vunpack.c.0.s8 %v4619
    %v4621 = vlaneseq
    %v4622 = vshrl.u32 %v4621, 7
    %v4623 = vsub.s32 %v4620, %v4622
    %v4624 = vrot.slane %v4610, %v4623
    %v4625 = vcombine.low %v4593, %v4608
    %v4626 = vcombine.high %v4593, %v4608
    %v4628 = vunpack.c.l.s4 1934713408
    %v4629 = vunpack.c.0.s8 %v4628
    %v4630 = vlaneseq
    %v4631 = vshrl.u32 %v4630, 7
    %v4632 = vsub.s32 %v4629, %v4631
    %v4633 = vrot.slane %v4625, %v4632
    %v4635 = vunpack.c.l.s4 1934713408
    %v4636 = vunpack.c.0.s8 %v4635
    %v4637 = vlaneseq
    %v4638 = vshrl.u32 %v4637, 7
    %v4639 = vsub.s32 %v4636, %v4638
    %v4640 = vrot.slane %v4626, %v4639
    %v4641 = vcombine.high %v4617, 0
    %v4642 = vcombine.high %v4624, 0
    %v4643 = vcombine.high %v4633, 0
    %v4644 = vcombine.high %v4640, 0
    %v4645 = vcombine.high %v4437, %v679
    %v4647 = vunpack.c.l.s4 1983009808
    %v4648 = vunpack.c.0.s8 %v4647
    %v4649 = vlaneseq
    %v4650 = vshrl.u32 %v4649, 7
    %v4651 = vsub.s32 %v4648, %v4650
    %v4652 = vrot.slane %v4437, %v4651
    %v4654 = vunpack.c.l.s4 1983009808
    %v4655 = vunpack.c.0.s8 %v4654
    %v4656 = vlaneseq
    %v4657 = vshrl.u32 %v4656, 7
    %v4658 = vsub.s32 %v4655, %v4657
    %v4659 = vrot.slane %v4645, %v4658
    %v4660 = vcombine.high %v4445, %v679
    %v4662 = vunpack.c.l.s4 1983009808
    %v4663 = vunpack.c.0.s8 %v4662
    %v4664 = vlaneseq
    %v4665 = vshrl.u32 %v4664, 7
    %v4666 = vsub.s32 %v4663, %v4665
    %v4667 = vrot.slane %v4445, %v4666
    %v4669 = vunpack.c.l.s4 1983009808
    %v4670 = vunpack.c.0.s8 %v4669
    %v4671 = vlaneseq
    %v4672 = vshrl.u32 %v4671, 7
    %v4673 = vsub.s32 %v4670, %v4672
    %v4674 = vrot.slane %v4660, %v4673
    %v4675 = vcombine.low %v4652, %v4667
    %v4676 = vcombine.high %v4652, %v4667
    %v4678 = vunpack.c.l.s4 1934713408
    %v4679 = vunpack.c.0.s8 %v4678
    %v4680 = vlaneseq
    %v4681 = vshrl.u32 %v4680, 7
    %v4682 = vsub.s32 %v4679, %v4681
    %v4683 = vrot.slane %v4675, %v4682
    %v4685 = vunpack.c.l.s4 1934713408
    %v4686 = vunpack.c.0.s8 %v4685
    %v4687 = vlaneseq
    %v4688 = vshrl.u32 %v4687, 7
    %v4689 = vsub.s32 %v4686, %v4688
    %v4690 = vrot.slane %v4676, %v4689
    %v4691 = vcombine.low %v4659, %v4674
    %v4692 = vcombine.high %v4659, %v4674
    %v4694 = vunpack.c.l.s4 1934713408
    %v4695 = vunpack.c.0.s8 %v4694
    %v4696 = vlaneseq
    %v4697 = vshrl.u32 %v4696, 7
    %v4698 = vsub.s32 %v4695, %v4697
    %v4699 = vrot.slane %v4691, %v4698
    %v4701 = vunpack.c.l.s4 1934713408
    %v4702 = vunpack.c.0.s8 %v4701
    %v4703 = vlaneseq
    %v4704 = vshrl.u32 %v4703, 7
    %v4705 = vsub.s32 %v4702, %v4704
    %v4706 = vrot.slane %v4692, %v4705
    %v4707 = vcombine.high %v4683, 0
    %v4708 = vcombine.high %v4690, 0
    %v4709 = vcombine.high %v4699, 0
    %v4710 = vcombine.high %v4706, 0
    %v4711 = vcombine.low %v4485, %v4501
    %v4713 = vunpack.c.l.s4 1983009808
    %v4714 = vunpack.c.0.s8 %v4713
    %v4715 = vlaneseq
    %v4716 = vshrl.u32 %v4715, 7
    %v4717 = vsub.s32 %v4714, %v4716
    %v4718 = vrot.slane %v4711, %v4717
    %v4719 = vcombine.low %v4492, %v4508
    %v4721 = vunpack.c.l.s4 1983009808
    %v4722 = vunpack.c.0.s8 %v4721
    %v4723 = vlaneseq
    %v4724 = vshrl.u32 %v4723, 7
    %v4725 = vsub.s32 %v4722, %v4724
    %v4726 = vrot.slane %v4719, %v4725
    %v4727 = vcombine.low %v4617, %v4633
    %v4729 = vunpack.c.l.s4 1983009808
    %v4730 = vunpack.c.0.s8 %v4729
    %v4731 = vlaneseq
    %v4732 = vshrl.u32 %v4731, 7
    %v4733 = vsub.s32 %v4730, %v4732
    %v4734 = vrot.slane %v4727, %v4733
    %v4735 = vcombine.low %v4624, %v4640
    %v4737 = vunpack.c.l.s4 1983009808
    %v4738 = vunpack.c.0.s8 %v4737
    %v4739 = vlaneseq
    %v4740 = vshrl.u32 %v4739, 7
    %v4741 = vsub.s32 %v4738, %v4740
    %v4742 = vrot.slane %v4735, %v4741
    %v4743 = vcombine.low %v4718, %v4726
    %v4745 = vunpack.c.l.s4 1934713408
    %v4746 = vunpack.c.0.s8 %v4745
    %v4747 = vlaneseq
    %v4748 = vshrl.u32 %v4747, 7
    %v4749 = vsub.s32 %v4746, %v4748
    %v4750 = vrot.slane %v4743, %v4749
    %v4751 = vcombine.low %v4734, %v4742
    %v4753 = vunpack.c.l.s4 1934713408
    %v4754 = vunpack.c.0.s8 %v4753
    %v4755 = vlaneseq
    %v4756 = vshrl.u32 %v4755, 7
    %v4757 = vsub.s32 %v4754, %v4756
    %v4758 = vrot.slane %v4751, %v4757
    %v4759 = vcombine.low %v4750, %v4758
    %v4760 = vcombine.high %v4750, %v4758
    %v4761 = vcombine.low %v4509, %v4511
    %v4763 = vunpack.c.l.s4 1983009808
    %v4764 = vunpack.c.0.s8 %v4763
    %v4765 = vlaneseq
    %v4766 = vshrl.u32 %v4765, 7
    %v4767 = vsub.s32 %v4764, %v4766
    %v4768 = vrot.slane %v4761, %v4767
    %v4769 = vcombine.low %v4510, %v4512
    %v4771 = vunpack.c.l.s4 1983009808
    %v4772 = vunpack.c.0.s8 %v4771
    %v4773 = vlaneseq
    %v4774 = vshrl.u32 %v4773, 7
    %v4775 = vsub.s32 %v4772, %v4774
    %v4776 = vrot.slane %v4769, %v4775
    %v4777 = vcombine.low %v4641, %v4643
    %v4779 = vunpack.c.l.s4 1983009808
    %v4780 = vunpack.c.0.s8 %v4779
    %v4781 = vlaneseq
    %v4782 = vshrl.u32 %v4781, 7
    %v4783 = vsub.s32 %v4780, %v4782
    %v4784 = vrot.slane %v4777, %v4783
    %v4785 = vcombine.low %v4642, %v4644
    %v4787 = vunpack.c.l.s4 1983009808
    %v4788 = vunpack.c.0.s8 %v4787
    %v4789 = vlaneseq
    %v4790 = vshrl.u32 %v4789, 7
    %v4791 = vsub.s32 %v4788, %v4790
    %v4792 = vrot.slane %v4785, %v4791
    %v4793 = vcombine.low %v4768, %v4776
    %v4795 = vunpack.c.l.s4 1934713408
    %v4796 = vunpack.c.0.s8 %v4795
    %v4797 = vlaneseq
    %v4798 = vshrl.u32 %v4797, 7
    %v4799 = vsub.s32 %v4796, %v4798
    %v4800 = vrot.slane %v4793, %v4799
    %v4801 = vcombine.low %v4784, %v4792
    %v4803 = vunpack.c.l.s4 1934713408
    %v4804 = vunpack.c.0.s8 %v4803
    %v4805 = vlaneseq
    %v4806 = vshrl.u32 %v4805, 7
    %v4807 = vsub.s32 %v4804, %v4806
    %v4808 = vrot.slane %v4801, %v4807
    %v4809 = vcombine.low %v4800, %v4808
    %v4810 = vcombine.high %v4800, %v4808
    %v4811 = vcombine.low %v4551, %v4567
    %v4813 = vunpack.c.l.s4 1983009808
    %v4814 = vunpack.c.0.s8 %v4813
    %v4815 = vlaneseq
    %v4816 = vshrl.u32 %v4815, 7
    %v4817 = vsub.s32 %v4814, %v4816
    %v4818 = vrot.slane %v4811, %v4817
    %v4819 = vcombine.low %v4558, %v4574
    %v4821 = vunpack.c.l.s4 1983009808
    %v4822 = vunpack.c.0.s8 %v4821
    %v4823 = vlaneseq
    %v4824 = vshrl.u32 %v4823, 7
    %v4825 = vsub.s32 %v4822, %v4824
    %v4826 = vrot.slane %v4819, %v4825
    %v4827 = vcombine.low %v4683, %v4699
    %v4829 = vunpack.c.l.s4 1983009808
    %v4830 = vunpack.c.0.s8 %v4829
    %v4831 = vlaneseq
    %v4832 = vshrl.u32 %v4831, 7
    %v4833 = vsub.s32 %v4830, %v4832
    %v4834 = vrot.slane %v4827, %v4833
    %v4835 = vcombine.low %v4690, %v4706
    %v4837 = vunpack.c.l.s4 1983009808
    %v4838 = vunpack.c.0.s8 %v4837
    %v4839 = vlaneseq
    %v4840 = vshrl.u32 %v4839, 7
    %v4841 = vsub.s32 %v4838, %v4840
    %v4842 = vrot.slane %v4835, %v4841
    %v4843 = vcombine.low %v4818, %v4826
    %v4845 = vunpack.c.l.s4 1934713408
    %v4846 = vunpack.c.0.s8 %v4845
    %v4847 = vlaneseq
    %v4848 = vshrl.u32 %v4847, 7
    %v4849 = vsub.s32 %v4846, %v4848
    %v4850 = vrot.slane %v4843, %v4849
    %v4851 = vcombine.low %v4834, %v4842
    %v4853 = vunpack.c.l.s4 1934713408
    %v4854 = vunpack.c.0.s8 %v4853
    %v4855 = vlaneseq
    %v4856 = vshrl.u32 %v4855, 7
    %v4857 = vsub.s32 %v4854, %v4856
    %v4858 = vrot.slane %v4851, %v4857
    %v4859 = vcombine.low %v4850, %v4858
    %v4860 = vcombine.high %v4850, %v4858
    %v4861 = vcombine.low %v4575, %v4577
    %v4863 = vunpack.c.l.s4 1983009808
    %v4864 = vunpack.c.0.s8 %v4863
    %v4865 = vlaneseq
    %v4866 = vshrl.u32 %v4865, 7
    %v4867 = vsub.s32 %v4864, %v4866
    %v4868 = vrot.slane %v4861, %v4867
    %v4869 = vcombine.low %v4576, %v4578
    %v4871 = vunpack.c.l.s4 1983009808
    %v4872 = vunpack.c.0.s8 %v4871
    %v4873 = vlaneseq
    %v4874 = vshrl.u32 %v4873, 7
    %v4875 = vsub.s32 %v4872, %v4874
    %v4876 = vrot.slane %v4869, %v4875
    %v4877 = vcombine.low %v4707, %v4709
    %v4879 = vunpack.c.l.s4 1983009808
    %v4880 = vunpack.c.0.s8 %v4879
    %v4881 = vlaneseq
    %v4882 = vshrl.u32 %v4881, 7
    %v4883 = vsub.s32 %v4880, %v4882
    %v4884 = vrot.slane %v4877, %v4883
    %v4885 = vcombine.low %v4708, %v4710
    %v4887 = vunpack.c.l.s4 1983009808
    %v4888 = vunpack.c.0.s8 %v4887
    %v4889 = vlaneseq
    %v4890 = vshrl.u32 %v4889, 7
    %v4891 = vsub.s32 %v4888, %v4890
    %v4892 = vrot.slane %v4885, %v4891
    %v4893 = vcombine.low %v4868, %v4876
    %v4895 = vunpack.c.l.s4 1934713408
    %v4896 = vunpack.c.0.s8 %v4895
    %v4897 = vlaneseq
    %v4898 = vshrl.u32 %v4897, 7
    %v4899 = vsub.s32 %v4896, %v4898
    %v4900 = vrot.slane %v4893, %v4899
    %v4901 = vcombine.low %v4884, %v4892
    %v4903 = vunpack.c.l.s4 1934713408
    %v4904 = vunpack.c.0.s8 %v4903
    %v4905 = vlaneseq
    %v4906 = vshrl.u32 %v4905, 7
    %v4907 = vsub.s32 %v4904, %v4906
    %v4908 = vrot.slane %v4901, %v4907
    %v4909 = vcombine.low %v4900, %v4908
    %v4910 = vcombine.high %v4900, %v4908
    %v4913 = vpack.i.b16 %v4809, %v4759
    %v4915 = vshrl.u32 %v4759, 16
    %v4916 = vshrl.u32 %v4809, 16
    %v4917 = vpack.i.b16 %v4916, %v4915
    %v4921 = vpack.i.b16 %v4810, %v4760
    %v4923 = vshrl.u32 %v4760, 16
    %v4924 = vshrl.u32 %v4810, 16
    %v4925 = vpack.i.b16 %v4924, %v4923
    %v4929 = vpack.i.b16 %v4909, %v4859
    %v4931 = vshrl.u32 %v4859, 16
    %v4932 = vshrl.u32 %v4909, 16
    %v4933 = vpack.i.b16 %v4932, %v4931
    %v4937 = vpack.i.b16 %v4910, %v4860
    %v4939 = vshrl.u32 %v4860, 16
    %v4940 = vshrl.u32 %v4910, 16
    %v4941 = vpack.i.b16 %v4940, %v4939
    %v4944 = vsel %vm1497, %v3841, 0
    %v4947 = vsel %vm1497, %v4377, 0
    %4949 = vmatprep.subr.bf16.mxu0 0
    %4950 = vmatpush1.bf16.xpose.msra.mxu0 %v4947
    %4951 = vmatprep.subr.bf16.mxu0 0
    %4952 = vmatpush1.bf16.xpose.msra.mxu0 0
    %4953 = vmatprep.subr.bf16.mxu0 0
    %4954 = vmatpush1.bf16.xpose.msra.mxu0 0
    %4955 = vmatprep.subr.bf16.mxu0 0
    %4956 = vmatpush1.bf16.xpose.msra.mxu0 0
    %4957 = vmatprep.subr.bf16.mxu0 0
    %4958 = vmatpush1.bf16.xpose.msra.mxu0 0
    %4959 = vmatprep.subr.bf16.mxu0 0
    %4960 = vmatpush1.bf16.xpose.msra.mxu0 0
    %4961 = vmatprep.subr.bf16.mxu0 0
    %4962 = vmatpush1.bf16.xpose.msra.mxu0 0
    %4963 = vmatprep.subr.bf16.mxu0 0
    %4964 = vmatpush1.bf16.xpose.msra.mxu0 0
    %4965 = vmatprep.subr.bf16.mxu0 0
    %4966 = vmatpush1.bf16.xpose.msra.mxu0 0
    %4967 = vmatprep.subr.bf16.mxu0 0
    %4968 = vmatpush1.bf16.xpose.msra.mxu0 0
    %4969 = vmatprep.subr.bf16.mxu0 0
    %4970 = vmatpush1.bf16.xpose.msra.mxu0 0
    %4971 = vmatprep.subr.bf16.mxu0 0
    %4972 = vmatpush1.bf16.xpose.msra.mxu0 0
    %4973 = vmatprep.subr.bf16.mxu0 0
    %4974 = vmatpush1.bf16.xpose.msra.mxu0 0
    %4975 = vmatprep.subr.bf16.mxu0 0
    %4976 = vmatpush1.bf16.xpose.msra.mxu0 0
    %4977 = vmatprep.subr.bf16.mxu0 0
    %4978 = vmatpush1.bf16.xpose.msra.mxu0 0
    %4979 = vmatprep.subr.bf16.mxu0 0
    %4980 = vmatpush1.bf16.xpose.msra.mxu0 0
    %4981 = vmatprep.mubr.bf16.mxu0 0
    %4982 = vmatmul.mubr.bf16.gmra.mrb[0].mxu0 %v4944
    %v4983 = vpop.f32.mrb[0].mxu0
    %v4984 = vadd.f32 0.0, %v4983
    %v4985 = vpop.f32.mrb[0].mxu0
    %v4986 = vpop.f32.mrb[0].mxu0
    %v4987 = vpop.f32.mrb[0].mxu0
    %4988 = vdwg.mxu0
    %v4990 = vsel %vm1497, %v3844, 0
    %v4993 = vsel %vm1497, %v4380, 0
    %4995 = vmatprep.subr.bf16.mxu0 0
    %4996 = vmatpush1.bf16.xpose.msra.mxu0 %v4993
    %4997 = vmatprep.subr.bf16.mxu0 0
    %4998 = vmatpush1.bf16.xpose.msra.mxu0 0
    %4999 = vmatprep.subr.bf16.mxu0 0
    %5000 = vmatpush1.bf16.xpose.msra.mxu0 0
    %5001 = vmatprep.subr.bf16.mxu0 0
    %5002 = vmatpush1.bf16.xpose.msra.mxu0 0
    %5003 = vmatprep.subr.bf16.mxu0 0
    %5004 = vmatpush1.bf16.xpose.msra.mxu0 0
    %5005 = vmatprep.subr.bf16.mxu0 0
    %5006 = vmatpush1.bf16.xpose.msra.mxu0 0
    %5007 = vmatprep.subr.bf16.mxu0 0
    %5008 = vmatpush1.bf16.xpose.msra.mxu0 0
    %5009 = vmatprep.subr.bf16.mxu0 0
    %5010 = vmatpush1.bf16.xpose.msra.mxu0 0
    %5011 = vmatprep.subr.bf16.mxu0 0
    %5012 = vmatpush1.bf16.xpose.msra.mxu0 0
    %5013 = vmatprep.subr.bf16.mxu0 0
    %5014 = vmatpush1.bf16.xpose.msra.mxu0 0
    %5015 = vmatprep.subr.bf16.mxu0 0
    %5016 = vmatpush1.bf16.xpose.msra.mxu0 0
    %5017 = vmatprep.subr.bf16.mxu0 0
    %5018 = vmatpush1.bf16.xpose.msra.mxu0 0
    %5019 = vmatprep.subr.bf16.mxu0 0
    %5020 = vmatpush1.bf16.xpose.msra.mxu0 0
    %5021 = vmatprep.subr.bf16.mxu0 0
    %5022 = vmatpush1.bf16.xpose.msra.mxu0 0
    %5023 = vmatprep.subr.bf16.mxu0 0
    %5024 = vmatpush1.bf16.xpose.msra.mxu0 0
    %5025 = vmatprep.subr.bf16.mxu0 0
    %5026 = vmatpush1.bf16.xpose.msra.mxu0 0
    %5027 = vmatprep.mubr.bf16.mxu0 0
    %5028 = vmatmul.mubr.bf16.gmra.mrb[0].mxu0 %v4990
    %v5029 = vpop.f32.mrb[0].mxu0
    %v5030 = vadd.f32 0.0, %v5029
    %v5031 = vpop.f32.mrb[0].mxu0
    %v5032 = vpop.f32.mrb[0].mxu0
    %v5033 = vpop.f32.mrb[0].mxu0
    %5034 = vdwg.mxu0
    %v5036 = vsel %vm1497, %v3847, 0
    %v5039 = vsel %vm1497, %v4383, 0
    %5041 = vmatprep.subr.bf16.mxu0 0
    %5042 = vmatpush1.bf16.xpose.msra.mxu0 %v5039
    %5043 = vmatprep.subr.bf16.mxu0 0
    %5044 = vmatpush1.bf16.xpose.msra.mxu0 0
    %5045 = vmatprep.subr.bf16.mxu0 0
    %5046 = vmatpush1.bf16.xpose.msra.mxu0 0
    %5047 = vmatprep.subr.bf16.mxu0 0
    %5048 = vmatpush1.bf16.xpose.msra.mxu0 0
    %5049 = vmatprep.subr.bf16.mxu0 0
    %5050 = vmatpush1.bf16.xpose.msra.mxu0 0
    %5051 = vmatprep.subr.bf16.mxu0 0
    %5052 = vmatpush1.bf16.xpose.msra.mxu0 0
    %5053 = vmatprep.subr.bf16.mxu0 0
    %5054 = vmatpush1.bf16.xpose.msra.mxu0 0
    %5055 = vmatprep.subr.bf16.mxu0 0
    %5056 = vmatpush1.bf16.xpose.msra.mxu0 0
    %5057 = vmatprep.subr.bf16.mxu0 0
    %5058 = vmatpush1.bf16.xpose.msra.mxu0 0
    %5059 = vmatprep.subr.bf16.mxu0 0
    %5060 = vmatpush1.bf16.xpose.msra.mxu0 0
    %5061 = vmatprep.subr.bf16.mxu0 0
    %5062 = vmatpush1.bf16.xpose.msra.mxu0 0
    %5063 = vmatprep.subr.bf16.mxu0 0
    %5064 = vmatpush1.bf16.xpose.msra.mxu0 0
    %5065 = vmatprep.subr.bf16.mxu0 0
    %5066 = vmatpush1.bf16.xpose.msra.mxu0 0
    %5067 = vmatprep.subr.bf16.mxu0 0
    %5068 = vmatpush1.bf16.xpose.msra.mxu0 0
    %5069 = vmatprep.subr.bf16.mxu0 0
    %5070 = vmatpush1.bf16.xpose.msra.mxu0 0
    %5071 = vmatprep.subr.bf16.mxu0 0
    %5072 = vmatpush1.bf16.xpose.msra.mxu0 0
    %5073 = vmatprep.mubr.bf16.mxu0 0
    %5074 = vmatmul.mubr.bf16.gmra.mrb[0].mxu0 %v5036
    %v5075 = vpop.f32.mrb[0].mxu0
    %v5076 = vadd.f32 0.0, %v5075
    %v5077 = vpop.f32.mrb[0].mxu0
    %v5078 = vpop.f32.mrb[0].mxu0
    %v5079 = vpop.f32.mrb[0].mxu0
    %5080 = vdwg.mxu0
    %v5082 = vsel %vm1497, %v3850, 0
    %v5085 = vsel %vm1497, %v4386, 0
    %5087 = vmatprep.subr.bf16.mxu0 0
    %5088 = vmatpush1.bf16.xpose.msra.mxu0 %v5085
    %5089 = vmatprep.subr.bf16.mxu0 0
    %5090 = vmatpush1.bf16.xpose.msra.mxu0 0
    %5091 = vmatprep.subr.bf16.mxu0 0
    %5092 = vmatpush1.bf16.xpose.msra.mxu0 0
    %5093 = vmatprep.subr.bf16.mxu0 0
    %5094 = vmatpush1.bf16.xpose.msra.mxu0 0
    %5095 = vmatprep.subr.bf16.mxu0 0
    %5096 = vmatpush1.bf16.xpose.msra.mxu0 0
    %5097 = vmatprep.subr.bf16.mxu0 0
    %5098 = vmatpush1.bf16.xpose.msra.mxu0 0
    %5099 = vmatprep.subr.bf16.mxu0 0
    %5100 = vmatpush1.bf16.xpose.msra.mxu0 0
    %5101 = vmatprep.subr.bf16.mxu0 0
    %5102 = vmatpush1.bf16.xpose.msra.mxu0 0
    %5103 = vmatprep.subr.bf16.mxu0 0
    %5104 = vmatpush1.bf16.xpose.msra.mxu0 0
    %5105 = vmatprep.subr.bf16.mxu0 0
    %5106 = vmatpush1.bf16.xpose.msra.mxu0 0
    %5107 = vmatprep.subr.bf16.mxu0 0
    %5108 = vmatpush1.bf16.xpose.msra.mxu0 0
    %5109 = vmatprep.subr.bf16.mxu0 0
    %5110 = vmatpush1.bf16.xpose.msra.mxu0 0
    %5111 = vmatprep.subr.bf16.mxu0 0
    %5112 = vmatpush1.bf16.xpose.msra.mxu0 0
    %5113 = vmatprep.subr.bf16.mxu0 0
    %5114 = vmatpush1.bf16.xpose.msra.mxu0 0
    %5115 = vmatprep.subr.bf16.mxu0 0
    %5116 = vmatpush1.bf16.xpose.msra.mxu0 0
    %5117 = vmatprep.subr.bf16.mxu0 0
    %5118 = vmatpush1.bf16.xpose.msra.mxu0 0
    %5119 = vmatprep.mubr.bf16.mxu0 0
    %5120 = vmatmul.mubr.bf16.gmra.mrb[0].mxu0 %v5082
    %v5121 = vpop.f32.mrb[0].mxu0
    %v5122 = vadd.f32 0.0, %v5121
    %v5123 = vpop.f32.mrb[0].mxu0
    %v5124 = vpop.f32.mrb[0].mxu0
    %v5125 = vpop.f32.mrb[0].mxu0
    %5126 = vdwg.mxu0
    %v5128 = vsel %vm1497, %v3853, 0
    %v5131 = vsel %vm1497, %v4389, 0
    %5133 = vmatprep.subr.bf16.mxu0 0
    %5134 = vmatpush1.bf16.xpose.msra.mxu0 %v5131
    %5135 = vmatprep.subr.bf16.mxu0 0
    %5136 = vmatpush1.bf16.xpose.msra.mxu0 0
    %5137 = vmatprep.subr.bf16.mxu0 0
    %5138 = vmatpush1.bf16.xpose.msra.mxu0 0
    %5139 = vmatprep.subr.bf16.mxu0 0
    %5140 = vmatpush1.bf16.xpose.msra.mxu0 0
    %5141 = vmatprep.subr.bf16.mxu0 0
    %5142 = vmatpush1.bf16.xpose.msra.mxu0 0
    %5143 = vmatprep.subr.bf16.mxu0 0
    %5144 = vmatpush1.bf16.xpose.msra.mxu0 0
    %5145 = vmatprep.subr.bf16.mxu0 0
    %5146 = vmatpush1.bf16.xpose.msra.mxu0 0
    %5147 = vmatprep.subr.bf16.mxu0 0
    %5148 = vmatpush1.bf16.xpose.msra.mxu0 0
    %5149 = vmatprep.subr.bf16.mxu0 0
    %5150 = vmatpush1.bf16.xpose.msra.mxu0 0
    %5151 = vmatprep.subr.bf16.mxu0 0
    %5152 = vmatpush1.bf16.xpose.msra.mxu0 0
    %5153 = vmatprep.subr.bf16.mxu0 0
    %5154 = vmatpush1.bf16.xpose.msra.mxu0 0
    %5155 = vmatprep.subr.bf16.mxu0 0
    %5156 = vmatpush1.bf16.xpose.msra.mxu0 0
    %5157 = vmatprep.subr.bf16.mxu0 0
    %5158 = vmatpush1.bf16.xpose.msra.mxu0 0
    %5159 = vmatprep.subr.bf16.mxu0 0
    %5160 = vmatpush1.bf16.xpose.msra.mxu0 0
    %5161 = vmatprep.subr.bf16.mxu0 0
    %5162 = vmatpush1.bf16.xpose.msra.mxu0 0
    %5163 = vmatprep.subr.bf16.mxu0 0
    %5164 = vmatpush1.bf16.xpose.msra.mxu0 0
    %5165 = vmatprep.mubr.bf16.mxu0 0
    %5166 = vmatmul.mubr.bf16.gmra.mrb[0].mxu0 %v5128
    %v5167 = vpop.f32.mrb[0].mxu0
    %v5168 = vadd.f32 0.0, %v5167
    %v5169 = vpop.f32.mrb[0].mxu0
    %v5170 = vpop.f32.mrb[0].mxu0
    %v5171 = vpop.f32.mrb[0].mxu0
    %5172 = vdwg.mxu0
    %v5174 = vsel %vm1497, %v3856, 0
    %v5177 = vsel %vm1497, %v4392, 0
    %5179 = vmatprep.subr.bf16.mxu0 0
    %5180 = vmatpush1.bf16.xpose.msra.mxu0 %v5177
    %5181 = vmatprep.subr.bf16.mxu0 0
    %5182 = vmatpush1.bf16.xpose.msra.mxu0 0
    %5183 = vmatprep.subr.bf16.mxu0 0
    %5184 = vmatpush1.bf16.xpose.msra.mxu0 0
    %5185 = vmatprep.subr.bf16.mxu0 0
    %5186 = vmatpush1.bf16.xpose.msra.mxu0 0
    %5187 = vmatprep.subr.bf16.mxu0 0
    %5188 = vmatpush1.bf16.xpose.msra.mxu0 0
    %5189 = vmatprep.subr.bf16.mxu0 0
    %5190 = vmatpush1.bf16.xpose.msra.mxu0 0
    %5191 = vmatprep.subr.bf16.mxu0 0
    %5192 = vmatpush1.bf16.xpose.msra.mxu0 0
    %5193 = vmatprep.subr.bf16.mxu0 0
    %5194 = vmatpush1.bf16.xpose.msra.mxu0 0
    %5195 = vmatprep.subr.bf16.mxu0 0
    %5196 = vmatpush1.bf16.xpose.msra.mxu0 0
    %5197 = vmatprep.subr.bf16.mxu0 0
    %5198 = vmatpush1.bf16.xpose.msra.mxu0 0
    %5199 = vmatprep.subr.bf16.mxu0 0
    %5200 = vmatpush1.bf16.xpose.msra.mxu0 0
    %5201 = vmatprep.subr.bf16.mxu0 0
    %5202 = vmatpush1.bf16.xpose.msra.mxu0 0
    %5203 = vmatprep.subr.bf16.mxu0 0
    %5204 = vmatpush1.bf16.xpose.msra.mxu0 0
    %5205 = vmatprep.subr.bf16.mxu0 0
    %5206 = vmatpush1.bf16.xpose.msra.mxu0 0
    %5207 = vmatprep.subr.bf16.mxu0 0
    %5208 = vmatpush1.bf16.xpose.msra.mxu0 0
    %5209 = vmatprep.subr.bf16.mxu0 0
    %5210 = vmatpush1.bf16.xpose.msra.mxu0 0
    %5211 = vmatprep.mubr.bf16.mxu0 0
    %5212 = vmatmul.mubr.bf16.gmra.mrb[0].mxu0 %v5174
    %v5213 = vpop.f32.mrb[0].mxu0
    %v5214 = vadd.f32 0.0, %v5213
    %v5215 = vpop.f32.mrb[0].mxu0
    %v5216 = vpop.f32.mrb[0].mxu0
    %v5217 = vpop.f32.mrb[0].mxu0
    %5218 = vdwg.mxu0
    %v5220 = vsel %vm1497, %v3859, 0
    %v5223 = vsel %vm1497, %v4395, 0
    %5225 = vmatprep.subr.bf16.mxu0 0
    %5226 = vmatpush1.bf16.xpose.msra.mxu0 %v5223
    %5227 = vmatprep.subr.bf16.mxu0 0
    %5228 = vmatpush1.bf16.xpose.msra.mxu0 0
    %5229 = vmatprep.subr.bf16.mxu0 0
    %5230 = vmatpush1.bf16.xpose.msra.mxu0 0
    %5231 = vmatprep.subr.bf16.mxu0 0
    %5232 = vmatpush1.bf16.xpose.msra.mxu0 0
    %5233 = vmatprep.subr.bf16.mxu0 0
    %5234 = vmatpush1.bf16.xpose.msra.mxu0 0
    %5235 = vmatprep.subr.bf16.mxu0 0
    %5236 = vmatpush1.bf16.xpose.msra.mxu0 0
    %5237 = vmatprep.subr.bf16.mxu0 0
    %5238 = vmatpush1.bf16.xpose.msra.mxu0 0
    %5239 = vmatprep.subr.bf16.mxu0 0
    %5240 = vmatpush1.bf16.xpose.msra.mxu0 0
    %5241 = vmatprep.subr.bf16.mxu0 0
    %5242 = vmatpush1.bf16.xpose.msra.mxu0 0
    %5243 = vmatprep.subr.bf16.mxu0 0
    %5244 = vmatpush1.bf16.xpose.msra.mxu0 0
    %5245 = vmatprep.subr.bf16.mxu0 0
    %5246 = vmatpush1.bf16.xpose.msra.mxu0 0
    %5247 = vmatprep.subr.bf16.mxu0 0
    %5248 = vmatpush1.bf16.xpose.msra.mxu0 0
    %5249 = vmatprep.subr.bf16.mxu0 0
    %5250 = vmatpush1.bf16.xpose.msra.mxu0 0
    %5251 = vmatprep.subr.bf16.mxu0 0
    %5252 = vmatpush1.bf16.xpose.msra.mxu0 0
    %5253 = vmatprep.subr.bf16.mxu0 0
    %5254 = vmatpush1.bf16.xpose.msra.mxu0 0
    %5255 = vmatprep.subr.bf16.mxu0 0
    %5256 = vmatpush1.bf16.xpose.msra.mxu0 0
    %5257 = vmatprep.mubr.bf16.mxu0 0
    %5258 = vmatmul.mubr.bf16.gmra.mrb[0].mxu0 %v5220
    %v5259 = vpop.f32.mrb[0].mxu0
    %v5260 = vadd.f32 0.0, %v5259
    %v5261 = vpop.f32.mrb[0].mxu0
    %v5262 = vpop.f32.mrb[0].mxu0
    %v5263 = vpop.f32.mrb[0].mxu0
    %5264 = vdwg.mxu0
    %v5266 = vsel %vm1497, %v3862, 0
    %v5269 = vsel %vm1497, %v4398, 0
    %5271 = vmatprep.subr.bf16.mxu0 0
    %5272 = vmatpush1.bf16.xpose.msra.mxu0 %v5269
    %5273 = vmatprep.subr.bf16.mxu0 0
    %5274 = vmatpush1.bf16.xpose.msra.mxu0 0
    %5275 = vmatprep.subr.bf16.mxu0 0
    %5276 = vmatpush1.bf16.xpose.msra.mxu0 0
    %5277 = vmatprep.subr.bf16.mxu0 0
    %5278 = vmatpush1.bf16.xpose.msra.mxu0 0
    %5279 = vmatprep.subr.bf16.mxu0 0
    %5280 = vmatpush1.bf16.xpose.msra.mxu0 0
    %5281 = vmatprep.subr.bf16.mxu0 0
    %5282 = vmatpush1.bf16.xpose.msra.mxu0 0
    %5283 = vmatprep.subr.bf16.mxu0 0
    %5284 = vmatpush1.bf16.xpose.msra.mxu0 0
    %5285 = vmatprep.subr.bf16.mxu0 0
    %5286 = vmatpush1.bf16.xpose.msra.mxu0 0
    %5287 = vmatprep.subr.bf16.mxu0 0
    %5288 = vmatpush1.bf16.xpose.msra.mxu0 0
    %5289 = vmatprep.subr.bf16.mxu0 0
    %5290 = vmatpush1.bf16.xpose.msra.mxu0 0
    %5291 = vmatprep.subr.bf16.mxu0 0
    %5292 = vmatpush1.bf16.xpose.msra.mxu0 0
    %5293 = vmatprep.subr.bf16.mxu0 0
    %5294 = vmatpush1.bf16.xpose.msra.mxu0 0
    %5295 = vmatprep.subr.bf16.mxu0 0
    %5296 = vmatpush1.bf16.xpose.msra.mxu0 0
    %5297 = vmatprep.subr.bf16.mxu0 0
    %5298 = vmatpush1.bf16.xpose.msra.mxu0 0
    %5299 = vmatprep.subr.bf16.mxu0 0
    %5300 = vmatpush1.bf16.xpose.msra.mxu0 0
    %5301 = vmatprep.subr.bf16.mxu0 0
    %5302 = vmatpush1.bf16.xpose.msra.mxu0 0
    %5303 = vmatprep.mubr.bf16.mxu0 0
    %5304 = vmatmul.mubr.bf16.gmra.mrb[0].mxu0 %v5266
    %v5305 = vpop.f32.mrb[0].mxu0
    %v5306 = vadd.f32 0.0, %v5305
    %v5307 = vpop.f32.mrb[0].mxu0
    %v5308 = vpop.f32.mrb[0].mxu0
    %v5309 = vpop.f32.mrb[0].mxu0
    %5310 = vdwg.mxu0
    %v5311 = vsel %vm2652, %v4984, -inf
    %5312 = vmax.xlane.f32.xlu0 %v5311
    %v5313 = vpop.xlane.xlu0 %5312
    %v5314 = vsel %vm2652, %v5030, -inf
    %5315 = vmax.xlane.f32.xlu0 %v5314
    %v5316 = vpop.xlane.xlu0 %5315
    %v5317 = vsel %vm2652, %v5076, -inf
    %5318 = vmax.xlane.f32.xlu0 %v5317
    %v5319 = vpop.xlane.xlu0 %5318
    %v5320 = vsel %vm2652, %v5122, -inf
    %5321 = vmax.xlane.f32.xlu0 %v5320
    %v5322 = vpop.xlane.xlu0 %5321
    %v5323 = vsel %vm2652, %v5168, -inf
    %5324 = vmax.xlane.f32.xlu0 %v5323
    %v5325 = vpop.xlane.xlu0 %5324
    %v5326 = vsel %vm2652, %v5214, -inf
    %5327 = vmax.xlane.f32.xlu0 %v5326
    %v5328 = vpop.xlane.xlu0 %5327
    %v5329 = vsel %vm2652, %v5260, -inf
    %5330 = vmax.xlane.f32.xlu0 %v5329
    %v5331 = vpop.xlane.xlu0 %5330
    %v5332 = vsel %vm2652, %v5306, -inf
    %5333 = vmax.xlane.f32.xlu0 %v5332
    %v5334 = vpop.xlane.xlu0 %5333
    %v5335 = vsub.f32 %v4984, %v5313
    %v5336 = vsub.f32 %v5030, %v5316
    %v5337 = vsub.f32 %v5076, %v5319
    %v5338 = vsub.f32 %v5122, %v5322
    %v5339 = vsub.f32 %v5168, %v5325
    %v5340 = vsub.f32 %v5214, %v5328
    %v5341 = vsub.f32 %v5260, %v5331
    %v5342 = vsub.f32 %v5306, %v5334
    %v5343 = vmul.f32 %v5335, 1.442695
    %v5344 = vpow.pop %v5343
    %v5345 = vmul.f32 %v5336, 1.442695
    %v5346 = vpow.pop %v5345
    %v5347 = vmul.f32 %v5337, 1.442695
    %v5348 = vpow.pop %v5347
    %v5349 = vmul.f32 %v5338, 1.442695
    %v5350 = vpow.pop %v5349
    %v5351 = vmul.f32 %v5339, 1.442695
    %v5352 = vpow.pop %v5351
    %v5353 = vmul.f32 %v5340, 1.442695
    %v5354 = vpow.pop %v5353
    %v5355 = vmul.f32 %v5341, 1.442695
    %v5356 = vpow.pop %v5355
    %v5357 = vmul.f32 %v5342, 1.442695
    %v5358 = vpow.pop %v5357
    %v5359 = vsel %vm2652, %v5344, 0.0
    %5360 = vadd.xlane.f32.xlu0 %v5359
    %v5361 = vpop.xlane.xlu0 %5360
    %v5362 = vsel %vm2652, %v5346, 0.0
    %5363 = vadd.xlane.f32.xlu0 %v5362
    %v5364 = vpop.xlane.xlu0 %5363
    %v5365 = vsel %vm2652, %v5348, 0.0
    %5366 = vadd.xlane.f32.xlu0 %v5365
    %v5367 = vpop.xlane.xlu0 %5366
    %v5368 = vsel %vm2652, %v5350, 0.0
    %5369 = vadd.xlane.f32.xlu0 %v5368
    %v5370 = vpop.xlane.xlu0 %5369
    %v5371 = vsel %vm2652, %v5352, 0.0
    %5372 = vadd.xlane.f32.xlu0 %v5371
    %v5373 = vpop.xlane.xlu0 %5372
    %v5374 = vsel %vm2652, %v5354, 0.0
    %5375 = vadd.xlane.f32.xlu0 %v5374
    %v5376 = vpop.xlane.xlu0 %5375
    %v5377 = vsel %vm2652, %v5356, 0.0
    %5378 = vadd.xlane.f32.xlu0 %v5377
    %v5379 = vpop.xlane.xlu0 %5378
    %v5380 = vsel %vm2652, %v5358, 0.0
    %5381 = vadd.xlane.f32.xlu0 %v5380
    %v5382 = vpop.xlane.xlu0 %5381
    %v5383 = vrcp.pop %v5361
    %v5384 = vrcp.pop %v5364
    %v5385 = vrcp.pop %v5367
    %v5386 = vrcp.pop %v5370
    %v5387 = vrcp.pop %v5373
    %v5388 = vrcp.pop %v5376
    %v5389 = vrcp.pop %v5379
    %v5390 = vrcp.pop %v5382
    %v5391 = vmul.f32 %v5344, %v5383
    %v5392 = vmul.f32 %v5346, %v5384
    %v5393 = vmul.f32 %v5348, %v5385
    %v5394 = vmul.f32 %v5350, %v5386
    %v5395 = vmul.f32 %v5352, %v5387
    %v5396 = vmul.f32 %v5354, %v5388
    %v5397 = vmul.f32 %v5356, %v5389
    %v5398 = vmul.f32 %v5358, %v5390
    %v5399 = vpack.c.bf16 %v5391, %v5391
    %v5400 = vpack.c.bf16 %v5392, %v5392
    %v5401 = vpack.c.bf16 %v5393, %v5393
    %v5402 = vpack.c.bf16 %v5394, %v5394
    %v5403 = vpack.c.bf16 %v5395, %v5395
    %v5404 = vpack.c.bf16 %v5396, %v5396
    %v5405 = vpack.c.bf16 %v5397, %v5397
    %v5406 = vpack.c.bf16 %v5398, %v5398
    %v5408 = vsel %vm2652, %v5399, 0
    %5410 = vmatprep.subr.bf16.mxu0 0
    %5411 = vmatpush1.bf16.msra.mxu0 %v4913
    %5412 = vmatprep.subr.bf16.mxu0 0
    %5413 = vmatpush1.bf16.msra.mxu0 0
    %5414 = vmatprep.subr.bf16.mxu0 0
    %5415 = vmatpush1.bf16.msra.mxu0 0
    %5416 = vmatprep.subr.bf16.mxu0 0
    %5417 = vmatpush1.bf16.msra.mxu0 0
    %5418 = vmatprep.subr.bf16.mxu0 0
    %5419 = vmatpush1.bf16.msra.mxu0 0
    %5420 = vmatprep.subr.bf16.mxu0 0
    %5421 = vmatpush1.bf16.msra.mxu0 0
    %5422 = vmatprep.subr.bf16.mxu0 0
    %5423 = vmatpush1.bf16.msra.mxu0 0
    %5424 = vmatprep.subr.bf16.mxu0 0
    %5425 = vmatpush1.bf16.msra.mxu0 0
    %5426 = vmatprep.subr.bf16.mxu0 0
    %5427 = vmatpush1.bf16.msra.mxu0 0
    %5428 = vmatprep.subr.bf16.mxu0 0
    %5429 = vmatpush1.bf16.msra.mxu0 0
    %5430 = vmatprep.subr.bf16.mxu0 0
    %5431 = vmatpush1.bf16.msra.mxu0 0
    %5432 = vmatprep.subr.bf16.mxu0 0
    %5433 = vmatpush1.bf16.msra.mxu0 0
    %5434 = vmatprep.subr.bf16.mxu0 0
    %5435 = vmatpush1.bf16.msra.mxu0 0
    %5436 = vmatprep.subr.bf16.mxu0 0
    %5437 = vmatpush1.bf16.msra.mxu0 0
    %5438 = vmatprep.subr.bf16.mxu0 0
    %5439 = vmatpush1.bf16.msra.mxu0 0
    %5440 = vmatprep.subr.bf16.mxu0 0
    %5441 = vmatpush1.bf16.msra.mxu0 0
    %5442 = vmatprep.mubr.bf16.mxu0 0
    %5443 = vmatmul.mubr.bf16.gmra.mrb[0].mxu0 %v5408
    %v5444 = vpop.f32.mrb[0].mxu0
    %v5445 = vadd.f32 0.0, %v5444
    %v5446 = vpop.f32.mrb[0].mxu0
    %v5447 = vpop.f32.mrb[0].mxu0
    %v5448 = vpop.f32.mrb[0].mxu0
    %5449 = vdwg.mxu0
    %v5451 = vsel %vm2652, %v5400, 0
    %5453 = vmatprep.subr.bf16.mxu0 0
    %5454 = vmatpush1.bf16.msra.mxu0 %v4917
    %5455 = vmatprep.subr.bf16.mxu0 0
    %5456 = vmatpush1.bf16.msra.mxu0 0
    %5457 = vmatprep.subr.bf16.mxu0 0
    %5458 = vmatpush1.bf16.msra.mxu0 0
    %5459 = vmatprep.subr.bf16.mxu0 0
    %5460 = vmatpush1.bf16.msra.mxu0 0
    %5461 = vmatprep.subr.bf16.mxu0 0
    %5462 = vmatpush1.bf16.msra.mxu0 0
    %5463 = vmatprep.subr.bf16.mxu0 0
    %5464 = vmatpush1.bf16.msra.mxu0 0
    %5465 = vmatprep.subr.bf16.mxu0 0
    %5466 = vmatpush1.bf16.msra.mxu0 0
    %5467 = vmatprep.subr.bf16.mxu0 0
    %5468 = vmatpush1.bf16.msra.mxu0 0
    %5469 = vmatprep.subr.bf16.mxu0 0
    %5470 = vmatpush1.bf16.msra.mxu0 0
    %5471 = vmatprep.subr.bf16.mxu0 0
    %5472 = vmatpush1.bf16.msra.mxu0 0
    %5473 = vmatprep.subr.bf16.mxu0 0
    %5474 = vmatpush1.bf16.msra.mxu0 0
    %5475 = vmatprep.subr.bf16.mxu0 0
    %5476 = vmatpush1.bf16.msra.mxu0 0
    %5477 = vmatprep.subr.bf16.mxu0 0
    %5478 = vmatpush1.bf16.msra.mxu0 0
    %5479 = vmatprep.subr.bf16.mxu0 0
    %5480 = vmatpush1.bf16.msra.mxu0 0
    %5481 = vmatprep.subr.bf16.mxu0 0
    %5482 = vmatpush1.bf16.msra.mxu0 0
    %5483 = vmatprep.subr.bf16.mxu0 0
    %5484 = vmatpush1.bf16.msra.mxu0 0
    %5485 = vmatprep.mubr.bf16.mxu0 0
    %5486 = vmatmul.mubr.bf16.gmra.mrb[0].mxu0 %v5451
    %v5487 = vpop.f32.mrb[0].mxu0
    %v5488 = vadd.f32 0.0, %v5487
    %v5489 = vpop.f32.mrb[0].mxu0
    %v5490 = vpop.f32.mrb[0].mxu0
    %v5491 = vpop.f32.mrb[0].mxu0
    %5492 = vdwg.mxu0
    %v5494 = vsel %vm2652, %v5401, 0
    %5496 = vmatprep.subr.bf16.mxu0 0
    %5497 = vmatpush1.bf16.msra.mxu0 %v4921
    %5498 = vmatprep.subr.bf16.mxu0 0
    %5499 = vmatpush1.bf16.msra.mxu0 0
    %5500 = vmatprep.subr.bf16.mxu0 0
    %5501 = vmatpush1.bf16.msra.mxu0 0
    %5502 = vmatprep.subr.bf16.mxu0 0
    %5503 = vmatpush1.bf16.msra.mxu0 0
    %5504 = vmatprep.subr.bf16.mxu0 0
    %5505 = vmatpush1.bf16.msra.mxu0 0
    %5506 = vmatprep.subr.bf16.mxu0 0
    %5507 = vmatpush1.bf16.msra.mxu0 0
    %5508 = vmatprep.subr.bf16.mxu0 0
    %5509 = vmatpush1.bf16.msra.mxu0 0
    %5510 = vmatprep.subr.bf16.mxu0 0
    %5511 = vmatpush1.bf16.msra.mxu0 0
    %5512 = vmatprep.subr.bf16.mxu0 0
    %5513 = vmatpush1.bf16.msra.mxu0 0
    %5514 = vmatprep.subr.bf16.mxu0 0
    %5515 = vmatpush1.bf16.msra.mxu0 0
    %5516 = vmatprep.subr.bf16.mxu0 0
    %5517 = vmatpush1.bf16.msra.mxu0 0
    %5518 = vmatprep.subr.bf16.mxu0 0
    %5519 = vmatpush1.bf16.msra.mxu0 0
    %5520 = vmatprep.subr.bf16.mxu0 0
    %5521 = vmatpush1.bf16.msra.mxu0 0
    %5522 = vmatprep.subr.bf16.mxu0 0
    %5523 = vmatpush1.bf16.msra.mxu0 0
    %5524 = vmatprep.subr.bf16.mxu0 0
    %5525 = vmatpush1.bf16.msra.mxu0 0
    %5526 = vmatprep.subr.bf16.mxu0 0
    %5527 = vmatpush1.bf16.msra.mxu0 0
    %5528 = vmatprep.mubr.bf16.mxu0 0
    %5529 = vmatmul.mubr.bf16.gmra.mrb[0].mxu0 %v5494
    %v5530 = vpop.f32.mrb[0].mxu0
    %v5531 = vadd.f32 0.0, %v5530
    %v5532 = vpop.f32.mrb[0].mxu0
    %v5533 = vpop.f32.mrb[0].mxu0
    %v5534 = vpop.f32.mrb[0].mxu0
    %5535 = vdwg.mxu0
    %v5537 = vsel %vm2652, %v5402, 0
    %5539 = vmatprep.subr.bf16.mxu0 0
    %5540 = vmatpush1.bf16.msra.mxu0 %v4925
    %5541 = vmatprep.subr.bf16.mxu0 0
    %5542 = vmatpush1.bf16.msra.mxu0 0
    %5543 = vmatprep.subr.bf16.mxu0 0
    %5544 = vmatpush1.bf16.msra.mxu0 0
    %5545 = vmatprep.subr.bf16.mxu0 0
    %5546 = vmatpush1.bf16.msra.mxu0 0
    %5547 = vmatprep.subr.bf16.mxu0 0
    %5548 = vmatpush1.bf16.msra.mxu0 0
    %5549 = vmatprep.subr.bf16.mxu0 0
    %5550 = vmatpush1.bf16.msra.mxu0 0
    %5551 = vmatprep.subr.bf16.mxu0 0
    %5552 = vmatpush1.bf16.msra.mxu0 0
    %5553 = vmatprep.subr.bf16.mxu0 0
    %5554 = vmatpush1.bf16.msra.mxu0 0
    %5555 = vmatprep.subr.bf16.mxu0 0
    %5556 = vmatpush1.bf16.msra.mxu0 0
    %5557 = vmatprep.subr.bf16.mxu0 0
    %5558 = vmatpush1.bf16.msra.mxu0 0
    %5559 = vmatprep.subr.bf16.mxu0 0
    %5560 = vmatpush1.bf16.msra.mxu0 0
    %5561 = vmatprep.subr.bf16.mxu0 0
    %5562 = vmatpush1.bf16.msra.mxu0 0
    %5563 = vmatprep.subr.bf16.mxu0 0
    %5564 = vmatpush1.bf16.msra.mxu0 0
    %5565 = vmatprep.subr.bf16.mxu0 0
    %5566 = vmatpush1.bf16.msra.mxu0 0
    %5567 = vmatprep.subr.bf16.mxu0 0
    %5568 = vmatpush1.bf16.msra.mxu0 0
    %5569 = vmatprep.subr.bf16.mxu0 0
    %5570 = vmatpush1.bf16.msra.mxu0 0
    %5571 = vmatprep.mubr.bf16.mxu0 0
    %5572 = vmatmul.mubr.bf16.gmra.mrb[0].mxu0 %v5537
    %v5573 = vpop.f32.mrb[0].mxu0
    %v5574 = vadd.f32 0.0, %v5573
    %v5575 = vpop.f32.mrb[0].mxu0
    %v5576 = vpop.f32.mrb[0].mxu0
    %v5577 = vpop.f32.mrb[0].mxu0
    %5578 = vdwg.mxu0
    %v5580 = vsel %vm2652, %v5403, 0
    %5582 = vmatprep.subr.bf16.mxu0 0
    %5583 = vmatpush1.bf16.msra.mxu0 %v4929
    %5584 = vmatprep.subr.bf16.mxu0 0
    %5585 = vmatpush1.bf16.msra.mxu0 0
    %5586 = vmatprep.subr.bf16.mxu0 0
    %5587 = vmatpush1.bf16.msra.mxu0 0
    %5588 = vmatprep.subr.bf16.mxu0 0
    %5589 = vmatpush1.bf16.msra.mxu0 0
    %5590 = vmatprep.subr.bf16.mxu0 0
    %5591 = vmatpush1.bf16.msra.mxu0 0
    %5592 = vmatprep.subr.bf16.mxu0 0
    %5593 = vmatpush1.bf16.msra.mxu0 0
    %5594 = vmatprep.subr.bf16.mxu0 0
    %5595 = vmatpush1.bf16.msra.mxu0 0
    %5596 = vmatprep.subr.bf16.mxu0 0
    %5597 = vmatpush1.bf16.msra.mxu0 0
    %5598 = vmatprep.subr.bf16.mxu0 0
    %5599 = vmatpush1.bf16.msra.mxu0 0
    %5600 = vmatprep.subr.bf16.mxu0 0
    %5601 = vmatpush1.bf16.msra.mxu0 0
    %5602 = vmatprep.subr.bf16.mxu0 0
    %5603 = vmatpush1.bf16.msra.mxu0 0
    %5604 = vmatprep.subr.bf16.mxu0 0
    %5605 = vmatpush1.bf16.msra.mxu0 0
    %5606 = vmatprep.subr.bf16.mxu0 0
    %5607 = vmatpush1.bf16.msra.mxu0 0
    %5608 = vmatprep.subr.bf16.mxu0 0
    %5609 = vmatpush1.bf16.msra.mxu0 0
    %5610 = vmatprep.subr.bf16.mxu0 0
    %5611 = vmatpush1.bf16.msra.mxu0 0
    %5612 = vmatprep.subr.bf16.mxu0 0
    %5613 = vmatpush1.bf16.msra.mxu0 0
    %5614 = vmatprep.mubr.bf16.mxu0 0
    %5615 = vmatmul.mubr.bf16.gmra.mrb[0].mxu0 %v5580
    %v5616 = vpop.f32.mrb[0].mxu0
    %v5617 = vadd.f32 0.0, %v5616
    %v5618 = vpop.f32.mrb[0].mxu0
    %v5619 = vpop.f32.mrb[0].mxu0
    %v5620 = vpop.f32.mrb[0].mxu0
    %5621 = vdwg.mxu0
    %v5623 = vsel %vm2652, %v5404, 0
    %5625 = vmatprep.subr.bf16.mxu0 0
    %5626 = vmatpush1.bf16.msra.mxu0 %v4933
    %5627 = vmatprep.subr.bf16.mxu0 0
    %5628 = vmatpush1.bf16.msra.mxu0 0
    %5629 = vmatprep.subr.bf16.mxu0 0
    %5630 = vmatpush1.bf16.msra.mxu0 0
    %5631 = vmatprep.subr.bf16.mxu0 0
    %5632 = vmatpush1.bf16.msra.mxu0 0
    %5633 = vmatprep.subr.bf16.mxu0 0
    %5634 = vmatpush1.bf16.msra.mxu0 0
    %5635 = vmatprep.subr.bf16.mxu0 0
    %5636 = vmatpush1.bf16.msra.mxu0 0
    %5637 = vmatprep.subr.bf16.mxu0 0
    %5638 = vmatpush1.bf16.msra.mxu0 0
    %5639 = vmatprep.subr.bf16.mxu0 0
    %5640 = vmatpush1.bf16.msra.mxu0 0
    %5641 = vmatprep.subr.bf16.mxu0 0
    %5642 = vmatpush1.bf16.msra.mxu0 0
    %5643 = vmatprep.subr.bf16.mxu0 0
    %5644 = vmatpush1.bf16.msra.mxu0 0
    %5645 = vmatprep.subr.bf16.mxu0 0
    %5646 = vmatpush1.bf16.msra.mxu0 0
    %5647 = vmatprep.subr.bf16.mxu0 0
    %5648 = vmatpush1.bf16.msra.mxu0 0
    %5649 = vmatprep.subr.bf16.mxu0 0
    %5650 = vmatpush1.bf16.msra.mxu0 0
    %5651 = vmatprep.subr.bf16.mxu0 0
    %5652 = vmatpush1.bf16.msra.mxu0 0
    %5653 = vmatprep.subr.bf16.mxu0 0
    %5654 = vmatpush1.bf16.msra.mxu0 0
    %5655 = vmatprep.subr.bf16.mxu0 0
    %5656 = vmatpush1.bf16.msra.mxu0 0
    %5657 = vmatprep.mubr.bf16.mxu0 0
    %5658 = vmatmul.mubr.bf16.gmra.mrb[0].mxu0 %v5623
    %v5659 = vpop.f32.mrb[0].mxu0
    %v5660 = vadd.f32 0.0, %v5659
    %v5661 = vpop.f32.mrb[0].mxu0
    %v5662 = vpop.f32.mrb[0].mxu0
    %v5663 = vpop.f32.mrb[0].mxu0
    %5664 = vdwg.mxu0
    %v5666 = vsel %vm2652, %v5405, 0
    %5668 = vmatprep.subr.bf16.mxu0 0
    %5669 = vmatpush1.bf16.msra.mxu0 %v4937
    %5670 = vmatprep.subr.bf16.mxu0 0
    %5671 = vmatpush1.bf16.msra.mxu0 0
    %5672 = vmatprep.subr.bf16.mxu0 0
    %5673 = vmatpush1.bf16.msra.mxu0 0
    %5674 = vmatprep.subr.bf16.mxu0 0
    %5675 = vmatpush1.bf16.msra.mxu0 0
    %5676 = vmatprep.subr.bf16.mxu0 0
    %5677 = vmatpush1.bf16.msra.mxu0 0
    %5678 = vmatprep.subr.bf16.mxu0 0
    %5679 = vmatpush1.bf16.msra.mxu0 0
    %5680 = vmatprep.subr.bf16.mxu0 0
    %5681 = vmatpush1.bf16.msra.mxu0 0
    %5682 = vmatprep.subr.bf16.mxu0 0
    %5683 = vmatpush1.bf16.msra.mxu0 0
    %5684 = vmatprep.subr.bf16.mxu0 0
    %5685 = vmatpush1.bf16.msra.mxu0 0
    %5686 = vmatprep.subr.bf16.mxu0 0
    %5687 = vmatpush1.bf16.msra.mxu0 0
    %5688 = vmatprep.subr.bf16.mxu0 0
    %5689 = vmatpush1.bf16.msra.mxu0 0
    %5690 = vmatprep.subr.bf16.mxu0 0
    %5691 = vmatpush1.bf16.msra.mxu0 0
    %5692 = vmatprep.subr.bf16.mxu0 0
    %5693 = vmatpush1.bf16.msra.mxu0 0
    %5694 = vmatprep.subr.bf16.mxu0 0
    %5695 = vmatpush1.bf16.msra.mxu0 0
    %5696 = vmatprep.subr.bf16.mxu0 0
    %5697 = vmatpush1.bf16.msra.mxu0 0
    %5698 = vmatprep.subr.bf16.mxu0 0
    %5699 = vmatpush1.bf16.msra.mxu0 0
    %5700 = vmatprep.mubr.bf16.mxu0 0
    %5701 = vmatmul.mubr.bf16.gmra.mrb[0].mxu0 %v5666
    %v5702 = vpop.f32.mrb[0].mxu0
    %v5703 = vadd.f32 0.0, %v5702
    %v5704 = vpop.f32.mrb[0].mxu0
    %v5705 = vpop.f32.mrb[0].mxu0
    %v5706 = vpop.f32.mrb[0].mxu0
    %5707 = vdwg.mxu0
    %v5709 = vsel %vm2652, %v5406, 0
    %5711 = vmatprep.subr.bf16.mxu0 0
    %5712 = vmatpush1.bf16.msra.mxu0 %v4941
    %5713 = vmatprep.subr.bf16.mxu0 0
    %5714 = vmatpush1.bf16.msra.mxu0 0
    %5715 = vmatprep.subr.bf16.mxu0 0
    %5716 = vmatpush1.bf16.msra.mxu0 0
    %5717 = vmatprep.subr.bf16.mxu0 0
    %5718 = vmatpush1.bf16.msra.mxu0 0
    %5719 = vmatprep.subr.bf16.mxu0 0
    %5720 = vmatpush1.bf16.msra.mxu0 0
    %5721 = vmatprep.subr.bf16.mxu0 0
    %5722 = vmatpush1.bf16.msra.mxu0 0
    %5723 = vmatprep.subr.bf16.mxu0 0
    %5724 = vmatpush1.bf16.msra.mxu0 0
    %5725 = vmatprep.subr.bf16.mxu0 0
    %5726 = vmatpush1.bf16.msra.mxu0 0
    %5727 = vmatprep.subr.bf16.mxu0 0
    %5728 = vmatpush1.bf16.msra.mxu0 0
    %5729 = vmatprep.subr.bf16.mxu0 0
    %5730 = vmatpush1.bf16.msra.mxu0 0
    %5731 = vmatprep.subr.bf16.mxu0 0
    %5732 = vmatpush1.bf16.msra.mxu0 0
    %5733 = vmatprep.subr.bf16.mxu0 0
    %5734 = vmatpush1.bf16.msra.mxu0 0
    %5735 = vmatprep.subr.bf16.mxu0 0
    %5736 = vmatpush1.bf16.msra.mxu0 0
    %5737 = vmatprep.subr.bf16.mxu0 0
    %5738 = vmatpush1.bf16.msra.mxu0 0
    %5739 = vmatprep.subr.bf16.mxu0 0
    %5740 = vmatpush1.bf16.msra.mxu0 0
    %5741 = vmatprep.subr.bf16.mxu0 0
    %5742 = vmatpush1.bf16.msra.mxu0 0
    %5743 = vmatprep.mubr.bf16.mxu0 0
    %5744 = vmatmul.mubr.bf16.gmra.mrb[0].mxu0 %v5709
    %v5745 = vpop.f32.mrb[0].mxu0
    %v5746 = vadd.f32 0.0, %v5745
    %v5747 = vpop.f32.mrb[0].mxu0
    %v5748 = vpop.f32.mrb[0].mxu0
    %v5749 = vpop.f32.mrb[0].mxu0
    %5750 = vdwg.mxu0
    %v5751 = vpack.c.bf16 %v5445, %v5445
    %v5753 = vunpack.c.l.s4 1983009808
    %v5754 = vunpack.c.0.s8 %v5753
    %v5755 = vlaneseq
    %v5756 = vshrl.u32 %v5755, 7
    %v5757 = vsub.s32 %v5754, %v5756
    %v5758 = vrot.slane %v5751, %v5757
    %v5759 = vpack.c.bf16 %v5531, %v5531
    %v5761 = vunpack.c.l.s4 1983009808
    %v5762 = vunpack.c.0.s8 %v5761
    %v5763 = vlaneseq
    %v5764 = vshrl.u32 %v5763, 7
    %v5765 = vsub.s32 %v5762, %v5764
    %v5766 = vrot.slane %v5759, %v5765
    %v5767 = vcombine.low %v5758, %v5766
    %v5768 = vcombine.high %v5758, %v5766
    %v5770 = vunpack.c.l.s4 1934713408
    %v5771 = vunpack.c.0.s8 %v5770
    %v5772 = vlaneseq
    %v5773 = vshrl.u32 %v5772, 7
    %v5774 = vsub.s32 %v5771, %v5773
    %v5775 = vrot.slane %v5767, %v5774
    %v5777 = vunpack.c.l.s4 1934713408
    %v5778 = vunpack.c.0.s8 %v5777
    %v5779 = vlaneseq
    %v5780 = vshrl.u32 %v5779, 7
    %v5781 = vsub.s32 %v5778, %v5780
    %v5782 = vrot.slane %v5768, %v5781
    %v5783 = vcombine.high %v5775, 0
    %v5784 = vcombine.high %v5782, 0
    %v5785 = vpack.c.bf16 %v5488, %v5488
    %v5787 = vunpack.c.l.s4 1983009808
    %v5788 = vunpack.c.0.s8 %v5787
    %v5789 = vlaneseq
    %v5790 = vshrl.u32 %v5789, 7
    %v5791 = vsub.s32 %v5788, %v5790
    %v5792 = vrot.slane %v5785, %v5791
    %v5793 = vpack.c.bf16 %v5574, %v5574
    %v5795 = vunpack.c.l.s4 1983009808
    %v5796 = vunpack.c.0.s8 %v5795
    %v5797 = vlaneseq
    %v5798 = vshrl.u32 %v5797, 7
    %v5799 = vsub.s32 %v5796, %v5798
    %v5800 = vrot.slane %v5793, %v5799
    %v5801 = vcombine.low %v5792, %v5800
    %v5802 = vcombine.high %v5792, %v5800
    %v5804 = vunpack.c.l.s4 1934713408
    %v5805 = vunpack.c.0.s8 %v5804
    %v5806 = vlaneseq
    %v5807 = vshrl.u32 %v5806, 7
    %v5808 = vsub.s32 %v5805, %v5807
    %v5809 = vrot.slane %v5801, %v5808
    %v5811 = vunpack.c.l.s4 1934713408
    %v5812 = vunpack.c.0.s8 %v5811
    %v5813 = vlaneseq
    %v5814 = vshrl.u32 %v5813, 7
    %v5815 = vsub.s32 %v5812, %v5814
    %v5816 = vrot.slane %v5802, %v5815
    %v5817 = vcombine.high %v5809, 0
    %v5818 = vcombine.high %v5816, 0
    %v5819 = vpack.c.bf16 %v5617, %v5617
    %v5821 = vunpack.c.l.s4 1983009808
    %v5822 = vunpack.c.0.s8 %v5821
    %v5823 = vlaneseq
    %v5824 = vshrl.u32 %v5823, 7
    %v5825 = vsub.s32 %v5822, %v5824
    %v5826 = vrot.slane %v5819, %v5825
    %v5827 = vpack.c.bf16 %v5703, %v5703
    %v5829 = vunpack.c.l.s4 1983009808
    %v5830 = vunpack.c.0.s8 %v5829
    %v5831 = vlaneseq
    %v5832 = vshrl.u32 %v5831, 7
    %v5833 = vsub.s32 %v5830, %v5832
    %v5834 = vrot.slane %v5827, %v5833
    %v5835 = vcombine.low %v5826, %v5834
    %v5836 = vcombine.high %v5826, %v5834
    %v5838 = vunpack.c.l.s4 1934713408
    %v5839 = vunpack.c.0.s8 %v5838
    %v5840 = vlaneseq
    %v5841 = vshrl.u32 %v5840, 7
    %v5842 = vsub.s32 %v5839, %v5841
    %v5843 = vrot.slane %v5835, %v5842
    %v5845 = vunpack.c.l.s4 1934713408
    %v5846 = vunpack.c.0.s8 %v5845
    %v5847 = vlaneseq
    %v5848 = vshrl.u32 %v5847, 7
    %v5849 = vsub.s32 %v5846, %v5848
    %v5850 = vrot.slane %v5836, %v5849
    %v5851 = vcombine.high %v5843, 0
    %v5852 = vcombine.high %v5850, 0
    %v5853 = vpack.c.bf16 %v5660, %v5660
    %v5855 = vunpack.c.l.s4 1983009808
    %v5856 = vunpack.c.0.s8 %v5855
    %v5857 = vlaneseq
    %v5858 = vshrl.u32 %v5857, 7
    %v5859 = vsub.s32 %v5856, %v5858
    %v5860 = vrot.slane %v5853, %v5859
    %v5861 = vpack.c.bf16 %v5746, %v5746
    %v5863 = vunpack.c.l.s4 1983009808
    %v5864 = vunpack.c.0.s8 %v5863
    %v5865 = vlaneseq
    %v5866 = vshrl.u32 %v5865, 7
    %v5867 = vsub.s32 %v5864, %v5866
    %v5868 = vrot.slane %v5861, %v5867
    %v5869 = vcombine.low %v5860, %v5868
    %v5870 = vcombine.high %v5860, %v5868
    %v5872 = vunpack.c.l.s4 1934713408
    %v5873 = vunpack.c.0.s8 %v5872
    %v5874 = vlaneseq
    %v5875 = vshrl.u32 %v5874, 7
    %v5876 = vsub.s32 %v5873, %v5875
    %v5877 = vrot.slane %v5869, %v5876
    %v5879 = vunpack.c.l.s4 1934713408
    %v5880 = vunpack.c.0.s8 %v5879
    %v5881 = vlaneseq
    %v5882 = vshrl.u32 %v5881, 7
    %v5883 = vsub.s32 %v5880, %v5882
    %v5884 = vrot.slane %v5870, %v5883
    %v5885 = vcombine.high %v5877, 0
    %v5886 = vcombine.high %v5884, 0
    %v5889 = vpack.i.b16 %v5809, %v5775
    %v5891 = vshrl.u32 %v5775, 16
    %v5892 = vshrl.u32 %v5809, 16
    %v5893 = vpack.i.b16 %v5892, %v5891
    %v5897 = vpack.i.b16 %v5817, %v5783
    %v5899 = vshrl.u32 %v5783, 16
    %v5900 = vshrl.u32 %v5817, 16
    %v5901 = vpack.i.b16 %v5900, %v5899
    %v5905 = vpack.i.b16 %v5816, %v5782
    %v5907 = vshrl.u32 %v5782, 16
    %v5908 = vshrl.u32 %v5816, 16
    %v5909 = vpack.i.b16 %v5908, %v5907
    %v5913 = vpack.i.b16 %v5818, %v5784
    %v5915 = vshrl.u32 %v5784, 16
    %v5916 = vshrl.u32 %v5818, 16
    %v5917 = vpack.i.b16 %v5916, %v5915
    %v5921 = vpack.i.b16 %v5877, %v5843
    %v5923 = vshrl.u32 %v5843, 16
    %v5924 = vshrl.u32 %v5877, 16
    %v5925 = vpack.i.b16 %v5924, %v5923
    %v5929 = vpack.i.b16 %v5885, %v5851
    %v5931 = vshrl.u32 %v5851, 16
    %v5932 = vshrl.u32 %v5885, 16
    %v5933 = vpack.i.b16 %v5932, %v5931
    %v5937 = vpack.i.b16 %v5884, %v5850
    %v5939 = vshrl.u32 %v5850, 16
    %v5940 = vshrl.u32 %v5884, 16
    %v5941 = vpack.i.b16 %v5940, %v5939
    %v5945 = vpack.i.b16 %v5886, %v5852
    %v5947 = vshrl.u32 %v5852, 16
    %v5948 = vshrl.u32 %v5886, 16
    %v5949 = vpack.i.b16 %v5948, %v5947
    %v5951 = vcombine.low %v5889, %v5897
    %v5953 = vunpack.c.l.s4 1983009808
    %v5954 = vunpack.c.0.s8 %v5953
    %v5955 = vlaneseq
    %v5956 = vshrl.u32 %v5955, 7
    %v5957 = vsub.s32 %v5954, %v5956
    %v5958 = vrot.slane %v5951, %v5957
    %v5959 = vcombine.low %v5893, %v5901
    %v5961 = vunpack.c.l.s4 1983009808
    %v5962 = vunpack.c.0.s8 %v5961
    %v5963 = vlaneseq
    %v5964 = vshrl.u32 %v5963, 7
    %v5965 = vsub.s32 %v5962, %v5964
    %v5966 = vrot.slane %v5959, %v5965
    %v5967 = vcombine.low %v5905, %v5913
    %v5969 = vunpack.c.l.s4 1983009808
    %v5970 = vunpack.c.0.s8 %v5969
    %v5971 = vlaneseq
    %v5972 = vshrl.u32 %v5971, 7
    %v5973 = vsub.s32 %v5970, %v5972
    %v5974 = vrot.slane %v5967, %v5973
    %v5975 = vcombine.low %v5909, %v5917
    %v5977 = vunpack.c.l.s4 1983009808
    %v5978 = vunpack.c.0.s8 %v5977
    %v5979 = vlaneseq
    %v5980 = vshrl.u32 %v5979, 7
    %v5981 = vsub.s32 %v5978, %v5980
    %v5982 = vrot.slane %v5975, %v5981
    %v5983 = vcombine.low %v5958, %v5966
    %v5985 = vunpack.c.l.s4 1934713408
    %v5986 = vunpack.c.0.s8 %v5985
    %v5987 = vlaneseq
    %v5988 = vshrl.u32 %v5987, 7
    %v5989 = vsub.s32 %v5986, %v5988
    %v5990 = vrot.slane %v5983, %v5989
    %v5991 = vcombine.low %v5974, %v5982
    %v5993 = vunpack.c.l.s4 1934713408
    %v5994 = vunpack.c.0.s8 %v5993
    %v5995 = vlaneseq
    %v5996 = vshrl.u32 %v5995, 7
    %v5997 = vsub.s32 %v5994, %v5996
    %v5998 = vrot.slane %v5991, %v5997
    %v5999 = vcombine.low %v5990, %v5998
    %v6000 = vcombine.high %v5990, %v5998
    %v6001 = vcombine.low %v5921, %v5929
    %v6003 = vunpack.c.l.s4 1983009808
    %v6004 = vunpack.c.0.s8 %v6003
    %v6005 = vlaneseq
    %v6006 = vshrl.u32 %v6005, 7
    %v6007 = vsub.s32 %v6004, %v6006
    %v6008 = vrot.slane %v6001, %v6007
    %v6009 = vcombine.low %v5925, %v5933
    %v6011 = vunpack.c.l.s4 1983009808
    %v6012 = vunpack.c.0.s8 %v6011
    %v6013 = vlaneseq
    %v6014 = vshrl.u32 %v6013, 7
    %v6015 = vsub.s32 %v6012, %v6014
    %v6016 = vrot.slane %v6009, %v6015
    %v6017 = vcombine.low %v5937, %v5945
    %v6019 = vunpack.c.l.s4 1983009808
    %v6020 = vunpack.c.0.s8 %v6019
    %v6021 = vlaneseq
    %v6022 = vshrl.u32 %v6021, 7
    %v6023 = vsub.s32 %v6020, %v6022
    %v6024 = vrot.slane %v6017, %v6023
    %v6025 = vcombine.low %v5941, %v5949
    %v6027 = vunpack.c.l.s4 1983009808
    %v6028 = vunpack.c.0.s8 %v6027
    %v6029 = vlaneseq
    %v6030 = vshrl.u32 %v6029, 7
    %v6031 = vsub.s32 %v6028, %v6030
    %v6032 = vrot.slane %v6025, %v6031
    %v6033 = vcombine.low %v6008, %v6016
    %v6035 = vunpack.c.l.s4 1934713408
    %v6036 = vunpack.c.0.s8 %v6035
    %v6037 = vlaneseq
    %v6038 = vshrl.u32 %v6037, 7
    %v6039 = vsub.s32 %v6036, %v6038
    %v6040 = vrot.slane %v6033, %v6039
    %v6041 = vcombine.low %v6024, %v6032
    %v6043 = vunpack.c.l.s4 1934713408
    %v6044 = vunpack.c.0.s8 %v6043
    %v6045 = vlaneseq
    %v6046 = vshrl.u32 %v6045, 7
    %v6047 = vsub.s32 %v6044, %v6046
    %v6048 = vrot.slane %v6041, %v6047
    %v6049 = vcombine.low %v6040, %v6048
    %v6050 = vcombine.high %v6040, %v6048
    %v6053 = vpack.i.b16 %v6049, %v5999
    %v6054 = vshrl.u32 %v5999, 16
    %v6055 = vshrl.u32 %v6049, 16
    %v6056 = vpack.i.b16 %v6055, %v6054
    %v6059 = vpack.i.b16 %v6050, %v6000
    %v6060 = vshrl.u32 %v6000, 16
    %v6061 = vshrl.u32 %v6050, 16
    %v6062 = vpack.i.b16 %v6061, %v6060
    %6063 = vrot.lane.b32.xlu0 %v6056, 8
    %v6064 = vpop.permute.xlu0 %6063
    %6065 = vrot.lane.b32.xlu0 %v6059, 16
    %v6066 = vpop.permute.xlu0 %6065
    %6067 = vrot.lane.b32.xlu0 %v6062, 24
    %v6068 = vpop.permute.xlu0 %6067
    %v6071 = vsel %vm1497, %v6053, %v6064
    %v6073 = vsel %vm2652, %v6071, %v6066
    %v6075 = vsel %vm2655, %v6073, %v6068
    %v6076 = vld [vmem:[#allocation20] sm:$0xf]
    %v6077 = vld [vmem:[#allocation20 + $0x4] sm:$0xf]
    %v6078 = vld [vmem:[#allocation20 + $0x8] sm:$0xf]
    %v6079 = vld [vmem:[#allocation20 + $0xc] sm:$0xf]
    %v6080 = vld [vmem:[%s39] sm:$0x1]
    %v6082 = vlaneseq
    %v6083 = vshrl.u32 %v6082, 7
    %v6084 = vsub.s32 0, %v6083
    %v6085 = vrot.slane %v6080, %v6084
    %v6091 = vunpack.c.l.b16 %v6076
    %v6092 = vunpack.c.l.b16 %v6077
    %v6093 = vunpack.c.l.b16 %v6078
    %v6094 = vunpack.c.l.b16 %v6079
    %v6095 = vpack.c.b16 %v6092, %v6091
    %v6096 = vpack.c.b16 %v6094, %v6093
    %v6099 = vsel %vm430, %v6075, 0
    %6101 = vmatprep.subr.bf16.mxu0 0
    %6102 = vmatpush1.bf16.msra.mxu0 %v6095
    %6103 = vmatprep.subr.bf16.mxu0 0
    %6104 = vmatpush1.bf16.msra.mxu0 %v6096
    %6105 = vmatprep.subr.bf16.mxu0 0
    %6106 = vmatpush1.bf16.msra.mxu0 0
    %6107 = vmatprep.subr.bf16.mxu0 0
    %6108 = vmatpush1.bf16.msra.mxu0 0
    %6109 = vmatprep.subr.bf16.mxu0 0
    %6110 = vmatpush1.bf16.msra.mxu0 0
    %6111 = vmatprep.subr.bf16.mxu0 0
    %6112 = vmatpush1.bf16.msra.mxu0 0
    %6113 = vmatprep.subr.bf16.mxu0 0
    %6114 = vmatpush1.bf16.msra.mxu0 0
    %6115 = vmatprep.subr.bf16.mxu0 0
    %6116 = vmatpush1.bf16.msra.mxu0 0
    %6117 = vmatprep.subr.bf16.mxu0 0
    %6118 = vmatpush1.bf16.msra.mxu0 0
    %6119 = vmatprep.subr.bf16.mxu0 0
    %6120 = vmatpush1.bf16.msra.mxu0 0
    %6121 = vmatprep.subr.bf16.mxu0 0
    %6122 = vmatpush1.bf16.msra.mxu0 0
    %6123 = vmatprep.subr.bf16.mxu0 0
    %6124 = vmatpush1.bf16.msra.mxu0 0
    %6125 = vmatprep.subr.bf16.mxu0 0
    %6126 = vmatpush1.bf16.msra.mxu0 0
    %6127 = vmatprep.subr.bf16.mxu0 0
    %6128 = vmatpush1.bf16.msra.mxu0 0
    %6129 = vmatprep.subr.bf16.mxu0 0
    %6130 = vmatpush1.bf16.msra.mxu0 0
    %6131 = vmatprep.subr.bf16.mxu0 0
    %6132 = vmatpush1.bf16.msra.mxu0 0
    %6133 = vmatprep.mubr.bf16.mxu0 0
    %6134 = vmatmul.mubr.bf16.gmra.mrb[0].mxu0 %v6099
    %v6135 = vpop.f32.mrb[0].mxu0
    %v6136 = vadd.f32 %v6085, %v6135
    %v6137 = vpop.f32.mrb[0].mxu0
    %v6138 = vpop.f32.mrb[0].mxu0
    %v6139 = vadd.f32 %v6085, %v6138
    %v6140 = vpop.f32.mrb[0].mxu0
    %6141 = vdwg.mxu0
    %v6144 = vcombine.high %v6136, %v6136
    %v6146 = vunpack.c.l.s4 1983009808
    %v6147 = vunpack.c.0.s8 %v6146
    %v6148 = vlaneseq
    %v6149 = vshrl.u32 %v6148, 7
    %v6150 = vsub.s32 %v6147, %v6149
    %v6151 = vrot.slane %v6136, %v6150
    %v6153 = vunpack.c.l.s4 1983009808
    %v6154 = vunpack.c.0.s8 %v6153
    %v6155 = vlaneseq
    %v6156 = vshrl.u32 %v6155, 7
    %v6157 = vsub.s32 %v6154, %v6156
    %v6158 = vrot.slane %v6144, %v6157
    %v6159 = vcombine.high %v6151, %v6151
    %v6160 = vcombine.high %v6158, %v6158
    %v6161 = vcombine.high %v6139, %v6139
    %v6163 = vunpack.c.l.s4 1983009808
    %v6164 = vunpack.c.0.s8 %v6163
    %v6165 = vlaneseq
    %v6166 = vshrl.u32 %v6165, 7
    %v6167 = vsub.s32 %v6164, %v6166
    %v6168 = vrot.slane %v6139, %v6167
    %v6170 = vunpack.c.l.s4 1983009808
    %v6171 = vunpack.c.0.s8 %v6170
    %v6172 = vlaneseq
    %v6173 = vshrl.u32 %v6172, 7
    %v6174 = vsub.s32 %v6171, %v6173
    %v6175 = vrot.slane %v6161, %v6174
    %v6176 = vcombine.high %v6168, %v6168
    %v6177 = vcombine.high %v6175, %v6175
    %v6186 = vadd.f32 %v3103, %v6151
    %v6187 = vadd.f32 %v3104, %v6159
    %v6188 = vadd.f32 %v3105, %v6158
    %v6189 = vadd.f32 %v3106, %v6160
    %v6190 = vadd.f32 %v3107, %v6168
    %v6191 = vadd.f32 %v3108, %v6176
    %v6192 = vadd.f32 %v3109, %v6175
    %v6193 = vadd.f32 %v3110, %v6177
    %v6194 = vld [vmem:[%s53] sm:$0x1]
    %v6195 = vld [vmem:[%s55] sm:$0x1]
    %v6204 = vcombine.low %v6186, %v6187
    %v6205 = vcombine.low %v6188, %v6189
    %v6207 = vunpack.c.l.s4 1983009808
    %v6208 = vunpack.c.0.s8 %v6207
    %v6209 = vlaneseq
    %v6210 = vshrl.u32 %v6209, 7
    %v6211 = vsub.s32 %v6208, %v6210
    %v6212 = vrot.slane %v6204, %v6211
    %v6214 = vunpack.c.l.s4 1983009808
    %v6215 = vunpack.c.0.s8 %v6214
    %v6216 = vlaneseq
    %v6217 = vshrl.u32 %v6216, 7
    %v6218 = vsub.s32 %v6215, %v6217
    %v6219 = vrot.slane %v6205, %v6218
    %v6220 = vcombine.low %v6212, %v6219
    %v6221 = vcombine.low %v6190, %v6191
    %v6222 = vcombine.low %v6192, %v6193
    %v6224 = vunpack.c.l.s4 1983009808
    %v6225 = vunpack.c.0.s8 %v6224
    %v6226 = vlaneseq
    %v6227 = vshrl.u32 %v6226, 7
    %v6228 = vsub.s32 %v6225, %v6227
    %v6229 = vrot.slane %v6221, %v6228
    %v6231 = vunpack.c.l.s4 1983009808
    %v6232 = vunpack.c.0.s8 %v6231
    %v6233 = vlaneseq
    %v6234 = vshrl.u32 %v6233, 7
    %v6235 = vsub.s32 %v6232, %v6234
    %v6236 = vrot.slane %v6222, %v6235
    %v6237 = vcombine.low %v6229, %v6236
    %v6240 = vsel %vm430, %v6220, 0.0
    %6241 = vadd.xlane.f32.xlu0 %v6240
    %v6242 = vpop.xlane.xlu0 %6241
    %v6243 = vsel %vm430, %v6237, 0.0
    %6244 = vadd.xlane.f32.xlu0 %v6243
    %v6245 = vpop.xlane.xlu0 %6244
    %v6246 = vmul.f32 %v6242, %v2828
    %v6247 = vmul.f32 %v6245, %v2828
    %v6251 = vunpack.c.l.s4 269488144
    %v6252 = vunpack.c.0.s8 %v6251
    %v6253 = vlaneseq
    %v6254 = vshrl.u32 %v6253, 7
    %v6255 = vsub.s32 %v6252, %v6254
    %v6256 = vrot.slane %v6246, %v6255
    %v6258 = vunpack.c.l.s4 842150450
    %v6259 = vunpack.c.0.s8 %v6258
    %v6260 = vlaneseq
    %v6261 = vshrl.u32 %v6260, 7
    %v6262 = vsub.s32 %v6259, %v6261
    %v6263 = vrot.slane %v6246, %v6262
    %v6265 = vunpack.c.l.s4 1414812756
    %v6266 = vunpack.c.0.s8 %v6265
    %v6267 = vlaneseq
    %v6268 = vshrl.u32 %v6267, 7
    %v6269 = vsub.s32 %v6266, %v6268
    %v6270 = vrot.slane %v6246, %v6269
    %v6272 = vunpack.c.l.s4 1987475062
    %v6273 = vunpack.c.0.s8 %v6272
    %v6274 = vlaneseq
    %v6275 = vshrl.u32 %v6274, 7
    %v6276 = vsub.s32 %v6273, %v6275
    %v6277 = vrot.slane %v6246, %v6276
    %v6279 = vunpack.c.l.s4 269488144
    %v6280 = vunpack.c.0.s8 %v6279
    %v6281 = vlaneseq
    %v6282 = vshrl.u32 %v6281, 7
    %v6283 = vsub.s32 %v6280, %v6282
    %v6284 = vrot.slane %v6247, %v6283
    %v6286 = vunpack.c.l.s4 842150450
    %v6287 = vunpack.c.0.s8 %v6286
    %v6288 = vlaneseq
    %v6289 = vshrl.u32 %v6288, 7
    %v6290 = vsub.s32 %v6287, %v6289
    %v6291 = vrot.slane %v6247, %v6290
    %v6293 = vunpack.c.l.s4 1414812756
    %v6294 = vunpack.c.0.s8 %v6293
    %v6295 = vlaneseq
    %v6296 = vshrl.u32 %v6295, 7
    %v6297 = vsub.s32 %v6294, %v6296
    %v6298 = vrot.slane %v6247, %v6297
    %v6300 = vunpack.c.l.s4 1987475062
    %v6301 = vunpack.c.0.s8 %v6300
    %v6302 = vlaneseq
    %v6303 = vshrl.u32 %v6302, 7
    %v6304 = vsub.s32 %v6301, %v6303
    %v6305 = vrot.slane %v6247, %v6304
    %v6314 = vsub.f32 %v6186, %v6256
    %v6315 = vsub.f32 %v6187, %v6263
    %v6316 = vsub.f32 %v6188, %v6270
    %v6317 = vsub.f32 %v6189, %v6277
    %v6318 = vsub.f32 %v6190, %v6284
    %v6319 = vsub.f32 %v6191, %v6291
    %v6320 = vsub.f32 %v6192, %v6298
    %v6321 = vsub.f32 %v6193, %v6305
    %v6322 = vmul.f32 %v6314, %v6314
    %v6323 = vmul.f32 %v6315, %v6315
    %v6324 = vmul.f32 %v6316, %v6316
    %v6325 = vmul.f32 %v6317, %v6317
    %v6326 = vmul.f32 %v6318, %v6318
    %v6327 = vmul.f32 %v6319, %v6319
    %v6328 = vmul.f32 %v6320, %v6320
    %v6329 = vmul.f32 %v6321, %v6321
    %v6338 = vcombine.low %v6322, %v6323
    %v6339 = vcombine.low %v6324, %v6325
    %v6341 = vunpack.c.l.s4 1983009808
    %v6342 = vunpack.c.0.s8 %v6341
    %v6343 = vlaneseq
    %v6344 = vshrl.u32 %v6343, 7
    %v6345 = vsub.s32 %v6342, %v6344
    %v6346 = vrot.slane %v6338, %v6345
    %v6348 = vunpack.c.l.s4 1983009808
    %v6349 = vunpack.c.0.s8 %v6348
    %v6350 = vlaneseq
    %v6351 = vshrl.u32 %v6350, 7
    %v6352 = vsub.s32 %v6349, %v6351
    %v6353 = vrot.slane %v6339, %v6352
    %v6354 = vcombine.low %v6346, %v6353
    %v6355 = vcombine.low %v6326, %v6327
    %v6356 = vcombine.low %v6328, %v6329
    %v6358 = vunpack.c.l.s4 1983009808
    %v6359 = vunpack.c.0.s8 %v6358
    %v6360 = vlaneseq
    %v6361 = vshrl.u32 %v6360, 7
    %v6362 = vsub.s32 %v6359, %v6361
    %v6363 = vrot.slane %v6355, %v6362
    %v6365 = vunpack.c.l.s4 1983009808
    %v6366 = vunpack.c.0.s8 %v6365
    %v6367 = vlaneseq
    %v6368 = vshrl.u32 %v6367, 7
    %v6369 = vsub.s32 %v6366, %v6368
    %v6370 = vrot.slane %v6356, %v6369
    %v6371 = vcombine.low %v6363, %v6370
    %v6374 = vsel %vm430, %v6354, 0.0
    %6375 = vadd.xlane.f32.xlu0 %v6374
    %v6376 = vpop.xlane.xlu0 %6375
    %v6377 = vsel %vm430, %v6371, 0.0
    %6378 = vadd.xlane.f32.xlu0 %v6377
    %v6379 = vpop.xlane.xlu0 %6378
    %v6380 = vmul.f32 %v6376, %v2828
    %v6381 = vmul.f32 %v6379, %v2828
    %v6382 = vadd.f32 %v6380, 1e-05
    %v6383 = vadd.f32 %v6381, 1e-05
    %v6384 = vrsqrt.pop %v6382
    %v6385 = vrsqrt.pop %v6383
    %v6389 = vunpack.c.l.s4 269488144
    %v6390 = vunpack.c.0.s8 %v6389
    %v6391 = vlaneseq
    %v6392 = vshrl.u32 %v6391, 7
    %v6393 = vsub.s32 %v6390, %v6392
    %v6394 = vrot.slane %v6384, %v6393
    %v6396 = vunpack.c.l.s4 842150450
    %v6397 = vunpack.c.0.s8 %v6396
    %v6398 = vlaneseq
    %v6399 = vshrl.u32 %v6398, 7
    %v6400 = vsub.s32 %v6397, %v6399
    %v6401 = vrot.slane %v6384, %v6400
    %v6403 = vunpack.c.l.s4 1414812756
    %v6404 = vunpack.c.0.s8 %v6403
    %v6405 = vlaneseq
    %v6406 = vshrl.u32 %v6405, 7
    %v6407 = vsub.s32 %v6404, %v6406
    %v6408 = vrot.slane %v6384, %v6407
    %v6410 = vunpack.c.l.s4 1987475062
    %v6411 = vunpack.c.0.s8 %v6410
    %v6412 = vlaneseq
    %v6413 = vshrl.u32 %v6412, 7
    %v6414 = vsub.s32 %v6411, %v6413
    %v6415 = vrot.slane %v6384, %v6414
    %v6417 = vunpack.c.l.s4 269488144
    %v6418 = vunpack.c.0.s8 %v6417
    %v6419 = vlaneseq
    %v6420 = vshrl.u32 %v6419, 7
    %v6421 = vsub.s32 %v6418, %v6420
    %v6422 = vrot.slane %v6385, %v6421
    %v6424 = vunpack.c.l.s4 842150450
    %v6425 = vunpack.c.0.s8 %v6424
    %v6426 = vlaneseq
    %v6427 = vshrl.u32 %v6426, 7
    %v6428 = vsub.s32 %v6425, %v6427
    %v6429 = vrot.slane %v6385, %v6428
    %v6431 = vunpack.c.l.s4 1414812756
    %v6432 = vunpack.c.0.s8 %v6431
    %v6433 = vlaneseq
    %v6434 = vshrl.u32 %v6433, 7
    %v6435 = vsub.s32 %v6432, %v6434
    %v6436 = vrot.slane %v6385, %v6435
    %v6438 = vunpack.c.l.s4 1987475062
    %v6439 = vunpack.c.0.s8 %v6438
    %v6440 = vlaneseq
    %v6441 = vshrl.u32 %v6440, 7
    %v6442 = vsub.s32 %v6439, %v6441
    %v6443 = vrot.slane %v6385, %v6442
    %v6452 = vmul.f32 %v6314, %v6394
    %v6453 = vmul.f32 %v6315, %v6401
    %v6454 = vmul.f32 %v6316, %v6408
    %v6455 = vmul.f32 %v6317, %v6415
    %v6456 = vmul.f32 %v6318, %v6422
    %v6457 = vmul.f32 %v6319, %v6429
    %v6458 = vmul.f32 %v6320, %v6436
    %v6459 = vmul.f32 %v6321, %v6443
    %v6461 = vlaneseq
    %v6462 = vshrl.u32 %v6461, 7
    %v6463 = vsub.s32 0, %v6462
    %v6464 = vrot.slane %v6194, %v6463
    %v6465 = vcombine.high %v6464, %v6464
    %v6467 = vunpack.c.l.s4 1983009808
    %v6468 = vunpack.c.0.s8 %v6467
    %v6469 = vlaneseq
    %v6470 = vshrl.u32 %v6469, 7
    %v6471 = vsub.s32 %v6468, %v6470
    %v6472 = vrot.slane %v6464, %v6471
    %v6474 = vunpack.c.l.s4 1983009808
    %v6475 = vunpack.c.0.s8 %v6474
    %v6476 = vlaneseq
    %v6477 = vshrl.u32 %v6476, 7
    %v6478 = vsub.s32 %v6475, %v6477
    %v6479 = vrot.slane %v6465, %v6478
    %v6480 = vcombine.high %v6472, %v6472
    %v6481 = vcombine.high %v6479, %v6479
    %v6486 = vmul.f32 %v6452, %v6472
    %v6487 = vmul.f32 %v6453, %v6480
    %v6488 = vmul.f32 %v6454, %v6479
    %v6489 = vmul.f32 %v6455, %v6481
    %v6490 = vmul.f32 %v6456, %v6472
    %v6491 = vmul.f32 %v6457, %v6480
    %v6492 = vmul.f32 %v6458, %v6479
    %v6493 = vmul.f32 %v6459, %v6481
    %v6495 = vlaneseq
    %v6496 = vshrl.u32 %v6495, 7
    %v6497 = vsub.s32 0, %v6496
    %v6498 = vrot.slane %v6195, %v6497
    %v6499 = vcombine.high %v6498, %v6498
    %v6501 = vunpack.c.l.s4 1983009808
    %v6502 = vunpack.c.0.s8 %v6501
    %v6503 = vlaneseq
    %v6504 = vshrl.u32 %v6503, 7
    %v6505 = vsub.s32 %v6502, %v6504
    %v6506 = vrot.slane %v6498, %v6505
    %v6508 = vunpack.c.l.s4 1983009808
    %v6509 = vunpack.c.0.s8 %v6508
    %v6510 = vlaneseq
    %v6511 = vshrl.u32 %v6510, 7
    %v6512 = vsub.s32 %v6509, %v6511
    %v6513 = vrot.slane %v6499, %v6512
    %v6514 = vcombine.high %v6506, %v6506
    %v6515 = vcombine.high %v6513, %v6513
    %v6520 = vadd.f32 %v6486, %v6506
    %v6521 = vadd.f32 %v6487, %v6514
    %v6522 = vadd.f32 %v6488, %v6513
    %v6523 = vadd.f32 %v6489, %v6515
    %v6524 = vadd.f32 %v6490, %v6506
    %v6525 = vadd.f32 %v6491, %v6514
    %v6526 = vadd.f32 %v6492, %v6513
    %v6527 = vadd.f32 %v6493, %v6515
    %v6536 = vcombine.low %v6520, %v6521
    %v6537 = vcombine.low %v6522, %v6523
    %v6539 = vunpack.c.l.s4 1983009808
    %v6540 = vunpack.c.0.s8 %v6539
    %v6541 = vlaneseq
    %v6542 = vshrl.u32 %v6541, 7
    %v6543 = vsub.s32 %v6540, %v6542
    %v6544 = vrot.slane %v6536, %v6543
    %v6546 = vunpack.c.l.s4 1983009808
    %v6547 = vunpack.c.0.s8 %v6546
    %v6548 = vlaneseq
    %v6549 = vshrl.u32 %v6548, 7
    %v6550 = vsub.s32 %v6547, %v6549
    %v6551 = vrot.slane %v6537, %v6550
    %v6552 = vcombine.low %v6544, %v6551
    %v6553 = vcombine.low %v6524, %v6525
    %v6554 = vcombine.low %v6526, %v6527
    %v6556 = vunpack.c.l.s4 1983009808
    %v6557 = vunpack.c.0.s8 %v6556
    %v6558 = vlaneseq
    %v6559 = vshrl.u32 %v6558, 7
    %v6560 = vsub.s32 %v6557, %v6559
    %v6561 = vrot.slane %v6553, %v6560
    %v6563 = vunpack.c.l.s4 1983009808
    %v6564 = vunpack.c.0.s8 %v6563
    %v6565 = vlaneseq
    %v6566 = vshrl.u32 %v6565, 7
    %v6567 = vsub.s32 %v6564, %v6566
    %v6568 = vrot.slane %v6554, %v6567
    %v6569 = vcombine.low %v6561, %v6568
    %v6572 = vpack.c.bf16 %v6569, %v6552
    %v6573 = vld [vmem:[%s41] sm:$0xf]
    %v6574 = vld [vmem:[%s41 + $0x4] sm:$0xf]
    %v6575 = vld [vmem:[%s41 + $0x8] sm:$0xf]
    %v6576 = vld [vmem:[%s41 + $0xc] sm:$0xf]
    %v6577 = vld [vmem:[%s43] sm:$0x1]
    %v6579 = vlaneseq
    %v6580 = vshrl.u32 %v6579, 7
    %v6581 = vsub.s32 0, %v6580
    %v6582 = vrot.slane %v6577, %v6581
    %v6588 = vunpack.c.l.b16 %v6573
    %v6589 = vunpack.c.l.b16 %v6574
    %v6590 = vunpack.c.l.b16 %v6575
    %v6591 = vunpack.c.l.b16 %v6576
    %v6592 = vpack.c.b16 %v6589, %v6588
    %v6593 = vpack.c.b16 %v6591, %v6590
    %v6597 = vsel %vm430, %v6572, 0
    %6599 = vmatprep.subr.bf16.mxu0 0
    %6600 = vmatpush1.bf16.msra.mxu0 %v6592
    %6601 = vmatprep.subr.bf16.mxu0 0
    %6602 = vmatpush1.bf16.msra.mxu0 %v6593
    %6603 = vmatprep.subr.bf16.mxu0 0
    %6604 = vmatpush1.bf16.msra.mxu0 0
    %6605 = vmatprep.subr.bf16.mxu0 0
    %6606 = vmatpush1.bf16.msra.mxu0 0
    %6607 = vmatprep.subr.bf16.mxu0 0
    %6608 = vmatpush1.bf16.msra.mxu0 0
    %6609 = vmatprep.subr.bf16.mxu0 0
    %6610 = vmatpush1.bf16.msra.mxu0 0
    %6611 = vmatprep.subr.bf16.mxu0 0
    %6612 = vmatpush1.bf16.msra.mxu0 0
    %6613 = vmatprep.subr.bf16.mxu0 0
    %6614 = vmatpush1.bf16.msra.mxu0 0
    %6615 = vmatprep.subr.bf16.mxu0 0
    %6616 = vmatpush1.bf16.msra.mxu0 0
    %6617 = vmatprep.subr.bf16.mxu0 0
    %6618 = vmatpush1.bf16.msra.mxu0 0
    %6619 = vmatprep.subr.bf16.mxu0 0
    %6620 = vmatpush1.bf16.msra.mxu0 0
    %6621 = vmatprep.subr.bf16.mxu0 0
    %6622 = vmatpush1.bf16.msra.mxu0 0
    %6623 = vmatprep.subr.bf16.mxu0 0
    %6624 = vmatpush1.bf16.msra.mxu0 0
    %6625 = vmatprep.subr.bf16.mxu0 0
    %6626 = vmatpush1.bf16.msra.mxu0 0
    %6627 = vmatprep.subr.bf16.mxu0 0
    %6628 = vmatpush1.bf16.msra.mxu0 0
    %6629 = vmatprep.subr.bf16.mxu0 0
    %6630 = vmatpush1.bf16.msra.mxu0 0
    %6631 = vmatprep.mubr.bf16.mxu0 0
    %6632 = vmatmul.mubr.bf16.gmra.mrb[0].mxu0 %v6597
    %v6633 = vpop.f32.mrb[0].mxu0
    %v6634 = vadd.f32 %v6582, %v6633
    %v6635 = vpop.f32.mrb[0].mxu0
    %v6636 = vpop.f32.mrb[0].mxu0
    %v6637 = vadd.f32 %v6582, %v6636
    %v6638 = vpop.f32.mrb[0].mxu0
    %6639 = vdwg.mxu0
    %v6640 = vmax.f32 %v6634, 0.0
    %v6641 = vmax.f32 %v6637, 0.0
    %v6642 = vpack.c.bf16 %v6641, %v6640
    %v6643 = vld [vmem:[%s45] sm:$0xf]
    %v6644 = vld [vmem:[%s45 + $0x4] sm:$0xf]
    %v6645 = vld [vmem:[%s45 + $0x8] sm:$0xf]
    %v6646 = vld [vmem:[%s45 + $0xc] sm:$0xf]
    %v6647 = vld [vmem:[%s45 + $0x10] sm:$0xf]
    %v6648 = vld [vmem:[%s45 + $0x14] sm:$0xf]
    %v6649 = vld [vmem:[%s45 + $0x18] sm:$0xf]
    %v6650 = vld [vmem:[%s45 + $0x1c] sm:$0xf]
    %v6651 = vld [vmem:[%s47] sm:$0x1]
    %v6653 = vlaneseq
    %v6654 = vshrl.u32 %v6653, 7
    %v6655 = vsub.s32 0, %v6654
    %v6656 = vrot.slane %v6651, %v6655
    %v6666 = vunpack.c.l.b16 %v6643
    %v6667 = vunpack.c.l.b16 %v6644
    %v6668 = vunpack.c.l.b16 %v6645
    %v6669 = vunpack.c.l.b16 %v6646
    %v6670 = vunpack.c.l.b16 %v6647
    %v6671 = vunpack.c.l.b16 %v6648
    %v6672 = vunpack.c.l.b16 %v6649
    %v6673 = vunpack.c.l.b16 %v6650
    %v6674 = vpack.c.b16 %v6667, %v6666
    %v6675 = vpack.c.b16 %v6669, %v6668
    %v6676 = vpack.c.b16 %v6671, %v6670
    %v6677 = vpack.c.b16 %v6673, %v6672
    %vm6682 = vcmask 523264
    %v6684 = vsel %vm6682, %v6642, 0
    %6686 = vmatprep.subr.bf16.mxu0 0
    %6687 = vmatpush1.bf16.msra.mxu0 %v6674
    %6688 = vmatprep.subr.bf16.mxu0 0
    %6689 = vmatpush1.bf16.msra.mxu0 %v6675
    %6690 = vmatprep.subr.bf16.mxu0 0
    %6691 = vmatpush1.bf16.msra.mxu0 %v6676
    %6692 = vmatprep.subr.bf16.mxu0 0
    %6693 = vmatpush1.bf16.msra.mxu0 %v6677
    %6694 = vmatprep.subr.bf16.mxu0 0
    %6695 = vmatpush1.bf16.msra.mxu0 0
    %6696 = vmatprep.subr.bf16.mxu0 0
    %6697 = vmatpush1.bf16.msra.mxu0 0
    %6698 = vmatprep.subr.bf16.mxu0 0
    %6699 = vmatpush1.bf16.msra.mxu0 0
    %6700 = vmatprep.subr.bf16.mxu0 0
    %6701 = vmatpush1.bf16.msra.mxu0 0
    %6702 = vmatprep.subr.bf16.mxu0 0
    %6703 = vmatpush1.bf16.msra.mxu0 0
    %6704 = vmatprep.subr.bf16.mxu0 0
    %6705 = vmatpush1.bf16.msra.mxu0 0
    %6706 = vmatprep.subr.bf16.mxu0 0
    %6707 = vmatpush1.bf16.msra.mxu0 0
    %6708 = vmatprep.subr.bf16.mxu0 0
    %6709 = vmatpush1.bf16.msra.mxu0 0
    %6710 = vmatprep.subr.bf16.mxu0 0
    %6711 = vmatpush1.bf16.msra.mxu0 0
    %6712 = vmatprep.subr.bf16.mxu0 0
    %6713 = vmatpush1.bf16.msra.mxu0 0
    %6714 = vmatprep.subr.bf16.mxu0 0
    %6715 = vmatpush1.bf16.msra.mxu0 0
    %6716 = vmatprep.subr.bf16.mxu0 0
    %6717 = vmatpush1.bf16.msra.mxu0 0
    %6718 = vmatprep.mubr.bf16.mxu0 0
    %6719 = vmatmul.mubr.bf16.gmra.mrb[0].mxu0 %v6684
    %v6720 = vpop.f32.mrb[0].mxu0
    %v6721 = vadd.f32 %v6656, %v6720
    %v6722 = vpop.f32.mrb[0].mxu0
    %v6723 = vpop.f32.mrb[0].mxu0
    %v6724 = vadd.f32 %v6656, %v6723
    %v6725 = vpop.f32.mrb[0].mxu0
    %6726 = vdwg.mxu0
    %v6729 = vcombine.high %v6721, %v6721
    %v6731 = vunpack.c.l.s4 1983009808
    %v6732 = vunpack.c.0.s8 %v6731
    %v6733 = vlaneseq
    %v6734 = vshrl.u32 %v6733, 7
    %v6735 = vsub.s32 %v6732, %v6734
    %v6736 = vrot.slane %v6721, %v6735
    %v6738 = vunpack.c.l.s4 1983009808
    %v6739 = vunpack.c.0.s8 %v6738
    %v6740 = vlaneseq
    %v6741 = vshrl.u32 %v6740, 7
    %v6742 = vsub.s32 %v6739, %v6741
    %v6743 = vrot.slane %v6729, %v6742
    %v6744 = vcombine.high %v6736, %v6736
    %v6745 = vcombine.high %v6743, %v6743
    %v6746 = vcombine.high %v6724, %v6724
    %v6748 = vunpack.c.l.s4 1983009808
    %v6749 = vunpack.c.0.s8 %v6748
    %v6750 = vlaneseq
    %v6751 = vshrl.u32 %v6750, 7
    %v6752 = vsub.s32 %v6749, %v6751
    %v6753 = vrot.slane %v6724, %v6752
    %v6755 = vunpack.c.l.s4 1983009808
    %v6756 = vunpack.c.0.s8 %v6755
    %v6757 = vlaneseq
    %v6758 = vshrl.u32 %v6757, 7
    %v6759 = vsub.s32 %v6756, %v6758
    %v6760 = vrot.slane %v6746, %v6759
    %v6761 = vcombine.high %v6753, %v6753
    %v6762 = vcombine.high %v6760, %v6760
    %v6771 = vadd.f32 %v6520, %v6736
    %v6772 = vadd.f32 %v6521, %v6744
    %v6773 = vadd.f32 %v6522, %v6743
    %v6774 = vadd.f32 %v6523, %v6745
    %v6775 = vadd.f32 %v6524, %v6753
    %v6776 = vadd.f32 %v6525, %v6761
    %v6777 = vadd.f32 %v6526, %v6760
    %v6778 = vadd.f32 %v6527, %v6762
    %v6779 = vld [vmem:[%s57] sm:$0x1]
    %v6780 = vld [vmem:[%s59] sm:$0x1]
    %v6789 = vcombine.low %v6771, %v6772
    %v6790 = vcombine.low %v6773, %v6774
    %v6792 = vunpack.c.l.s4 1983009808
    %v6793 = vunpack.c.0.s8 %v6792
    %v6794 = vlaneseq
    %v6795 = vshrl.u32 %v6794, 7
    %v6796 = vsub.s32 %v6793, %v6795
    %v6797 = vrot.slane %v6789, %v6796
    %v6799 = vunpack.c.l.s4 1983009808
    %v6800 = vunpack.c.0.s8 %v6799
    %v6801 = vlaneseq
    %v6802 = vshrl.u32 %v6801, 7
    %v6803 = vsub.s32 %v6800, %v6802
    %v6804 = vrot.slane %v6790, %v6803
    %v6805 = vcombine.low %v6797, %v6804
    %v6806 = vcombine.low %v6775, %v6776
    %v6807 = vcombine.low %v6777, %v6778
    %v6809 = vunpack.c.l.s4 1983009808
    %v6810 = vunpack.c.0.s8 %v6809
    %v6811 = vlaneseq
    %v6812 = vshrl.u32 %v6811, 7
    %v6813 = vsub.s32 %v6810, %v6812
    %v6814 = vrot.slane %v6806, %v6813
    %v6816 = vunpack.c.l.s4 1983009808
    %v6817 = vunpack.c.0.s8 %v6816
    %v6818 = vlaneseq
    %v6819 = vshrl.u32 %v6818, 7
    %v6820 = vsub.s32 %v6817, %v6819
    %v6821 = vrot.slane %v6807, %v6820
    %v6822 = vcombine.low %v6814, %v6821
    %v6825 = vsel %vm430, %v6805, 0.0
    %6826 = vadd.xlane.f32.xlu0 %v6825
    %v6827 = vpop.xlane.xlu0 %6826
    %v6828 = vsel %vm430, %v6822, 0.0
    %6829 = vadd.xlane.f32.xlu0 %v6828
    %v6830 = vpop.xlane.xlu0 %6829
    %v6831 = vmul.f32 %v6827, %v2828
    %v6832 = vmul.f32 %v6830, %v2828
    %v6836 = vunpack.c.l.s4 269488144
    %v6837 = vunpack.c.0.s8 %v6836
    %v6838 = vlaneseq
    %v6839 = vshrl.u32 %v6838, 7
    %v6840 = vsub.s32 %v6837, %v6839
    %v6841 = vrot.slane %v6831, %v6840
    %v6843 = vunpack.c.l.s4 842150450
    %v6844 = vunpack.c.0.s8 %v6843
    %v6845 = vlaneseq
    %v6846 = vshrl.u32 %v6845, 7
    %v6847 = vsub.s32 %v6844, %v6846
    %v6848 = vrot.slane %v6831, %v6847
    %v6850 = vunpack.c.l.s4 1414812756
    %v6851 = vunpack.c.0.s8 %v6850
    %v6852 = vlaneseq
    %v6853 = vshrl.u32 %v6852, 7
    %v6854 = vsub.s32 %v6851, %v6853
    %v6855 = vrot.slane %v6831, %v6854
    %v6857 = vunpack.c.l.s4 1987475062
    %v6858 = vunpack.c.0.s8 %v6857
    %v6859 = vlaneseq
    %v6860 = vshrl.u32 %v6859, 7
    %v6861 = vsub.s32 %v6858, %v6860
    %v6862 = vrot.slane %v6831, %v6861
    %v6864 = vunpack.c.l.s4 269488144
    %v6865 = vunpack.c.0.s8 %v6864
    %v6866 = vlaneseq
    %v6867 = vshrl.u32 %v6866, 7
    %v6868 = vsub.s32 %v6865, %v6867
    %v6869 = vrot.slane %v6832, %v6868
    %v6871 = vunpack.c.l.s4 842150450
    %v6872 = vunpack.c.0.s8 %v6871
    %v6873 = vlaneseq
    %v6874 = vshrl.u32 %v6873, 7
    %v6875 = vsub.s32 %v6872, %v6874
    %v6876 = vrot.slane %v6832, %v6875
    %v6878 = vunpack.c.l.s4 1414812756
    %v6879 = vunpack.c.0.s8 %v6878
    %v6880 = vlaneseq
    %v6881 = vshrl.u32 %v6880, 7
    %v6882 = vsub.s32 %v6879, %v6881
    %v6883 = vrot.slane %v6832, %v6882
    %v6885 = vunpack.c.l.s4 1987475062
    %v6886 = vunpack.c.0.s8 %v6885
    %v6887 = vlaneseq
    %v6888 = vshrl.u32 %v6887, 7
    %v6889 = vsub.s32 %v6886, %v6888
    %v6890 = vrot.slane %v6832, %v6889
    %v6899 = vsub.f32 %v6771, %v6841
    %v6900 = vsub.f32 %v6772, %v6848
    %v6901 = vsub.f32 %v6773, %v6855
    %v6902 = vsub.f32 %v6774, %v6862
    %v6903 = vsub.f32 %v6775, %v6869
    %v6904 = vsub.f32 %v6776, %v6876
    %v6905 = vsub.f32 %v6777, %v6883
    %v6906 = vsub.f32 %v6778, %v6890
    %v6907 = vmul.f32 %v6899, %v6899
    %v6908 = vmul.f32 %v6900, %v6900
    %v6909 = vmul.f32 %v6901, %v6901
    %v6910 = vmul.f32 %v6902, %v6902
    %v6911 = vmul.f32 %v6903, %v6903
    %v6912 = vmul.f32 %v6904, %v6904
    %v6913 = vmul.f32 %v6905, %v6905
    %v6914 = vmul.f32 %v6906, %v6906
    %v6923 = vcombine.low %v6907, %v6908
    %v6924 = vcombine.low %v6909, %v6910
    %v6926 = vunpack.c.l.s4 1983009808
    %v6927 = vunpack.c.0.s8 %v6926
    %v6928 = vlaneseq
    %v6929 = vshrl.u32 %v6928, 7
    %v6930 = vsub.s32 %v6927, %v6929
    %v6931 = vrot.slane %v6923, %v6930
    %v6933 = vunpack.c.l.s4 1983009808
    %v6934 = vunpack.c.0.s8 %v6933
    %v6935 = vlaneseq
    %v6936 = vshrl.u32 %v6935, 7
    %v6937 = vsub.s32 %v6934, %v6936
    %v6938 = vrot.slane %v6924, %v6937
    %v6939 = vcombine.low %v6931, %v6938
    %v6940 = vcombine.low %v6911, %v6912
    %v6941 = vcombine.low %v6913, %v6914
    %v6943 = vunpack.c.l.s4 1983009808
    %v6944 = vunpack.c.0.s8 %v6943
    %v6945 = vlaneseq
    %v6946 = vshrl.u32 %v6945, 7
    %v6947 = vsub.s32 %v6944, %v6946
    %v6948 = vrot.slane %v6940, %v6947
    %v6950 = vunpack.c.l.s4 1983009808
    %v6951 = vunpack.c.0.s8 %v6950
    %v6952 = vlaneseq
    %v6953 = vshrl.u32 %v6952, 7
    %v6954 = vsub.s32 %v6951, %v6953
    %v6955 = vrot.slane %v6941, %v6954
    %v6956 = vcombine.low %v6948, %v6955
    %v6959 = vsel %vm430, %v6939, 0.0
    %6960 = vadd.xlane.f32.xlu0 %v6959
    %v6961 = vpop.xlane.xlu0 %6960
    %v6962 = vsel %vm430, %v6956, 0.0
    %6963 = vadd.xlane.f32.xlu0 %v6962
    %v6964 = vpop.xlane.xlu0 %6963
    %v6965 = vmul.f32 %v6961, %v2828
    %v6966 = vmul.f32 %v6964, %v2828
    %v6967 = vadd.f32 %v6965, 1e-05
    %v6968 = vadd.f32 %v6966, 1e-05
    %v6969 = vrsqrt.pop %v6967
    %v6970 = vrsqrt.pop %v6968
    %v6974 = vunpack.c.l.s4 269488144
    %v6975 = vunpack.c.0.s8 %v6974
    %v6976 = vlaneseq
    %v6977 = vshrl.u32 %v6976, 7
    %v6978 = vsub.s32 %v6975, %v6977
    %v6979 = vrot.slane %v6969, %v6978
    %v6981 = vunpack.c.l.s4 842150450
    %v6982 = vunpack.c.0.s8 %v6981
    %v6983 = vlaneseq
    %v6984 = vshrl.u32 %v6983, 7
    %v6985 = vsub.s32 %v6982, %v6984
    %v6986 = vrot.slane %v6969, %v6985
    %v6988 = vunpack.c.l.s4 1414812756
    %v6989 = vunpack.c.0.s8 %v6988
    %v6990 = vlaneseq
    %v6991 = vshrl.u32 %v6990, 7
    %v6992 = vsub.s32 %v6989, %v6991
    %v6993 = vrot.slane %v6969, %v6992
    %v6995 = vunpack.c.l.s4 1987475062
    %v6996 = vunpack.c.0.s8 %v6995
    %v6997 = vlaneseq
    %v6998 = vshrl.u32 %v6997, 7
    %v6999 = vsub.s32 %v6996, %v6998
    %v7000 = vrot.slane %v6969, %v6999
    %v7002 = vunpack.c.l.s4 269488144
    %v7003 = vunpack.c.0.s8 %v7002
    %v7004 = vlaneseq
    %v7005 = vshrl.u32 %v7004, 7
    %v7006 = vsub.s32 %v7003, %v7005
    %v7007 = vrot.slane %v6970, %v7006
    %v7009 = vunpack.c.l.s4 842150450
    %v7010 = vunpack.c.0.s8 %v7009
    %v7011 = vlaneseq
    %v7012 = vshrl.u32 %v7011, 7
    %v7013 = vsub.s32 %v7010, %v7012
    %v7014 = vrot.slane %v6970, %v7013
    %v7016 = vunpack.c.l.s4 1414812756
    %v7017 = vunpack.c.0.s8 %v7016
    %v7018 = vlaneseq
    %v7019 = vshrl.u32 %v7018, 7
    %v7020 = vsub.s32 %v7017, %v7019
    %v7021 = vrot.slane %v6970, %v7020
    %v7023 = vunpack.c.l.s4 1987475062
    %v7024 = vunpack.c.0.s8 %v7023
    %v7025 = vlaneseq
    %v7026 = vshrl.u32 %v7025, 7
    %v7027 = vsub.s32 %v7024, %v7026
    %v7028 = vrot.slane %v6970, %v7027
    %v7037 = vmul.f32 %v6899, %v6979
    %v7038 = vmul.f32 %v6900, %v6986
    %v7039 = vmul.f32 %v6901, %v6993
    %v7040 = vmul.f32 %v6902, %v7000
    %v7041 = vmul.f32 %v6903, %v7007
    %v7042 = vmul.f32 %v6904, %v7014
    %v7043 = vmul.f32 %v6905, %v7021
    %v7044 = vmul.f32 %v6906, %v7028
    %v7046 = vlaneseq
    %v7047 = vshrl.u32 %v7046, 7
    %v7048 = vsub.s32 0, %v7047
    %v7049 = vrot.slane %v6779, %v7048
    %v7050 = vcombine.high %v7049, %v7049
    %v7052 = vunpack.c.l.s4 1983009808
    %v7053 = vunpack.c.0.s8 %v7052
    %v7054 = vlaneseq
    %v7055 = vshrl.u32 %v7054, 7
    %v7056 = vsub.s32 %v7053, %v7055
    %v7057 = vrot.slane %v7049, %v7056
    %v7059 = vunpack.c.l.s4 1983009808
    %v7060 = vunpack.c.0.s8 %v7059
    %v7061 = vlaneseq
    %v7062 = vshrl.u32 %v7061, 7
    %v7063 = vsub.s32 %v7060, %v7062
    %v7064 = vrot.slane %v7050, %v7063
    %v7065 = vcombine.high %v7057, %v7057
    %v7066 = vcombine.high %v7064, %v7064
    %v7071 = vmul.f32 %v7037, %v7057
    %v7072 = vmul.f32 %v7038, %v7065
    %v7073 = vmul.f32 %v7039, %v7064
    %v7074 = vmul.f32 %v7040, %v7066
    %v7075 = vmul.f32 %v7041, %v7057
    %v7076 = vmul.f32 %v7042, %v7065
    %v7077 = vmul.f32 %v7043, %v7064
    %v7078 = vmul.f32 %v7044, %v7066
    %v7080 = vlaneseq
    %v7081 = vshrl.u32 %v7080, 7
    %v7082 = vsub.s32 0, %v7081
    %v7083 = vrot.slane %v6780, %v7082
    %v7084 = vcombine.high %v7083, %v7083
    %v7086 = vunpack.c.l.s4 1983009808
    %v7087 = vunpack.c.0.s8 %v7086
    %v7088 = vlaneseq
    %v7089 = vshrl.u32 %v7088, 7
    %v7090 = vsub.s32 %v7087, %v7089
    %v7091 = vrot.slane %v7083, %v7090
    %v7093 = vunpack.c.l.s4 1983009808
    %v7094 = vunpack.c.0.s8 %v7093
    %v7095 = vlaneseq
    %v7096 = vshrl.u32 %v7095, 7
    %v7097 = vsub.s32 %v7094, %v7096
    %v7098 = vrot.slane %v7084, %v7097
    %v7099 = vcombine.high %v7091, %v7091
    %v7100 = vcombine.high %v7098, %v7098
    %v7105 = vadd.f32 %v7071, %v7091
    %v7106 = vadd.f32 %v7072, %v7099
    %v7107 = vadd.f32 %v7073, %v7098
    %v7108 = vadd.f32 %v7074, %v7100
    %v7109 = vadd.f32 %v7075, %v7091
    %v7110 = vadd.f32 %v7076, %v7099
    %v7111 = vadd.f32 %v7077, %v7098
    %v7112 = vadd.f32 %v7078, %v7100
    %vm7113 = vcmask 254976
    %7114 = vst.msk [vmem:[#allocation25] sm:$0x3] %vm7113, %v7105
    %7115 = vst.msk [vmem:[#allocation25 + $0x2] sm:$0x3] %vm7113, %v7106
    %7116 = vst.msk [vmem:[#allocation25 + $0x4] sm:$0x3] %vm7113, %v7107
    %7117 = vst.msk [vmem:[#allocation25 + $0x6] sm:$0x3] %vm7113, %v7108
    %7118 = vst.msk [vmem:[#allocation25 + $0x8] sm:$0x3] %vm7113, %v7109
    %7119 = vst.msk [vmem:[#allocation25 + $0xa] sm:$0x3] %vm7113, %v7110
    %7120 = vst.msk [vmem:[#allocation25 + $0xc] sm:$0x3] %vm7113, %v7111
    %7121 = vst.msk [vmem:[#allocation25 + $0xe] sm:$0x3] %vm7113, %v7112
    // Predicated region
    $region178: #{tpu_custom_call.1} parent=1 // pred_check
      _
    $region179: #{tpu_custom_call.1} parent=1 // pred_check_branch
      %7123 = sbr.rel (0) target = $region181
    $region180: #{tpu_custom_call.1} parent=1 // pred_region
      %s7125 = ssub.s32 256, 256
      %7126 = vsyncadd [#allocation4], %s7125
      %s7127 = sshll.u32 [#allocation25], 4
      %s7128 = int_to_ptr.vmem [resolvable:$true] %s7127
      %7133 = dma.vmem_to_hbm [thread:$0]  %s7128, 256, %s61, [#allocation4], 32, 32, 2
    $region181: #{tpu_custom_call.1} parent=1 // pred_fallthru
      _
    // Predicated region
    $region182: #{tpu_custom_call.1} parent=1 // pred_check
      _
    $region183: #{tpu_custom_call.1} parent=1 // pred_check_branch
      %7135 = sbr.rel (0) target = $region185
    $region184: #{tpu_custom_call.1} parent=1 // pred_region
      %7136 = dma.done [#allocation4], 256
    $region185: #{tpu_custom_call.1} parent=1 // pred_fallthru
      _
    %7137 = vsyncpa [#allocation3], 1
    %7138 = vsyncpa [#allocation6], 1
    %7139 = vsyncpa [#allocation9], 1
    %7140 = vsyncpa [#allocation12], 1
    %7141 = vsyncpa [#allocation15], 1
    %7142 = vsyncpa [#allocation18], 1
    %7143 = vsyncpa [#allocation21], 1
    %7144 = vsyncpa [#allocation24], 1
    %7145 = vsyncpa [#allocation4], 1

</llo_original>
